<compile_context>
chip_gen: v7x
topology: tpu7x:2x2x1
jax: 0.10.0
libtpu: 0.0.40
codegen_flags: <defaults>
</compile_context>

<pallas_src>
import functools
import math

import jax
import jax.numpy as jnp
from jax.experimental import pallas as pl
from jax.experimental.pallas import tpu as pltpu


# Operand dtype for the MXU matmul.  Keep float32 for exact parity with the
# PyTorch reference; on v6e/v7x this can be set to jnp.bfloat16 to halve
# operand DMA bytes and feed the 256x256 bf16 MXU (accumulation / epilogue
# stay in float32 via preferred_element_type).
MXU_OPERAND_DTYPE = jnp.float32


# ----------------------------------------------------------------------------
# Fused Pallas kernels (transposed layout):
#   o (N, TM) = W (N, K) @ X (K, TM) + bias (N, 1) [+ residual (N, TM)] [ReLU]
# ----------------------------------------------------------------------------
def _matmul_bias_kernel(w_ref, x_ref, b_ref, o_ref, *, relu):
    acc = jnp.dot(w_ref[...], x_ref[...], preferred_element_type=jnp.float32)
    y = acc + b_ref[...]                      # lane-broadcast of (N, 1) bias
    if relu:
        y = jnp.maximum(y, 0.0)
    o_ref[...] = y


def _matmul_bias_res_kernel(w_ref, x_ref, b_ref, r_ref, o_ref, *, relu):
    acc = jnp.dot(w_ref[...], x_ref[...], preferred_element_type=jnp.float32)
    y = acc + b_ref[...] + r_ref[...]
    if relu:
        y = jnp.maximum(y, 0.0)
    o_ref[...] = y


def fused_matmul_t(Wt, Xt, bias, relu, residual_t=None):
    """Wt: (N, K), Xt: (K, M), bias: (N,), residual_t: (N, M) or None.

    Returns out^T of shape (N, M), float32.
    """
    N, K = Wt.shape
    M = Xt.shape[1]

    # Pad the contraction dim to a multiple of 8 (sublane granularity).
    Kp = ((K + 7) // 8) * 8
    if Kp != K:
        Wt = jnp.pad(Wt, ((0, 0), (0, Kp - K)))
        Xt = jnp.pad(Xt, ((0, Kp - K), (0, 0)))

    Wt = Wt.astype(MXU_OPERAND_DTYPE)
    Xt = Xt.astype(MXU_OPERAND_DTYPE)

    # Lane tile over M: expose >=2 parallel grid steps on the big layers
    # (megacore), single block otherwise.  No padding is ever required.
    TM = 256 if (M % 256 == 0 and M > 256) else M
    grid = (M // TM,)

    in_specs = [
        pl.BlockSpec((N, Kp), lambda i: (0, 0)),     # weights (full)
        pl.BlockSpec((Kp, TM), lambda i: (0, i)),    # patches^T tile
        pl.BlockSpec((N, 1), lambda i: (0, 0)),      # bias
    ]
    args = [Wt, Xt, bias.reshape(N, 1)]

    if residual_t is None:
        kernel = functools.partial(_matmul_bias_kernel, relu=relu)
    else:
        kernel = functools.partial(_matmul_bias_res_kernel, relu=relu)
        in_specs.append(pl.BlockSpec((N, TM), lambda i: (0, i)))
        args.append(residual_t)

    out = pl.pallas_call(
        kernel,
        out_shape=jax.ShapeDtypeStruct((N, M), jnp.float32),
        grid=grid,
        in_specs=in_specs,
        out_specs=pl.BlockSpec((N, TM), lambda i: (0, i)),
        compiler_params=pltpu.CompilerParams(dimension_semantics=("parallel",)),
    )(*args)
    return out


# ----------------------------------------------------------------------------
# Convolution wrapper: im2col (XLA glue) + fused transposed Pallas matmul
# ----------------------------------------------------------------------------
def conv2d(x, w, scale=None, bias=None, stride=1, pad=0, relu=False,
           residual=None):
    """x: (B, H, W, Cin) NHWC, w: (Cout, Cin, KH, KW) (PyTorch layout)."""
    B, H, W, Cin = x.shape
    Cout, _, KH, KW = w.shape

    Ho = (H + 2 * pad - KH) // stride + 1
    Wo = (W + 2 * pad - KW) // stride + 1
    M = B * Ho * Wo
    K = KH * KW * Cin

    xp = jnp.pad(x, ((0, 0), (pad, pad), (pad, pad), (0, 0))) if pad else x

    # im2col: K axis ordered (kh, kw, cin); M axis ordered (b, ho, wo).
    cols = []
    for kh in range(KH):
        for kw in range(KW):
            cols.append(xp[:, kh:kh + stride * (Ho - 1) + 1:stride,
                              kw:kw + stride * (Wo - 1) + 1:stride, :])
    patches = jnp.concatenate(cols, axis=-1).reshape(M, K)
    Xt = patches.T                                   # (K, M): lane axis = M

    # (Cout, Cin, KH, KW) -> (Cout, KH, KW, Cin) -> (Cout, K) to match patches.
    Wt = jnp.transpose(w, (0, 2, 3, 1)).reshape(Cout, K)
    if scale is not None:
        Wt = Wt * scale[:, None]                     # fold BN scale (trace time)
    if bias is None:
        bias = jnp.zeros((Cout,), jnp.float32)

    res_t = None
    if residual is not None:
        res_t = residual.reshape(M, Cout).T          # (Cout, M)

    y_t = fused_matmul_t(Wt, Xt, bias, relu, res_t)  # (Cout, M)
    return y_t.T.reshape(B, Ho, Wo, Cout)


def upsample2_nearest(x):
    """Nearest-neighbor 2x upsample, NHWC (== F.interpolate scale_factor=2)."""
    return jnp.repeat(jnp.repeat(x, 2, axis=1), 2, axis=2)


# ----------------------------------------------------------------------------
# Static architecture config (kernel, stride, pad) — kept OUT of the jitted
# params pytree so jnp.pad / slicing see concrete Python ints.
# ----------------------------------------------------------------------------
_CHAIN_CFG = {
    "conv01": [(3, 1, 1), (3, 1, 1)],
    "conv12": [(5, 2, 2), (3, 1, 1), (3, 1, 1)],
    "conv23": [(5, 2, 2), (3, 1, 1), (3, 1, 1)],
    "conv34": [(5, 2, 2), (3, 1, 1), (3, 1, 1)],
}


# ----------------------------------------------------------------------------
# Parameter init (deterministic, synthetic)
# ----------------------------------------------------------------------------
def init_conv_bn(key, cin, cout, k):
    k1, k2, k3, k4, k5 = jax.random.split(key, 5)
    w = jax.random.normal(k1, (cout, cin, k, k), jnp.float32) / math.sqrt(cin * k * k)
    gamma = jax.random.uniform(k2, (cout,), jnp.float32, 0.5, 1.5)
    beta = 0.1 * jax.random.normal(k3, (cout,), jnp.float32)
    mean = 0.1 * jax.random.normal(k4, (cout,), jnp.float32)
    var = jax.random.uniform(k5, (cout,), jnp.float32, 0.5, 1.5)
    scale = gamma / jnp.sqrt(var + 1e-5)          # folded BN (eval mode)
    bias = beta - mean * scale
    return {"w": w, "scale": scale, "bias": bias}


def init_conv(key, cin, cout, k, with_bias):
    k1, k2 = jax.random.split(key)
    w = jax.random.normal(k1, (cout, cin, k, k), jnp.float32) / math.sqrt(cin * k * k)
    b = (0.1 * jax.random.normal(k2, (cout,), jnp.float32)) if with_bias else None
    return {"w": w, "b": b}


def init_feature_ex(key, out_chs=(8, 16, 32, 64)):
    c0, c1, c2, c3 = out_chs
    keys = iter(jax.random.split(key, 32))
    p = {}
    p["conv01"] = [init_conv_bn(next(keys), 3, c0, 3),
                   init_conv_bn(next(keys), c0, c0, 3)]
    p["conv12"] = [init_conv_bn(next(keys), c0, c1, 5),
                   init_conv_bn(next(keys), c1, c1, 3),
                   init_conv_bn(next(keys), c1, c1, 3)]
    p["conv23"] = [init_conv_bn(next(keys), c1, c2, 5),
                   init_conv_bn(next(keys), c2, c2, 3),
                   init_conv_bn(next(keys), c2, c2, 3)]
    p["conv34"] = [init_conv_bn(next(keys), c2, c3, 5),
                   init_conv_bn(next(keys), c3, c3, 3),
                   init_conv_bn(next(keys), c3, c3, 3)]
    p["lat1"] = init_conv(next(keys), c0, c3, 1, True)
    p["lat2"] = init_conv(next(keys), c1, c3, 1, True)
    p["lat3"] = init_conv(next(keys), c2, c3, 1, True)
    p["out1"] = init_conv(next(keys), c3, c0, 3, False)
    p["out2"] = init_conv(next(keys), c3, c1, 3, False)
    p["out3"] = init_conv(next(keys), c3, c2, 3, False)
    p["out4"] = init_conv(next(keys), c3, c3, 1, False)
    return p


# ----------------------------------------------------------------------------
# Forward pass (matches FeatureEX.forward)
# ----------------------------------------------------------------------------
def run_chain(x, layers, cfg):
    for layer, (_k, stride, pad) in zip(layers, cfg):
        x = conv2d(x, layer["w"], layer["scale"], layer["bias"],
                   stride=stride, pad=pad, relu=True)
    return x


def feature_ex_forward(params, x_nchw):
    x = jnp.transpose(x_nchw, (0, 2, 3, 1))          # NCHW -> NHWC

    x1 = run_chain(x, params["conv01"], _CHAIN_CFG["conv01"])
    x2 = run_chain(x1, params["conv12"], _CHAIN_CFG["conv12"])
    x3 = run_chain(x2, params["conv23"], _CHAIN_CFG["conv23"])
    x4 = run_chain(x3, params["conv34"], _CHAIN_CFG["conv34"])

    y4 = conv2d(x4, params["out4"]["w"])                              # 1x1, no bias

    x3 = conv2d(x3, params["lat3"]["w"], bias=params["lat3"]["b"],    # lat + upsample add
                residual=upsample2_nearest(x4))
    y3 = conv2d(x3, params["out3"]["w"], stride=1, pad=1)

    x2 = conv2d(x2, params["lat2"]["w"], bias=params["lat2"]["b"],
                residual=upsample2_nearest(x3))
    y2 = conv2d(x2, params["out2"]["w"], stride=1, pad=1)

    x1 = conv2d(x1, params["lat1"]["w"], bias=params["lat1"]["b"],
                residual=upsample2_nearest(x2))
    y1 = conv2d(x1, params["out1"]["w"], stride=1, pad=1)

    to_nchw = lambda t: jnp.transpose(t, (0, 3, 1, 2))
    return to_nchw(y4), to_nchw(y3), to_nchw(y2), to_nchw(y1)


# ----------------------------------------------------------------------------
if __name__ == "__main__":
    key = jax.random.PRNGKey(0)
    kp, kx = jax.random.split(key)

    params = init_feature_ex(kp, out_chs=(8, 16, 32, 64))
    x = jax.random.normal(kx, (2, 3, 16, 16), jnp.float32)   # NCHW like PyTorch

    fwd = jax.jit(feature_ex_forward)
    y4, y3, y2, y1 = fwd(params, x)
    jax.block_until_ready((y4, y3, y2, y1))

    assert y4.shape == (2, 64, 2, 2)
    assert y3.shape == (2, 32, 4, 4)
    assert y2.shape == (2, 16, 8, 8)
    assert y1.shape == (2, 8, 16, 16)
    print("KERNEL_OK")
</pallas_src>

<mosaic_0001>
module attributes {stable_mosaic.version = 11 : i64} {
  func.func @_matmul_bias_kernel(%arg0: i32, %arg1: memref<8x32xf32, #tpu.memory_space<vmem>>, %arg2: memref<32x256xf32, #tpu.memory_space<vmem>>, %arg3: memref<8x1xf32, #tpu.memory_space<vmem>>, %arg4: memref<8x256xf32, #tpu.memory_space<vmem>>) attributes {dimension_semantics = [#tpu.dimension_semantics<parallel>], iteration_bounds = array<i64: 2>, scalar_prefetch = 0 : i64, scratch_operands = 0 : i64, tpu.core_type = #tpu.core_type<tc>, window_params = [{pipeline_mode = #tpu.pipeline_mode<synchronous>, transform_indices = @transform_0, window_bounds = array<i64: 8, 32>}, {transform_indices = @transform_1, window_bounds = array<i64: 32, 256>}, {pipeline_mode = #tpu.pipeline_mode<synchronous>, transform_indices = @transform_2, window_bounds = array<i64: 8, 1>}, {transform_indices = @transform_3, window_bounds = array<i64: 8, 256>}]} {
    %c0 = arith.constant 0 : index
    %c0_0 = arith.constant 0 : index
    %0 = vector.load %arg1[%c0, %c0_0] : memref<8x32xf32, #tpu.memory_space<vmem>>, vector<8x32xf32>
    %c0_1 = arith.constant 0 : index
    %c0_2 = arith.constant 0 : index
    %1 = vector.load %arg2[%c0_1, %c0_2] : memref<32x256xf32, #tpu.memory_space<vmem>>, vector<32x256xf32>
    %cst = arith.constant dense<0.000000e+00> : vector<8x256xf32>
    %2 = tpu.matmul %0, %1, %cst {dimension_numbers = #tpu.dot_dimension_numbers<[1], [0], [0], [1], [0, 0, 1, 1], [], []>} : vector<8x32xf32>, vector<32x256xf32>, vector<8x256xf32> -> vector<8x256xf32>
    %c0_3 = arith.constant 0 : index
    %c0_4 = arith.constant 0 : index
    %3 = vector.load %arg3[%c0_3, %c0_4] : memref<8x1xf32, #tpu.memory_space<vmem>>, vector<8x1xf32>
    %4 = vector.broadcast %3 : vector<8x1xf32> to vector<8x256xf32>
    %5 = arith.addf %2, %4 : vector<8x256xf32>
    %cst_5 = arith.constant 0.000000e+00 : f32
    %6 = vector.broadcast %cst_5 : f32 to vector<8x256xf32>
    %7 = arith.maximumf %5, %6 : vector<8x256xf32>
    %c0_6 = arith.constant 0 : index
    %c0_7 = arith.constant 0 : index
    %8 = vector.load %arg4[%c0_6, %c0_7] : memref<8x256xf32, #tpu.memory_space<vmem>>, vector<8x256xf32>
    tpu.vector_store %arg4[%c0_6, %c0_7], %7 {strides = array<i32>} : memref<8x256xf32, #tpu.memory_space<vmem>>, vector<8x256xf32>,
    return
  }
  func.func @transform_0(%arg0: i32) -> (i32, i32) {
    %c0_i32 = arith.constant 0 : i32
    %c0_i32_0 = arith.constant 0 : i32
    %c0_i32_1 = arith.constant 0 : i32
    return %c0_i32, %c0_i32_0 : i32, i32
  }
  func.func @transform_1(%arg0: i32) -> (i32, i32) {
    %c0_i32 = arith.constant 0 : i32
    %c0_i32_0 = arith.constant 0 : i32
    return %c0_i32, %arg0 : i32, i32
  }
  func.func @transform_2(%arg0: i32) -> (i32, i32) {
    %c0_i32 = arith.constant 0 : i32
    %c0_i32_0 = arith.constant 0 : i32
    %c0_i32_1 = arith.constant 0 : i32
    return %c0_i32, %c0_i32_0 : i32, i32
  }
  func.func @transform_3(%arg0: i32) -> (i32, i32) {
    %c0_i32 = arith.constant 0 : i32
    %c0_i32_0 = arith.constant 0 : i32
    return %c0_i32, %arg0 : i32, i32
  }
}

module attributes {stable_mosaic.version = 11 : i64} {
  func.func @_matmul_bias_kernel(%arg0: i32, %arg1: memref<8x72xf32, #tpu.memory_space<vmem>>, %arg2: memref<72x256xf32, #tpu.memory_space<vmem>>, %arg3: memref<8x1xf32, #tpu.memory_space<vmem>>, %arg4: memref<8x256xf32, #tpu.memory_space<vmem>>) attributes {dimension_semantics = [#tpu.dimension_semantics<parallel>], iteration_bounds = array<i64: 2>, scalar_prefetch = 0 : i64, scratch_operands = 0 : i64, tpu.core_type = #tpu.core_type<tc>, window_params = [{pipeline_mode = #tpu.pipeline_mode<synchronous>, transform_indices = @transform_0, window_bounds = array<i64: 8, 72>}, {transform_indices = @transform_1, window_bounds = array<i64: 72, 256>}, {pipeline_mode = #tpu.pipeline_mode<synchronous>, transform_indices = @transform_2, window_bounds = array<i64: 8, 1>}, {transform_indices = @transform_3, window_bounds = array<i64: 8, 256>}]} {
    %c0 = arith.constant 0 : index
    %c0_0 = arith.constant 0 : index
    %0 = vector.load %arg1[%c0, %c0_0] : memref<8x72xf32, #tpu.memory_space<vmem>>, vector<8x72xf32>
    %c0_1 = arith.constant 0 : index
    %c0_2 = arith.constant 0 : index
    %1 = vector.load %arg2[%c0_1, %c0_2] : memref<72x256xf32, #tpu.memory_space<vmem>>, vector<72x256xf32>
    %cst = arith.constant dense<0.000000e+00> : vector<8x256xf32>
    %2 = tpu.matmul %0, %1, %cst {dimension_numbers = #tpu.dot_dimension_numbers<[1], [0], [0], [1], [0, 0, 1, 1], [], []>} : vector<8x72xf32>, vector<72x256xf32>, vector<8x256xf32> -> vector<8x256xf32>
    %c0_3 = arith.constant 0 : index
    %c0_4 = arith.constant 0 : index
    %3 = vector.load %arg3[%c0_3, %c0_4] : memref<8x1xf32, #tpu.memory_space<vmem>>, vector<8x1xf32>
    %4 = vector.broadcast %3 : vector<8x1xf32> to vector<8x256xf32>
    %5 = arith.addf %2, %4 : vector<8x256xf32>
    %cst_5 = arith.constant 0.000000e+00 : f32
    %6 = vector.broadcast %cst_5 : f32 to vector<8x256xf32>
    %7 = arith.maximumf %5, %6 : vector<8x256xf32>
    %c0_6 = arith.constant 0 : index
    %c0_7 = arith.constant 0 : index
    %8 = vector.load %arg4[%c0_6, %c0_7] : memref<8x256xf32, #tpu.memory_space<vmem>>, vector<8x256xf32>
    tpu.vector_store %arg4[%c0_6, %c0_7], %7 {strides = array<i32>} : memref<8x256xf32, #tpu.memory_space<vmem>>, vector<8x256xf32>,
    return
  }
  func.func @transform_0(%arg0: i32) -> (i32, i32) {
    %c0_i32 = arith.constant 0 : i32
    %c0_i32_0 = arith.constant 0 : i32
    %c0_i32_1 = arith.constant 0 : i32
    return %c0_i32, %c0_i32_0 : i32, i32
  }
  func.func @transform_1(%arg0: i32) -> (i32, i32) {
    %c0_i32 = arith.constant 0 : i32
    %c0_i32_0 = arith.constant 0 : i32
    return %c0_i32, %arg0 : i32, i32
  }
  func.func @transform_2(%arg0: i32) -> (i32, i32) {
    %c0_i32 = arith.constant 0 : i32
    %c0_i32_0 = arith.constant 0 : i32
    %c0_i32_1 = arith.constant 0 : i32
    return %c0_i32, %c0_i32_0 : i32, i32
  }
  func.func @transform_3(%arg0: i32) -> (i32, i32) {
    %c0_i32 = arith.constant 0 : i32
    %c0_i32_0 = arith.constant 0 : i32
    return %c0_i32, %arg0 : i32, i32
  }
}

module attributes {stable_mosaic.version = 11 : i64} {
  func.func @_matmul_bias_kernel(%arg0: i32, %arg1: memref<16x200xf32, #tpu.memory_space<vmem>>, %arg2: memref<200x128xf32, #tpu.memory_space<vmem>>, %arg3: memref<16x1xf32, #tpu.memory_space<vmem>>, %arg4: memref<16x128xf32, #tpu.memory_space<vmem>>) attributes {dimension_semantics = [#tpu.dimension_semantics<parallel>], iteration_bounds = array<i64: 1>, scalar_prefetch = 0 : i64, scratch_operands = 0 : i64, tpu.core_type = #tpu.core_type<tc>, window_params = [{pipeline_mode = #tpu.pipeline_mode<synchronous>, transform_indices = @transform_0, window_bounds = array<i64: 16, 200>}, {transform_indices = @transform_1, window_bounds = array<i64: 200, 128>}, {pipeline_mode = #tpu.pipeline_mode<synchronous>, transform_indices = @transform_2, window_bounds = array<i64: 16, 1>}, {transform_indices = @transform_3, window_bounds = array<i64: 16, 128>}]} {
    %c0 = arith.constant 0 : index
    %c0_0 = arith.constant 0 : index
    %0 = vector.load %arg1[%c0, %c0_0] : memref<16x200xf32, #tpu.memory_space<vmem>>, vector<16x200xf32>
    %c0_1 = arith.constant 0 : index
    %c0_2 = arith.constant 0 : index
    %1 = vector.load %arg2[%c0_1, %c0_2] : memref<200x128xf32, #tpu.memory_space<vmem>>, vector<200x128xf32>
    %cst = arith.constant dense<0.000000e+00> : vector<16x128xf32>
    %2 = tpu.matmul %0, %1, %cst {dimension_numbers = #tpu.dot_dimension_numbers<[1], [0], [0], [1], [0, 0, 1, 1], [], []>} : vector<16x200xf32>, vector<200x128xf32>, vector<16x128xf32> -> vector<16x128xf32>
    %c0_3 = arith.constant 0 : index
    %c0_4 = arith.constant 0 : index
    %3 = vector.load %arg3[%c0_3, %c0_4] : memref<16x1xf32, #tpu.memory_space<vmem>>, vector<16x1xf32>
    %4 = vector.broadcast %3 : vector<16x1xf32> to vector<16x128xf32>
    %5 = arith.addf %2, %4 : vector<16x128xf32>
    %cst_5 = arith.constant 0.000000e+00 : f32
    %6 = vector.broadcast %cst_5 : f32 to vector<16x128xf32>
    %7 = arith.maximumf %5, %6 : vector<16x128xf32>
    %c0_6 = arith.constant 0 : index
    %c0_7 = arith.constant 0 : index
    %8 = vector.load %arg4[%c0_6, %c0_7] : memref<16x128xf32, #tpu.memory_space<vmem>>, vector<16x128xf32>
    tpu.vector_store %arg4[%c0_6, %c0_7], %7 {strides = array<i32>} : memref<16x128xf32, #tpu.memory_space<vmem>>, vector<16x128xf32>,
    return
  }
  func.func @transform_0(%arg0: i32) -> (i32, i32) {
    %c0_i32 = arith.constant 0 : i32
    %c0_i32_0 = arith.constant 0 : i32
    %c0_i32_1 = arith.constant 0 : i32
    return %c0_i32, %c0_i32_0 : i32, i32
  }
  func.func @transform_1(%arg0: i32) -> (i32, i32) {
    %c0_i32 = arith.constant 0 : i32
    %c0_i32_0 = arith.constant 0 : i32
    return %c0_i32, %arg0 : i32, i32
  }
  func.func @transform_2(%arg0: i32) -> (i32, i32) {
    %c0_i32 = arith.constant 0 : i32
    %c0_i32_0 = arith.constant 0 : i32
    %c0_i32_1 = arith.constant 0 : i32
    return %c0_i32, %c0_i32_0 : i32, i32
  }
  func.func @transform_3(%arg0: i32) -> (i32, i32) {
    %c0_i32 = arith.constant 0 : i32
    %c0_i32_0 = arith.constant 0 : i32
    return %c0_i32, %arg0 : i32, i32
  }
}

module attributes {stable_mosaic.version = 11 : i64} {
  func.func @_matmul_bias_kernel(%arg0: i32, %arg1: memref<16x144xf32, #tpu.memory_space<vmem>>, %arg2: memref<144x128xf32, #tpu.memory_space<vmem>>, %arg3: memref<16x1xf32, #tpu.memory_space<vmem>>, %arg4: memref<16x128xf32, #tpu.memory_space<vmem>>) attributes {dimension_semantics = [#tpu.dimension_semantics<parallel>], iteration_bounds = array<i64: 1>, scalar_prefetch = 0 : i64, scratch_operands = 0 : i64, tpu.core_type = #tpu.core_type<tc>, window_params = [{pipeline_mode = #tpu.pipeline_mode<synchronous>, transform_indices = @transform_0, window_bounds = array<i64: 16, 144>}, {transform_indices = @transform_1, window_bounds = array<i64: 144, 128>}, {pipeline_mode = #tpu.pipeline_mode<synchronous>, transform_indices = @transform_2, window_bounds = array<i64: 16, 1>}, {transform_indices = @transform_3, window_bounds = array<i64: 16, 128>}]} {
    %c0 = arith.constant 0 : index
    %c0_0 = arith.constant 0 : index
    %0 = vector.load %arg1[%c0, %c0_0] : memref<16x144xf32, #tpu.memory_space<vmem>>, vector<16x144xf32>
    %c0_1 = arith.constant 0 : index
    %c0_2 = arith.constant 0 : index
    %1 = vector.load %arg2[%c0_1, %c0_2] : memref<144x128xf32, #tpu.memory_space<vmem>>, vector<144x128xf32>
    %cst = arith.constant dense<0.000000e+00> : vector<16x128xf32>
    %2 = tpu.matmul %0, %1, %cst {dimension_numbers = #tpu.dot_dimension_numbers<[1], [0], [0], [1], [0, 0, 1, 1], [], []>} : vector<16x144xf32>, vector<144x128xf32>, vector<16x128xf32> -> vector<16x128xf32>
    %c0_3 = arith.constant 0 : index
    %c0_4 = arith.constant 0 : index
    %3 = vector.load %arg3[%c0_3, %c0_4] : memref<16x1xf32, #tpu.memory_space<vmem>>, vector<16x1xf32>
    %4 = vector.broadcast %3 : vector<16x1xf32> to vector<16x128xf32>
    %5 = arith.addf %2, %4 : vector<16x128xf32>
    %cst_5 = arith.constant 0.000000e+00 : f32
    %6 = vector.broadcast %cst_5 : f32 to vector<16x128xf32>
    %7 = arith.maximumf %5, %6 : vector<16x128xf32>
    %c0_6 = arith.constant 0 : index
    %c0_7 = arith.constant 0 : index
    %8 = vector.load %arg4[%c0_6, %c0_7] : memref<16x128xf32, #tpu.memory_space<vmem>>, vector<16x128xf32>
    tpu.vector_store %arg4[%c0_6, %c0_7], %7 {strides = array<i32>} : memref<16x128xf32, #tpu.memory_space<vmem>>, vector<16x128xf32>,
    return
  }
  func.func @transform_0(%arg0: i32) -> (i32, i32) {
    %c0_i32 = arith.constant 0 : i32
    %c0_i32_0 = arith.constant 0 : i32
    %c0_i32_1 = arith.constant 0 : i32
    return %c0_i32, %c0_i32_0 : i32, i32
  }
  func.func @transform_1(%arg0: i32) -> (i32, i32) {
    %c0_i32 = arith.constant 0 : i32
    %c0_i32_0 = arith.constant 0 : i32
    return %c0_i32, %arg0 : i32, i32
  }
  func.func @transform_2(%arg0: i32) -> (i32, i32) {
    %c0_i32 = arith.constant 0 : i32
    %c0_i32_0 = arith.constant 0 : i32
    %c0_i32_1 = arith.constant 0 : i32
    return %c0_i32, %c0_i32_0 : i32, i32
  }
  func.func @transform_3(%arg0: i32) -> (i32, i32) {
    %c0_i32 = arith.constant 0 : i32
    %c0_i32_0 = arith.constant 0 : i32
    return %c0_i32, %arg0 : i32, i32
  }
}

module attributes {stable_mosaic.version = 11 : i64} {
  func.func @_matmul_bias_kernel(%arg0: i32, %arg1: memref<32x400xf32, #tpu.memory_space<vmem>>, %arg2: memref<400x32xf32, #tpu.memory_space<vmem>>, %arg3: memref<32x1xf32, #tpu.memory_space<vmem>>, %arg4: memref<32x32xf32, #tpu.memory_space<vmem>>) attributes {dimension_semantics = [#tpu.dimension_semantics<parallel>], iteration_bounds = array<i64: 1>, scalar_prefetch = 0 : i64, scratch_operands = 0 : i64, tpu.core_type = #tpu.core_type<tc>, window_params = [{pipeline_mode = #tpu.pipeline_mode<synchronous>, transform_indices = @transform_0, window_bounds = array<i64: 32, 400>}, {transform_indices = @transform_1, window_bounds = array<i64: 400, 32>}, {pipeline_mode = #tpu.pipeline_mode<synchronous>, transform_indices = @transform_2, window_bounds = array<i64: 32, 1>}, {transform_indices = @transform_3, window_bounds = array<i64: 32, 32>}]} {
    %c0 = arith.constant 0 : index
    %c0_0 = arith.constant 0 : index
    %0 = vector.load %arg1[%c0, %c0_0] : memref<32x400xf32, #tpu.memory_space<vmem>>, vector<32x400xf32>
    %c0_1 = arith.constant 0 : index
    %c0_2 = arith.constant 0 : index
    %1 = vector.load %arg2[%c0_1, %c0_2] : memref<400x32xf32, #tpu.memory_space<vmem>>, vector<400x32xf32>
    %cst = arith.constant dense<0.000000e+00> : vector<32x32xf32>
    %2 = tpu.matmul %0, %1, %cst {dimension_numbers = #tpu.dot_dimension_numbers<[1], [0], [0], [1], [0, 0, 1, 1], [], []>} : vector<32x400xf32>, vector<400x32xf32>, vector<32x32xf32> -> vector<32x32xf32>
    %c0_3 = arith.constant 0 : index
    %c0_4 = arith.constant 0 : index
    %3 = vector.load %arg3[%c0_3, %c0_4] : memref<32x1xf32, #tpu.memory_space<vmem>>, vector<32x1xf32>
    %4 = vector.broadcast %3 : vector<32x1xf32> to vector<32x32xf32>
    %5 = arith.addf %2, %4 : vector<32x32xf32>
    %cst_5 = arith.constant 0.000000e+00 : f32
    %6 = vector.broadcast %cst_5 : f32 to vector<32x32xf32>
    %7 = arith.maximumf %5, %6 : vector<32x32xf32>
    %c0_6 = arith.constant 0 : index
    %c0_7 = arith.constant 0 : index
    %8 = vector.load %arg4[%c0_6, %c0_7] : memref<32x32xf32, #tpu.memory_space<vmem>>, vector<32x32xf32>
    tpu.vector_store %arg4[%c0_6, %c0_7], %7 {strides = array<i32>} : memref<32x32xf32, #tpu.memory_space<vmem>>, vector<32x32xf32>,
    return
  }
  func.func @transform_0(%arg0: i32) -> (i32, i32) {
    %c0_i32 = arith.constant 0 : i32
    %c0_i32_0 = arith.constant 0 : i32
    %c0_i32_1 = arith.constant 0 : i32
    return %c0_i32, %c0_i32_0 : i32, i32
  }
  func.func @transform_1(%arg0: i32) -> (i32, i32) {
    %c0_i32 = arith.constant 0 : i32
    %c0_i32_0 = arith.constant 0 : i32
    return %c0_i32, %arg0 : i32, i32
  }
  func.func @transform_2(%arg0: i32) -> (i32, i32) {
    %c0_i32 = arith.constant 0 : i32
    %c0_i32_0 = arith.constant 0 : i32
    %c0_i32_1 = arith.constant 0 : i32
    return %c0_i32, %c0_i32_0 : i32, i32
  }
  func.func @transform_3(%arg0: i32) -> (i32, i32) {
    %c0_i32 = arith.constant 0 : i32
    %c0_i32_0 = arith.constant 0 : i32
    return %c0_i32, %arg0 : i32, i32
  }
}

module attributes {stable_mosaic.version = 11 : i64} {
  func.func @_matmul_bias_kernel(%arg0: i32, %arg1: memref<32x288xf32, #tpu.memory_space<vmem>>, %arg2: memref<288x32xf32, #tpu.memory_space<vmem>>, %arg3: memref<32x1xf32, #tpu.memory_space<vmem>>, %arg4: memref<32x32xf32, #tpu.memory_space<vmem>>) attributes {dimension_semantics = [#tpu.dimension_semantics<parallel>], iteration_bounds = array<i64: 1>, scalar_prefetch = 0 : i64, scratch_operands = 0 : i64, tpu.core_type = #tpu.core_type<tc>, window_params = [{pipeline_mode = #tpu.pipeline_mode<synchronous>, transform_indices = @transform_0, window_bounds = array<i64: 32, 288>}, {transform_indices = @transform_1, window_bounds = array<i64: 288, 32>}, {pipeline_mode = #tpu.pipeline_mode<synchronous>, transform_indices = @transform_2, window_bounds = array<i64: 32, 1>}, {transform_indices = @transform_3, window_bounds = array<i64: 32, 32>}]} {
    %c0 = arith.constant 0 : index
    %c0_0 = arith.constant 0 : index
    %0 = vector.load %arg1[%c0, %c0_0] : memref<32x288xf32, #tpu.memory_space<vmem>>, vector<32x288xf32>
    %c0_1 = arith.constant 0 : index
    %c0_2 = arith.constant 0 : index
    %1 = vector.load %arg2[%c0_1, %c0_2] : memref<288x32xf32, #tpu.memory_space<vmem>>, vector<288x32xf32>
    %cst = arith.constant dense<0.000000e+00> : vector<32x32xf32>
    %2 = tpu.matmul %0, %1, %cst {dimension_numbers = #tpu.dot_dimension_numbers<[1], [0], [0], [1], [0, 0, 1, 1], [], []>} : vector<32x288xf32>, vector<288x32xf32>, vector<32x32xf32> -> vector<32x32xf32>
    %c0_3 = arith.constant 0 : index
    %c0_4 = arith.constant 0 : index
    %3 = vector.load %arg3[%c0_3, %c0_4] : memref<32x1xf32, #tpu.memory_space<vmem>>, vector<32x1xf32>
    %4 = vector.broadcast %3 : vector<32x1xf32> to vector<32x32xf32>
    %5 = arith.addf %2, %4 : vector<32x32xf32>
    %cst_5 = arith.constant 0.000000e+00 : f32
    %6 = vector.broadcast %cst_5 : f32 to vector<32x32xf32>
    %7 = arith.maximumf %5, %6 : vector<32x32xf32>
    %c0_6 = arith.constant 0 : index
    %c0_7 = arith.constant 0 : index
    %8 = vector.load %arg4[%c0_6, %c0_7] : memref<32x32xf32, #tpu.memory_space<vmem>>, vector<32x32xf32>
    tpu.vector_store %arg4[%c0_6, %c0_7], %7 {strides = array<i32>} : memref<32x32xf32, #tpu.memory_space<vmem>>, vector<32x32xf32>,
    return
  }
  func.func @transform_0(%arg0: i32) -> (i32, i32) {
    %c0_i32 = arith.constant 0 : i32
    %c0_i32_0 = arith.constant 0 : i32
    %c0_i32_1 = arith.constant 0 : i32
    return %c0_i32, %c0_i32_0 : i32, i32
  }
  func.func @transform_1(%arg0: i32) -> (i32, i32) {
    %c0_i32 = arith.constant 0 : i32
    %c0_i32_0 = arith.constant 0 : i32
    return %c0_i32, %arg0 : i32, i32
  }
  func.func @transform_2(%arg0: i32) -> (i32, i32) {
    %c0_i32 = arith.constant 0 : i32
    %c0_i32_0 = arith.constant 0 : i32
    %c0_i32_1 = arith.constant 0 : i32
    return %c0_i32, %c0_i32_0 : i32, i32
  }
  func.func @transform_3(%arg0: i32) -> (i32, i32) {
    %c0_i32 = arith.constant 0 : i32
    %c0_i32_0 = arith.constant 0 : i32
    return %c0_i32, %arg0 : i32, i32
  }
}

module attributes {stable_mosaic.version = 11 : i64} {
  func.func @_matmul_bias_kernel(%arg0: i32, %arg1: memref<64x800xf32, #tpu.memory_space<vmem>>, %arg2: memref<800x8xf32, #tpu.memory_space<vmem>>, %arg3: memref<64x1xf32, #tpu.memory_space<vmem>>, %arg4: memref<64x8xf32, #tpu.memory_space<vmem>>) attributes {dimension_semantics = [#tpu.dimension_semantics<parallel>], iteration_bounds = array<i64: 1>, scalar_prefetch = 0 : i64, scratch_operands = 0 : i64, tpu.core_type = #tpu.core_type<tc>, window_params = [{pipeline_mode = #tpu.pipeline_mode<synchronous>, transform_indices = @transform_0, window_bounds = array<i64: 64, 800>}, {transform_indices = @transform_1, window_bounds = array<i64: 800, 8>}, {pipeline_mode = #tpu.pipeline_mode<synchronous>, transform_indices = @transform_2, window_bounds = array<i64: 64, 1>}, {transform_indices = @transform_3, window_bounds = array<i64: 64, 8>}]} {
    %c0 = arith.constant 0 : index
    %c0_0 = arith.constant 0 : index
    %0 = vector.load %arg1[%c0, %c0_0] : memref<64x800xf32, #tpu.memory_space<vmem>>, vector<64x800xf32>
    %c0_1 = arith.constant 0 : index
    %c0_2 = arith.constant 0 : index
    %1 = vector.load %arg2[%c0_1, %c0_2] : memref<800x8xf32, #tpu.memory_space<vmem>>, vector<800x8xf32>
    %cst = arith.constant dense<0.000000e+00> : vector<64x8xf32>
    %2 = tpu.matmul %0, %1, %cst {dimension_numbers = #tpu.dot_dimension_numbers<[1], [0], [0], [1], [0, 0, 1, 1], [], []>} : vector<64x800xf32>, vector<800x8xf32>, vector<64x8xf32> -> vector<64x8xf32>
    %c0_3 = arith.constant 0 : index
    %c0_4 = arith.constant 0 : index
    %3 = vector.load %arg3[%c0_3, %c0_4] : memref<64x1xf32, #tpu.memory_space<vmem>>, vector<64x1xf32>
    %4 = vector.broadcast %3 : vector<64x1xf32> to vector<64x8xf32>
    %5 = arith.addf %2, %4 : vector<64x8xf32>
    %cst_5 = arith.constant 0.000000e+00 : f32
    %6 = vector.broadcast %cst_5 : f32 to vector<64x8xf32>
    %7 = arith.maximumf %5, %6 : vector<64x8xf32>
    %c0_6 = arith.constant 0 : index
    %c0_7 = arith.constant 0 : index
    %8 = vector.load %arg4[%c0_6, %c0_7] : memref<64x8xf32, #tpu.memory_space<vmem>>, vector<64x8xf32>
    tpu.vector_store %arg4[%c0_6, %c0_7], %7 {strides = array<i32>} : memref<64x8xf32, #tpu.memory_space<vmem>>, vector<64x8xf32>,
    return
  }
  func.func @transform_0(%arg0: i32) -> (i32, i32) {
    %c0_i32 = arith.constant 0 : i32
    %c0_i32_0 = arith.constant 0 : i32
    %c0_i32_1 = arith.constant 0 : i32
    return %c0_i32, %c0_i32_0 : i32, i32
  }
  func.func @transform_1(%arg0: i32) -> (i32, i32) {
    %c0_i32 = arith.constant 0 : i32
    %c0_i32_0 = arith.constant 0 : i32
    return %c0_i32, %arg0 : i32, i32
  }
  func.func @transform_2(%arg0: i32) -> (i32, i32) {
    %c0_i32 = arith.constant 0 : i32
    %c0_i32_0 = arith.constant 0 : i32
    %c0_i32_1 = arith.constant 0 : i32
    return %c0_i32, %c0_i32_0 : i32, i32
  }
  func.func @transform_3(%arg0: i32) -> (i32, i32) {
    %c0_i32 = arith.constant 0 : i32
    %c0_i32_0 = arith.constant 0 : i32
    return %c0_i32, %arg0 : i32, i32
  }
}

module attributes {stable_mosaic.version = 11 : i64} {
  func.func @_matmul_bias_kernel(%arg0: i32, %arg1: memref<64x576xf32, #tpu.memory_space<vmem>>, %arg2: memref<576x8xf32, #tpu.memory_space<vmem>>, %arg3: memref<64x1xf32, #tpu.memory_space<vmem>>, %arg4: memref<64x8xf32, #tpu.memory_space<vmem>>) attributes {dimension_semantics = [#tpu.dimension_semantics<parallel>], iteration_bounds = array<i64: 1>, scalar_prefetch = 0 : i64, scratch_operands = 0 : i64, tpu.core_type = #tpu.core_type<tc>, window_params = [{pipeline_mode = #tpu.pipeline_mode<synchronous>, transform_indices = @transform_0, window_bounds = array<i64: 64, 576>}, {transform_indices = @transform_1, window_bounds = array<i64: 576, 8>}, {pipeline_mode = #tpu.pipeline_mode<synchronous>, transform_indices = @transform_2, window_bounds = array<i64: 64, 1>}, {transform_indices = @transform_3, window_bounds = array<i64: 64, 8>}]} {
    %c0 = arith.constant 0 : index
    %c0_0 = arith.constant 0 : index
    %0 = vector.load %arg1[%c0, %c0_0] : memref<64x576xf32, #tpu.memory_space<vmem>>, vector<64x576xf32>
    %c0_1 = arith.constant 0 : index
    %c0_2 = arith.constant 0 : index
    %1 = vector.load %arg2[%c0_1, %c0_2] : memref<576x8xf32, #tpu.memory_space<vmem>>, vector<576x8xf32>
    %cst = arith.constant dense<0.000000e+00> : vector<64x8xf32>
    %2 = tpu.matmul %0, %1, %cst {dimension_numbers = #tpu.dot_dimension_numbers<[1], [0], [0], [1], [0, 0, 1, 1], [], []>} : vector<64x576xf32>, vector<576x8xf32>, vector<64x8xf32> -> vector<64x8xf32>
    %c0_3 = arith.constant 0 : index
    %c0_4 = arith.constant 0 : index
    %3 = vector.load %arg3[%c0_3, %c0_4] : memref<64x1xf32, #tpu.memory_space<vmem>>, vector<64x1xf32>
    %4 = vector.broadcast %3 : vector<64x1xf32> to vector<64x8xf32>
    %5 = arith.addf %2, %4 : vector<64x8xf32>
    %cst_5 = arith.constant 0.000000e+00 : f32
    %6 = vector.broadcast %cst_5 : f32 to vector<64x8xf32>
    %7 = arith.maximumf %5, %6 : vector<64x8xf32>
    %c0_6 = arith.constant 0 : index
    %c0_7 = arith.constant 0 : index
    %8 = vector.load %arg4[%c0_6, %c0_7] : memref<64x8xf32, #tpu.memory_space<vmem>>, vector<64x8xf32>
    tpu.vector_store %arg4[%c0_6, %c0_7], %7 {strides = array<i32>} : memref<64x8xf32, #tpu.memory_space<vmem>>, vector<64x8xf32>,
    return
  }
  func.func @transform_0(%arg0: i32) -> (i32, i32) {
    %c0_i32 = arith.constant 0 : i32
    %c0_i32_0 = arith.constant 0 : i32
    %c0_i32_1 = arith.constant 0 : i32
    return %c0_i32, %c0_i32_0 : i32, i32
  }
  func.func @transform_1(%arg0: i32) -> (i32, i32) {
    %c0_i32 = arith.constant 0 : i32
    %c0_i32_0 = arith.constant 0 : i32
    return %c0_i32, %arg0 : i32, i32
  }
  func.func @transform_2(%arg0: i32) -> (i32, i32) {
    %c0_i32 = arith.constant 0 : i32
    %c0_i32_0 = arith.constant 0 : i32
    %c0_i32_1 = arith.constant 0 : i32
    return %c0_i32, %c0_i32_0 : i32, i32
  }
  func.func @transform_3(%arg0: i32) -> (i32, i32) {
    %c0_i32 = arith.constant 0 : i32
    %c0_i32_0 = arith.constant 0 : i32
    return %c0_i32, %arg0 : i32, i32
  }
}

module attributes {stable_mosaic.version = 11 : i64} {
  func.func @_matmul_bias_kernel(%arg0: i32, %arg1: memref<64x64xf32, #tpu.memory_space<vmem>>, %arg2: memref<64x8xf32, #tpu.memory_space<vmem>>, %arg3: memref<64x1xf32, #tpu.memory_space<vmem>>, %arg4: memref<64x8xf32, #tpu.memory_space<vmem>>) attributes {dimension_semantics = [#tpu.dimension_semantics<parallel>], iteration_bounds = array<i64: 1>, scalar_prefetch = 0 : i64, scratch_operands = 0 : i64, tpu.core_type = #tpu.core_type<tc>, window_params = [{pipeline_mode = #tpu.pipeline_mode<synchronous>, transform_indices = @transform_0, window_bounds = array<i64: 64, 64>}, {transform_indices = @transform_1, window_bounds = array<i64: 64, 8>}, {pipeline_mode = #tpu.pipeline_mode<synchronous>, transform_indices = @transform_2, window_bounds = array<i64: 64, 1>}, {transform_indices = @transform_3, window_bounds = array<i64: 64, 8>}]} {
    %c0 = arith.constant 0 : index
    %c0_0 = arith.constant 0 : index
    %0 = vector.load %arg1[%c0, %c0_0] : memref<64x64xf32, #tpu.memory_space<vmem>>, vector<64x64xf32>
    %c0_1 = arith.constant 0 : index
    %c0_2 = arith.constant 0 : index
    %1 = vector.load %arg2[%c0_1, %c0_2] : memref<64x8xf32, #tpu.memory_space<vmem>>, vector<64x8xf32>
    %cst = arith.constant dense<0.000000e+00> : vector<64x8xf32>
    %2 = tpu.matmul %0, %1, %cst {dimension_numbers = #tpu.dot_dimension_numbers<[1], [0], [0], [1], [0, 0, 1, 1], [], []>} : vector<64x64xf32>, vector<64x8xf32>, vector<64x8xf32> -> vector<64x8xf32>
    %c0_3 = arith.constant 0 : index
    %c0_4 = arith.constant 0 : index
    %3 = vector.load %arg3[%c0_3, %c0_4] : memref<64x1xf32, #tpu.memory_space<vmem>>, vector<64x1xf32>
    %4 = vector.broadcast %3 : vector<64x1xf32> to vector<64x8xf32>
    %5 = arith.addf %2, %4 : vector<64x8xf32>
    %c0_5 = arith.constant 0 : index
    %c0_6 = arith.constant 0 : index
    %6 = vector.load %arg4[%c0_5, %c0_6] : memref<64x8xf32, #tpu.memory_space<vmem>>, vector<64x8xf32>
    tpu.vector_store %arg4[%c0_5, %c0_6], %5 {strides = array<i32>} : memref<64x8xf32, #tpu.memory_space<vmem>>, vector<64x8xf32>,
    return
  }
  func.func @transform_0(%arg0: i32) -> (i32, i32) {
    %c0_i32 = arith.constant 0 : i32
    %c0_i32_0 = arith.constant 0 : i32
    %c0_i32_1 = arith.constant 0 : i32
    return %c0_i32, %c0_i32_0 : i32, i32
  }
  func.func @transform_1(%arg0: i32) -> (i32, i32) {
    %c0_i32 = arith.constant 0 : i32
    %c0_i32_0 = arith.constant 0 : i32
    return %c0_i32, %arg0 : i32, i32
  }
  func.func @transform_2(%arg0: i32) -> (i32, i32) {
    %c0_i32 = arith.constant 0 : i32
    %c0_i32_0 = arith.constant 0 : i32
    %c0_i32_1 = arith.constant 0 : i32
    return %c0_i32, %c0_i32_0 : i32, i32
  }
  func.func @transform_3(%arg0: i32) -> (i32, i32) {
    %c0_i32 = arith.constant 0 : i32
    %c0_i32_0 = arith.constant 0 : i32
    return %c0_i32, %arg0 : i32, i32
  }
}

module attributes {stable_mosaic.version = 11 : i64} {
  func.func @_matmul_bias_res_kernel(%arg0: i32, %arg1: memref<64x32xf32, #tpu.memory_space<vmem>>, %arg2: memref<32x32xf32, #tpu.memory_space<vmem>>, %arg3: memref<64x1xf32, #tpu.memory_space<vmem>>, %arg4: memref<64x32xf32, #tpu.memory_space<vmem>>, %arg5: memref<64x32xf32, #tpu.memory_space<vmem>>) attributes {dimension_semantics = [#tpu.dimension_semantics<parallel>], iteration_bounds = array<i64: 1>, scalar_prefetch = 0 : i64, scratch_operands = 0 : i64, tpu.core_type = #tpu.core_type<tc>, window_params = [{pipeline_mode = #tpu.pipeline_mode<synchronous>, transform_indices = @transform_0, window_bounds = array<i64: 64, 32>}, {transform_indices = @transform_1, window_bounds = array<i64: 32, 32>}, {pipeline_mode = #tpu.pipeline_mode<synchronous>, transform_indices = @transform_2, window_bounds = array<i64: 64, 1>}, {transform_indices = @transform_3, window_bounds = array<i64: 64, 32>}, {transform_indices = @transform_4, window_bounds = array<i64: 64, 32>}]} {
    %c0 = arith.constant 0 : index
    %c0_0 = arith.constant 0 : index
    %0 = vector.load %arg1[%c0, %c0_0] : memref<64x32xf32, #tpu.memory_space<vmem>>, vector<64x32xf32>
    %c0_1 = arith.constant 0 : index
    %c0_2 = arith.constant 0 : index
    %1 = vector.load %arg2[%c0_1, %c0_2] : memref<32x32xf32, #tpu.memory_space<vmem>>, vector<32x32xf32>
    %cst = arith.constant dense<0.000000e+00> : vector<64x32xf32>
    %2 = tpu.matmul %0, %1, %cst {dimension_numbers = #tpu.dot_dimension_numbers<[1], [0], [0], [1], [0, 0, 1, 1], [], []>} : vector<64x32xf32>, vector<32x32xf32>, vector<64x32xf32> -> vector<64x32xf32>
    %c0_3 = arith.constant 0 : index
    %c0_4 = arith.constant 0 : index
    %3 = vector.load %arg3[%c0_3, %c0_4] : memref<64x1xf32, #tpu.memory_space<vmem>>, vector<64x1xf32>
    %4 = vector.broadcast %3 : vector<64x1xf32> to vector<64x32xf32>
    %5 = arith.addf %2, %4 : vector<64x32xf32>
    %c0_5 = arith.constant 0 : index
    %c0_6 = arith.constant 0 : index
    %6 = vector.load %arg4[%c0_5, %c0_6] : memref<64x32xf32, #tpu.memory_space<vmem>>, vector<64x32xf32>
    %7 = arith.addf %5, %6 : vector<64x32xf32>
    %c0_7 = arith.constant 0 : index
    %c0_8 = arith.constant 0 : index
    %8 = vector.load %arg5[%c0_7, %c0_8] : memref<64x32xf32, #tpu.memory_space<vmem>>, vector<64x32xf32>
    tpu.vector_store %arg5[%c0_7, %c0_8], %7 {strides = array<i32>} : memref<64x32xf32, #tpu.memory_space<vmem>>, vector<64x32xf32>,
    return
  }
  func.func @transform_0(%arg0: i32) -> (i32, i32) {
    %c0_i32 = arith.constant 0 : i32
    %c0_i32_0 = arith.constant 0 : i32
    %c0_i32_1 = arith.constant 0 : i32
    return %c0_i32, %c0_i32_0 : i32, i32
  }
  func.func @transform_1(%arg0: i32) -> (i32, i32) {
    %c0_i32 = arith.constant 0 : i32
    %c0_i32_0 = arith.constant 0 : i32
    return %c0_i32, %arg0 : i32, i32
  }
  func.func @transform_2(%arg0: i32) -> (i32, i32) {
    %c0_i32 = arith.constant 0 : i32
    %c0_i32_0 = arith.constant 0 : i32
    %c0_i32_1 = arith.constant 0 : i32
    return %c0_i32, %c0_i32_0 : i32, i32
  }
  func.func @transform_3(%arg0: i32) -> (i32, i32) {
    %c0_i32 = arith.constant 0 : i32
    %c0_i32_0 = arith.constant 0 : i32
    return %c0_i32, %arg0 : i32, i32
  }
  func.func @transform_4(%arg0: i32) -> (i32, i32) {
    %c0_i32 = arith.constant 0 : i32
    %c0_i32_0 = arith.constant 0 : i32
    return %c0_i32, %arg0 : i32, i32
  }
}

module attributes {stable_mosaic.version = 11 : i64} {
  func.func @_matmul_bias_res_kernel(%arg0: i32, %arg1: memref<64x16xf32, #tpu.memory_space<vmem>>, %arg2: memref<16x128xf32, #tpu.memory_space<vmem>>, %arg3: memref<64x1xf32, #tpu.memory_space<vmem>>, %arg4: memref<64x128xf32, #tpu.memory_space<vmem>>, %arg5: memref<64x128xf32, #tpu.memory_space<vmem>>) attributes {dimension_semantics = [#tpu.dimension_semantics<parallel>], iteration_bounds = array<i64: 1>, scalar_prefetch = 0 : i64, scratch_operands = 0 : i64, tpu.core_type = #tpu.core_type<tc>, window_params = [{pipeline_mode = #tpu.pipeline_mode<synchronous>, transform_indices = @transform_0, window_bounds = array<i64: 64, 16>}, {transform_indices = @transform_1, window_bounds = array<i64: 16, 128>}, {pipeline_mode = #tpu.pipeline_mode<synchronous>, transform_indices = @transform_2, window_bounds = array<i64: 64, 1>}, {transform_indices = @transform_3, window_bounds = array<i64: 64, 128>}, {transform_indices = @transform_4, window_bounds = array<i64: 64, 128>}]} {
    %c0 = arith.constant 0 : index
    %c0_0 = arith.constant 0 : index
    %0 = vector.load %arg1[%c0, %c0_0] : memref<64x16xf32, #tpu.memory_space<vmem>>, vector<64x16xf32>
    %c0_1 = arith.constant 0 : index
    %c0_2 = arith.constant 0 : index
    %1 = vector.load %arg2[%c0_1, %c0_2] : memref<16x128xf32, #tpu.memory_space<vmem>>, vector<16x128xf32>
    %cst = arith.constant dense<0.000000e+00> : vector<64x128xf32>
    %2 = tpu.matmul %0, %1, %cst {dimension_numbers = #tpu.dot_dimension_numbers<[1], [0], [0], [1], [0, 0, 1, 1], [], []>} : vector<64x16xf32>, vector<16x128xf32>, vector<64x128xf32> -> vector<64x128xf32>
    %c0_3 = arith.constant 0 : index
    %c0_4 = arith.constant 0 : index
    %3 = vector.load %arg3[%c0_3, %c0_4] : memref<64x1xf32, #tpu.memory_space<vmem>>, vector<64x1xf32>
    %4 = vector.broadcast %3 : vector<64x1xf32> to vector<64x128xf32>
    %5 = arith.addf %2, %4 : vector<64x128xf32>
    %c0_5 = arith.constant 0 : index
    %c0_6 = arith.constant 0 : index
    %6 = vector.load %arg4[%c0_5, %c0_6] : memref<64x128xf32, #tpu.memory_space<vmem>>, vector<64x128xf32>
    %7 = arith.addf %5, %6 : vector<64x128xf32>
    %c0_7 = arith.constant 0 : index
    %c0_8 = arith.constant 0 : index
    %8 = vector.load %arg5[%c0_7, %c0_8] : memref<64x128xf32, #tpu.memory_space<vmem>>, vector<64x128xf32>
    tpu.vector_store %arg5[%c0_7, %c0_8], %7 {strides = array<i32>} : memref<64x128xf32, #tpu.memory_space<vmem>>, vector<64x128xf32>,
    return
  }
  func.func @transform_0(%arg0: i32) -> (i32, i32) {
    %c0_i32 = arith.constant 0 : i32
    %c0_i32_0 = arith.constant 0 : i32
    %c0_i32_1 = arith.constant 0 : i32
    return %c0_i32, %c0_i32_0 : i32, i32
  }
  func.func @transform_1(%arg0: i32) -> (i32, i32) {
    %c0_i32 = arith.constant 0 : i32
    %c0_i32_0 = arith.constant 0 : i32
    return %c0_i32, %arg0 : i32, i32
  }
  func.func @transform_2(%arg0: i32) -> (i32, i32) {
    %c0_i32 = arith.constant 0 : i32
    %c0_i32_0 = arith.constant 0 : i32
    %c0_i32_1 = arith.constant 0 : i32
    return %c0_i32, %c0_i32_0 : i32, i32
  }
  func.func @transform_3(%arg0: i32) -> (i32, i32) {
    %c0_i32 = arith.constant 0 : i32
    %c0_i32_0 = arith.constant 0 : i32
    return %c0_i32, %arg0 : i32, i32
  }
  func.func @transform_4(%arg0: i32) -> (i32, i32) {
    %c0_i32 = arith.constant 0 : i32
    %c0_i32_0 = arith.constant 0 : i32
    return %c0_i32, %arg0 : i32, i32
  }
}

module attributes {stable_mosaic.version = 11 : i64} {
  func.func @_matmul_bias_res_kernel(%arg0: i32, %arg1: memref<64x8xf32, #tpu.memory_space<vmem>>, %arg2: memref<8x256xf32, #tpu.memory_space<vmem>>, %arg3: memref<64x1xf32, #tpu.memory_space<vmem>>, %arg4: memref<64x256xf32, #tpu.memory_space<vmem>>, %arg5: memref<64x256xf32, #tpu.memory_space<vmem>>) attributes {dimension_semantics = [#tpu.dimension_semantics<parallel>], iteration_bounds = array<i64: 2>, scalar_prefetch = 0 : i64, scratch_operands = 0 : i64, tpu.core_type = #tpu.core_type<tc>, window_params = [{pipeline_mode = #tpu.pipeline_mode<synchronous>, transform_indices = @transform_0, window_bounds = array<i64: 64, 8>}, {transform_indices = @transform_1, window_bounds = array<i64: 8, 256>}, {pipeline_mode = #tpu.pipeline_mode<synchronous>, transform_indices = @transform_2, window_bounds = array<i64: 64, 1>}, {transform_indices = @transform_3, window_bounds = array<i64: 64, 256>}, {transform_indices = @transform_4, window_bounds = array<i64: 64, 256>}]} {
    %c0 = arith.constant 0 : index
    %c0_0 = arith.constant 0 : index
    %0 = vector.load %arg1[%c0, %c0_0] : memref<64x8xf32, #tpu.memory_space<vmem>>, vector<64x8xf32>
    %c0_1 = arith.constant 0 : index
    %c0_2 = arith.constant 0 : index
    %1 = vector.load %arg2[%c0_1, %c0_2] : memref<8x256xf32, #tpu.memory_space<vmem>>, vector<8x256xf32>
    %cst = arith.constant dense<0.000000e+00> : vector<64x256xf32>
    %2 = tpu.matmul %0, %1, %cst {dimension_numbers = #tpu.dot_dimension_numbers<[1], [0], [0], [1], [0, 0, 1, 1], [], []>} : vector<64x8xf32>, vector<8x256xf32>, vector<64x256xf32> -> vector<64x256xf32>
    %c0_3 = arith.constant 0 : index
    %c0_4 = arith.constant 0 : index
    %3 = vector.load %arg3[%c0_3, %c0_4] : memref<64x1xf32, #tpu.memory_space<vmem>>, vector<64x1xf32>
    %4 = vector.broadcast %3 : vector<64x1xf32> to vector<64x256xf32>
    %5 = arith.addf %2, %4 : vector<64x256xf32>
    %c0_5 = arith.constant 0 : index
    %c0_6 = arith.constant 0 : index
    %6 = vector.load %arg4[%c0_5, %c0_6] : memref<64x256xf32, #tpu.memory_space<vmem>>, vector<64x256xf32>
    %7 = arith.addf %5, %6 : vector<64x256xf32>
    %c0_7 = arith.constant 0 : index
    %c0_8 = arith.constant 0 : index
    %8 = vector.load %arg5[%c0_7, %c0_8] : memref<64x256xf32, #tpu.memory_space<vmem>>, vector<64x256xf32>
    tpu.vector_store %arg5[%c0_7, %c0_8], %7 {strides = array<i32>} : memref<64x256xf32, #tpu.memory_space<vmem>>, vector<64x256xf32>,
    return
  }
  func.func @transform_0(%arg0: i32) -> (i32, i32) {
    %c0_i32 = arith.constant 0 : i32
    %c0_i32_0 = arith.constant 0 : i32
    %c0_i32_1 = arith.constant 0 : i32
    return %c0_i32, %c0_i32_0 : i32, i32
  }
  func.func @transform_1(%arg0: i32) -> (i32, i32) {
    %c0_i32 = arith.constant 0 : i32
    %c0_i32_0 = arith.constant 0 : i32
    return %c0_i32, %arg0 : i32, i32
  }
  func.func @transform_2(%arg0: i32) -> (i32, i32) {
    %c0_i32 = arith.constant 0 : i32
    %c0_i32_0 = arith.constant 0 : i32
    %c0_i32_1 = arith.constant 0 : i32
    return %c0_i32, %c0_i32_0 : i32, i32
  }
  func.func @transform_3(%arg0: i32) -> (i32, i32) {
    %c0_i32 = arith.constant 0 : i32
    %c0_i32_0 = arith.constant 0 : i32
    return %c0_i32, %arg0 : i32, i32
  }
  func.func @transform_4(%arg0: i32) -> (i32, i32) {
    %c0_i32 = arith.constant 0 : i32
    %c0_i32_0 = arith.constant 0 : i32
    return %c0_i32, %arg0 : i32, i32
  }
}

module attributes {stable_mosaic.version = 11 : i64} {
  func.func @_matmul_bias_kernel(%arg0: i32, %arg1: memref<32x576xf32, #tpu.memory_space<vmem>>, %arg2: memref<576x32xf32, #tpu.memory_space<vmem>>, %arg3: memref<32x1xf32, #tpu.memory_space<vmem>>, %arg4: memref<32x32xf32, #tpu.memory_space<vmem>>) attributes {dimension_semantics = [#tpu.dimension_semantics<parallel>], iteration_bounds = array<i64: 1>, scalar_prefetch = 0 : i64, scratch_operands = 0 : i64, tpu.core_type = #tpu.core_type<tc>, window_params = [{pipeline_mode = #tpu.pipeline_mode<synchronous>, transform_indices = @transform_0, window_bounds = array<i64: 32, 576>}, {transform_indices = @transform_1, window_bounds = array<i64: 576, 32>}, {pipeline_mode = #tpu.pipeline_mode<synchronous>, transform_indices = @transform_2, window_bounds = array<i64: 32, 1>}, {transform_indices = @transform_3, window_bounds = array<i64: 32, 32>}]} {
    %c0 = arith.constant 0 : index
    %c0_0 = arith.constant 0 : index
    %0 = vector.load %arg1[%c0, %c0_0] : memref<32x576xf32, #tpu.memory_space<vmem>>, vector<32x576xf32>
    %c0_1 = arith.constant 0 : index
    %c0_2 = arith.constant 0 : index
    %1 = vector.load %arg2[%c0_1, %c0_2] : memref<576x32xf32, #tpu.memory_space<vmem>>, vector<576x32xf32>
    %cst = arith.constant dense<0.000000e+00> : vector<32x32xf32>
    %2 = tpu.matmul %0, %1, %cst {dimension_numbers = #tpu.dot_dimension_numbers<[1], [0], [0], [1], [0, 0, 1, 1], [], []>} : vector<32x576xf32>, vector<576x32xf32>, vector<32x32xf32> -> vector<32x32xf32>
    %c0_3 = arith.constant 0 : index
    %c0_4 = arith.constant 0 : index
    %3 = vector.load %arg3[%c0_3, %c0_4] : memref<32x1xf32, #tpu.memory_space<vmem>>, vector<32x1xf32>
    %4 = vector.broadcast %3 : vector<32x1xf32> to vector<32x32xf32>
    %5 = arith.addf %2, %4 : vector<32x32xf32>
    %c0_5 = arith.constant 0 : index
    %c0_6 = arith.constant 0 : index
    %6 = vector.load %arg4[%c0_5, %c0_6] : memref<32x32xf32, #tpu.memory_space<vmem>>, vector<32x32xf32>
    tpu.vector_store %arg4[%c0_5, %c0_6], %5 {strides = array<i32>} : memref<32x32xf32, #tpu.memory_space<vmem>>, vector<32x32xf32>,
    return
  }
  func.func @transform_0(%arg0: i32) -> (i32, i32) {
    %c0_i32 = arith.constant 0 : i32
    %c0_i32_0 = arith.constant 0 : i32
    %c0_i32_1 = arith.constant 0 : i32
    return %c0_i32, %c0_i32_0 : i32, i32
  }
  func.func @transform_1(%arg0: i32) -> (i32, i32) {
    %c0_i32 = arith.constant 0 : i32
    %c0_i32_0 = arith.constant 0 : i32
    return %c0_i32, %arg0 : i32, i32
  }
  func.func @transform_2(%arg0: i32) -> (i32, i32) {
    %c0_i32 = arith.constant 0 : i32
    %c0_i32_0 = arith.constant 0 : i32
    %c0_i32_1 = arith.constant 0 : i32
    return %c0_i32, %c0_i32_0 : i32, i32
  }
  func.func @transform_3(%arg0: i32) -> (i32, i32) {
    %c0_i32 = arith.constant 0 : i32
    %c0_i32_0 = arith.constant 0 : i32
    return %c0_i32, %arg0 : i32, i32
  }
}

module attributes {stable_mosaic.version = 11 : i64} {
  func.func @_matmul_bias_kernel(%arg0: i32, %arg1: memref<16x576xf32, #tpu.memory_space<vmem>>, %arg2: memref<576x128xf32, #tpu.memory_space<vmem>>, %arg3: memref<16x1xf32, #tpu.memory_space<vmem>>, %arg4: memref<16x128xf32, #tpu.memory_space<vmem>>) attributes {dimension_semantics = [#tpu.dimension_semantics<parallel>], iteration_bounds = array<i64: 1>, scalar_prefetch = 0 : i64, scratch_operands = 0 : i64, tpu.core_type = #tpu.core_type<tc>, window_params = [{pipeline_mode = #tpu.pipeline_mode<synchronous>, transform_indices = @transform_0, window_bounds = array<i64: 16, 576>}, {transform_indices = @transform_1, window_bounds = array<i64: 576, 128>}, {pipeline_mode = #tpu.pipeline_mode<synchronous>, transform_indices = @transform_2, window_bounds = array<i64: 16, 1>}, {transform_indices = @transform_3, window_bounds = array<i64: 16, 128>}]} {
    %c0 = arith.constant 0 : index
    %c0_0 = arith.constant 0 : index
    %0 = vector.load %arg1[%c0, %c0_0] : memref<16x576xf32, #tpu.memory_space<vmem>>, vector<16x576xf32>
    %c0_1 = arith.constant 0 : index
    %c0_2 = arith.constant 0 : index
    %1 = vector.load %arg2[%c0_1, %c0_2] : memref<576x128xf32, #tpu.memory_space<vmem>>, vector<576x128xf32>
    %cst = arith.constant dense<0.000000e+00> : vector<16x128xf32>
    %2 = tpu.matmul %0, %1, %cst {dimension_numbers = #tpu.dot_dimension_numbers<[1], [0], [0], [1], [0, 0, 1, 1], [], []>} : vector<16x576xf32>, vector<576x128xf32>, vector<16x128xf32> -> vector<16x128xf32>
    %c0_3 = arith.constant 0 : index
    %c0_4 = arith.constant 0 : index
    %3 = vector.load %arg3[%c0_3, %c0_4] : memref<16x1xf32, #tpu.memory_space<vmem>>, vector<16x1xf32>
    %4 = vector.broadcast %3 : vector<16x1xf32> to vector<16x128xf32>
    %5 = arith.addf %2, %4 : vector<16x128xf32>
    %c0_5 = arith.constant 0 : index
    %c0_6 = arith.constant 0 : index
    %6 = vector.load %arg4[%c0_5, %c0_6] : memref<16x128xf32, #tpu.memory_space<vmem>>, vector<16x128xf32>
    tpu.vector_store %arg4[%c0_5, %c0_6], %5 {strides = array<i32>} : memref<16x128xf32, #tpu.memory_space<vmem>>, vector<16x128xf32>,
    return
  }
  func.func @transform_0(%arg0: i32) -> (i32, i32) {
    %c0_i32 = arith.constant 0 : i32
    %c0_i32_0 = arith.constant 0 : i32
    %c0_i32_1 = arith.constant 0 : i32
    return %c0_i32, %c0_i32_0 : i32, i32
  }
  func.func @transform_1(%arg0: i32) -> (i32, i32) {
    %c0_i32 = arith.constant 0 : i32
    %c0_i32_0 = arith.constant 0 : i32
    return %c0_i32, %arg0 : i32, i32
  }
  func.func @transform_2(%arg0: i32) -> (i32, i32) {
    %c0_i32 = arith.constant 0 : i32
    %c0_i32_0 = arith.constant 0 : i32
    %c0_i32_1 = arith.constant 0 : i32
    return %c0_i32, %c0_i32_0 : i32, i32
  }
  func.func @transform_3(%arg0: i32) -> (i32, i32) {
    %c0_i32 = arith.constant 0 : i32
    %c0_i32_0 = arith.constant 0 : i32
    return %c0_i32, %arg0 : i32, i32
  }
}

module attributes {stable_mosaic.version = 11 : i64} {
  func.func @_matmul_bias_kernel(%arg0: i32, %arg1: memref<8x576xf32, #tpu.memory_space<vmem>>, %arg2: memref<576x256xf32, #tpu.memory_space<vmem>>, %arg3: memref<8x1xf32, #tpu.memory_space<vmem>>, %arg4: memref<8x256xf32, #tpu.memory_space<vmem>>) attributes {dimension_semantics = [#tpu.dimension_semantics<parallel>], iteration_bounds = array<i64: 2>, scalar_prefetch = 0 : i64, scratch_operands = 0 : i64, tpu.core_type = #tpu.core_type<tc>, window_params = [{pipeline_mode = #tpu.pipeline_mode<synchronous>, transform_indices = @transform_0, window_bounds = array<i64: 8, 576>}, {transform_indices = @transform_1, window_bounds = array<i64: 576, 256>}, {pipeline_mode = #tpu.pipeline_mode<synchronous>, transform_indices = @transform_2, window_bounds = array<i64: 8, 1>}, {transform_indices = @transform_3, window_bounds = array<i64: 8, 256>}]} {
    %c0 = arith.constant 0 : index
    %c0_0 = arith.constant 0 : index
    %0 = vector.load %arg1[%c0, %c0_0] : memref<8x576xf32, #tpu.memory_space<vmem>>, vector<8x576xf32>
    %c0_1 = arith.constant 0 : index
    %c0_2 = arith.constant 0 : index
    %1 = vector.load %arg2[%c0_1, %c0_2] : memref<576x256xf32, #tpu.memory_space<vmem>>, vector<576x256xf32>
    %cst = arith.constant dense<0.000000e+00> : vector<8x256xf32>
    %2 = tpu.matmul %0, %1, %cst {dimension_numbers = #tpu.dot_dimension_numbers<[1], [0], [0], [1], [0, 0, 1, 1], [], []>} : vector<8x576xf32>, vector<576x256xf32>, vector<8x256xf32> -> vector<8x256xf32>
    %c0_3 = arith.constant 0 : index
    %c0_4 = arith.constant 0 : index
    %3 = vector.load %arg3[%c0_3, %c0_4] : memref<8x1xf32, #tpu.memory_space<vmem>>, vector<8x1xf32>
    %4 = vector.broadcast %3 : vector<8x1xf32> to vector<8x256xf32>
    %5 = arith.addf %2, %4 : vector<8x256xf32>
    %c0_5 = arith.constant 0 : index
    %c0_6 = arith.constant 0 : index
    %6 = vector.load %arg4[%c0_5, %c0_6] : memref<8x256xf32, #tpu.memory_space<vmem>>, vector<8x256xf32>
    tpu.vector_store %arg4[%c0_5, %c0_6], %5 {strides = array<i32>} : memref<8x256xf32, #tpu.memory_space<vmem>>, vector<8x256xf32>,
    return
  }
  func.func @transform_0(%arg0: i32) -> (i32, i32) {
    %c0_i32 = arith.constant 0 : i32
    %c0_i32_0 = arith.constant 0 : i32
    %c0_i32_1 = arith.constant 0 : i32
    return %c0_i32, %c0_i32_0 : i32, i32
  }
  func.func @transform_1(%arg0: i32) -> (i32, i32) {
    %c0_i32 = arith.constant 0 : i32
    %c0_i32_0 = arith.constant 0 : i32
    return %c0_i32, %arg0 : i32, i32
  }
  func.func @transform_2(%arg0: i32) -> (i32, i32) {
    %c0_i32 = arith.constant 0 : i32
    %c0_i32_0 = arith.constant 0 : i32
    %c0_i32_1 = arith.constant 0 : i32
    return %c0_i32, %c0_i32_0 : i32, i32
  }
  func.func @transform_3(%arg0: i32) -> (i32, i32) {
    %c0_i32 = arith.constant 0 : i32
    %c0_i32_0 = arith.constant 0 : i32
    return %c0_i32, %arg0 : i32, i32
  }
}

</mosaic_0001>

<llo_original>
// kernel: feature_ex_forward.18
$region0: #{feature_ex_forward.18}
  #allocation0 [shape = 'u32[]', space=smem, size = 0x4, offset = 0x4, fixed_abs, tag = 'smem constant byte address 0x4 - core index']
  #allocation1 [shape = 'u32[144,128]{1,0:T(1,128)}', space=vmem, size = 0x12000, scoped, tag = 'internal scratch']
  %s0 = inlined_call_operand.vmem [shape: f32[8,32], index: 0, kind: input, shape index: {}]
  %s1 = inlined_call_operand.vmem [shape: f32[32,512], index: 1, kind: input, shape index: {}]
  %s2 = inlined_call_operand.vmem [shape: f32[8,1], index: 2, kind: input, shape index: {}]
  %s3 = inlined_call_operand.vmem [shape: f32[8,512], index: 3, kind: output, shape index: {}]
  %s4 = sld [smem:[#allocation0]]
  $region68: #{feature_ex_forward.18} parent=0
    _
  %s6 = ssub.s32 1, %s4
  %s7 = scalar_select 0, %s6, %s4
  $region1: #{feature_ex_forward.18} parent=0
    #allocation2 [shape = 'u8[65536]{0}', space=vmem, size = 0x10000, scoped, tag = 'input window, operand 1']
    loop: start=0, step=1, limit=4
    $region2: #{feature_ex_forward.18} parent=1 // loop_pre_header
      _
    $region3: #{feature_ex_forward.18} parent=1 // loop_header
      %s9 = sphi 0, %s13
      %p10 = scmp.ge.s32.totalorder %s9, 4
      %s17 = sphi 0, %s17
      %s19 = sphi 0, %s17
      %s20 = sphi 0, %s19
      %s34 = sphi 0, %s20
      %s40 = sphi 0, %s42
      %s43 = sphi 0, %s40
      %s44 = sphi 0, %s43
      %s60 = sphi 0, %s44
      %s64 = sphi 0, %s64
      %s66 = sphi 0, %s64
      %s67 = sphi 0, %s66
      %s81 = sphi 0, %s67
      %s87 = sphi 0, %s89
      %s90 = sphi 0, %s87
      %s91 = sphi 0, %s90
      %s107 = sphi 0, %s91
    $region4: #{feature_ex_forward.18} parent=1 // loop_header_branch
      %12 = sbr.rel (%p10) target = $region8
    $region5: #{feature_ex_forward.18} parent=1 // loop_body
      %s14 = ssub.s32 %s9, 1
      %s15 = ssub.s32 %s9, 2
      %s16 = sadd.s32 %s9, 1
      %s18 = sadd.s32 %s17, 1
      %p21 = scmp.eq.s32.totalorder %s9, 1
      %p22 = scmp.ne.s32.totalorder %s17, %s19
      %p23 = scmp.eq.s32.totalorder %s9, 0
      %p24 = por %p22, %p23
      %p25 = scmp.ne.s32.totalorder %s17, %s19
      %p26 = scmp.eq.s32.totalorder %s14, 1
      %p27 = por %p25, %p26
      %p28 = scmp.ne.s32.totalorder %s19, %s20
      %p29 = scmp.eq.s32.totalorder %s14, 0
      %p30 = por %p28, %p29
      %p31 = scmp.ne.s32.totalorder %s19, %s20
      %p32 = scmp.eq.s32.totalorder %s15, 1
      %p33 = por %p31, %p32
      %p35 = scmp.ne.s32.totalorder %s20, %s34
      %p36 = scmp.eq.s32.totalorder %s15, 0
      %p37 = por %p35, %p36
      %s38 = ssub.s32 %s9, %s16
      %p39 = scmp.eq.s32.totalorder %s38, 0
      %s41 = sadd.s32 %s40, 1
      %s42 = scalar_select %p39, %s40, %s41
      %p45 = pneg %p39
      %p46 = scmp.eq.s32.totalorder %s9, 1
      %p47 = por %p45, %p46
      %p48 = scmp.ne.s32.totalorder %s40, %s43
      %p49 = scmp.eq.s32.totalorder %s9, 0
      %p50 = por %p48, %p49
      %p51 = scmp.ne.s32.totalorder %s40, %s43
      %p52 = scmp.eq.s32.totalorder %s14, 1
      %p53 = por %p51, %p52
      %p54 = scmp.ne.s32.totalorder %s43, %s44
      %p55 = scmp.eq.s32.totalorder %s14, 0
      %p56 = por %p54, %p55
      %p57 = scmp.ne.s32.totalorder %s43, %s44
      %p58 = scmp.eq.s32.totalorder %s15, 1
      %p59 = por %p57, %p58
      %p61 = scmp.ne.s32.totalorder %s44, %s60
      %p62 = scmp.eq.s32.totalorder %s15, 0
      %p63 = por %p61, %p62
      %s65 = sadd.s32 %s64, 1
      %p68 = scmp.eq.s32.totalorder %s9, 1
      %p69 = scmp.ne.s32.totalorder %s64, %s66
      %p70 = scmp.eq.s32.totalorder %s9, 0
      %p71 = por %p69, %p70
      %p72 = scmp.ne.s32.totalorder %s64, %s66
      %p73 = scmp.eq.s32.totalorder %s14, 1
      %p74 = por %p72, %p73
      %p75 = scmp.ne.s32.totalorder %s66, %s67
      %p76 = scmp.eq.s32.totalorder %s14, 0
      %p77 = por %p75, %p76
      %p78 = scmp.ne.s32.totalorder %s66, %s67
      %p79 = scmp.eq.s32.totalorder %s15, 1
      %p80 = por %p78, %p79
      %p82 = scmp.ne.s32.totalorder %s67, %s81
      %p83 = scmp.eq.s32.totalorder %s15, 0
      %p84 = por %p82, %p83
      %s85 = ssub.s32 %s9, %s16
      %p86 = scmp.eq.s32.totalorder %s85, 0
      %s88 = sadd.s32 %s87, 1
      %s89 = scalar_select %p86, %s87, %s88
      %p92 = pneg %p86
      %p93 = scmp.eq.s32.totalorder %s9, 1
      %p94 = por %p92, %p93
      %p95 = scmp.ne.s32.totalorder %s87, %s90
      %p96 = scmp.eq.s32.totalorder %s9, 0
      %p97 = por %p95, %p96
      %p98 = scmp.ne.s32.totalorder %s87, %s90
      %p99 = scmp.eq.s32.totalorder %s14, 1
      %p100 = por %p98, %p99
      %p101 = scmp.ne.s32.totalorder %s90, %s91
      %p102 = scmp.eq.s32.totalorder %s14, 0
      %p103 = por %p101, %p102
      %p104 = scmp.ne.s32.totalorder %s90, %s91
      %p105 = scmp.eq.s32.totalorder %s15, 1
      %p106 = por %p104, %p105
      %p108 = scmp.ne.s32.totalorder %s91, %s107
      %p109 = scmp.eq.s32.totalorder %s15, 0
      %p110 = por %p108, %p109
      %p111 = scmp.le.s32.totalorder 1, %s9
      %p112 = scmp.lt.s32.totalorder %s9, 3
      %p113 = pnand %p111, %p112
      %p114 = pneg %p113
      // Predicated region
      $region9: #{feature_ex_forward.18} parent=5 // pred_check
        _
      $region10: #{feature_ex_forward.18} parent=5 // pred_check_branch
        %116 = sbr.rel (%p113) target = $region12
      $region11: #{feature_ex_forward.18} parent=5 // pred_region
        %s117 = ssub.s32 %s9, 1
        // Predicated region
        $region13: #{feature_ex_forward.18} parent=11 // pred_check
          %p118 = pneg %p30
        $region14: #{feature_ex_forward.18} parent=11 // pred_check_branch
          %120 = sbr.rel (%p118) target = $region16
        $region15: #{feature_ex_forward.18} parent=11 // pred_region
          _
        $region16: #{feature_ex_forward.18} parent=11 // pred_fallthru
          _
        // Predicated region
        $region17: #{feature_ex_forward.18} parent=11 // pred_check
          %p121 = pneg %p77
        $region18: #{feature_ex_forward.18} parent=11 // pred_check_branch
          %123 = sbr.rel (%p121) target = $region20
        $region19: #{feature_ex_forward.18} parent=11 // pred_region
          _
        $region20: #{feature_ex_forward.18} parent=11 // pred_fallthru
          _
      $region12: #{feature_ex_forward.18} parent=5 // pred_fallthru
        _
      %p124 = scmp.lt.s32.totalorder %s9, 2
      // Predicated region
      $region21: #{feature_ex_forward.18} parent=5 // pred_check
        %p125 = pneg %p124
      $region22: #{feature_ex_forward.18} parent=5 // pred_check_branch
        %127 = sbr.rel (%p125) target = $region24
      $region23: #{feature_ex_forward.18} parent=5 // pred_region
        // Predicated region
        $region25: #{feature_ex_forward.18} parent=23 // pred_check
          %p128 = pneg %p50
        $region26: #{feature_ex_forward.18} parent=23 // pred_check_branch
          %130 = sbr.rel (%p128) target = $region28
        $region27: #{feature_ex_forward.18} parent=23 // pred_region
          %s131 = sand.u32 %s40, 1
          %s132 = sand.u32 %s40, 1
          %s133 = smul.addr %s132, 64
          %s134 = scalar_lea.vmem [#allocation2], %s133
          %s135 = smul.u32 2, %s9
          %s136 = smul.addr %s135, 8
          %s137 = scalar_lea.vmem %s1, %s136
          // Predicated region
          $region29: #{feature_ex_forward.18} parent=27 // pred_check
            _
          $region30: #{feature_ex_forward.18} parent=27 // pred_check_branch
            %139 = sbr.rel (0) target = $region32
          $region31: #{feature_ex_forward.18} parent=27 // pred_region
            // Predicated region
            $region33: #{feature_ex_forward.18} parent=31 // pred_check
              _
            $region34: #{feature_ex_forward.18} parent=31 // pred_check_branch
              %141 = sbr.rel (0) target = $region36
            $region35: #{feature_ex_forward.18} parent=31 // pred_region
              loop: start=0, step=1, limit=1
              $region37: #{feature_ex_forward.18} parent=35 // loop_pre_header
                _
              $region38: #{feature_ex_forward.18} parent=35 // loop_header
                %s143 = sphi 0, %s147
                %p144 = scmp.ge.s32.totalorder %s143, 1
                %s148 = sphi %s137, %s137
                %s149 = sphi %s134, %s134
              $region39: #{feature_ex_forward.18} parent=35 // loop_header_branch
                %146 = sbr.rel (%p144) target = $region43
              $region40: #{feature_ex_forward.18} parent=35 // loop_body
                %v150 = vld [vmem:[%s148] sm:$0xff]
                %151 = vst [vmem:[%s149] sm:$0xff] %v150
                %v152 = vld [vmem:[%s148 + $0x8] sm:$0xff]
                %153 = vst [vmem:[%s149 + $0x8] sm:$0xff] %v152
                %v154 = vld [vmem:[%s148 + $0x20] sm:$0xff]
                %155 = vst [vmem:[%s149 + $0x10] sm:$0xff] %v154
                %v156 = vld [vmem:[%s148 + $0x28] sm:$0xff]
                %157 = vst [vmem:[%s149 + $0x18] sm:$0xff] %v156
                %v158 = vld [vmem:[%s148 + $0x40] sm:$0xff]
                %159 = vst [vmem:[%s149 + $0x20] sm:$0xff] %v158
                %v160 = vld [vmem:[%s148 + $0x48] sm:$0xff]
                %161 = vst [vmem:[%s149 + $0x28] sm:$0xff] %v160
                %v162 = vld [vmem:[%s148 + $0x60] sm:$0xff]
                %163 = vst [vmem:[%s149 + $0x30] sm:$0xff] %v162
                %v164 = vld [vmem:[%s148 + $0x68] sm:$0xff]
                %165 = vst [vmem:[%s149 + $0x38] sm:$0xff] %v164
              $region41: #{feature_ex_forward.18} parent=35 // loop_footer
                %s147 = sadd.s32 1, %s143
              $region42: #{feature_ex_forward.18} parent=35 // loop_footer_branch
                %142 = sbr.rel target = $region38
              $region43: #{feature_ex_forward.18} parent=35 // loop_exit
                _
            $region36: #{feature_ex_forward.18} parent=31 // pred_fallthru
              _
            // Predicated region
            $region44: #{feature_ex_forward.18} parent=31 // pred_check
              _
            $region45: #{feature_ex_forward.18} parent=31 // pred_check_branch
              %167 = sbr.rel target = $region47
            $region46: #{feature_ex_forward.18} parent=31 // pred_region
              _
            $region47: #{feature_ex_forward.18} parent=31 // pred_fallthru
              _
          $region32: #{feature_ex_forward.18} parent=27 // pred_fallthru
            _
          %168 = vnop
        $region28: #{feature_ex_forward.18} parent=23 // pred_fallthru
          _
      $region24: #{feature_ex_forward.18} parent=5 // pred_fallthru
        _
      %p169 = scmp.le.s32.totalorder 1, %s9
      %p170 = scmp.lt.s32.totalorder %s9, 3
      %p171 = pnand %p169, %p170
      %p172 = pneg %p171
      // Predicated region
      $region48: #{feature_ex_forward.18} parent=5 // pred_check
        _
      $region49: #{feature_ex_forward.18} parent=5 // pred_check_branch
        %174 = sbr.rel (%p171) target = $region51
      $region50: #{feature_ex_forward.18} parent=5 // pred_region
        %s175 = ssub.s32 %s9, 1
        %s176 = sand.u32 %s43, 1
        %s177 = sand.u32 %s43, 1
        %s178 = smul.addr %s177, 64
        %s179 = scalar_lea.vmem [#allocation2], %s178
        // Predicated region
        $region52: #{feature_ex_forward.18} parent=50 // pred_check
          %p180 = pneg %p56
        $region53: #{feature_ex_forward.18} parent=50 // pred_check_branch
          %182 = sbr.rel (%p180) target = $region55
        $region54: #{feature_ex_forward.18} parent=50 // pred_region
          _
        $region55: #{feature_ex_forward.18} parent=50 // pred_fallthru
          _
        %p183 = pneg %p30
        %p184 = pneg %p27
        %s185 = sand.u32 %s43, 1
        %s186 = sand.u32 %s43, 1
        %s187 = smul.addr %s186, 64
        %s188 = scalar_lea.vmem [#allocation2], %s187
        %p189 = pneg %p56
        %p190 = pneg %p53
        %p191 = pneg %p77
        %p192 = pneg %p74
        %p193 = pneg %p103
        %p194 = pneg %p100
        %s195 = smul.u32 2, %s14
        %p196 = scmp.lt.s32.totalorder %s195, 3
        %s197 = scalar_select %p196, %s195, 3
        %s198 = smul.addr %s197, 8
        %s199 = scalar_lea.vmem %s3, %s198
        %s200 = smul.u32 2, %s14
        %s201 = smul.u32 2, %s14
        %p202 = scmp.lt.s32.totalorder %s201, 3
        %s203 = scalar_select %p202, %s201, 3
        %s204 = smul.addr %s203, 8
        %s205 = scalar_lea.vmem %s3, %s204
        %s206 = smul.u32 2, %s14
        %v207 = vld [vmem:[%s0] sm:$0xff]
        %v208 = vld [vmem:[%s179] sm:$0xff]
        %v209 = vld [vmem:[%s179 + $0x8] sm:$0xff]
        %v210 = vld [vmem:[%s179 + $0x10] sm:$0xff]
        %v211 = vld [vmem:[%s179 + $0x18] sm:$0xff]
        %v212 = vld [vmem:[%s179 + $0x20] sm:$0xff]
        %v213 = vld [vmem:[%s179 + $0x28] sm:$0xff]
        %v214 = vld [vmem:[%s179 + $0x30] sm:$0xff]
        %v215 = vld [vmem:[%s179 + $0x38] sm:$0xff]
        %v216 = vld [vmem:[%s2] sm:$0xff]
        %218 = vset.pattern.permute.xlu0 0
        %219 = vperm.xlu0 %218, %v216
        %v220 = vpop.permute.xlu0 %219
        %vm222 = vcmask 261120
        %v224 = vsel %vm222, %v207, 0
        %226 = vmatprep.subr.mxu0 %v209
        %227 = vmatpush1.msra.mxu0 %v208
        %228 = vmatprep.subr.mxu0 %v211
        %229 = vmatpush1.msra.mxu0 %v210
        %230 = vmatprep.subr.mxu0 %v213
        %231 = vmatpush1.msra.mxu0 %v212
        %232 = vmatprep.subr.mxu0 %v215
        %233 = vmatpush1.msra.mxu0 %v214
        %234 = vmatprep.subr.mxu0 0.0
        %235 = vmatpush1.msra.mxu0 0.0
        %236 = vmatprep.subr.mxu0 0.0
        %237 = vmatpush1.msra.mxu0 0.0
        %238 = vmatprep.subr.mxu0 0.0
        %239 = vmatpush1.msra.mxu0 0.0
        %240 = vmatprep.subr.mxu0 0.0
        %241 = vmatpush1.msra.mxu0 0.0
        %242 = vmatprep.subr.mxu0 0.0
        %243 = vmatpush1.msra.mxu0 0.0
        %244 = vmatprep.subr.mxu0 0.0
        %245 = vmatpush1.msra.mxu0 0.0
        %246 = vmatprep.subr.mxu0 0.0
        %247 = vmatpush1.msra.mxu0 0.0
        %248 = vmatprep.subr.mxu0 0.0
        %249 = vmatpush1.msra.mxu0 0.0
        %250 = vmatprep.subr.mxu0 0.0
        %251 = vmatpush1.msra.mxu0 0.0
        %252 = vmatprep.subr.mxu0 0.0
        %253 = vmatpush1.msra.mxu0 0.0
        %254 = vmatprep.subr.mxu0 0.0
        %255 = vmatpush1.msra.mxu0 0.0
        %256 = vmatprep.subr.mxu0 0.0
        %257 = vmatpush1.msra.mxu0 0.0
        %258 = vmatprep.subr.mxu0 0.0
        %259 = vmatpush1.msra.mxu0 0.0
        %260 = vmatprep.subr.mxu0 0.0
        %261 = vmatpush1.msra.mxu0 0.0
        %262 = vmatprep.subr.mxu0 0.0
        %263 = vmatpush1.msra.mxu0 0.0
        %264 = vmatprep.subr.mxu0 0.0
        %265 = vmatpush1.msra.mxu0 0.0
        %266 = vmatprep.subr.mxu0 0.0
        %267 = vmatpush1.msra.mxu0 0.0
        %268 = vmatprep.subr.mxu0 0.0
        %269 = vmatpush1.msra.mxu0 0.0
        %270 = vmatprep.subr.mxu0 0.0
        %271 = vmatpush1.msra.mxu0 0.0
        %272 = vmatprep.subr.mxu0 0.0
        %273 = vmatpush1.msra.mxu0 0.0
        %274 = vmatprep.subr.mxu0 0.0
        %275 = vmatpush1.msra.mxu0 0.0
        %276 = vmatprep.subr.mxu0 0.0
        %277 = vmatpush1.msra.mxu0 0.0
        %278 = vmatprep.subr.mxu0 0.0
        %279 = vmatpush1.msra.mxu0 0.0
        %280 = vmatprep.subr.mxu0 0.0
        %281 = vmatpush1.msra.mxu0 0.0
        %282 = vmatprep.subr.mxu0 0.0
        %283 = vmatpush1.msra.mxu0 0.0
        %284 = vmatprep.subr.mxu0 0.0
        %285 = vmatpush1.msra.mxu0 0.0
        %286 = vmatprep.subr.mxu0 0.0
        %287 = vmatpush1.msra.mxu0 0.0
        %288 = vmatprep.subr.mxu0 0.0
        %289 = vmatpush1.msra.mxu0 0.0
        %290 = vmatprep.mubr.f32.mxu0 0.0
        %291 = vmatmul.mubr.f32.gmra.mrb[0].mxu0 %v224
        %v292 = vpop.f32.mrb[0].mxu0
        %v293 = vadd.f32 %v220, %v292
        %v294 = vpop.f32.mrb[0].mxu0
        %v295 = vadd.f32 %v220, %v294
        %296 = vdwg.mxu0
        %v297 = vmax.f32 %v293, 0.0
        %v298 = vmax.f32 %v295, 0.0
        %299 = vst [vmem:[%s205] sm:$0xff] %v297
        %300 = vst [vmem:[%s205 + $0x8] sm:$0xff] %v298
        %s301 = smul.u32 2, %s14
        %p302 = scmp.lt.s32.totalorder %s301, 3
        %s303 = scalar_select %p302, %s301, 3
        %s304 = smul.addr %s303, 8
        %s305 = scalar_lea.vmem %s3, %s304
        // Predicated region
        $region56: #{feature_ex_forward.18} parent=50 // pred_check
          %p306 = pneg %p100
        $region57: #{feature_ex_forward.18} parent=50 // pred_check_branch
          %308 = sbr.rel (%p306) target = $region59
        $region58: #{feature_ex_forward.18} parent=50 // pred_region
          %s309 = smul.u32 2, %s14
        $region59: #{feature_ex_forward.18} parent=50 // pred_fallthru
          _
      $region51: #{feature_ex_forward.18} parent=5 // pred_fallthru
        _
      %p310 = scmp.le.s32.totalorder 2, %s9
      // Predicated region
      $region60: #{feature_ex_forward.18} parent=5 // pred_check
        %p311 = pneg %p310
      $region61: #{feature_ex_forward.18} parent=5 // pred_check_branch
        %313 = sbr.rel (%p311) target = $region63
      $region62: #{feature_ex_forward.18} parent=5 // pred_region
        %s314 = ssub.s32 %s9, 2
        // Predicated region
        $region64: #{feature_ex_forward.18} parent=62 // pred_check
          %p315 = pneg %p106
        $region65: #{feature_ex_forward.18} parent=62 // pred_check_branch
          %317 = sbr.rel (%p315) target = $region67
        $region66: #{feature_ex_forward.18} parent=62 // pred_region
          %s318 = smul.u32 2, %s15
          %p319 = scmp.lt.s32.totalorder %s318, 3
          %s320 = scalar_select %p319, %s318, 3
          %s321 = smul.addr %s320, 8
          %s322 = scalar_lea.vmem %s3, %s321
        $region67: #{feature_ex_forward.18} parent=62 // pred_fallthru
          _
      $region63: #{feature_ex_forward.18} parent=5 // pred_fallthru
        _
    $region6: #{feature_ex_forward.18} parent=1 // loop_footer
      %s13 = sadd.s32 1, %s9
    $region7: #{feature_ex_forward.18} parent=1 // loop_footer_branch
      %8 = sbr.rel target = $region3
    $region8: #{feature_ex_forward.18} parent=1 // loop_exit
      _

// kernel: feature_ex_forward.19
$region0: #{feature_ex_forward.19}
  #allocation0 [shape = 'u32[]', space=smem, size = 0x4, offset = 0x4, fixed_abs, tag = 'smem constant byte address 0x4 - core index']
  #allocation1 [shape = 'u32[144,128]{1,0:T(1,128)}', space=vmem, size = 0x12000, scoped, tag = 'internal scratch']
  %s0 = inlined_call_operand.vmem [shape: f32[8,72], index: 0, kind: input, shape index: {}]
  %s1 = inlined_call_operand.vmem [shape: f32[72,512], index: 1, kind: input, shape index: {}]
  %s2 = inlined_call_operand.vmem [shape: f32[8,1], index: 2, kind: input, shape index: {}]
  %s3 = inlined_call_operand.vmem [shape: f32[8,512], index: 3, kind: output, shape index: {}]
  %s4 = sld [smem:[#allocation0]]
  $region68: #{feature_ex_forward.19} parent=0
    _
  %s6 = ssub.s32 1, %s4
  %s7 = scalar_select 0, %s6, %s4
  $region1: #{feature_ex_forward.19} parent=0
    #allocation2 [shape = 'u8[147456]{0}', space=vmem, size = 0x24000, scoped, tag = 'input window, operand 1']
    loop: start=0, step=1, limit=4
    $region2: #{feature_ex_forward.19} parent=1 // loop_pre_header
      _
    $region3: #{feature_ex_forward.19} parent=1 // loop_header
      %s9 = sphi 0, %s13
      %p10 = scmp.ge.s32.totalorder %s9, 4
      %s17 = sphi 0, %s17
      %s19 = sphi 0, %s17
      %s20 = sphi 0, %s19
      %s34 = sphi 0, %s20
      %s40 = sphi 0, %s42
      %s43 = sphi 0, %s40
      %s44 = sphi 0, %s43
      %s60 = sphi 0, %s44
      %s64 = sphi 0, %s64
      %s66 = sphi 0, %s64
      %s67 = sphi 0, %s66
      %s81 = sphi 0, %s67
      %s87 = sphi 0, %s89
      %s90 = sphi 0, %s87
      %s91 = sphi 0, %s90
      %s107 = sphi 0, %s91
    $region4: #{feature_ex_forward.19} parent=1 // loop_header_branch
      %12 = sbr.rel (%p10) target = $region8
    $region5: #{feature_ex_forward.19} parent=1 // loop_body
      %s14 = ssub.s32 %s9, 1
      %s15 = ssub.s32 %s9, 2
      %s16 = sadd.s32 %s9, 1
      %s18 = sadd.s32 %s17, 1
      %p21 = scmp.eq.s32.totalorder %s9, 1
      %p22 = scmp.ne.s32.totalorder %s17, %s19
      %p23 = scmp.eq.s32.totalorder %s9, 0
      %p24 = por %p22, %p23
      %p25 = scmp.ne.s32.totalorder %s17, %s19
      %p26 = scmp.eq.s32.totalorder %s14, 1
      %p27 = por %p25, %p26
      %p28 = scmp.ne.s32.totalorder %s19, %s20
      %p29 = scmp.eq.s32.totalorder %s14, 0
      %p30 = por %p28, %p29
      %p31 = scmp.ne.s32.totalorder %s19, %s20
      %p32 = scmp.eq.s32.totalorder %s15, 1
      %p33 = por %p31, %p32
      %p35 = scmp.ne.s32.totalorder %s20, %s34
      %p36 = scmp.eq.s32.totalorder %s15, 0
      %p37 = por %p35, %p36
      %s38 = ssub.s32 %s9, %s16
      %p39 = scmp.eq.s32.totalorder %s38, 0
      %s41 = sadd.s32 %s40, 1
      %s42 = scalar_select %p39, %s40, %s41
      %p45 = pneg %p39
      %p46 = scmp.eq.s32.totalorder %s9, 1
      %p47 = por %p45, %p46
      %p48 = scmp.ne.s32.totalorder %s40, %s43
      %p49 = scmp.eq.s32.totalorder %s9, 0
      %p50 = por %p48, %p49
      %p51 = scmp.ne.s32.totalorder %s40, %s43
      %p52 = scmp.eq.s32.totalorder %s14, 1
      %p53 = por %p51, %p52
      %p54 = scmp.ne.s32.totalorder %s43, %s44
      %p55 = scmp.eq.s32.totalorder %s14, 0
      %p56 = por %p54, %p55
      %p57 = scmp.ne.s32.totalorder %s43, %s44
      %p58 = scmp.eq.s32.totalorder %s15, 1
      %p59 = por %p57, %p58
      %p61 = scmp.ne.s32.totalorder %s44, %s60
      %p62 = scmp.eq.s32.totalorder %s15, 0
      %p63 = por %p61, %p62
      %s65 = sadd.s32 %s64, 1
      %p68 = scmp.eq.s32.totalorder %s9, 1
      %p69 = scmp.ne.s32.totalorder %s64, %s66
      %p70 = scmp.eq.s32.totalorder %s9, 0
      %p71 = por %p69, %p70
      %p72 = scmp.ne.s32.totalorder %s64, %s66
      %p73 = scmp.eq.s32.totalorder %s14, 1
      %p74 = por %p72, %p73
      %p75 = scmp.ne.s32.totalorder %s66, %s67
      %p76 = scmp.eq.s32.totalorder %s14, 0
      %p77 = por %p75, %p76
      %p78 = scmp.ne.s32.totalorder %s66, %s67
      %p79 = scmp.eq.s32.totalorder %s15, 1
      %p80 = por %p78, %p79
      %p82 = scmp.ne.s32.totalorder %s67, %s81
      %p83 = scmp.eq.s32.totalorder %s15, 0
      %p84 = por %p82, %p83
      %s85 = ssub.s32 %s9, %s16
      %p86 = scmp.eq.s32.totalorder %s85, 0
      %s88 = sadd.s32 %s87, 1
      %s89 = scalar_select %p86, %s87, %s88
      %p92 = pneg %p86
      %p93 = scmp.eq.s32.totalorder %s9, 1
      %p94 = por %p92, %p93
      %p95 = scmp.ne.s32.totalorder %s87, %s90
      %p96 = scmp.eq.s32.totalorder %s9, 0
      %p97 = por %p95, %p96
      %p98 = scmp.ne.s32.totalorder %s87, %s90
      %p99 = scmp.eq.s32.totalorder %s14, 1
      %p100 = por %p98, %p99
      %p101 = scmp.ne.s32.totalorder %s90, %s91
      %p102 = scmp.eq.s32.totalorder %s14, 0
      %p103 = por %p101, %p102
      %p104 = scmp.ne.s32.totalorder %s90, %s91
      %p105 = scmp.eq.s32.totalorder %s15, 1
      %p106 = por %p104, %p105
      %p108 = scmp.ne.s32.totalorder %s91, %s107
      %p109 = scmp.eq.s32.totalorder %s15, 0
      %p110 = por %p108, %p109
      %p111 = scmp.le.s32.totalorder 1, %s9
      %p112 = scmp.lt.s32.totalorder %s9, 3
      %p113 = pnand %p111, %p112
      %p114 = pneg %p113
      // Predicated region
      $region9: #{feature_ex_forward.19} parent=5 // pred_check
        _
      $region10: #{feature_ex_forward.19} parent=5 // pred_check_branch
        %116 = sbr.rel (%p113) target = $region12
      $region11: #{feature_ex_forward.19} parent=5 // pred_region
        %s117 = ssub.s32 %s9, 1
        // Predicated region
        $region13: #{feature_ex_forward.19} parent=11 // pred_check
          %p118 = pneg %p30
        $region14: #{feature_ex_forward.19} parent=11 // pred_check_branch
          %120 = sbr.rel (%p118) target = $region16
        $region15: #{feature_ex_forward.19} parent=11 // pred_region
          _
        $region16: #{feature_ex_forward.19} parent=11 // pred_fallthru
          _
        // Predicated region
        $region17: #{feature_ex_forward.19} parent=11 // pred_check
          %p121 = pneg %p77
        $region18: #{feature_ex_forward.19} parent=11 // pred_check_branch
          %123 = sbr.rel (%p121) target = $region20
        $region19: #{feature_ex_forward.19} parent=11 // pred_region
          _
        $region20: #{feature_ex_forward.19} parent=11 // pred_fallthru
          _
      $region12: #{feature_ex_forward.19} parent=5 // pred_fallthru
        _
      %p124 = scmp.lt.s32.totalorder %s9, 2
      // Predicated region
      $region21: #{feature_ex_forward.19} parent=5 // pred_check
        %p125 = pneg %p124
      $region22: #{feature_ex_forward.19} parent=5 // pred_check_branch
        %127 = sbr.rel (%p125) target = $region24
      $region23: #{feature_ex_forward.19} parent=5 // pred_region
        // Predicated region
        $region25: #{feature_ex_forward.19} parent=23 // pred_check
          %p128 = pneg %p50
        $region26: #{feature_ex_forward.19} parent=23 // pred_check_branch
          %130 = sbr.rel (%p128) target = $region28
        $region27: #{feature_ex_forward.19} parent=23 // pred_region
          %s131 = sand.u32 %s40, 1
          %s132 = sand.u32 %s40, 1
          %s133 = smul.addr %s132, 144
          %s134 = scalar_lea.vmem [#allocation2], %s133
          %s135 = smul.u32 2, %s9
          %s136 = smul.addr %s135, 8
          %s137 = scalar_lea.vmem %s1, %s136
          // Predicated region
          $region29: #{feature_ex_forward.19} parent=27 // pred_check
            _
          $region30: #{feature_ex_forward.19} parent=27 // pred_check_branch
            %139 = sbr.rel (0) target = $region32
          $region31: #{feature_ex_forward.19} parent=27 // pred_region
            // Predicated region
            $region33: #{feature_ex_forward.19} parent=31 // pred_check
              _
            $region34: #{feature_ex_forward.19} parent=31 // pred_check_branch
              %141 = sbr.rel (0) target = $region36
            $region35: #{feature_ex_forward.19} parent=31 // pred_region
              loop: start=0, step=1, limit=1
              $region37: #{feature_ex_forward.19} parent=35 // loop_pre_header
                _
              $region38: #{feature_ex_forward.19} parent=35 // loop_header
                %s143 = sphi 0, %s147
                %p144 = scmp.ge.s32.totalorder %s143, 1
                %s148 = sphi %s137, %s137
                %s149 = sphi %s134, %s134
              $region39: #{feature_ex_forward.19} parent=35 // loop_header_branch
                %146 = sbr.rel (%p144) target = $region43
              $region40: #{feature_ex_forward.19} parent=35 // loop_body
                %v150 = vld [vmem:[%s148] sm:$0xff]
                %151 = vst [vmem:[%s149] sm:$0xff] %v150
                %v152 = vld [vmem:[%s148 + $0x8] sm:$0xff]
                %153 = vst [vmem:[%s149 + $0x8] sm:$0xff] %v152
                %v154 = vld [vmem:[%s148 + $0x20] sm:$0xff]
                %155 = vst [vmem:[%s149 + $0x10] sm:$0xff] %v154
                %v156 = vld [vmem:[%s148 + $0x28] sm:$0xff]
                %157 = vst [vmem:[%s149 + $0x18] sm:$0xff] %v156
                %v158 = vld [vmem:[%s148 + $0x40] sm:$0xff]
                %159 = vst [vmem:[%s149 + $0x20] sm:$0xff] %v158
                %v160 = vld [vmem:[%s148 + $0x48] sm:$0xff]
                %161 = vst [vmem:[%s149 + $0x28] sm:$0xff] %v160
                %v162 = vld [vmem:[%s148 + $0x60] sm:$0xff]
                %163 = vst [vmem:[%s149 + $0x30] sm:$0xff] %v162
                %v164 = vld [vmem:[%s148 + $0x68] sm:$0xff]
                %165 = vst [vmem:[%s149 + $0x38] sm:$0xff] %v164
                %v166 = vld [vmem:[%s148 + $0x80] sm:$0xff]
                %167 = vst [vmem:[%s149 + $0x40] sm:$0xff] %v166
                %v168 = vld [vmem:[%s148 + $0x88] sm:$0xff]
                %169 = vst [vmem:[%s149 + $0x48] sm:$0xff] %v168
                %v170 = vld [vmem:[%s148 + $0xa0] sm:$0xff]
                %171 = vst [vmem:[%s149 + $0x50] sm:$0xff] %v170
                %v172 = vld [vmem:[%s148 + $0xa8] sm:$0xff]
                %173 = vst [vmem:[%s149 + $0x58] sm:$0xff] %v172
                %v174 = vld [vmem:[%s148 + $0xc0] sm:$0xff]
                %175 = vst [vmem:[%s149 + $0x60] sm:$0xff] %v174
                %v176 = vld [vmem:[%s148 + $0xc8] sm:$0xff]
                %177 = vst [vmem:[%s149 + $0x68] sm:$0xff] %v176
                %v178 = vld [vmem:[%s148 + $0xe0] sm:$0xff]
                %179 = vst [vmem:[%s149 + $0x70] sm:$0xff] %v178
                %v180 = vld [vmem:[%s148 + $0xe8] sm:$0xff]
                %181 = vst [vmem:[%s149 + $0x78] sm:$0xff] %v180
                %v182 = vld [vmem:[%s148 + $0x100] sm:$0xff]
                %183 = vst [vmem:[%s149 + $0x80] sm:$0xff] %v182
                %v184 = vld [vmem:[%s148 + $0x108] sm:$0xff]
                %185 = vst [vmem:[%s149 + $0x88] sm:$0xff] %v184
              $region41: #{feature_ex_forward.19} parent=35 // loop_footer
                %s147 = sadd.s32 1, %s143
              $region42: #{feature_ex_forward.19} parent=35 // loop_footer_branch
                %142 = sbr.rel target = $region38
              $region43: #{feature_ex_forward.19} parent=35 // loop_exit
                _
            $region36: #{feature_ex_forward.19} parent=31 // pred_fallthru
              _
            // Predicated region
            $region44: #{feature_ex_forward.19} parent=31 // pred_check
              _
            $region45: #{feature_ex_forward.19} parent=31 // pred_check_branch
              %187 = sbr.rel target = $region47
            $region46: #{feature_ex_forward.19} parent=31 // pred_region
              _
            $region47: #{feature_ex_forward.19} parent=31 // pred_fallthru
              _
          $region32: #{feature_ex_forward.19} parent=27 // pred_fallthru
            _
          %188 = vnop
        $region28: #{feature_ex_forward.19} parent=23 // pred_fallthru
          _
      $region24: #{feature_ex_forward.19} parent=5 // pred_fallthru
        _
      %p189 = scmp.le.s32.totalorder 1, %s9
      %p190 = scmp.lt.s32.totalorder %s9, 3
      %p191 = pnand %p189, %p190
      %p192 = pneg %p191
      // Predicated region
      $region48: #{feature_ex_forward.19} parent=5 // pred_check
        _
      $region49: #{feature_ex_forward.19} parent=5 // pred_check_branch
        %194 = sbr.rel (%p191) target = $region51
      $region50: #{feature_ex_forward.19} parent=5 // pred_region
        %s195 = ssub.s32 %s9, 1
        %s196 = sand.u32 %s43, 1
        %s197 = sand.u32 %s43, 1
        %s198 = smul.addr %s197, 144
        %s199 = scalar_lea.vmem [#allocation2], %s198
        // Predicated region
        $region52: #{feature_ex_forward.19} parent=50 // pred_check
          %p200 = pneg %p56
        $region53: #{feature_ex_forward.19} parent=50 // pred_check_branch
          %202 = sbr.rel (%p200) target = $region55
        $region54: #{feature_ex_forward.19} parent=50 // pred_region
          _
        $region55: #{feature_ex_forward.19} parent=50 // pred_fallthru
          _
        %p203 = pneg %p30
        %p204 = pneg %p27
        %s205 = sand.u32 %s43, 1
        %s206 = sand.u32 %s43, 1
        %s207 = smul.addr %s206, 144
        %s208 = scalar_lea.vmem [#allocation2], %s207
        %p209 = pneg %p56
        %p210 = pneg %p53
        %p211 = pneg %p77
        %p212 = pneg %p74
        %p213 = pneg %p103
        %p214 = pneg %p100
        %s215 = smul.u32 2, %s14
        %p216 = scmp.lt.s32.totalorder %s215, 3
        %s217 = scalar_select %p216, %s215, 3
        %s218 = smul.addr %s217, 8
        %s219 = scalar_lea.vmem %s3, %s218
        %s220 = smul.u32 2, %s14
        %s221 = smul.u32 2, %s14
        %p222 = scmp.lt.s32.totalorder %s221, 3
        %s223 = scalar_select %p222, %s221, 3
        %s224 = smul.addr %s223, 8
        %s225 = scalar_lea.vmem %s3, %s224
        %s226 = smul.u32 2, %s14
        %v227 = vld [vmem:[%s0] sm:$0xff]
        %v228 = vld [vmem:[%s199] sm:$0xff]
        %v229 = vld [vmem:[%s199 + $0x8] sm:$0xff]
        %v230 = vld [vmem:[%s199 + $0x10] sm:$0xff]
        %v231 = vld [vmem:[%s199 + $0x18] sm:$0xff]
        %v232 = vld [vmem:[%s199 + $0x20] sm:$0xff]
        %v233 = vld [vmem:[%s199 + $0x28] sm:$0xff]
        %v234 = vld [vmem:[%s199 + $0x30] sm:$0xff]
        %v235 = vld [vmem:[%s199 + $0x38] sm:$0xff]
        %v236 = vld [vmem:[%s199 + $0x40] sm:$0xff]
        %v237 = vld [vmem:[%s199 + $0x48] sm:$0xff]
        %v238 = vld [vmem:[%s199 + $0x50] sm:$0xff]
        %v239 = vld [vmem:[%s199 + $0x58] sm:$0xff]
        %v240 = vld [vmem:[%s199 + $0x60] sm:$0xff]
        %v241 = vld [vmem:[%s199 + $0x68] sm:$0xff]
        %v242 = vld [vmem:[%s199 + $0x70] sm:$0xff]
        %v243 = vld [vmem:[%s199 + $0x78] sm:$0xff]
        %v244 = vld [vmem:[%s199 + $0x80] sm:$0xff]
        %v245 = vld [vmem:[%s199 + $0x88] sm:$0xff]
        %v246 = vld [vmem:[%s2] sm:$0xff]
        %248 = vset.pattern.permute.xlu0 0
        %249 = vperm.xlu0 %248, %v246
        %v250 = vpop.permute.xlu0 %249
        %vm252 = vcmask 588800
        %v254 = vsel %vm252, %v227, 0
        %256 = vmatprep.subr.mxu0 %v229
        %257 = vmatpush1.msra.mxu0 %v228
        %258 = vmatprep.subr.mxu0 %v231
        %259 = vmatpush1.msra.mxu0 %v230
        %260 = vmatprep.subr.mxu0 %v233
        %261 = vmatpush1.msra.mxu0 %v232
        %262 = vmatprep.subr.mxu0 %v235
        %263 = vmatpush1.msra.mxu0 %v234
        %264 = vmatprep.subr.mxu0 %v237
        %265 = vmatpush1.msra.mxu0 %v236
        %266 = vmatprep.subr.mxu0 %v239
        %267 = vmatpush1.msra.mxu0 %v238
        %268 = vmatprep.subr.mxu0 %v241
        %269 = vmatpush1.msra.mxu0 %v240
        %270 = vmatprep.subr.mxu0 %v243
        %271 = vmatpush1.msra.mxu0 %v242
        %272 = vmatprep.subr.mxu0 %v245
        %273 = vmatpush1.msra.mxu0 %v244
        %274 = vmatprep.subr.mxu0 0.0
        %275 = vmatpush1.msra.mxu0 0.0
        %276 = vmatprep.subr.mxu0 0.0
        %277 = vmatpush1.msra.mxu0 0.0
        %278 = vmatprep.subr.mxu0 0.0
        %279 = vmatpush1.msra.mxu0 0.0
        %280 = vmatprep.subr.mxu0 0.0
        %281 = vmatpush1.msra.mxu0 0.0
        %282 = vmatprep.subr.mxu0 0.0
        %283 = vmatpush1.msra.mxu0 0.0
        %284 = vmatprep.subr.mxu0 0.0
        %285 = vmatpush1.msra.mxu0 0.0
        %286 = vmatprep.subr.mxu0 0.0
        %287 = vmatpush1.msra.mxu0 0.0
        %288 = vmatprep.subr.mxu0 0.0
        %289 = vmatpush1.msra.mxu0 0.0
        %290 = vmatprep.subr.mxu0 0.0
        %291 = vmatpush1.msra.mxu0 0.0
        %292 = vmatprep.subr.mxu0 0.0
        %293 = vmatpush1.msra.mxu0 0.0
        %294 = vmatprep.subr.mxu0 0.0
        %295 = vmatpush1.msra.mxu0 0.0
        %296 = vmatprep.subr.mxu0 0.0
        %297 = vmatpush1.msra.mxu0 0.0
        %298 = vmatprep.subr.mxu0 0.0
        %299 = vmatpush1.msra.mxu0 0.0
        %300 = vmatprep.subr.mxu0 0.0
        %301 = vmatpush1.msra.mxu0 0.0
        %302 = vmatprep.subr.mxu0 0.0
        %303 = vmatpush1.msra.mxu0 0.0
        %304 = vmatprep.subr.mxu0 0.0
        %305 = vmatpush1.msra.mxu0 0.0
        %306 = vmatprep.subr.mxu0 0.0
        %307 = vmatpush1.msra.mxu0 0.0
        %308 = vmatprep.subr.mxu0 0.0
        %309 = vmatpush1.msra.mxu0 0.0
        %310 = vmatprep.subr.mxu0 0.0
        %311 = vmatpush1.msra.mxu0 0.0
        %312 = vmatprep.subr.mxu0 0.0
        %313 = vmatpush1.msra.mxu0 0.0
        %314 = vmatprep.subr.mxu0 0.0
        %315 = vmatpush1.msra.mxu0 0.0
        %316 = vmatprep.subr.mxu0 0.0
        %317 = vmatpush1.msra.mxu0 0.0
        %318 = vmatprep.subr.mxu0 0.0
        %319 = vmatpush1.msra.mxu0 0.0
        %320 = vmatprep.mubr.f32.mxu0 0.0
        %321 = vmatmul.mubr.f32.gmra.mrb[0].mxu0 %v254
        %v322 = vpop.f32.mrb[0].mxu0
        %v323 = vadd.f32 %v250, %v322
        %v324 = vpop.f32.mrb[0].mxu0
        %v325 = vadd.f32 %v250, %v324
        %326 = vdwg.mxu0
        %v327 = vmax.f32 %v323, 0.0
        %v328 = vmax.f32 %v325, 0.0
        %329 = vst [vmem:[%s225] sm:$0xff] %v327
        %330 = vst [vmem:[%s225 + $0x8] sm:$0xff] %v328
        %s331 = smul.u32 2, %s14
        %p332 = scmp.lt.s32.totalorder %s331, 3
        %s333 = scalar_select %p332, %s331, 3
        %s334 = smul.addr %s333, 8
        %s335 = scalar_lea.vmem %s3, %s334
        // Predicated region
        $region56: #{feature_ex_forward.19} parent=50 // pred_check
          %p336 = pneg %p100
        $region57: #{feature_ex_forward.19} parent=50 // pred_check_branch
          %338 = sbr.rel (%p336) target = $region59
        $region58: #{feature_ex_forward.19} parent=50 // pred_region
          %s339 = smul.u32 2, %s14
        $region59: #{feature_ex_forward.19} parent=50 // pred_fallthru
          _
      $region51: #{feature_ex_forward.19} parent=5 // pred_fallthru
        _
      %p340 = scmp.le.s32.totalorder 2, %s9
      // Predicated region
      $region60: #{feature_ex_forward.19} parent=5 // pred_check
        %p341 = pneg %p340
      $region61: #{feature_ex_forward.19} parent=5 // pred_check_branch
        %343 = sbr.rel (%p341) target = $region63
      $region62: #{feature_ex_forward.19} parent=5 // pred_region
        %s344 = ssub.s32 %s9, 2
        // Predicated region
        $region64: #{feature_ex_forward.19} parent=62 // pred_check
          %p345 = pneg %p106
        $region65: #{feature_ex_forward.19} parent=62 // pred_check_branch
          %347 = sbr.rel (%p345) target = $region67
        $region66: #{feature_ex_forward.19} parent=62 // pred_region
          %s348 = smul.u32 2, %s15
          %p349 = scmp.lt.s32.totalorder %s348, 3
          %s350 = scalar_select %p349, %s348, 3
          %s351 = smul.addr %s350, 8
          %s352 = scalar_lea.vmem %s3, %s351
        $region67: #{feature_ex_forward.19} parent=62 // pred_fallthru
          _
      $region63: #{feature_ex_forward.19} parent=5 // pred_fallthru
        _
    $region6: #{feature_ex_forward.19} parent=1 // loop_footer
      %s13 = sadd.s32 1, %s9
    $region7: #{feature_ex_forward.19} parent=1 // loop_footer_branch
      %8 = sbr.rel target = $region3
    $region8: #{feature_ex_forward.19} parent=1 // loop_exit
      _

// kernel: feature_ex_forward.20
$region0: #{feature_ex_forward.20}
  #allocation0 [shape = 'u32[]', space=smem, size = 0x4, offset = 0x4, fixed_abs, tag = 'smem constant byte address 0x4 - core index']
  #allocation1 [shape = 'u32[144,128]{1,0:T(1,128)}', space=vmem, size = 0x12000, scoped, tag = 'internal scratch']
  %s0 = inlined_call_operand.vmem [shape: f32[16,200], index: 0, kind: input, shape index: {}]
  %s1 = inlined_call_operand.vmem [shape: f32[200,128], index: 1, kind: input, shape index: {}]
  %s2 = inlined_call_operand.vmem [shape: f32[16,1], index: 2, kind: input, shape index: {}]
  %s3 = inlined_call_operand.vmem [shape: f32[16,128], index: 3, kind: output, shape index: {}]
  %s4 = sld [smem:[#allocation0]]
  $region22: #{feature_ex_forward.20} parent=0
    _
  %s6 = ssub.s32 1, %s4
  %s7 = scalar_select 0, %s6, %s4
  // Predicated region
  $region2: #{feature_ex_forward.20} parent=0 // pred_check
    _
  $region3: #{feature_ex_forward.20} parent=0 // pred_check_branch
    %9 = sbr.rel (0) target = $region5
  $region4: #{feature_ex_forward.20} parent=0 // pred_region
    _
  $region5: #{feature_ex_forward.20} parent=0 // pred_fallthru
    _
  // Predicated region
  $region6: #{feature_ex_forward.20} parent=0 // pred_check
    _
  $region7: #{feature_ex_forward.20} parent=0 // pred_check_branch
    %11 = sbr.rel (0) target = $region9
  $region8: #{feature_ex_forward.20} parent=0 // pred_region
    _
  $region9: #{feature_ex_forward.20} parent=0 // pred_fallthru
    _
  // Predicated region
  $region10: #{feature_ex_forward.20} parent=0 // pred_check
    _
  $region11: #{feature_ex_forward.20} parent=0 // pred_check_branch
    %13 = sbr.rel (0) target = $region13
  $region12: #{feature_ex_forward.20} parent=0 // pred_region
    _
  $region13: #{feature_ex_forward.20} parent=0 // pred_fallthru
    _
  %v14 = vld [vmem:[%s0] sm:$0xff]
  %v15 = vld [vmem:[%s0 + $0x8] sm:$0xff]
  %v16 = vld [vmem:[%s0 + $0x10] sm:$0xff]
  %v17 = vld [vmem:[%s0 + $0x18] sm:$0xff]
  %v18 = vld [vmem:[%s1] sm:$0xff]
  %v19 = vld [vmem:[%s1 + $0x8] sm:$0xff]
  %v20 = vld [vmem:[%s1 + $0x10] sm:$0xff]
  %v21 = vld [vmem:[%s1 + $0x18] sm:$0xff]
  %v22 = vld [vmem:[%s1 + $0x20] sm:$0xff]
  %v23 = vld [vmem:[%s1 + $0x28] sm:$0xff]
  %v24 = vld [vmem:[%s1 + $0x30] sm:$0xff]
  %v25 = vld [vmem:[%s1 + $0x38] sm:$0xff]
  %v26 = vld [vmem:[%s1 + $0x40] sm:$0xff]
  %v27 = vld [vmem:[%s1 + $0x48] sm:$0xff]
  %v28 = vld [vmem:[%s1 + $0x50] sm:$0xff]
  %v29 = vld [vmem:[%s1 + $0x58] sm:$0xff]
  %v30 = vld [vmem:[%s1 + $0x60] sm:$0xff]
  %v31 = vld [vmem:[%s1 + $0x68] sm:$0xff]
  %v32 = vld [vmem:[%s1 + $0x70] sm:$0xff]
  %v33 = vld [vmem:[%s1 + $0x78] sm:$0xff]
  %v34 = vld [vmem:[%s1 + $0x80] sm:$0xff]
  %v35 = vld [vmem:[%s1 + $0x88] sm:$0xff]
  %v36 = vld [vmem:[%s1 + $0x90] sm:$0xff]
  %v37 = vld [vmem:[%s1 + $0x98] sm:$0xff]
  %v38 = vld [vmem:[%s1 + $0xa0] sm:$0xff]
  %v39 = vld [vmem:[%s1 + $0xa8] sm:$0xff]
  %v40 = vld [vmem:[%s1 + $0xb0] sm:$0xff]
  %v41 = vld [vmem:[%s1 + $0xb8] sm:$0xff]
  %v42 = vld [vmem:[%s1 + $0xc0] sm:$0xff]
  %v43 = vld [vmem:[%s2] sm:$0xff]
  %v44 = vld [vmem:[%s2 + $0x8] sm:$0xff]
  %46 = vset.pattern.permute.xlu0 0
  %47 = vperm.xlu0 %46, %v43
  %v48 = vpop.permute.xlu0 %47
  %51 = vset.pattern.permute.xlu0 0
  %52 = vperm.xlu0 %51, %v44
  %v53 = vpop.permute.xlu0 %52
  %vm55 = vcmask 588800
  %v57 = vsel %vm55, %v15, 0
  %v60 = vsel %vm55, %v17, 0
  %62 = vmatprep.subr.mxu0 0.0
  %63 = vmatpush1.msra.mxu0 %v18
  %64 = vmatprep.subr.mxu0 0.0
  %65 = vmatpush1.msra.mxu0 %v19
  %66 = vmatprep.subr.mxu0 0.0
  %67 = vmatpush1.msra.mxu0 %v20
  %68 = vmatprep.subr.mxu0 0.0
  %69 = vmatpush1.msra.mxu0 %v21
  %70 = vmatprep.subr.mxu0 0.0
  %71 = vmatpush1.msra.mxu0 %v22
  %72 = vmatprep.subr.mxu0 0.0
  %73 = vmatpush1.msra.mxu0 %v23
  %74 = vmatprep.subr.mxu0 0.0
  %75 = vmatpush1.msra.mxu0 %v24
  %76 = vmatprep.subr.mxu0 0.0
  %77 = vmatpush1.msra.mxu0 %v25
  %78 = vmatprep.subr.mxu0 0.0
  %79 = vmatpush1.msra.mxu0 %v26
  %80 = vmatprep.subr.mxu0 0.0
  %81 = vmatpush1.msra.mxu0 %v27
  %82 = vmatprep.subr.mxu0 0.0
  %83 = vmatpush1.msra.mxu0 %v28
  %84 = vmatprep.subr.mxu0 0.0
  %85 = vmatpush1.msra.mxu0 %v29
  %86 = vmatprep.subr.mxu0 0.0
  %87 = vmatpush1.msra.mxu0 %v30
  %88 = vmatprep.subr.mxu0 0.0
  %89 = vmatpush1.msra.mxu0 %v31
  %90 = vmatprep.subr.mxu0 0.0
  %91 = vmatpush1.msra.mxu0 %v32
  %92 = vmatprep.subr.mxu0 0.0
  %93 = vmatpush1.msra.mxu0 %v33
  %94 = vmatprep.subr.mxu0 0.0
  %95 = vmatpush1.msra.mxu0 %v34
  %96 = vmatprep.subr.mxu0 0.0
  %97 = vmatpush1.msra.mxu0 %v35
  %98 = vmatprep.subr.mxu0 0.0
  %99 = vmatpush1.msra.mxu0 %v36
  %100 = vmatprep.subr.mxu0 0.0
  %101 = vmatpush1.msra.mxu0 %v37
  %102 = vmatprep.subr.mxu0 0.0
  %103 = vmatpush1.msra.mxu0 %v38
  %104 = vmatprep.subr.mxu0 0.0
  %105 = vmatpush1.msra.mxu0 %v39
  %106 = vmatprep.subr.mxu0 0.0
  %107 = vmatpush1.msra.mxu0 %v40
  %108 = vmatprep.subr.mxu0 0.0
  %109 = vmatpush1.msra.mxu0 %v41
  %110 = vmatprep.subr.mxu0 0.0
  %111 = vmatpush1.msra.mxu0 %v42
  %112 = vmatprep.subr.mxu0 0.0
  %113 = vmatpush1.msra.mxu0 0.0
  %114 = vmatprep.subr.mxu0 0.0
  %115 = vmatpush1.msra.mxu0 0.0
  %116 = vmatprep.subr.mxu0 0.0
  %117 = vmatpush1.msra.mxu0 0.0
  %118 = vmatprep.subr.mxu0 0.0
  %119 = vmatpush1.msra.mxu0 0.0
  %120 = vmatprep.subr.mxu0 0.0
  %121 = vmatpush1.msra.mxu0 0.0
  %122 = vmatprep.subr.mxu0 0.0
  %123 = vmatpush1.msra.mxu0 0.0
  %124 = vmatprep.subr.mxu0 0.0
  %125 = vmatpush1.msra.mxu0 0.0
  %126 = vmatprep.mubr.f32.mxu0 %v57
  %127 = vmatmul.mubr.f32.gmra.mrb[0].mxu0 %v14
  %v128 = vpop.f32.mrb[0].mxu0
  %v129 = vadd.f32 %v48, %v128
  %v130 = vpop.f32.mrb[0].mxu0
  %131 = vmatprep.mubr.f32.mxu0 %v60
  %132 = vmatmul.mubr.f32.gmra.mrb[0].mxu0 %v16
  %v133 = vpop.f32.mrb[0].mxu0
  %v134 = vadd.f32 %v53, %v133
  %v135 = vpop.f32.mrb[0].mxu0
  %136 = vdwg.mxu0
  %v137 = vmax.f32 %v129, 0.0
  %v138 = vmax.f32 %v134, 0.0
  %139 = vst [vmem:[%s3] sm:$0xff] %v137
  %140 = vst [vmem:[%s3 + $0x8] sm:$0xff] %v138
  // Predicated region
  $region14: #{feature_ex_forward.20} parent=0 // pred_check
    _
  $region15: #{feature_ex_forward.20} parent=0 // pred_check_branch
    %142 = sbr.rel (0) target = $region17
  $region16: #{feature_ex_forward.20} parent=0 // pred_region
    _
  $region17: #{feature_ex_forward.20} parent=0 // pred_fallthru
    _
  // Predicated region
  $region18: #{feature_ex_forward.20} parent=0 // pred_check
    _
  $region19: #{feature_ex_forward.20} parent=0 // pred_check_branch
    %144 = sbr.rel (0) target = $region21
  $region20: #{feature_ex_forward.20} parent=0 // pred_region
    _
  $region21: #{feature_ex_forward.20} parent=0 // pred_fallthru
    _

// kernel: feature_ex_forward.21
$region0: #{feature_ex_forward.21}
  #allocation0 [shape = 'u32[]', space=smem, size = 0x4, offset = 0x4, fixed_abs, tag = 'smem constant byte address 0x4 - core index']
  #allocation1 [shape = 'u32[144,128]{1,0:T(1,128)}', space=vmem, size = 0x12000, scoped, tag = 'internal scratch']
  %s0 = inlined_call_operand.vmem [shape: f32[16,144], index: 0, kind: input, shape index: {}]
  %s1 = inlined_call_operand.vmem [shape: f32[144,128], index: 1, kind: input, shape index: {}]
  %s2 = inlined_call_operand.vmem [shape: f32[16,1], index: 2, kind: input, shape index: {}]
  %s3 = inlined_call_operand.vmem [shape: f32[16,128], index: 3, kind: output, shape index: {}]
  %s4 = sld [smem:[#allocation0]]
  $region22: #{feature_ex_forward.21} parent=0
    _
  %s6 = ssub.s32 1, %s4
  %s7 = scalar_select 0, %s6, %s4
  // Predicated region
  $region2: #{feature_ex_forward.21} parent=0 // pred_check
    _
  $region3: #{feature_ex_forward.21} parent=0 // pred_check_branch
    %9 = sbr.rel (0) target = $region5
  $region4: #{feature_ex_forward.21} parent=0 // pred_region
    _
  $region5: #{feature_ex_forward.21} parent=0 // pred_fallthru
    _
  // Predicated region
  $region6: #{feature_ex_forward.21} parent=0 // pred_check
    _
  $region7: #{feature_ex_forward.21} parent=0 // pred_check_branch
    %11 = sbr.rel (0) target = $region9
  $region8: #{feature_ex_forward.21} parent=0 // pred_region
    _
  $region9: #{feature_ex_forward.21} parent=0 // pred_fallthru
    _
  // Predicated region
  $region10: #{feature_ex_forward.21} parent=0 // pred_check
    _
  $region11: #{feature_ex_forward.21} parent=0 // pred_check_branch
    %13 = sbr.rel (0) target = $region13
  $region12: #{feature_ex_forward.21} parent=0 // pred_region
    _
  $region13: #{feature_ex_forward.21} parent=0 // pred_fallthru
    _
  %v14 = vld [vmem:[%s0] sm:$0xff]
  %v15 = vld [vmem:[%s0 + $0x8] sm:$0xff]
  %v16 = vld [vmem:[%s0 + $0x10] sm:$0xff]
  %v17 = vld [vmem:[%s0 + $0x18] sm:$0xff]
  %v18 = vld [vmem:[%s1] sm:$0xff]
  %v19 = vld [vmem:[%s1 + $0x8] sm:$0xff]
  %v20 = vld [vmem:[%s1 + $0x10] sm:$0xff]
  %v21 = vld [vmem:[%s1 + $0x18] sm:$0xff]
  %v22 = vld [vmem:[%s1 + $0x20] sm:$0xff]
  %v23 = vld [vmem:[%s1 + $0x28] sm:$0xff]
  %v24 = vld [vmem:[%s1 + $0x30] sm:$0xff]
  %v25 = vld [vmem:[%s1 + $0x38] sm:$0xff]
  %v26 = vld [vmem:[%s1 + $0x40] sm:$0xff]
  %v27 = vld [vmem:[%s1 + $0x48] sm:$0xff]
  %v28 = vld [vmem:[%s1 + $0x50] sm:$0xff]
  %v29 = vld [vmem:[%s1 + $0x58] sm:$0xff]
  %v30 = vld [vmem:[%s1 + $0x60] sm:$0xff]
  %v31 = vld [vmem:[%s1 + $0x68] sm:$0xff]
  %v32 = vld [vmem:[%s1 + $0x70] sm:$0xff]
  %v33 = vld [vmem:[%s1 + $0x78] sm:$0xff]
  %v34 = vld [vmem:[%s1 + $0x80] sm:$0xff]
  %v35 = vld [vmem:[%s1 + $0x88] sm:$0xff]
  %v36 = vld [vmem:[%s2] sm:$0xff]
  %v37 = vld [vmem:[%s2 + $0x8] sm:$0xff]
  %39 = vset.pattern.permute.xlu0 0
  %40 = vperm.xlu0 %39, %v36
  %v41 = vpop.permute.xlu0 %40
  %44 = vset.pattern.permute.xlu0 0
  %45 = vperm.xlu0 %44, %v37
  %v46 = vpop.permute.xlu0 %45
  %vm48 = vcmask 130048
  %v50 = vsel %vm48, %v15, 0
  %v53 = vsel %vm48, %v17, 0
  %55 = vmatprep.subr.mxu0 0.0
  %56 = vmatpush1.msra.mxu0 %v18
  %57 = vmatprep.subr.mxu0 0.0
  %58 = vmatpush1.msra.mxu0 %v19
  %59 = vmatprep.subr.mxu0 0.0
  %60 = vmatpush1.msra.mxu0 %v20
  %61 = vmatprep.subr.mxu0 0.0
  %62 = vmatpush1.msra.mxu0 %v21
  %63 = vmatprep.subr.mxu0 0.0
  %64 = vmatpush1.msra.mxu0 %v22
  %65 = vmatprep.subr.mxu0 0.0
  %66 = vmatpush1.msra.mxu0 %v23
  %67 = vmatprep.subr.mxu0 0.0
  %68 = vmatpush1.msra.mxu0 %v24
  %69 = vmatprep.subr.mxu0 0.0
  %70 = vmatpush1.msra.mxu0 %v25
  %71 = vmatprep.subr.mxu0 0.0
  %72 = vmatpush1.msra.mxu0 %v26
  %73 = vmatprep.subr.mxu0 0.0
  %74 = vmatpush1.msra.mxu0 %v27
  %75 = vmatprep.subr.mxu0 0.0
  %76 = vmatpush1.msra.mxu0 %v28
  %77 = vmatprep.subr.mxu0 0.0
  %78 = vmatpush1.msra.mxu0 %v29
  %79 = vmatprep.subr.mxu0 0.0
  %80 = vmatpush1.msra.mxu0 %v30
  %81 = vmatprep.subr.mxu0 0.0
  %82 = vmatpush1.msra.mxu0 %v31
  %83 = vmatprep.subr.mxu0 0.0
  %84 = vmatpush1.msra.mxu0 %v32
  %85 = vmatprep.subr.mxu0 0.0
  %86 = vmatpush1.msra.mxu0 %v33
  %87 = vmatprep.subr.mxu0 0.0
  %88 = vmatpush1.msra.mxu0 %v34
  %89 = vmatprep.subr.mxu0 0.0
  %90 = vmatpush1.msra.mxu0 %v35
  %91 = vmatprep.subr.mxu0 0.0
  %92 = vmatpush1.msra.mxu0 0.0
  %93 = vmatprep.subr.mxu0 0.0
  %94 = vmatpush1.msra.mxu0 0.0
  %95 = vmatprep.subr.mxu0 0.0
  %96 = vmatpush1.msra.mxu0 0.0
  %97 = vmatprep.subr.mxu0 0.0
  %98 = vmatpush1.msra.mxu0 0.0
  %99 = vmatprep.subr.mxu0 0.0
  %100 = vmatpush1.msra.mxu0 0.0
  %101 = vmatprep.subr.mxu0 0.0
  %102 = vmatpush1.msra.mxu0 0.0
  %103 = vmatprep.subr.mxu0 0.0
  %104 = vmatpush1.msra.mxu0 0.0
  %105 = vmatprep.subr.mxu0 0.0
  %106 = vmatpush1.msra.mxu0 0.0
  %107 = vmatprep.subr.mxu0 0.0
  %108 = vmatpush1.msra.mxu0 0.0
  %109 = vmatprep.subr.mxu0 0.0
  %110 = vmatpush1.msra.mxu0 0.0
  %111 = vmatprep.subr.mxu0 0.0
  %112 = vmatpush1.msra.mxu0 0.0
  %113 = vmatprep.subr.mxu0 0.0
  %114 = vmatpush1.msra.mxu0 0.0
  %115 = vmatprep.subr.mxu0 0.0
  %116 = vmatpush1.msra.mxu0 0.0
  %117 = vmatprep.subr.mxu0 0.0
  %118 = vmatpush1.msra.mxu0 0.0
  %119 = vmatprep.mubr.f32.mxu0 %v50
  %120 = vmatmul.mubr.f32.gmra.mrb[0].mxu0 %v14
  %v121 = vpop.f32.mrb[0].mxu0
  %v122 = vadd.f32 %v41, %v121
  %v123 = vpop.f32.mrb[0].mxu0
  %124 = vmatprep.mubr.f32.mxu0 %v53
  %125 = vmatmul.mubr.f32.gmra.mrb[0].mxu0 %v16
  %v126 = vpop.f32.mrb[0].mxu0
  %v127 = vadd.f32 %v46, %v126
  %v128 = vpop.f32.mrb[0].mxu0
  %129 = vdwg.mxu0
  %v130 = vmax.f32 %v122, 0.0
  %v131 = vmax.f32 %v127, 0.0
  %132 = vst [vmem:[%s3] sm:$0xff] %v130
  %133 = vst [vmem:[%s3 + $0x8] sm:$0xff] %v131
  // Predicated region
  $region14: #{feature_ex_forward.21} parent=0 // pred_check
    _
  $region15: #{feature_ex_forward.21} parent=0 // pred_check_branch
    %135 = sbr.rel (0) target = $region17
  $region16: #{feature_ex_forward.21} parent=0 // pred_region
    _
  $region17: #{feature_ex_forward.21} parent=0 // pred_fallthru
    _
  // Predicated region
  $region18: #{feature_ex_forward.21} parent=0 // pred_check
    _
  $region19: #{feature_ex_forward.21} parent=0 // pred_check_branch
    %137 = sbr.rel (0) target = $region21
  $region20: #{feature_ex_forward.21} parent=0 // pred_region
    _
  $region21: #{feature_ex_forward.21} parent=0 // pred_fallthru
    _

// kernel: feature_ex_forward.23
$region0: #{feature_ex_forward.23}
  #allocation0 [shape = 'u32[]', space=smem, size = 0x4, offset = 0x4, fixed_abs, tag = 'smem constant byte address 0x4 - core index']
  #allocation1 [shape = 'u32[144,128]{1,0:T(1,128)}', space=vmem, size = 0x12000, scoped, tag = 'internal scratch']
  %s0 = inlined_call_operand.vmem [shape: f32[32,400], index: 0, kind: input, shape index: {}]
  %s1 = inlined_call_operand.vmem [shape: f32[400,32], index: 1, kind: input, shape index: {}]
  %s2 = inlined_call_operand.vmem [shape: f32[32,1], index: 2, kind: input, shape index: {}]
  %s3 = inlined_call_operand.vmem [shape: f32[32,32], index: 3, kind: output, shape index: {}]
  %s4 = sld [smem:[#allocation0]]
  $region22: #{feature_ex_forward.23} parent=0
    _
  %s6 = ssub.s32 1, %s4
  %s7 = scalar_select 0, %s6, %s4
  // Predicated region
  $region2: #{feature_ex_forward.23} parent=0 // pred_check
    _
  $region3: #{feature_ex_forward.23} parent=0 // pred_check_branch
    %9 = sbr.rel (0) target = $region5
  $region4: #{feature_ex_forward.23} parent=0 // pred_region
    _
  $region5: #{feature_ex_forward.23} parent=0 // pred_fallthru
    _
  // Predicated region
  $region6: #{feature_ex_forward.23} parent=0 // pred_check
    _
  $region7: #{feature_ex_forward.23} parent=0 // pred_check_branch
    %11 = sbr.rel (0) target = $region9
  $region8: #{feature_ex_forward.23} parent=0 // pred_region
    _
  $region9: #{feature_ex_forward.23} parent=0 // pred_fallthru
    _
  // Predicated region
  $region10: #{feature_ex_forward.23} parent=0 // pred_check
    _
  $region11: #{feature_ex_forward.23} parent=0 // pred_check_branch
    %13 = sbr.rel (0) target = $region13
  $region12: #{feature_ex_forward.23} parent=0 // pred_region
    _
  $region13: #{feature_ex_forward.23} parent=0 // pred_fallthru
    _
  %v14 = vld [vmem:[%s0] sm:$0xff]
  %v15 = vld [vmem:[%s0 + $0x8] sm:$0xff]
  %v16 = vld [vmem:[%s0 + $0x10] sm:$0xff]
  %v17 = vld [vmem:[%s0 + $0x18] sm:$0xff]
  %v18 = vld [vmem:[%s0 + $0x20] sm:$0xff]
  %v19 = vld [vmem:[%s0 + $0x28] sm:$0xff]
  %v20 = vld [vmem:[%s0 + $0x30] sm:$0xff]
  %v21 = vld [vmem:[%s0 + $0x38] sm:$0xff]
  %v22 = vld [vmem:[%s0 + $0x40] sm:$0xff]
  %v23 = vld [vmem:[%s0 + $0x48] sm:$0xff]
  %v24 = vld [vmem:[%s0 + $0x50] sm:$0xff]
  %v25 = vld [vmem:[%s0 + $0x58] sm:$0xff]
  %v26 = vld [vmem:[%s0 + $0x60] sm:$0xff]
  %v27 = vld [vmem:[%s0 + $0x68] sm:$0xff]
  %v28 = vld [vmem:[%s0 + $0x70] sm:$0xff]
  %v29 = vld [vmem:[%s0 + $0x78] sm:$0xff]
  %v30 = vld [vmem:[%s1] sm:$0xff]
  %v31 = vld [vmem:[%s1 + $0x8] sm:$0xff]
  %v32 = vld [vmem:[%s1 + $0x10] sm:$0xff]
  %v33 = vld [vmem:[%s1 + $0x18] sm:$0xff]
  %v34 = vld [vmem:[%s1 + $0x20] sm:$0xff]
  %v35 = vld [vmem:[%s1 + $0x28] sm:$0xff]
  %v36 = vld [vmem:[%s1 + $0x30] sm:$0xff]
  %v37 = vld [vmem:[%s1 + $0x38] sm:$0xff]
  %v38 = vld [vmem:[%s1 + $0x40] sm:$0xff]
  %v39 = vld [vmem:[%s1 + $0x48] sm:$0xff]
  %v40 = vld [vmem:[%s1 + $0x50] sm:$0xff]
  %v41 = vld [vmem:[%s1 + $0x58] sm:$0xff]
  %v42 = vld [vmem:[%s1 + $0x60] sm:$0xff]
  %v43 = vld [vmem:[%s1 + $0x68] sm:$0xff]
  %v44 = vld [vmem:[%s1 + $0x70] sm:$0xff]
  %v45 = vld [vmem:[%s1 + $0x78] sm:$0xff]
  %v46 = vld [vmem:[%s1 + $0x80] sm:$0xff]
  %v47 = vld [vmem:[%s1 + $0x88] sm:$0xff]
  %v48 = vld [vmem:[%s1 + $0x90] sm:$0xff]
  %v49 = vld [vmem:[%s1 + $0x98] sm:$0xff]
  %v50 = vld [vmem:[%s1 + $0xa0] sm:$0xff]
  %v51 = vld [vmem:[%s1 + $0xa8] sm:$0xff]
  %v52 = vld [vmem:[%s1 + $0xb0] sm:$0xff]
  %v53 = vld [vmem:[%s1 + $0xb8] sm:$0xff]
  %v54 = vld [vmem:[%s1 + $0xc0] sm:$0xff]
  %v55 = vld [vmem:[%s1 + $0xc8] sm:$0xff]
  %v56 = vld [vmem:[%s1 + $0xd0] sm:$0xff]
  %v57 = vld [vmem:[%s1 + $0xd8] sm:$0xff]
  %v58 = vld [vmem:[%s1 + $0xe0] sm:$0xff]
  %v59 = vld [vmem:[%s1 + $0xe8] sm:$0xff]
  %v60 = vld [vmem:[%s1 + $0xf0] sm:$0xff]
  %v61 = vld [vmem:[%s1 + $0xf8] sm:$0xff]
  %v62 = vld [vmem:[%s1 + $0x100] sm:$0xff]
  %v63 = vld [vmem:[%s1 + $0x108] sm:$0xff]
  %v64 = vld [vmem:[%s1 + $0x110] sm:$0xff]
  %v65 = vld [vmem:[%s1 + $0x118] sm:$0xff]
  %v66 = vld [vmem:[%s1 + $0x120] sm:$0xff]
  %v67 = vld [vmem:[%s1 + $0x128] sm:$0xff]
  %v68 = vld [vmem:[%s1 + $0x130] sm:$0xff]
  %v69 = vld [vmem:[%s1 + $0x138] sm:$0xff]
  %v70 = vld [vmem:[%s1 + $0x140] sm:$0xff]
  %v71 = vld [vmem:[%s1 + $0x148] sm:$0xff]
  %v72 = vld [vmem:[%s1 + $0x150] sm:$0xff]
  %v73 = vld [vmem:[%s1 + $0x158] sm:$0xff]
  %v74 = vld [vmem:[%s1 + $0x160] sm:$0xff]
  %v75 = vld [vmem:[%s1 + $0x168] sm:$0xff]
  %v76 = vld [vmem:[%s1 + $0x170] sm:$0xff]
  %v77 = vld [vmem:[%s1 + $0x178] sm:$0xff]
  %v78 = vld [vmem:[%s1 + $0x180] sm:$0xff]
  %v79 = vld [vmem:[%s1 + $0x188] sm:$0xff]
  %v80 = vld [vmem:[%s2] sm:$0xff]
  %v81 = vld [vmem:[%s2 + $0x8] sm:$0xff]
  %v82 = vld [vmem:[%s2 + $0x10] sm:$0xff]
  %v83 = vld [vmem:[%s2 + $0x18] sm:$0xff]
  %85 = vset.pattern.permute.xlu0 0
  %86 = vperm.xlu0 %85, %v80
  %v87 = vpop.permute.xlu0 %86
  %90 = vset.pattern.permute.xlu0 0
  %91 = vperm.xlu0 %90, %v81
  %v92 = vpop.permute.xlu0 %91
  %95 = vset.pattern.permute.xlu0 0
  %96 = vperm.xlu0 %95, %v82
  %v97 = vpop.permute.xlu0 %96
  %100 = vset.pattern.permute.xlu0 0
  %101 = vperm.xlu0 %100, %v83
  %v102 = vpop.permute.xlu0 %101
  %vm104 = vcmask 130048
  %v106 = vsel %vm104, %v17, 0
  %v109 = vsel %vm104, %v21, 0
  %v112 = vsel %vm104, %v25, 0
  %v115 = vsel %vm104, %v29, 0
  %117 = vmatprep.subr.mxu0 0.0
  %118 = vmatpush1.msra.mxu0 %v30
  %119 = vmatprep.subr.mxu0 0.0
  %120 = vmatpush1.msra.mxu0 %v31
  %121 = vmatprep.subr.mxu0 0.0
  %122 = vmatpush1.msra.mxu0 %v32
  %123 = vmatprep.subr.mxu0 0.0
  %124 = vmatpush1.msra.mxu0 %v33
  %125 = vmatprep.subr.mxu0 0.0
  %126 = vmatpush1.msra.mxu0 %v34
  %127 = vmatprep.subr.mxu0 0.0
  %128 = vmatpush1.msra.mxu0 %v35
  %129 = vmatprep.subr.mxu0 0.0
  %130 = vmatpush1.msra.mxu0 %v36
  %131 = vmatprep.subr.mxu0 0.0
  %132 = vmatpush1.msra.mxu0 %v37
  %133 = vmatprep.subr.mxu0 0.0
  %134 = vmatpush1.msra.mxu0 %v38
  %135 = vmatprep.subr.mxu0 0.0
  %136 = vmatpush1.msra.mxu0 %v39
  %137 = vmatprep.subr.mxu0 0.0
  %138 = vmatpush1.msra.mxu0 %v40
  %139 = vmatprep.subr.mxu0 0.0
  %140 = vmatpush1.msra.mxu0 %v41
  %141 = vmatprep.subr.mxu0 0.0
  %142 = vmatpush1.msra.mxu0 %v42
  %143 = vmatprep.subr.mxu0 0.0
  %144 = vmatpush1.msra.mxu0 %v43
  %145 = vmatprep.subr.mxu0 0.0
  %146 = vmatpush1.msra.mxu0 %v44
  %147 = vmatprep.subr.mxu0 0.0
  %148 = vmatpush1.msra.mxu0 %v45
  %149 = vmatprep.subr.mxu0 0.0
  %150 = vmatpush1.msra.mxu0 %v46
  %151 = vmatprep.subr.mxu0 0.0
  %152 = vmatpush1.msra.mxu0 %v47
  %153 = vmatprep.subr.mxu0 0.0
  %154 = vmatpush1.msra.mxu0 %v48
  %155 = vmatprep.subr.mxu0 0.0
  %156 = vmatpush1.msra.mxu0 %v49
  %157 = vmatprep.subr.mxu0 0.0
  %158 = vmatpush1.msra.mxu0 %v50
  %159 = vmatprep.subr.mxu0 0.0
  %160 = vmatpush1.msra.mxu0 %v51
  %161 = vmatprep.subr.mxu0 0.0
  %162 = vmatpush1.msra.mxu0 %v52
  %163 = vmatprep.subr.mxu0 0.0
  %164 = vmatpush1.msra.mxu0 %v53
  %165 = vmatprep.subr.mxu0 0.0
  %166 = vmatpush1.msra.mxu0 %v54
  %167 = vmatprep.subr.mxu0 0.0
  %168 = vmatpush1.msra.mxu0 %v55
  %169 = vmatprep.subr.mxu0 0.0
  %170 = vmatpush1.msra.mxu0 %v56
  %171 = vmatprep.subr.mxu0 0.0
  %172 = vmatpush1.msra.mxu0 %v57
  %173 = vmatprep.subr.mxu0 0.0
  %174 = vmatpush1.msra.mxu0 %v58
  %175 = vmatprep.subr.mxu0 0.0
  %176 = vmatpush1.msra.mxu0 %v59
  %177 = vmatprep.subr.mxu0 0.0
  %178 = vmatpush1.msra.mxu0 %v60
  %179 = vmatprep.subr.mxu0 0.0
  %180 = vmatpush1.msra.mxu0 %v61
  %181 = vmatprep.mubr.f32.mxu0 %v15
  %182 = vmatmul.mubr.f32.gmra.mrb[0].mxu0 %v14
  %v183 = vpop.f32.mrb[0].mxu0
  %v184 = vadd.f32 %v87, %v183
  %v185 = vpop.f32.mrb[0].mxu0
  %186 = vmatprep.mubr.f32.mxu0 %v19
  %187 = vmatmul.mubr.f32.gmra.mrb[0].mxu0 %v18
  %v188 = vpop.f32.mrb[0].mxu0
  %v189 = vadd.f32 %v92, %v188
  %v190 = vpop.f32.mrb[0].mxu0
  %191 = vmatprep.mubr.f32.mxu0 %v23
  %192 = vmatmul.mubr.f32.gmra.mrb[0].mxu0 %v22
  %v193 = vpop.f32.mrb[0].mxu0
  %v194 = vadd.f32 %v97, %v193
  %v195 = vpop.f32.mrb[0].mxu0
  %196 = vmatprep.mubr.f32.mxu0 %v27
  %197 = vmatmul.mubr.f32.gmra.mrb[0].mxu0 %v26
  %v198 = vpop.f32.mrb[0].mxu0
  %v199 = vadd.f32 %v102, %v198
  %v200 = vpop.f32.mrb[0].mxu0
  %201 = vdwg.mxu0
  %202 = vmatprep.subr.mxu0 0.0
  %203 = vmatpush1.msra.mxu0 %v62
  %204 = vmatprep.subr.mxu0 0.0
  %205 = vmatpush1.msra.mxu0 %v63
  %206 = vmatprep.subr.mxu0 0.0
  %207 = vmatpush1.msra.mxu0 %v64
  %208 = vmatprep.subr.mxu0 0.0
  %209 = vmatpush1.msra.mxu0 %v65
  %210 = vmatprep.subr.mxu0 0.0
  %211 = vmatpush1.msra.mxu0 %v66
  %212 = vmatprep.subr.mxu0 0.0
  %213 = vmatpush1.msra.mxu0 %v67
  %214 = vmatprep.subr.mxu0 0.0
  %215 = vmatpush1.msra.mxu0 %v68
  %216 = vmatprep.subr.mxu0 0.0
  %217 = vmatpush1.msra.mxu0 %v69
  %218 = vmatprep.subr.mxu0 0.0
  %219 = vmatpush1.msra.mxu0 %v70
  %220 = vmatprep.subr.mxu0 0.0
  %221 = vmatpush1.msra.mxu0 %v71
  %222 = vmatprep.subr.mxu0 0.0
  %223 = vmatpush1.msra.mxu0 %v72
  %224 = vmatprep.subr.mxu0 0.0
  %225 = vmatpush1.msra.mxu0 %v73
  %226 = vmatprep.subr.mxu0 0.0
  %227 = vmatpush1.msra.mxu0 %v74
  %228 = vmatprep.subr.mxu0 0.0
  %229 = vmatpush1.msra.mxu0 %v75
  %230 = vmatprep.subr.mxu0 0.0
  %231 = vmatpush1.msra.mxu0 %v76
  %232 = vmatprep.subr.mxu0 0.0
  %233 = vmatpush1.msra.mxu0 %v77
  %234 = vmatprep.subr.mxu0 0.0
  %235 = vmatpush1.msra.mxu0 %v78
  %236 = vmatprep.subr.mxu0 0.0
  %237 = vmatpush1.msra.mxu0 %v79
  %238 = vmatprep.subr.mxu0 0.0
  %239 = vmatpush1.msra.mxu0 0.0
  %240 = vmatprep.subr.mxu0 0.0
  %241 = vmatpush1.msra.mxu0 0.0
  %242 = vmatprep.subr.mxu0 0.0
  %243 = vmatpush1.msra.mxu0 0.0
  %244 = vmatprep.subr.mxu0 0.0
  %245 = vmatpush1.msra.mxu0 0.0
  %246 = vmatprep.subr.mxu0 0.0
  %247 = vmatpush1.msra.mxu0 0.0
  %248 = vmatprep.subr.mxu0 0.0
  %249 = vmatpush1.msra.mxu0 0.0
  %250 = vmatprep.subr.mxu0 0.0
  %251 = vmatpush1.msra.mxu0 0.0
  %252 = vmatprep.subr.mxu0 0.0
  %253 = vmatpush1.msra.mxu0 0.0
  %254 = vmatprep.subr.mxu0 0.0
  %255 = vmatpush1.msra.mxu0 0.0
  %256 = vmatprep.subr.mxu0 0.0
  %257 = vmatpush1.msra.mxu0 0.0
  %258 = vmatprep.subr.mxu0 0.0
  %259 = vmatpush1.msra.mxu0 0.0
  %260 = vmatprep.subr.mxu0 0.0
  %261 = vmatpush1.msra.mxu0 0.0
  %262 = vmatprep.subr.mxu0 0.0
  %263 = vmatpush1.msra.mxu0 0.0
  %264 = vmatprep.subr.mxu0 0.0
  %265 = vmatpush1.msra.mxu0 0.0
  %266 = vmatprep.mubr.f32.mxu0 %v106
  %267 = vmatmul.mubr.f32.gmra.mrb[0].mxu0 %v16
  %v268 = vpop.f32.mrb[0].mxu0
  %v269 = vadd.f32 %v184, %v268
  %v270 = vpop.f32.mrb[0].mxu0
  %271 = vmatprep.mubr.f32.mxu0 %v109
  %272 = vmatmul.mubr.f32.gmra.mrb[0].mxu0 %v20
  %v273 = vpop.f32.mrb[0].mxu0
  %v274 = vadd.f32 %v189, %v273
  %v275 = vpop.f32.mrb[0].mxu0
  %276 = vmatprep.mubr.f32.mxu0 %v112
  %277 = vmatmul.mubr.f32.gmra.mrb[0].mxu0 %v24
  %v278 = vpop.f32.mrb[0].mxu0
  %v279 = vadd.f32 %v194, %v278
  %v280 = vpop.f32.mrb[0].mxu0
  %281 = vmatprep.mubr.f32.mxu0 %v115
  %282 = vmatmul.mubr.f32.gmra.mrb[0].mxu0 %v28
  %v283 = vpop.f32.mrb[0].mxu0
  %v284 = vadd.f32 %v199, %v283
  %v285 = vpop.f32.mrb[0].mxu0
  %286 = vdwg.mxu0
  %v287 = vmax.f32 %v269, 0.0
  %v288 = vmax.f32 %v274, 0.0
  %v289 = vmax.f32 %v279, 0.0
  %v290 = vmax.f32 %v284, 0.0
  %vm291 = vcmask 261120
  %292 = vst.msk [vmem:[%s3] sm:$0xff] %vm291, %v287
  %293 = vst.msk [vmem:[%s3 + $0x8] sm:$0xff] %vm291, %v288
  %294 = vst.msk [vmem:[%s3 + $0x10] sm:$0xff] %vm291, %v289
  %295 = vst.msk [vmem:[%s3 + $0x18] sm:$0xff] %vm291, %v290
  // Predicated region
  $region14: #{feature_ex_forward.23} parent=0 // pred_check
    _
  $region15: #{feature_ex_forward.23} parent=0 // pred_check_branch
    %297 = sbr.rel (0) target = $region17
  $region16: #{feature_ex_forward.23} parent=0 // pred_region
    _
  $region17: #{feature_ex_forward.23} parent=0 // pred_fallthru
    _
  // Predicated region
  $region18: #{feature_ex_forward.23} parent=0 // pred_check
    _
  $region19: #{feature_ex_forward.23} parent=0 // pred_check_branch
    %299 = sbr.rel (0) target = $region21
  $region20: #{feature_ex_forward.23} parent=0 // pred_region
    _
  $region21: #{feature_ex_forward.23} parent=0 // pred_fallthru
    _

// kernel: feature_ex_forward.24
$region0: #{feature_ex_forward.24}
  #allocation0 [shape = 'u32[]', space=smem, size = 0x4, offset = 0x4, fixed_abs, tag = 'smem constant byte address 0x4 - core index']
  #allocation1 [shape = 'u32[144,128]{1,0:T(1,128)}', space=vmem, size = 0x12000, scoped, tag = 'internal scratch']
  %s0 = inlined_call_operand.vmem [shape: f32[32,288], index: 0, kind: input, shape index: {}]
  %s1 = inlined_call_operand.vmem [shape: f32[288,32], index: 1, kind: input, shape index: {}]
  %s2 = inlined_call_operand.vmem [shape: f32[32,1], index: 2, kind: input, shape index: {}]
  %s3 = inlined_call_operand.vmem [shape: f32[32,32], index: 3, kind: output, shape index: {}]
  %s4 = sld [smem:[#allocation0]]
  $region22: #{feature_ex_forward.24} parent=0
    _
  %s6 = ssub.s32 1, %s4
  %s7 = scalar_select 0, %s6, %s4
  // Predicated region
  $region2: #{feature_ex_forward.24} parent=0 // pred_check
    _
  $region3: #{feature_ex_forward.24} parent=0 // pred_check_branch
    %9 = sbr.rel (0) target = $region5
  $region4: #{feature_ex_forward.24} parent=0 // pred_region
    _
  $region5: #{feature_ex_forward.24} parent=0 // pred_fallthru
    _
  // Predicated region
  $region6: #{feature_ex_forward.24} parent=0 // pred_check
    _
  $region7: #{feature_ex_forward.24} parent=0 // pred_check_branch
    %11 = sbr.rel (0) target = $region9
  $region8: #{feature_ex_forward.24} parent=0 // pred_region
    _
  $region9: #{feature_ex_forward.24} parent=0 // pred_fallthru
    _
  // Predicated region
  $region10: #{feature_ex_forward.24} parent=0 // pred_check
    _
  $region11: #{feature_ex_forward.24} parent=0 // pred_check_branch
    %13 = sbr.rel (0) target = $region13
  $region12: #{feature_ex_forward.24} parent=0 // pred_region
    _
  $region13: #{feature_ex_forward.24} parent=0 // pred_fallthru
    _
  %v14 = vld [vmem:[%s0] sm:$0xff]
  %v15 = vld [vmem:[%s0 + $0x8] sm:$0xff]
  %v16 = vld [vmem:[%s0 + $0x10] sm:$0xff]
  %v17 = vld [vmem:[%s0 + $0x18] sm:$0xff]
  %v18 = vld [vmem:[%s0 + $0x20] sm:$0xff]
  %v19 = vld [vmem:[%s0 + $0x28] sm:$0xff]
  %v20 = vld [vmem:[%s0 + $0x30] sm:$0xff]
  %v21 = vld [vmem:[%s0 + $0x38] sm:$0xff]
  %v22 = vld [vmem:[%s0 + $0x40] sm:$0xff]
  %v23 = vld [vmem:[%s0 + $0x48] sm:$0xff]
  %v24 = vld [vmem:[%s0 + $0x50] sm:$0xff]
  %v25 = vld [vmem:[%s0 + $0x58] sm:$0xff]
  %v26 = vld [vmem:[%s1] sm:$0xff]
  %v27 = vld [vmem:[%s1 + $0x8] sm:$0xff]
  %v28 = vld [vmem:[%s1 + $0x10] sm:$0xff]
  %v29 = vld [vmem:[%s1 + $0x18] sm:$0xff]
  %v30 = vld [vmem:[%s1 + $0x20] sm:$0xff]
  %v31 = vld [vmem:[%s1 + $0x28] sm:$0xff]
  %v32 = vld [vmem:[%s1 + $0x30] sm:$0xff]
  %v33 = vld [vmem:[%s1 + $0x38] sm:$0xff]
  %v34 = vld [vmem:[%s1 + $0x40] sm:$0xff]
  %v35 = vld [vmem:[%s1 + $0x48] sm:$0xff]
  %v36 = vld [vmem:[%s1 + $0x50] sm:$0xff]
  %v37 = vld [vmem:[%s1 + $0x58] sm:$0xff]
  %v38 = vld [vmem:[%s1 + $0x60] sm:$0xff]
  %v39 = vld [vmem:[%s1 + $0x68] sm:$0xff]
  %v40 = vld [vmem:[%s1 + $0x70] sm:$0xff]
  %v41 = vld [vmem:[%s1 + $0x78] sm:$0xff]
  %v42 = vld [vmem:[%s1 + $0x80] sm:$0xff]
  %v43 = vld [vmem:[%s1 + $0x88] sm:$0xff]
  %v44 = vld [vmem:[%s1 + $0x90] sm:$0xff]
  %v45 = vld [vmem:[%s1 + $0x98] sm:$0xff]
  %v46 = vld [vmem:[%s1 + $0xa0] sm:$0xff]
  %v47 = vld [vmem:[%s1 + $0xa8] sm:$0xff]
  %v48 = vld [vmem:[%s1 + $0xb0] sm:$0xff]
  %v49 = vld [vmem:[%s1 + $0xb8] sm:$0xff]
  %v50 = vld [vmem:[%s1 + $0xc0] sm:$0xff]
  %v51 = vld [vmem:[%s1 + $0xc8] sm:$0xff]
  %v52 = vld [vmem:[%s1 + $0xd0] sm:$0xff]
  %v53 = vld [vmem:[%s1 + $0xd8] sm:$0xff]
  %v54 = vld [vmem:[%s1 + $0xe0] sm:$0xff]
  %v55 = vld [vmem:[%s1 + $0xe8] sm:$0xff]
  %v56 = vld [vmem:[%s1 + $0xf0] sm:$0xff]
  %v57 = vld [vmem:[%s1 + $0xf8] sm:$0xff]
  %v58 = vld [vmem:[%s1 + $0x100] sm:$0xff]
  %v59 = vld [vmem:[%s1 + $0x108] sm:$0xff]
  %v60 = vld [vmem:[%s1 + $0x110] sm:$0xff]
  %v61 = vld [vmem:[%s1 + $0x118] sm:$0xff]
  %v62 = vld [vmem:[%s2] sm:$0xff]
  %v63 = vld [vmem:[%s2 + $0x8] sm:$0xff]
  %v64 = vld [vmem:[%s2 + $0x10] sm:$0xff]
  %v65 = vld [vmem:[%s2 + $0x18] sm:$0xff]
  %67 = vset.pattern.permute.xlu0 0
  %68 = vperm.xlu0 %67, %v62
  %v69 = vpop.permute.xlu0 %68
  %72 = vset.pattern.permute.xlu0 0
  %73 = vperm.xlu0 %72, %v63
  %v74 = vpop.permute.xlu0 %73
  %77 = vset.pattern.permute.xlu0 0
  %78 = vperm.xlu0 %77, %v64
  %v79 = vpop.permute.xlu0 %78
  %82 = vset.pattern.permute.xlu0 0
  %83 = vperm.xlu0 %82, %v65
  %v84 = vpop.permute.xlu0 %83
  %vm86 = vcmask 261120
  %v88 = vsel %vm86, %v16, 0
  %v91 = vsel %vm86, %v19, 0
  %v94 = vsel %vm86, %v22, 0
  %v97 = vsel %vm86, %v25, 0
  %99 = vmatprep.subr.mxu0 0.0
  %100 = vmatpush1.msra.mxu0 %v26
  %101 = vmatprep.subr.mxu0 0.0
  %102 = vmatpush1.msra.mxu0 %v27
  %103 = vmatprep.subr.mxu0 0.0
  %104 = vmatpush1.msra.mxu0 %v28
  %105 = vmatprep.subr.mxu0 0.0
  %106 = vmatpush1.msra.mxu0 %v29
  %107 = vmatprep.subr.mxu0 0.0
  %108 = vmatpush1.msra.mxu0 %v30
  %109 = vmatprep.subr.mxu0 0.0
  %110 = vmatpush1.msra.mxu0 %v31
  %111 = vmatprep.subr.mxu0 0.0
  %112 = vmatpush1.msra.mxu0 %v32
  %113 = vmatprep.subr.mxu0 0.0
  %114 = vmatpush1.msra.mxu0 %v33
  %115 = vmatprep.subr.mxu0 0.0
  %116 = vmatpush1.msra.mxu0 %v34
  %117 = vmatprep.subr.mxu0 0.0
  %118 = vmatpush1.msra.mxu0 %v35
  %119 = vmatprep.subr.mxu0 0.0
  %120 = vmatpush1.msra.mxu0 %v36
  %121 = vmatprep.subr.mxu0 0.0
  %122 = vmatpush1.msra.mxu0 %v37
  %123 = vmatprep.subr.mxu0 0.0
  %124 = vmatpush1.msra.mxu0 %v38
  %125 = vmatprep.subr.mxu0 0.0
  %126 = vmatpush1.msra.mxu0 %v39
  %127 = vmatprep.subr.mxu0 0.0
  %128 = vmatpush1.msra.mxu0 %v40
  %129 = vmatprep.subr.mxu0 0.0
  %130 = vmatpush1.msra.mxu0 %v41
  %131 = vmatprep.subr.mxu0 0.0
  %132 = vmatpush1.msra.mxu0 %v42
  %133 = vmatprep.subr.mxu0 0.0
  %134 = vmatpush1.msra.mxu0 %v43
  %135 = vmatprep.subr.mxu0 0.0
  %136 = vmatpush1.msra.mxu0 %v44
  %137 = vmatprep.subr.mxu0 0.0
  %138 = vmatpush1.msra.mxu0 %v45
  %139 = vmatprep.subr.mxu0 0.0
  %140 = vmatpush1.msra.mxu0 %v46
  %141 = vmatprep.subr.mxu0 0.0
  %142 = vmatpush1.msra.mxu0 %v47
  %143 = vmatprep.subr.mxu0 0.0
  %144 = vmatpush1.msra.mxu0 %v48
  %145 = vmatprep.subr.mxu0 0.0
  %146 = vmatpush1.msra.mxu0 %v49
  %147 = vmatprep.subr.mxu0 0.0
  %148 = vmatpush1.msra.mxu0 %v50
  %149 = vmatprep.subr.mxu0 0.0
  %150 = vmatpush1.msra.mxu0 %v51
  %151 = vmatprep.subr.mxu0 0.0
  %152 = vmatpush1.msra.mxu0 %v52
  %153 = vmatprep.subr.mxu0 0.0
  %154 = vmatpush1.msra.mxu0 %v53
  %155 = vmatprep.subr.mxu0 0.0
  %156 = vmatpush1.msra.mxu0 %v54
  %157 = vmatprep.subr.mxu0 0.0
  %158 = vmatpush1.msra.mxu0 %v55
  %159 = vmatprep.subr.mxu0 0.0
  %160 = vmatpush1.msra.mxu0 %v56
  %161 = vmatprep.subr.mxu0 0.0
  %162 = vmatpush1.msra.mxu0 %v57
  %163 = vmatprep.mubr.f32.mxu0 %v15
  %164 = vmatmul.mubr.f32.gmra.mrb[0].mxu0 %v14
  %v165 = vpop.f32.mrb[0].mxu0
  %v166 = vadd.f32 %v69, %v165
  %v167 = vpop.f32.mrb[0].mxu0
  %168 = vmatprep.mubr.f32.mxu0 %v18
  %169 = vmatmul.mubr.f32.gmra.mrb[0].mxu0 %v17
  %v170 = vpop.f32.mrb[0].mxu0
  %v171 = vadd.f32 %v74, %v170
  %v172 = vpop.f32.mrb[0].mxu0
  %173 = vmatprep.mubr.f32.mxu0 %v21
  %174 = vmatmul.mubr.f32.gmra.mrb[0].mxu0 %v20
  %v175 = vpop.f32.mrb[0].mxu0
  %v176 = vadd.f32 %v79, %v175
  %v177 = vpop.f32.mrb[0].mxu0
  %178 = vmatprep.mubr.f32.mxu0 %v24
  %179 = vmatmul.mubr.f32.gmra.mrb[0].mxu0 %v23
  %v180 = vpop.f32.mrb[0].mxu0
  %v181 = vadd.f32 %v84, %v180
  %v182 = vpop.f32.mrb[0].mxu0
  %183 = vdwg.mxu0
  %184 = vmatprep.subr.mxu0 0.0
  %185 = vmatpush1.msra.mxu0 %v58
  %186 = vmatprep.subr.mxu0 0.0
  %187 = vmatpush1.msra.mxu0 %v59
  %188 = vmatprep.subr.mxu0 0.0
  %189 = vmatpush1.msra.mxu0 %v60
  %190 = vmatprep.subr.mxu0 0.0
  %191 = vmatpush1.msra.mxu0 %v61
  %192 = vmatprep.subr.mxu0 0.0
  %193 = vmatpush1.msra.mxu0 0.0
  %194 = vmatprep.subr.mxu0 0.0
  %195 = vmatpush1.msra.mxu0 0.0
  %196 = vmatprep.subr.mxu0 0.0
  %197 = vmatpush1.msra.mxu0 0.0
  %198 = vmatprep.subr.mxu0 0.0
  %199 = vmatpush1.msra.mxu0 0.0
  %200 = vmatprep.subr.mxu0 0.0
  %201 = vmatpush1.msra.mxu0 0.0
  %202 = vmatprep.subr.mxu0 0.0
  %203 = vmatpush1.msra.mxu0 0.0
  %204 = vmatprep.subr.mxu0 0.0
  %205 = vmatpush1.msra.mxu0 0.0
  %206 = vmatprep.subr.mxu0 0.0
  %207 = vmatpush1.msra.mxu0 0.0
  %208 = vmatprep.subr.mxu0 0.0
  %209 = vmatpush1.msra.mxu0 0.0
  %210 = vmatprep.subr.mxu0 0.0
  %211 = vmatpush1.msra.mxu0 0.0
  %212 = vmatprep.subr.mxu0 0.0
  %213 = vmatpush1.msra.mxu0 0.0
  %214 = vmatprep.subr.mxu0 0.0
  %215 = vmatpush1.msra.mxu0 0.0
  %216 = vmatprep.subr.mxu0 0.0
  %217 = vmatpush1.msra.mxu0 0.0
  %218 = vmatprep.subr.mxu0 0.0
  %219 = vmatpush1.msra.mxu0 0.0
  %220 = vmatprep.subr.mxu0 0.0
  %221 = vmatpush1.msra.mxu0 0.0
  %222 = vmatprep.subr.mxu0 0.0
  %223 = vmatpush1.msra.mxu0 0.0
  %224 = vmatprep.subr.mxu0 0.0
  %225 = vmatpush1.msra.mxu0 0.0
  %226 = vmatprep.subr.mxu0 0.0
  %227 = vmatpush1.msra.mxu0 0.0
  %228 = vmatprep.subr.mxu0 0.0
  %229 = vmatpush1.msra.mxu0 0.0
  %230 = vmatprep.subr.mxu0 0.0
  %231 = vmatpush1.msra.mxu0 0.0
  %232 = vmatprep.subr.mxu0 0.0
  %233 = vmatpush1.msra.mxu0 0.0
  %234 = vmatprep.subr.mxu0 0.0
  %235 = vmatpush1.msra.mxu0 0.0
  %236 = vmatprep.subr.mxu0 0.0
  %237 = vmatpush1.msra.mxu0 0.0
  %238 = vmatprep.subr.mxu0 0.0
  %239 = vmatpush1.msra.mxu0 0.0
  %240 = vmatprep.subr.mxu0 0.0
  %241 = vmatpush1.msra.mxu0 0.0
  %242 = vmatprep.subr.mxu0 0.0
  %243 = vmatpush1.msra.mxu0 0.0
  %244 = vmatprep.subr.mxu0 0.0
  %245 = vmatpush1.msra.mxu0 0.0
  %246 = vmatprep.subr.mxu0 0.0
  %247 = vmatpush1.msra.mxu0 0.0
  %248 = vmatprep.mubr.f32.mxu0 0.0
  %249 = vmatmul.mubr.f32.gmra.mrb[0].mxu0 %v88
  %v250 = vpop.f32.mrb[0].mxu0
  %v251 = vadd.f32 %v166, %v250
  %v252 = vpop.f32.mrb[0].mxu0
  %253 = vmatprep.mubr.f32.mxu0 0.0
  %254 = vmatmul.mubr.f32.gmra.mrb[0].mxu0 %v91
  %v255 = vpop.f32.mrb[0].mxu0
  %v256 = vadd.f32 %v171, %v255
  %v257 = vpop.f32.mrb[0].mxu0
  %258 = vmatprep.mubr.f32.mxu0 0.0
  %259 = vmatmul.mubr.f32.gmra.mrb[0].mxu0 %v94
  %v260 = vpop.f32.mrb[0].mxu0
  %v261 = vadd.f32 %v176, %v260
  %v262 = vpop.f32.mrb[0].mxu0
  %263 = vmatprep.mubr.f32.mxu0 0.0
  %264 = vmatmul.mubr.f32.gmra.mrb[0].mxu0 %v97
  %v265 = vpop.f32.mrb[0].mxu0
  %v266 = vadd.f32 %v181, %v265
  %v267 = vpop.f32.mrb[0].mxu0
  %268 = vdwg.mxu0
  %v269 = vmax.f32 %v251, 0.0
  %v270 = vmax.f32 %v256, 0.0
  %v271 = vmax.f32 %v261, 0.0
  %v272 = vmax.f32 %v266, 0.0
  %273 = vst.msk [vmem:[%s3] sm:$0xff] %vm86, %v269
  %274 = vst.msk [vmem:[%s3 + $0x8] sm:$0xff] %vm86, %v270
  %275 = vst.msk [vmem:[%s3 + $0x10] sm:$0xff] %vm86, %v271
  %276 = vst.msk [vmem:[%s3 + $0x18] sm:$0xff] %vm86, %v272
  // Predicated region
  $region14: #{feature_ex_forward.24} parent=0 // pred_check
    _
  $region15: #{feature_ex_forward.24} parent=0 // pred_check_branch
    %278 = sbr.rel (0) target = $region17
  $region16: #{feature_ex_forward.24} parent=0 // pred_region
    _
  $region17: #{feature_ex_forward.24} parent=0 // pred_fallthru
    _
  // Predicated region
  $region18: #{feature_ex_forward.24} parent=0 // pred_check
    _
  $region19: #{feature_ex_forward.24} parent=0 // pred_check_branch
    %280 = sbr.rel (0) target = $region21
  $region20: #{feature_ex_forward.24} parent=0 // pred_region
    _
  $region21: #{feature_ex_forward.24} parent=0 // pred_fallthru
    _

// kernel: feature_ex_forward.26
$region0: #{feature_ex_forward.26}
  #allocation0 [shape = 'u32[]', space=smem, size = 0x4, offset = 0x4, fixed_abs, tag = 'smem constant byte address 0x4 - core index']
  #allocation1 [shape = 'u32[144,128]{1,0:T(1,128)}', space=vmem, size = 0x12000, scoped, tag = 'internal scratch']
  %s0 = inlined_call_operand.vmem [shape: f32[64,800], index: 0, kind: input, shape index: {}]
  %s1 = inlined_call_operand.vmem [shape: f32[800,8], index: 1, kind: input, shape index: {}]
  %s2 = inlined_call_operand.vmem [shape: f32[64,1], index: 2, kind: input, shape index: {}]
  %s3 = inlined_call_operand.vmem [shape: f32[64,8], index: 3, kind: output, shape index: {}]
  %s4 = sld [smem:[#allocation0]]
  $region22: #{feature_ex_forward.26} parent=0
    _
  %s6 = ssub.s32 1, %s4
  %s7 = scalar_select 0, %s6, %s4
  // Predicated region
  $region2: #{feature_ex_forward.26} parent=0 // pred_check
    _
  $region3: #{feature_ex_forward.26} parent=0 // pred_check_branch
    %9 = sbr.rel (0) target = $region5
  $region4: #{feature_ex_forward.26} parent=0 // pred_region
    _
  $region5: #{feature_ex_forward.26} parent=0 // pred_fallthru
    _
  // Predicated region
  $region6: #{feature_ex_forward.26} parent=0 // pred_check
    _
  $region7: #{feature_ex_forward.26} parent=0 // pred_check_branch
    %11 = sbr.rel (0) target = $region9
  $region8: #{feature_ex_forward.26} parent=0 // pred_region
    _
  $region9: #{feature_ex_forward.26} parent=0 // pred_fallthru
    _
  // Predicated region
  $region10: #{feature_ex_forward.26} parent=0 // pred_check
    _
  $region11: #{feature_ex_forward.26} parent=0 // pred_check_branch
    %13 = sbr.rel (0) target = $region13
  $region12: #{feature_ex_forward.26} parent=0 // pred_region
    _
  $region13: #{feature_ex_forward.26} parent=0 // pred_fallthru
    _
  %v14 = vld [vmem:[%s0] sm:$0xff]
  %v15 = vld [vmem:[%s0 + $0x8] sm:$0xff]
  %v16 = vld [vmem:[%s0 + $0x10] sm:$0xff]
  %v17 = vld [vmem:[%s0 + $0x18] sm:$0xff]
  %v18 = vld [vmem:[%s0 + $0x20] sm:$0xff]
  %v19 = vld [vmem:[%s0 + $0x28] sm:$0xff]
  %v20 = vld [vmem:[%s0 + $0x30] sm:$0xff]
  %v21 = vld [vmem:[%s0 + $0x38] sm:$0xff]
  %v22 = vld [vmem:[%s0 + $0x40] sm:$0xff]
  %v23 = vld [vmem:[%s0 + $0x48] sm:$0xff]
  %v24 = vld [vmem:[%s0 + $0x50] sm:$0xff]
  %v25 = vld [vmem:[%s0 + $0x58] sm:$0xff]
  %v26 = vld [vmem:[%s0 + $0x60] sm:$0xff]
  %v27 = vld [vmem:[%s0 + $0x68] sm:$0xff]
  %v28 = vld [vmem:[%s0 + $0x70] sm:$0xff]
  %v29 = vld [vmem:[%s0 + $0x78] sm:$0xff]
  %v30 = vld [vmem:[%s0 + $0x80] sm:$0xff]
  %v31 = vld [vmem:[%s0 + $0x88] sm:$0xff]
  %v32 = vld [vmem:[%s0 + $0x90] sm:$0xff]
  %v33 = vld [vmem:[%s0 + $0x98] sm:$0xff]
  %v34 = vld [vmem:[%s0 + $0xa0] sm:$0xff]
  %v35 = vld [vmem:[%s0 + $0xa8] sm:$0xff]
  %v36 = vld [vmem:[%s0 + $0xb0] sm:$0xff]
  %v37 = vld [vmem:[%s0 + $0xb8] sm:$0xff]
  %v38 = vld [vmem:[%s0 + $0xc0] sm:$0xff]
  %v39 = vld [vmem:[%s0 + $0xc8] sm:$0xff]
  %v40 = vld [vmem:[%s0 + $0xd0] sm:$0xff]
  %v41 = vld [vmem:[%s0 + $0xd8] sm:$0xff]
  %v42 = vld [vmem:[%s0 + $0xe0] sm:$0xff]
  %v43 = vld [vmem:[%s0 + $0xe8] sm:$0xff]
  %v44 = vld [vmem:[%s0 + $0xf0] sm:$0xff]
  %v45 = vld [vmem:[%s0 + $0xf8] sm:$0xff]
  %v46 = vld [vmem:[%s0 + $0x100] sm:$0xff]
  %v47 = vld [vmem:[%s0 + $0x108] sm:$0xff]
  %v48 = vld [vmem:[%s0 + $0x110] sm:$0xff]
  %v49 = vld [vmem:[%s0 + $0x118] sm:$0xff]
  %v50 = vld [vmem:[%s0 + $0x120] sm:$0xff]
  %v51 = vld [vmem:[%s0 + $0x128] sm:$0xff]
  %v52 = vld [vmem:[%s0 + $0x130] sm:$0xff]
  %v53 = vld [vmem:[%s0 + $0x138] sm:$0xff]
  %v54 = vld [vmem:[%s0 + $0x140] sm:$0xff]
  %v55 = vld [vmem:[%s0 + $0x148] sm:$0xff]
  %v56 = vld [vmem:[%s0 + $0x150] sm:$0xff]
  %v57 = vld [vmem:[%s0 + $0x158] sm:$0xff]
  %v58 = vld [vmem:[%s0 + $0x160] sm:$0xff]
  %v59 = vld [vmem:[%s0 + $0x168] sm:$0xff]
  %v60 = vld [vmem:[%s0 + $0x170] sm:$0xff]
  %v61 = vld [vmem:[%s0 + $0x178] sm:$0xff]
  %v62 = vld [vmem:[%s0 + $0x180] sm:$0xff]
  %v63 = vld [vmem:[%s0 + $0x188] sm:$0xff]
  %v64 = vld [vmem:[%s0 + $0x190] sm:$0xff]
  %v65 = vld [vmem:[%s0 + $0x198] sm:$0xff]
  %v66 = vld [vmem:[%s0 + $0x1a0] sm:$0xff]
  %v67 = vld [vmem:[%s0 + $0x1a8] sm:$0xff]
  %v68 = vld [vmem:[%s0 + $0x1b0] sm:$0xff]
  %v69 = vld [vmem:[%s0 + $0x1b8] sm:$0xff]
  %v70 = vld [vmem:[%s1] sm:$0xff]
  %v71 = vld [vmem:[%s1 + $0x8] sm:$0xff]
  %v72 = vld [vmem:[%s1 + $0x10] sm:$0xff]
  %v73 = vld [vmem:[%s1 + $0x18] sm:$0xff]
  %v74 = vld [vmem:[%s1 + $0x20] sm:$0xff]
  %v75 = vld [vmem:[%s1 + $0x28] sm:$0xff]
  %v76 = vld [vmem:[%s1 + $0x30] sm:$0xff]
  %v77 = vld [vmem:[%s1 + $0x38] sm:$0xff]
  %v78 = vld [vmem:[%s1 + $0x40] sm:$0xff]
  %v79 = vld [vmem:[%s1 + $0x48] sm:$0xff]
  %v80 = vld [vmem:[%s1 + $0x50] sm:$0xff]
  %v81 = vld [vmem:[%s1 + $0x58] sm:$0xff]
  %v82 = vld [vmem:[%s1 + $0x60] sm:$0xff]
  %v83 = vld [vmem:[%s1 + $0x68] sm:$0xff]
  %v84 = vld [vmem:[%s1 + $0x70] sm:$0xff]
  %v85 = vld [vmem:[%s1 + $0x78] sm:$0xff]
  %v86 = vld [vmem:[%s1 + $0x80] sm:$0xff]
  %v87 = vld [vmem:[%s1 + $0x88] sm:$0xff]
  %v88 = vld [vmem:[%s1 + $0x90] sm:$0xff]
  %v89 = vld [vmem:[%s1 + $0x98] sm:$0xff]
  %v90 = vld [vmem:[%s1 + $0xa0] sm:$0xff]
  %v91 = vld [vmem:[%s1 + $0xa8] sm:$0xff]
  %v92 = vld [vmem:[%s1 + $0xb0] sm:$0xff]
  %v93 = vld [vmem:[%s1 + $0xb8] sm:$0xff]
  %v94 = vld [vmem:[%s1 + $0xc0] sm:$0xff]
  %v95 = vld [vmem:[%s1 + $0xc8] sm:$0xff]
  %v96 = vld [vmem:[%s1 + $0xd0] sm:$0xff]
  %v97 = vld [vmem:[%s1 + $0xd8] sm:$0xff]
  %v98 = vld [vmem:[%s1 + $0xe0] sm:$0xff]
  %v99 = vld [vmem:[%s1 + $0xe8] sm:$0xff]
  %v100 = vld [vmem:[%s1 + $0xf0] sm:$0xff]
  %v101 = vld [vmem:[%s1 + $0xf8] sm:$0xff]
  %v102 = vld [vmem:[%s1 + $0x100] sm:$0xff]
  %v103 = vld [vmem:[%s1 + $0x108] sm:$0xff]
  %v104 = vld [vmem:[%s1 + $0x110] sm:$0xff]
  %v105 = vld [vmem:[%s1 + $0x118] sm:$0xff]
  %v106 = vld [vmem:[%s1 + $0x120] sm:$0xff]
  %v107 = vld [vmem:[%s1 + $0x128] sm:$0xff]
  %v108 = vld [vmem:[%s1 + $0x130] sm:$0xff]
  %v109 = vld [vmem:[%s1 + $0x138] sm:$0xff]
  %v110 = vld [vmem:[%s1 + $0x140] sm:$0xff]
  %v111 = vld [vmem:[%s1 + $0x148] sm:$0xff]
  %v112 = vld [vmem:[%s1 + $0x150] sm:$0xff]
  %v113 = vld [vmem:[%s1 + $0x158] sm:$0xff]
  %v114 = vld [vmem:[%s1 + $0x160] sm:$0xff]
  %v115 = vld [vmem:[%s1 + $0x168] sm:$0xff]
  %v116 = vld [vmem:[%s1 + $0x170] sm:$0xff]
  %v117 = vld [vmem:[%s1 + $0x178] sm:$0xff]
  %v118 = vld [vmem:[%s1 + $0x180] sm:$0xff]
  %v119 = vld [vmem:[%s1 + $0x188] sm:$0xff]
  %v120 = vld [vmem:[%s1 + $0x190] sm:$0xff]
  %v121 = vld [vmem:[%s1 + $0x198] sm:$0xff]
  %v122 = vld [vmem:[%s1 + $0x1a0] sm:$0xff]
  %v123 = vld [vmem:[%s1 + $0x1a8] sm:$0xff]
  %v124 = vld [vmem:[%s1 + $0x1b0] sm:$0xff]
  %v125 = vld [vmem:[%s1 + $0x1b8] sm:$0xff]
  %v126 = vld [vmem:[%s1 + $0x1c0] sm:$0xff]
  %v127 = vld [vmem:[%s1 + $0x1c8] sm:$0xff]
  %v128 = vld [vmem:[%s1 + $0x1d0] sm:$0xff]
  %v129 = vld [vmem:[%s1 + $0x1d8] sm:$0xff]
  %v130 = vld [vmem:[%s1 + $0x1e0] sm:$0xff]
  %v131 = vld [vmem:[%s1 + $0x1e8] sm:$0xff]
  %v132 = vld [vmem:[%s1 + $0x1f0] sm:$0xff]
  %v133 = vld [vmem:[%s1 + $0x1f8] sm:$0xff]
  %v134 = vld [vmem:[%s1 + $0x200] sm:$0xff]
  %v135 = vld [vmem:[%s1 + $0x208] sm:$0xff]
  %v136 = vld [vmem:[%s1 + $0x210] sm:$0xff]
  %v137 = vld [vmem:[%s1 + $0x218] sm:$0xff]
  %v138 = vld [vmem:[%s1 + $0x220] sm:$0xff]
  %v139 = vld [vmem:[%s1 + $0x228] sm:$0xff]
  %v140 = vld [vmem:[%s1 + $0x230] sm:$0xff]
  %v141 = vld [vmem:[%s1 + $0x238] sm:$0xff]
  %v142 = vld [vmem:[%s1 + $0x240] sm:$0xff]
  %v143 = vld [vmem:[%s1 + $0x248] sm:$0xff]
  %v144 = vld [vmem:[%s1 + $0x250] sm:$0xff]
  %v145 = vld [vmem:[%s1 + $0x258] sm:$0xff]
  %v146 = vld [vmem:[%s1 + $0x260] sm:$0xff]
  %v147 = vld [vmem:[%s1 + $0x268] sm:$0xff]
  %v148 = vld [vmem:[%s1 + $0x270] sm:$0xff]
  %v149 = vld [vmem:[%s1 + $0x278] sm:$0xff]
  %v150 = vld [vmem:[%s1 + $0x280] sm:$0xff]
  %v151 = vld [vmem:[%s1 + $0x288] sm:$0xff]
  %v152 = vld [vmem:[%s1 + $0x290] sm:$0xff]
  %v153 = vld [vmem:[%s1 + $0x298] sm:$0xff]
  %v154 = vld [vmem:[%s1 + $0x2a0] sm:$0xff]
  %v155 = vld [vmem:[%s1 + $0x2a8] sm:$0xff]
  %v156 = vld [vmem:[%s1 + $0x2b0] sm:$0xff]
  %v157 = vld [vmem:[%s1 + $0x2b8] sm:$0xff]
  %v158 = vld [vmem:[%s1 + $0x2c0] sm:$0xff]
  %v159 = vld [vmem:[%s1 + $0x2c8] sm:$0xff]
  %v160 = vld [vmem:[%s1 + $0x2d0] sm:$0xff]
  %v161 = vld [vmem:[%s1 + $0x2d8] sm:$0xff]
  %v162 = vld [vmem:[%s1 + $0x2e0] sm:$0xff]
  %v163 = vld [vmem:[%s1 + $0x2e8] sm:$0xff]
  %v164 = vld [vmem:[%s1 + $0x2f0] sm:$0xff]
  %v165 = vld [vmem:[%s1 + $0x2f8] sm:$0xff]
  %v166 = vld [vmem:[%s1 + $0x300] sm:$0xff]
  %v167 = vld [vmem:[%s1 + $0x308] sm:$0xff]
  %v168 = vld [vmem:[%s1 + $0x310] sm:$0xff]
  %v169 = vld [vmem:[%s1 + $0x318] sm:$0xff]
  %v170 = vld [vmem:[%s2] sm:$0xff]
  %v171 = vld [vmem:[%s2 + $0x8] sm:$0xff]
  %v172 = vld [vmem:[%s2 + $0x10] sm:$0xff]
  %v173 = vld [vmem:[%s2 + $0x18] sm:$0xff]
  %v174 = vld [vmem:[%s2 + $0x20] sm:$0xff]
  %v175 = vld [vmem:[%s2 + $0x28] sm:$0xff]
  %v176 = vld [vmem:[%s2 + $0x30] sm:$0xff]
  %v177 = vld [vmem:[%s2 + $0x38] sm:$0xff]
  %179 = vset.pattern.permute.xlu0 0
  %180 = vperm.xlu0 %179, %v170
  %v181 = vpop.permute.xlu0 %180
  %184 = vset.pattern.permute.xlu0 0
  %185 = vperm.xlu0 %184, %v171
  %v186 = vpop.permute.xlu0 %185
  %189 = vset.pattern.permute.xlu0 0
  %190 = vperm.xlu0 %189, %v172
  %v191 = vpop.permute.xlu0 %190
  %194 = vset.pattern.permute.xlu0 0
  %195 = vperm.xlu0 %194, %v173
  %v196 = vpop.permute.xlu0 %195
  %199 = vset.pattern.permute.xlu0 0
  %200 = vperm.xlu0 %199, %v174
  %v201 = vpop.permute.xlu0 %200
  %204 = vset.pattern.permute.xlu0 0
  %205 = vperm.xlu0 %204, %v175
  %v206 = vpop.permute.xlu0 %205
  %209 = vset.pattern.permute.xlu0 0
  %210 = vperm.xlu0 %209, %v176
  %v211 = vpop.permute.xlu0 %210
  %214 = vset.pattern.permute.xlu0 0
  %215 = vperm.xlu0 %214, %v177
  %v216 = vpop.permute.xlu0 %215
  %vm218 = vcmask 261120
  %v220 = vsel %vm218, %v20, 0
  %v223 = vsel %vm218, %v27, 0
  %v226 = vsel %vm218, %v34, 0
  %v229 = vsel %vm218, %v41, 0
  %v232 = vsel %vm218, %v48, 0
  %v235 = vsel %vm218, %v55, 0
  %v238 = vsel %vm218, %v62, 0
  %v241 = vsel %vm218, %v69, 0
  %243 = vmatprep.subr.mxu0 0.0
  %244 = vmatpush1.msra.mxu0 %v70
  %245 = vmatprep.subr.mxu0 0.0
  %246 = vmatpush1.msra.mxu0 %v71
  %247 = vmatprep.subr.mxu0 0.0
  %248 = vmatpush1.msra.mxu0 %v72
  %249 = vmatprep.subr.mxu0 0.0
  %250 = vmatpush1.msra.mxu0 %v73
  %251 = vmatprep.subr.mxu0 0.0
  %252 = vmatpush1.msra.mxu0 %v74
  %253 = vmatprep.subr.mxu0 0.0
  %254 = vmatpush1.msra.mxu0 %v75
  %255 = vmatprep.subr.mxu0 0.0
  %256 = vmatpush1.msra.mxu0 %v76
  %257 = vmatprep.subr.mxu0 0.0
  %258 = vmatpush1.msra.mxu0 %v77
  %259 = vmatprep.subr.mxu0 0.0
  %260 = vmatpush1.msra.mxu0 %v78
  %261 = vmatprep.subr.mxu0 0.0
  %262 = vmatpush1.msra.mxu0 %v79
  %263 = vmatprep.subr.mxu0 0.0
  %264 = vmatpush1.msra.mxu0 %v80
  %265 = vmatprep.subr.mxu0 0.0
  %266 = vmatpush1.msra.mxu0 %v81
  %267 = vmatprep.subr.mxu0 0.0
  %268 = vmatpush1.msra.mxu0 %v82
  %269 = vmatprep.subr.mxu0 0.0
  %270 = vmatpush1.msra.mxu0 %v83
  %271 = vmatprep.subr.mxu0 0.0
  %272 = vmatpush1.msra.mxu0 %v84
  %273 = vmatprep.subr.mxu0 0.0
  %274 = vmatpush1.msra.mxu0 %v85
  %275 = vmatprep.subr.mxu0 0.0
  %276 = vmatpush1.msra.mxu0 %v86
  %277 = vmatprep.subr.mxu0 0.0
  %278 = vmatpush1.msra.mxu0 %v87
  %279 = vmatprep.subr.mxu0 0.0
  %280 = vmatpush1.msra.mxu0 %v88
  %281 = vmatprep.subr.mxu0 0.0
  %282 = vmatpush1.msra.mxu0 %v89
  %283 = vmatprep.subr.mxu0 0.0
  %284 = vmatpush1.msra.mxu0 %v90
  %285 = vmatprep.subr.mxu0 0.0
  %286 = vmatpush1.msra.mxu0 %v91
  %287 = vmatprep.subr.mxu0 0.0
  %288 = vmatpush1.msra.mxu0 %v92
  %289 = vmatprep.subr.mxu0 0.0
  %290 = vmatpush1.msra.mxu0 %v93
  %291 = vmatprep.subr.mxu0 0.0
  %292 = vmatpush1.msra.mxu0 %v94
  %293 = vmatprep.subr.mxu0 0.0
  %294 = vmatpush1.msra.mxu0 %v95
  %295 = vmatprep.subr.mxu0 0.0
  %296 = vmatpush1.msra.mxu0 %v96
  %297 = vmatprep.subr.mxu0 0.0
  %298 = vmatpush1.msra.mxu0 %v97
  %299 = vmatprep.subr.mxu0 0.0
  %300 = vmatpush1.msra.mxu0 %v98
  %301 = vmatprep.subr.mxu0 0.0
  %302 = vmatpush1.msra.mxu0 %v99
  %303 = vmatprep.subr.mxu0 0.0
  %304 = vmatpush1.msra.mxu0 %v100
  %305 = vmatprep.subr.mxu0 0.0
  %306 = vmatpush1.msra.mxu0 %v101
  %307 = vmatprep.mubr.f32.mxu0 %v15
  %308 = vmatmul.mubr.f32.gmra.mrb[0].mxu0 %v14
  %v309 = vpop.f32.mrb[0].mxu0
  %v310 = vadd.f32 %v181, %v309
  %v311 = vpop.f32.mrb[0].mxu0
  %312 = vmatprep.mubr.f32.mxu0 %v22
  %313 = vmatmul.mubr.f32.gmra.mrb[0].mxu0 %v21
  %v314 = vpop.f32.mrb[0].mxu0
  %v315 = vadd.f32 %v186, %v314
  %v316 = vpop.f32.mrb[0].mxu0
  %317 = vmatprep.mubr.f32.mxu0 %v29
  %318 = vmatmul.mubr.f32.gmra.mrb[0].mxu0 %v28
  %v319 = vpop.f32.mrb[0].mxu0
  %v320 = vadd.f32 %v191, %v319
  %v321 = vpop.f32.mrb[0].mxu0
  %322 = vmatprep.mubr.f32.mxu0 %v36
  %323 = vmatmul.mubr.f32.gmra.mrb[0].mxu0 %v35
  %v324 = vpop.f32.mrb[0].mxu0
  %v325 = vadd.f32 %v196, %v324
  %v326 = vpop.f32.mrb[0].mxu0
  %327 = vmatprep.mubr.f32.mxu0 %v43
  %328 = vmatmul.mubr.f32.gmra.mrb[0].mxu0 %v42
  %v329 = vpop.f32.mrb[0].mxu0
  %v330 = vadd.f32 %v201, %v329
  %v331 = vpop.f32.mrb[0].mxu0
  %332 = vmatprep.mubr.f32.mxu0 %v50
  %333 = vmatmul.mubr.f32.gmra.mrb[0].mxu0 %v49
  %v334 = vpop.f32.mrb[0].mxu0
  %v335 = vadd.f32 %v206, %v334
  %v336 = vpop.f32.mrb[0].mxu0
  %337 = vmatprep.mubr.f32.mxu0 %v57
  %338 = vmatmul.mubr.f32.gmra.mrb[0].mxu0 %v56
  %v339 = vpop.f32.mrb[0].mxu0
  %v340 = vadd.f32 %v211, %v339
  %v341 = vpop.f32.mrb[0].mxu0
  %342 = vmatprep.mubr.f32.mxu0 %v64
  %343 = vmatmul.mubr.f32.gmra.mrb[0].mxu0 %v63
  %v344 = vpop.f32.mrb[0].mxu0
  %v345 = vadd.f32 %v216, %v344
  %v346 = vpop.f32.mrb[0].mxu0
  %347 = vdwg.mxu0
  %348 = vmatprep.subr.mxu0 0.0
  %349 = vmatpush1.msra.mxu0 %v102
  %350 = vmatprep.subr.mxu0 0.0
  %351 = vmatpush1.msra.mxu0 %v103
  %352 = vmatprep.subr.mxu0 0.0
  %353 = vmatpush1.msra.mxu0 %v104
  %354 = vmatprep.subr.mxu0 0.0
  %355 = vmatpush1.msra.mxu0 %v105
  %356 = vmatprep.subr.mxu0 0.0
  %357 = vmatpush1.msra.mxu0 %v106
  %358 = vmatprep.subr.mxu0 0.0
  %359 = vmatpush1.msra.mxu0 %v107
  %360 = vmatprep.subr.mxu0 0.0
  %361 = vmatpush1.msra.mxu0 %v108
  %362 = vmatprep.subr.mxu0 0.0
  %363 = vmatpush1.msra.mxu0 %v109
  %364 = vmatprep.subr.mxu0 0.0
  %365 = vmatpush1.msra.mxu0 %v110
  %366 = vmatprep.subr.mxu0 0.0
  %367 = vmatpush1.msra.mxu0 %v111
  %368 = vmatprep.subr.mxu0 0.0
  %369 = vmatpush1.msra.mxu0 %v112
  %370 = vmatprep.subr.mxu0 0.0
  %371 = vmatpush1.msra.mxu0 %v113
  %372 = vmatprep.subr.mxu0 0.0
  %373 = vmatpush1.msra.mxu0 %v114
  %374 = vmatprep.subr.mxu0 0.0
  %375 = vmatpush1.msra.mxu0 %v115
  %376 = vmatprep.subr.mxu0 0.0
  %377 = vmatpush1.msra.mxu0 %v116
  %378 = vmatprep.subr.mxu0 0.0
  %379 = vmatpush1.msra.mxu0 %v117
  %380 = vmatprep.subr.mxu0 0.0
  %381 = vmatpush1.msra.mxu0 %v118
  %382 = vmatprep.subr.mxu0 0.0
  %383 = vmatpush1.msra.mxu0 %v119
  %384 = vmatprep.subr.mxu0 0.0
  %385 = vmatpush1.msra.mxu0 %v120
  %386 = vmatprep.subr.mxu0 0.0
  %387 = vmatpush1.msra.mxu0 %v121
  %388 = vmatprep.subr.mxu0 0.0
  %389 = vmatpush1.msra.mxu0 %v122
  %390 = vmatprep.subr.mxu0 0.0
  %391 = vmatpush1.msra.mxu0 %v123
  %392 = vmatprep.subr.mxu0 0.0
  %393 = vmatpush1.msra.mxu0 %v124
  %394 = vmatprep.subr.mxu0 0.0
  %395 = vmatpush1.msra.mxu0 %v125
  %396 = vmatprep.subr.mxu0 0.0
  %397 = vmatpush1.msra.mxu0 %v126
  %398 = vmatprep.subr.mxu0 0.0
  %399 = vmatpush1.msra.mxu0 %v127
  %400 = vmatprep.subr.mxu0 0.0
  %401 = vmatpush1.msra.mxu0 %v128
  %402 = vmatprep.subr.mxu0 0.0
  %403 = vmatpush1.msra.mxu0 %v129
  %404 = vmatprep.subr.mxu0 0.0
  %405 = vmatpush1.msra.mxu0 %v130
  %406 = vmatprep.subr.mxu0 0.0
  %407 = vmatpush1.msra.mxu0 %v131
  %408 = vmatprep.subr.mxu0 0.0
  %409 = vmatpush1.msra.mxu0 %v132
  %410 = vmatprep.subr.mxu0 0.0
  %411 = vmatpush1.msra.mxu0 %v133
  %412 = vmatprep.mubr.f32.mxu0 %v17
  %413 = vmatmul.mubr.f32.gmra.mrb[0].mxu0 %v16
  %v414 = vpop.f32.mrb[0].mxu0
  %v415 = vadd.f32 %v310, %v414
  %v416 = vpop.f32.mrb[0].mxu0
  %417 = vmatprep.mubr.f32.mxu0 %v24
  %418 = vmatmul.mubr.f32.gmra.mrb[0].mxu0 %v23
  %v419 = vpop.f32.mrb[0].mxu0
  %v420 = vadd.f32 %v315, %v419
  %v421 = vpop.f32.mrb[0].mxu0
  %422 = vmatprep.mubr.f32.mxu0 %v31
  %423 = vmatmul.mubr.f32.gmra.mrb[0].mxu0 %v30
  %v424 = vpop.f32.mrb[0].mxu0
  %v425 = vadd.f32 %v320, %v424
  %v426 = vpop.f32.mrb[0].mxu0
  %427 = vmatprep.mubr.f32.mxu0 %v38
  %428 = vmatmul.mubr.f32.gmra.mrb[0].mxu0 %v37
  %v429 = vpop.f32.mrb[0].mxu0
  %v430 = vadd.f32 %v325, %v429
  %v431 = vpop.f32.mrb[0].mxu0
  %432 = vmatprep.mubr.f32.mxu0 %v45
  %433 = vmatmul.mubr.f32.gmra.mrb[0].mxu0 %v44
  %v434 = vpop.f32.mrb[0].mxu0
  %v435 = vadd.f32 %v330, %v434
  %v436 = vpop.f32.mrb[0].mxu0
  %437 = vmatprep.mubr.f32.mxu0 %v52
  %438 = vmatmul.mubr.f32.gmra.mrb[0].mxu0 %v51
  %v439 = vpop.f32.mrb[0].mxu0
  %v440 = vadd.f32 %v335, %v439
  %v441 = vpop.f32.mrb[0].mxu0
  %442 = vmatprep.mubr.f32.mxu0 %v59
  %443 = vmatmul.mubr.f32.gmra.mrb[0].mxu0 %v58
  %v444 = vpop.f32.mrb[0].mxu0
  %v445 = vadd.f32 %v340, %v444
  %v446 = vpop.f32.mrb[0].mxu0
  %447 = vmatprep.mubr.f32.mxu0 %v66
  %448 = vmatmul.mubr.f32.gmra.mrb[0].mxu0 %v65
  %v449 = vpop.f32.mrb[0].mxu0
  %v450 = vadd.f32 %v345, %v449
  %v451 = vpop.f32.mrb[0].mxu0
  %452 = vdwg.mxu0
  %453 = vmatprep.subr.mxu0 0.0
  %454 = vmatpush1.msra.mxu0 %v134
  %455 = vmatprep.subr.mxu0 0.0
  %456 = vmatpush1.msra.mxu0 %v135
  %457 = vmatprep.subr.mxu0 0.0
  %458 = vmatpush1.msra.mxu0 %v136
  %459 = vmatprep.subr.mxu0 0.0
  %460 = vmatpush1.msra.mxu0 %v137
  %461 = vmatprep.subr.mxu0 0.0
  %462 = vmatpush1.msra.mxu0 %v138
  %463 = vmatprep.subr.mxu0 0.0
  %464 = vmatpush1.msra.mxu0 %v139
  %465 = vmatprep.subr.mxu0 0.0
  %466 = vmatpush1.msra.mxu0 %v140
  %467 = vmatprep.subr.mxu0 0.0
  %468 = vmatpush1.msra.mxu0 %v141
  %469 = vmatprep.subr.mxu0 0.0
  %470 = vmatpush1.msra.mxu0 %v142
  %471 = vmatprep.subr.mxu0 0.0
  %472 = vmatpush1.msra.mxu0 %v143
  %473 = vmatprep.subr.mxu0 0.0
  %474 = vmatpush1.msra.mxu0 %v144
  %475 = vmatprep.subr.mxu0 0.0
  %476 = vmatpush1.msra.mxu0 %v145
  %477 = vmatprep.subr.mxu0 0.0
  %478 = vmatpush1.msra.mxu0 %v146
  %479 = vmatprep.subr.mxu0 0.0
  %480 = vmatpush1.msra.mxu0 %v147
  %481 = vmatprep.subr.mxu0 0.0
  %482 = vmatpush1.msra.mxu0 %v148
  %483 = vmatprep.subr.mxu0 0.0
  %484 = vmatpush1.msra.mxu0 %v149
  %485 = vmatprep.subr.mxu0 0.0
  %486 = vmatpush1.msra.mxu0 %v150
  %487 = vmatprep.subr.mxu0 0.0
  %488 = vmatpush1.msra.mxu0 %v151
  %489 = vmatprep.subr.mxu0 0.0
  %490 = vmatpush1.msra.mxu0 %v152
  %491 = vmatprep.subr.mxu0 0.0
  %492 = vmatpush1.msra.mxu0 %v153
  %493 = vmatprep.subr.mxu0 0.0
  %494 = vmatpush1.msra.mxu0 %v154
  %495 = vmatprep.subr.mxu0 0.0
  %496 = vmatpush1.msra.mxu0 %v155
  %497 = vmatprep.subr.mxu0 0.0
  %498 = vmatpush1.msra.mxu0 %v156
  %499 = vmatprep.subr.mxu0 0.0
  %500 = vmatpush1.msra.mxu0 %v157
  %501 = vmatprep.subr.mxu0 0.0
  %502 = vmatpush1.msra.mxu0 %v158
  %503 = vmatprep.subr.mxu0 0.0
  %504 = vmatpush1.msra.mxu0 %v159
  %505 = vmatprep.subr.mxu0 0.0
  %506 = vmatpush1.msra.mxu0 %v160
  %507 = vmatprep.subr.mxu0 0.0
  %508 = vmatpush1.msra.mxu0 %v161
  %509 = vmatprep.subr.mxu0 0.0
  %510 = vmatpush1.msra.mxu0 %v162
  %511 = vmatprep.subr.mxu0 0.0
  %512 = vmatpush1.msra.mxu0 %v163
  %513 = vmatprep.subr.mxu0 0.0
  %514 = vmatpush1.msra.mxu0 %v164
  %515 = vmatprep.subr.mxu0 0.0
  %516 = vmatpush1.msra.mxu0 %v165
  %517 = vmatprep.mubr.f32.mxu0 %v19
  %518 = vmatmul.mubr.f32.gmra.mrb[0].mxu0 %v18
  %v519 = vpop.f32.mrb[0].mxu0
  %v520 = vadd.f32 %v415, %v519
  %v521 = vpop.f32.mrb[0].mxu0
  %522 = vmatprep.mubr.f32.mxu0 %v26
  %523 = vmatmul.mubr.f32.gmra.mrb[0].mxu0 %v25
  %v524 = vpop.f32.mrb[0].mxu0
  %v525 = vadd.f32 %v420, %v524
  %v526 = vpop.f32.mrb[0].mxu0
  %527 = vmatprep.mubr.f32.mxu0 %v33
  %528 = vmatmul.mubr.f32.gmra.mrb[0].mxu0 %v32
  %v529 = vpop.f32.mrb[0].mxu0
  %v530 = vadd.f32 %v425, %v529
  %v531 = vpop.f32.mrb[0].mxu0
  %532 = vmatprep.mubr.f32.mxu0 %v40
  %533 = vmatmul.mubr.f32.gmra.mrb[0].mxu0 %v39
  %v534 = vpop.f32.mrb[0].mxu0
  %v535 = vadd.f32 %v430, %v534
  %v536 = vpop.f32.mrb[0].mxu0
  %537 = vmatprep.mubr.f32.mxu0 %v47
  %538 = vmatmul.mubr.f32.gmra.mrb[0].mxu0 %v46
  %v539 = vpop.f32.mrb[0].mxu0
  %v540 = vadd.f32 %v435, %v539
  %v541 = vpop.f32.mrb[0].mxu0
  %542 = vmatprep.mubr.f32.mxu0 %v54
  %543 = vmatmul.mubr.f32.gmra.mrb[0].mxu0 %v53
  %v544 = vpop.f32.mrb[0].mxu0
  %v545 = vadd.f32 %v440, %v544
  %v546 = vpop.f32.mrb[0].mxu0
  %547 = vmatprep.mubr.f32.mxu0 %v61
  %548 = vmatmul.mubr.f32.gmra.mrb[0].mxu0 %v60
  %v549 = vpop.f32.mrb[0].mxu0
  %v550 = vadd.f32 %v445, %v549
  %v551 = vpop.f32.mrb[0].mxu0
  %552 = vmatprep.mubr.f32.mxu0 %v68
  %553 = vmatmul.mubr.f32.gmra.mrb[0].mxu0 %v67
  %v554 = vpop.f32.mrb[0].mxu0
  %v555 = vadd.f32 %v450, %v554
  %v556 = vpop.f32.mrb[0].mxu0
  %557 = vdwg.mxu0
  %558 = vmatprep.subr.mxu0 0.0
  %559 = vmatpush1.msra.mxu0 %v166
  %560 = vmatprep.subr.mxu0 0.0
  %561 = vmatpush1.msra.mxu0 %v167
  %562 = vmatprep.subr.mxu0 0.0
  %563 = vmatpush1.msra.mxu0 %v168
  %564 = vmatprep.subr.mxu0 0.0
  %565 = vmatpush1.msra.mxu0 %v169
  %566 = vmatprep.subr.mxu0 0.0
  %567 = vmatpush1.msra.mxu0 0.0
  %568 = vmatprep.subr.mxu0 0.0
  %569 = vmatpush1.msra.mxu0 0.0
  %570 = vmatprep.subr.mxu0 0.0
  %571 = vmatpush1.msra.mxu0 0.0
  %572 = vmatprep.subr.mxu0 0.0
  %573 = vmatpush1.msra.mxu0 0.0
  %574 = vmatprep.subr.mxu0 0.0
  %575 = vmatpush1.msra.mxu0 0.0
  %576 = vmatprep.subr.mxu0 0.0
  %577 = vmatpush1.msra.mxu0 0.0
  %578 = vmatprep.subr.mxu0 0.0
  %579 = vmatpush1.msra.mxu0 0.0
  %580 = vmatprep.subr.mxu0 0.0
  %581 = vmatpush1.msra.mxu0 0.0
  %582 = vmatprep.subr.mxu0 0.0
  %583 = vmatpush1.msra.mxu0 0.0
  %584 = vmatprep.subr.mxu0 0.0
  %585 = vmatpush1.msra.mxu0 0.0
  %586 = vmatprep.subr.mxu0 0.0
  %587 = vmatpush1.msra.mxu0 0.0
  %588 = vmatprep.subr.mxu0 0.0
  %589 = vmatpush1.msra.mxu0 0.0
  %590 = vmatprep.subr.mxu0 0.0
  %591 = vmatpush1.msra.mxu0 0.0
  %592 = vmatprep.subr.mxu0 0.0
  %593 = vmatpush1.msra.mxu0 0.0
  %594 = vmatprep.subr.mxu0 0.0
  %595 = vmatpush1.msra.mxu0 0.0
  %596 = vmatprep.subr.mxu0 0.0
  %597 = vmatpush1.msra.mxu0 0.0
  %598 = vmatprep.subr.mxu0 0.0
  %599 = vmatpush1.msra.mxu0 0.0
  %600 = vmatprep.subr.mxu0 0.0
  %601 = vmatpush1.msra.mxu0 0.0
  %602 = vmatprep.subr.mxu0 0.0
  %603 = vmatpush1.msra.mxu0 0.0
  %604 = vmatprep.subr.mxu0 0.0
  %605 = vmatpush1.msra.mxu0 0.0
  %606 = vmatprep.subr.mxu0 0.0
  %607 = vmatpush1.msra.mxu0 0.0
  %608 = vmatprep.subr.mxu0 0.0
  %609 = vmatpush1.msra.mxu0 0.0
  %610 = vmatprep.subr.mxu0 0.0
  %611 = vmatpush1.msra.mxu0 0.0
  %612 = vmatprep.subr.mxu0 0.0
  %613 = vmatpush1.msra.mxu0 0.0
  %614 = vmatprep.subr.mxu0 0.0
  %615 = vmatpush1.msra.mxu0 0.0
  %616 = vmatprep.subr.mxu0 0.0
  %617 = vmatpush1.msra.mxu0 0.0
  %618 = vmatprep.subr.mxu0 0.0
  %619 = vmatpush1.msra.mxu0 0.0
  %620 = vmatprep.subr.mxu0 0.0
  %621 = vmatpush1.msra.mxu0 0.0
  %622 = vmatprep.mubr.f32.mxu0 0.0
  %623 = vmatmul.mubr.f32.gmra.mrb[0].mxu0 %v220
  %v624 = vpop.f32.mrb[0].mxu0
  %v625 = vadd.f32 %v520, %v624
  %v626 = vpop.f32.mrb[0].mxu0
  %627 = vmatprep.mubr.f32.mxu0 0.0
  %628 = vmatmul.mubr.f32.gmra.mrb[0].mxu0 %v223
  %v629 = vpop.f32.mrb[0].mxu0
  %v630 = vadd.f32 %v525, %v629
  %v631 = vpop.f32.mrb[0].mxu0
  %632 = vmatprep.mubr.f32.mxu0 0.0
  %633 = vmatmul.mubr.f32.gmra.mrb[0].mxu0 %v226
  %v634 = vpop.f32.mrb[0].mxu0
  %v635 = vadd.f32 %v530, %v634
  %v636 = vpop.f32.mrb[0].mxu0
  %637 = vmatprep.mubr.f32.mxu0 0.0
  %638 = vmatmul.mubr.f32.gmra.mrb[0].mxu0 %v229
  %v639 = vpop.f32.mrb[0].mxu0
  %v640 = vadd.f32 %v535, %v639
  %v641 = vpop.f32.mrb[0].mxu0
  %642 = vmatprep.mubr.f32.mxu0 0.0
  %643 = vmatmul.mubr.f32.gmra.mrb[0].mxu0 %v232
  %v644 = vpop.f32.mrb[0].mxu0
  %v645 = vadd.f32 %v540, %v644
  %v646 = vpop.f32.mrb[0].mxu0
  %647 = vmatprep.mubr.f32.mxu0 0.0
  %648 = vmatmul.mubr.f32.gmra.mrb[0].mxu0 %v235
  %v649 = vpop.f32.mrb[0].mxu0
  %v650 = vadd.f32 %v545, %v649
  %v651 = vpop.f32.mrb[0].mxu0
  %652 = vmatprep.mubr.f32.mxu0 0.0
  %653 = vmatmul.mubr.f32.gmra.mrb[0].mxu0 %v238
  %v654 = vpop.f32.mrb[0].mxu0
  %v655 = vadd.f32 %v550, %v654
  %v656 = vpop.f32.mrb[0].mxu0
  %657 = vmatprep.mubr.f32.mxu0 0.0
  %658 = vmatmul.mubr.f32.gmra.mrb[0].mxu0 %v241
  %v659 = vpop.f32.mrb[0].mxu0
  %v660 = vadd.f32 %v555, %v659
  %v661 = vpop.f32.mrb[0].mxu0
  %662 = vdwg.mxu0
  %v663 = vmax.f32 %v625, 0.0
  %v664 = vmax.f32 %v630, 0.0
  %v665 = vmax.f32 %v635, 0.0
  %v666 = vmax.f32 %v640, 0.0
  %v667 = vmax.f32 %v645, 0.0
  %v668 = vmax.f32 %v650, 0.0
  %v669 = vmax.f32 %v655, 0.0
  %v670 = vmax.f32 %v660, 0.0
  %vm671 = vcmask 64512
  %672 = vst.msk [vmem:[%s3] sm:$0xff] %vm671, %v663
  %673 = vst.msk [vmem:[%s3 + $0x8] sm:$0xff] %vm671, %v664
  %674 = vst.msk [vmem:[%s3 + $0x10] sm:$0xff] %vm671, %v665
  %675 = vst.msk [vmem:[%s3 + $0x18] sm:$0xff] %vm671, %v666
  %676 = vst.msk [vmem:[%s3 + $0x20] sm:$0xff] %vm671, %v667
  %677 = vst.msk [vmem:[%s3 + $0x28] sm:$0xff] %vm671, %v668
  %678 = vst.msk [vmem:[%s3 + $0x30] sm:$0xff] %vm671, %v669
  %679 = vst.msk [vmem:[%s3 + $0x38] sm:$0xff] %vm671, %v670
  // Predicated region
  $region14: #{feature_ex_forward.26} parent=0 // pred_check
    _
  $region15: #{feature_ex_forward.26} parent=0 // pred_check_branch
    %681 = sbr.rel (0) target = $region17
  $region16: #{feature_ex_forward.26} parent=0 // pred_region
    _
  $region17: #{feature_ex_forward.26} parent=0 // pred_fallthru
    _
  // Predicated region
  $region18: #{feature_ex_forward.26} parent=0 // pred_check
    _
  $region19: #{feature_ex_forward.26} parent=0 // pred_check_branch
    %683 = sbr.rel (0) target = $region21
  $region20: #{feature_ex_forward.26} parent=0 // pred_region
    _
  $region21: #{feature_ex_forward.26} parent=0 // pred_fallthru
    _

// kernel: feature_ex_forward.29
$region0: #{feature_ex_forward.29}
  #allocation0 [shape = 'u32[]', space=smem, size = 0x4, offset = 0x4, fixed_abs, tag = 'smem constant byte address 0x4 - core index']
  #allocation1 [shape = 'u32[144,128]{1,0:T(1,128)}', space=vmem, size = 0x12000, scoped, tag = 'internal scratch']
  %s0 = inlined_call_operand.vmem [shape: f32[64,64], index: 0, kind: input, shape index: {}]
  %s1 = inlined_call_operand.vmem [shape: f32[64,8], index: 1, kind: input, shape index: {}]
  %s2 = inlined_call_operand.vmem [shape: f32[64,1], index: 2, kind: input, shape index: {}]
  %s3 = inlined_call_operand.vmem [shape: f32[64,8], index: 3, kind: output, shape index: {}]
  %s4 = sld [smem:[#allocation0]]
  $region22: #{feature_ex_forward.29} parent=0
    _
  %s6 = ssub.s32 1, %s4
  %s7 = scalar_select 0, %s6, %s4
  // Predicated region
  $region2: #{feature_ex_forward.29} parent=0 // pred_check
    _
  $region3: #{feature_ex_forward.29} parent=0 // pred_check_branch
    %9 = sbr.rel (0) target = $region5
  $region4: #{feature_ex_forward.29} parent=0 // pred_region
    _
  $region5: #{feature_ex_forward.29} parent=0 // pred_fallthru
    _
  // Predicated region
  $region6: #{feature_ex_forward.29} parent=0 // pred_check
    _
  $region7: #{feature_ex_forward.29} parent=0 // pred_check_branch
    %11 = sbr.rel (0) target = $region9
  $region8: #{feature_ex_forward.29} parent=0 // pred_region
    _
  $region9: #{feature_ex_forward.29} parent=0 // pred_fallthru
    _
  // Predicated region
  $region10: #{feature_ex_forward.29} parent=0 // pred_check
    _
  $region11: #{feature_ex_forward.29} parent=0 // pred_check_branch
    %13 = sbr.rel (0) target = $region13
  $region12: #{feature_ex_forward.29} parent=0 // pred_region
    _
  $region13: #{feature_ex_forward.29} parent=0 // pred_fallthru
    _
  %v14 = vld [vmem:[%s0] sm:$0xff]
  %v15 = vld [vmem:[%s0 + $0x8] sm:$0xff]
  %v16 = vld [vmem:[%s0 + $0x10] sm:$0xff]
  %v17 = vld [vmem:[%s0 + $0x18] sm:$0xff]
  %v18 = vld [vmem:[%s0 + $0x20] sm:$0xff]
  %v19 = vld [vmem:[%s0 + $0x28] sm:$0xff]
  %v20 = vld [vmem:[%s0 + $0x30] sm:$0xff]
  %v21 = vld [vmem:[%s0 + $0x38] sm:$0xff]
  %v22 = vld [vmem:[%s1] sm:$0xff]
  %v23 = vld [vmem:[%s1 + $0x8] sm:$0xff]
  %v24 = vld [vmem:[%s1 + $0x10] sm:$0xff]
  %v25 = vld [vmem:[%s1 + $0x18] sm:$0xff]
  %v26 = vld [vmem:[%s1 + $0x20] sm:$0xff]
  %v27 = vld [vmem:[%s1 + $0x28] sm:$0xff]
  %v28 = vld [vmem:[%s1 + $0x30] sm:$0xff]
  %v29 = vld [vmem:[%s1 + $0x38] sm:$0xff]
  %v30 = vld [vmem:[%s2] sm:$0xff]
  %v31 = vld [vmem:[%s2 + $0x8] sm:$0xff]
  %v32 = vld [vmem:[%s2 + $0x10] sm:$0xff]
  %v33 = vld [vmem:[%s2 + $0x18] sm:$0xff]
  %v34 = vld [vmem:[%s2 + $0x20] sm:$0xff]
  %v35 = vld [vmem:[%s2 + $0x28] sm:$0xff]
  %v36 = vld [vmem:[%s2 + $0x30] sm:$0xff]
  %v37 = vld [vmem:[%s2 + $0x38] sm:$0xff]
  %39 = vset.pattern.permute.xlu0 0
  %40 = vperm.xlu0 %39, %v30
  %v41 = vpop.permute.xlu0 %40
  %44 = vset.pattern.permute.xlu0 0
  %45 = vperm.xlu0 %44, %v31
  %v46 = vpop.permute.xlu0 %45
  %49 = vset.pattern.permute.xlu0 0
  %50 = vperm.xlu0 %49, %v32
  %v51 = vpop.permute.xlu0 %50
  %54 = vset.pattern.permute.xlu0 0
  %55 = vperm.xlu0 %54, %v33
  %v56 = vpop.permute.xlu0 %55
  %59 = vset.pattern.permute.xlu0 0
  %60 = vperm.xlu0 %59, %v34
  %v61 = vpop.permute.xlu0 %60
  %64 = vset.pattern.permute.xlu0 0
  %65 = vperm.xlu0 %64, %v35
  %v66 = vpop.permute.xlu0 %65
  %69 = vset.pattern.permute.xlu0 0
  %70 = vperm.xlu0 %69, %v36
  %v71 = vpop.permute.xlu0 %70
  %74 = vset.pattern.permute.xlu0 0
  %75 = vperm.xlu0 %74, %v37
  %v76 = vpop.permute.xlu0 %75
  %vm78 = vcmask 523264
  %v80 = vsel %vm78, %v14, 0
  %v83 = vsel %vm78, %v15, 0
  %v86 = vsel %vm78, %v16, 0
  %v89 = vsel %vm78, %v17, 0
  %v92 = vsel %vm78, %v18, 0
  %v95 = vsel %vm78, %v19, 0
  %v98 = vsel %vm78, %v20, 0
  %v101 = vsel %vm78, %v21, 0
  %103 = vmatprep.subr.mxu0 0.0
  %104 = vmatpush1.msra.mxu0 %v22
  %105 = vmatprep.subr.mxu0 0.0
  %106 = vmatpush1.msra.mxu0 %v23
  %107 = vmatprep.subr.mxu0 0.0
  %108 = vmatpush1.msra.mxu0 %v24
  %109 = vmatprep.subr.mxu0 0.0
  %110 = vmatpush1.msra.mxu0 %v25
  %111 = vmatprep.subr.mxu0 0.0
  %112 = vmatpush1.msra.mxu0 %v26
  %113 = vmatprep.subr.mxu0 0.0
  %114 = vmatpush1.msra.mxu0 %v27
  %115 = vmatprep.subr.mxu0 0.0
  %116 = vmatpush1.msra.mxu0 %v28
  %117 = vmatprep.subr.mxu0 0.0
  %118 = vmatpush1.msra.mxu0 %v29
  %119 = vmatprep.subr.mxu0 0.0
  %120 = vmatpush1.msra.mxu0 0.0
  %121 = vmatprep.subr.mxu0 0.0
  %122 = vmatpush1.msra.mxu0 0.0
  %123 = vmatprep.subr.mxu0 0.0
  %124 = vmatpush1.msra.mxu0 0.0
  %125 = vmatprep.subr.mxu0 0.0
  %126 = vmatpush1.msra.mxu0 0.0
  %127 = vmatprep.subr.mxu0 0.0
  %128 = vmatpush1.msra.mxu0 0.0
  %129 = vmatprep.subr.mxu0 0.0
  %130 = vmatpush1.msra.mxu0 0.0
  %131 = vmatprep.subr.mxu0 0.0
  %132 = vmatpush1.msra.mxu0 0.0
  %133 = vmatprep.subr.mxu0 0.0
  %134 = vmatpush1.msra.mxu0 0.0
  %135 = vmatprep.subr.mxu0 0.0
  %136 = vmatpush1.msra.mxu0 0.0
  %137 = vmatprep.subr.mxu0 0.0
  %138 = vmatpush1.msra.mxu0 0.0
  %139 = vmatprep.subr.mxu0 0.0
  %140 = vmatpush1.msra.mxu0 0.0
  %141 = vmatprep.subr.mxu0 0.0
  %142 = vmatpush1.msra.mxu0 0.0
  %143 = vmatprep.subr.mxu0 0.0
  %144 = vmatpush1.msra.mxu0 0.0
  %145 = vmatprep.subr.mxu0 0.0
  %146 = vmatpush1.msra.mxu0 0.0
  %147 = vmatprep.subr.mxu0 0.0
  %148 = vmatpush1.msra.mxu0 0.0
  %149 = vmatprep.subr.mxu0 0.0
  %150 = vmatpush1.msra.mxu0 0.0
  %151 = vmatprep.subr.mxu0 0.0
  %152 = vmatpush1.msra.mxu0 0.0
  %153 = vmatprep.subr.mxu0 0.0
  %154 = vmatpush1.msra.mxu0 0.0
  %155 = vmatprep.subr.mxu0 0.0
  %156 = vmatpush1.msra.mxu0 0.0
  %157 = vmatprep.subr.mxu0 0.0
  %158 = vmatpush1.msra.mxu0 0.0
  %159 = vmatprep.subr.mxu0 0.0
  %160 = vmatpush1.msra.mxu0 0.0
  %161 = vmatprep.subr.mxu0 0.0
  %162 = vmatpush1.msra.mxu0 0.0
  %163 = vmatprep.subr.mxu0 0.0
  %164 = vmatpush1.msra.mxu0 0.0
  %165 = vmatprep.subr.mxu0 0.0
  %166 = vmatpush1.msra.mxu0 0.0
  %167 = vmatprep.mubr.f32.mxu0 0.0
  %168 = vmatmul.mubr.f32.gmra.mrb[0].mxu0 %v80
  %v169 = vpop.f32.mrb[0].mxu0
  %v170 = vadd.f32 %v41, %v169
  %v171 = vpop.f32.mrb[0].mxu0
  %172 = vmatprep.mubr.f32.mxu0 0.0
  %173 = vmatmul.mubr.f32.gmra.mrb[0].mxu0 %v83
  %v174 = vpop.f32.mrb[0].mxu0
  %v175 = vadd.f32 %v46, %v174
  %v176 = vpop.f32.mrb[0].mxu0
  %177 = vmatprep.mubr.f32.mxu0 0.0
  %178 = vmatmul.mubr.f32.gmra.mrb[0].mxu0 %v86
  %v179 = vpop.f32.mrb[0].mxu0
  %v180 = vadd.f32 %v51, %v179
  %v181 = vpop.f32.mrb[0].mxu0
  %182 = vmatprep.mubr.f32.mxu0 0.0
  %183 = vmatmul.mubr.f32.gmra.mrb[0].mxu0 %v89
  %v184 = vpop.f32.mrb[0].mxu0
  %v185 = vadd.f32 %v56, %v184
  %v186 = vpop.f32.mrb[0].mxu0
  %187 = vmatprep.mubr.f32.mxu0 0.0
  %188 = vmatmul.mubr.f32.gmra.mrb[0].mxu0 %v92
  %v189 = vpop.f32.mrb[0].mxu0
  %v190 = vadd.f32 %v61, %v189
  %v191 = vpop.f32.mrb[0].mxu0
  %192 = vmatprep.mubr.f32.mxu0 0.0
  %193 = vmatmul.mubr.f32.gmra.mrb[0].mxu0 %v95
  %v194 = vpop.f32.mrb[0].mxu0
  %v195 = vadd.f32 %v66, %v194
  %v196 = vpop.f32.mrb[0].mxu0
  %197 = vmatprep.mubr.f32.mxu0 0.0
  %198 = vmatmul.mubr.f32.gmra.mrb[0].mxu0 %v98
  %v199 = vpop.f32.mrb[0].mxu0
  %v200 = vadd.f32 %v71, %v199
  %v201 = vpop.f32.mrb[0].mxu0
  %202 = vmatprep.mubr.f32.mxu0 0.0
  %203 = vmatmul.mubr.f32.gmra.mrb[0].mxu0 %v101
  %v204 = vpop.f32.mrb[0].mxu0
  %v205 = vadd.f32 %v76, %v204
  %v206 = vpop.f32.mrb[0].mxu0
  %207 = vdwg.mxu0
  %vm208 = vcmask 64512
  %209 = vst.msk [vmem:[%s3] sm:$0xff] %vm208, %v170
  %210 = vst.msk [vmem:[%s3 + $0x8] sm:$0xff] %vm208, %v175
  %211 = vst.msk [vmem:[%s3 + $0x10] sm:$0xff] %vm208, %v180
  %212 = vst.msk [vmem:[%s3 + $0x18] sm:$0xff] %vm208, %v185
  %213 = vst.msk [vmem:[%s3 + $0x20] sm:$0xff] %vm208, %v190
  %214 = vst.msk [vmem:[%s3 + $0x28] sm:$0xff] %vm208, %v195
  %215 = vst.msk [vmem:[%s3 + $0x30] sm:$0xff] %vm208, %v200
  %216 = vst.msk [vmem:[%s3 + $0x38] sm:$0xff] %vm208, %v205
  // Predicated region
  $region14: #{feature_ex_forward.29} parent=0 // pred_check
    _
  $region15: #{feature_ex_forward.29} parent=0 // pred_check_branch
    %218 = sbr.rel (0) target = $region17
  $region16: #{feature_ex_forward.29} parent=0 // pred_region
    _
  $region17: #{feature_ex_forward.29} parent=0 // pred_fallthru
    _
  // Predicated region
  $region18: #{feature_ex_forward.29} parent=0 // pred_check
    _
  $region19: #{feature_ex_forward.29} parent=0 // pred_check_branch
    %220 = sbr.rel (0) target = $region21
  $region20: #{feature_ex_forward.29} parent=0 // pred_region
    _
  $region21: #{feature_ex_forward.29} parent=0 // pred_fallthru
    _

// kernel: feature_ex_forward.27
$region0: #{feature_ex_forward.27}
  #allocation0 [shape = 'u32[]', space=smem, size = 0x4, offset = 0x4, fixed_abs, tag = 'smem constant byte address 0x4 - core index']
  #allocation1 [shape = 'u32[144,128]{1,0:T(1,128)}', space=vmem, size = 0x12000, scoped, tag = 'internal scratch']
  %s0 = inlined_call_operand.vmem [shape: f32[64,576], index: 0, kind: input, shape index: {}]
  %s1 = inlined_call_operand.vmem [shape: f32[576,8], index: 1, kind: input, shape index: {}]
  %s2 = inlined_call_operand.vmem [shape: f32[64,1], index: 2, kind: input, shape index: {}]
  %s3 = inlined_call_operand.vmem [shape: f32[64,8], index: 3, kind: output, shape index: {}]
  %s4 = sld [smem:[#allocation0]]
  $region22: #{feature_ex_forward.27} parent=0
    _
  %s6 = ssub.s32 1, %s4
  %s7 = scalar_select 0, %s6, %s4
  // Predicated region
  $region2: #{feature_ex_forward.27} parent=0 // pred_check
    _
  $region3: #{feature_ex_forward.27} parent=0 // pred_check_branch
    %9 = sbr.rel (0) target = $region5
  $region4: #{feature_ex_forward.27} parent=0 // pred_region
    _
  $region5: #{feature_ex_forward.27} parent=0 // pred_fallthru
    _
  // Predicated region
  $region6: #{feature_ex_forward.27} parent=0 // pred_check
    _
  $region7: #{feature_ex_forward.27} parent=0 // pred_check_branch
    %11 = sbr.rel (0) target = $region9
  $region8: #{feature_ex_forward.27} parent=0 // pred_region
    _
  $region9: #{feature_ex_forward.27} parent=0 // pred_fallthru
    _
  // Predicated region
  $region10: #{feature_ex_forward.27} parent=0 // pred_check
    _
  $region11: #{feature_ex_forward.27} parent=0 // pred_check_branch
    %13 = sbr.rel (0) target = $region13
  $region12: #{feature_ex_forward.27} parent=0 // pred_region
    _
  $region13: #{feature_ex_forward.27} parent=0 // pred_fallthru
    _
  %v14 = vld [vmem:[%s0] sm:$0xff]
  %v15 = vld [vmem:[%s0 + $0x8] sm:$0xff]
  %v16 = vld [vmem:[%s0 + $0x10] sm:$0xff]
  %v17 = vld [vmem:[%s0 + $0x18] sm:$0xff]
  %v18 = vld [vmem:[%s0 + $0x20] sm:$0xff]
  %v19 = vld [vmem:[%s0 + $0x28] sm:$0xff]
  %v20 = vld [vmem:[%s0 + $0x30] sm:$0xff]
  %v21 = vld [vmem:[%s0 + $0x38] sm:$0xff]
  %v22 = vld [vmem:[%s0 + $0x40] sm:$0xff]
  %v23 = vld [vmem:[%s0 + $0x48] sm:$0xff]
  %v24 = vld [vmem:[%s0 + $0x50] sm:$0xff]
  %v25 = vld [vmem:[%s0 + $0x58] sm:$0xff]
  %v26 = vld [vmem:[%s0 + $0x60] sm:$0xff]
  %v27 = vld [vmem:[%s0 + $0x68] sm:$0xff]
  %v28 = vld [vmem:[%s0 + $0x70] sm:$0xff]
  %v29 = vld [vmem:[%s0 + $0x78] sm:$0xff]
  %v30 = vld [vmem:[%s0 + $0x80] sm:$0xff]
  %v31 = vld [vmem:[%s0 + $0x88] sm:$0xff]
  %v32 = vld [vmem:[%s0 + $0x90] sm:$0xff]
  %v33 = vld [vmem:[%s0 + $0x98] sm:$0xff]
  %v34 = vld [vmem:[%s0 + $0xa0] sm:$0xff]
  %v35 = vld [vmem:[%s0 + $0xa8] sm:$0xff]
  %v36 = vld [vmem:[%s0 + $0xb0] sm:$0xff]
  %v37 = vld [vmem:[%s0 + $0xb8] sm:$0xff]
  %v38 = vld [vmem:[%s0 + $0xc0] sm:$0xff]
  %v39 = vld [vmem:[%s0 + $0xc8] sm:$0xff]
  %v40 = vld [vmem:[%s0 + $0xd0] sm:$0xff]
  %v41 = vld [vmem:[%s0 + $0xd8] sm:$0xff]
  %v42 = vld [vmem:[%s0 + $0xe0] sm:$0xff]
  %v43 = vld [vmem:[%s0 + $0xe8] sm:$0xff]
  %v44 = vld [vmem:[%s0 + $0xf0] sm:$0xff]
  %v45 = vld [vmem:[%s0 + $0xf8] sm:$0xff]
  %v46 = vld [vmem:[%s0 + $0x100] sm:$0xff]
  %v47 = vld [vmem:[%s0 + $0x108] sm:$0xff]
  %v48 = vld [vmem:[%s0 + $0x110] sm:$0xff]
  %v49 = vld [vmem:[%s0 + $0x118] sm:$0xff]
  %v50 = vld [vmem:[%s0 + $0x120] sm:$0xff]
  %v51 = vld [vmem:[%s0 + $0x128] sm:$0xff]
  %v52 = vld [vmem:[%s0 + $0x130] sm:$0xff]
  %v53 = vld [vmem:[%s0 + $0x138] sm:$0xff]
  %v54 = vld [vmem:[%s1] sm:$0xff]
  %v55 = vld [vmem:[%s1 + $0x8] sm:$0xff]
  %v56 = vld [vmem:[%s1 + $0x10] sm:$0xff]
  %v57 = vld [vmem:[%s1 + $0x18] sm:$0xff]
  %v58 = vld [vmem:[%s1 + $0x20] sm:$0xff]
  %v59 = vld [vmem:[%s1 + $0x28] sm:$0xff]
  %v60 = vld [vmem:[%s1 + $0x30] sm:$0xff]
  %v61 = vld [vmem:[%s1 + $0x38] sm:$0xff]
  %v62 = vld [vmem:[%s1 + $0x40] sm:$0xff]
  %v63 = vld [vmem:[%s1 + $0x48] sm:$0xff]
  %v64 = vld [vmem:[%s1 + $0x50] sm:$0xff]
  %v65 = vld [vmem:[%s1 + $0x58] sm:$0xff]
  %v66 = vld [vmem:[%s1 + $0x60] sm:$0xff]
  %v67 = vld [vmem:[%s1 + $0x68] sm:$0xff]
  %v68 = vld [vmem:[%s1 + $0x70] sm:$0xff]
  %v69 = vld [vmem:[%s1 + $0x78] sm:$0xff]
  %v70 = vld [vmem:[%s1 + $0x80] sm:$0xff]
  %v71 = vld [vmem:[%s1 + $0x88] sm:$0xff]
  %v72 = vld [vmem:[%s1 + $0x90] sm:$0xff]
  %v73 = vld [vmem:[%s1 + $0x98] sm:$0xff]
  %v74 = vld [vmem:[%s1 + $0xa0] sm:$0xff]
  %v75 = vld [vmem:[%s1 + $0xa8] sm:$0xff]
  %v76 = vld [vmem:[%s1 + $0xb0] sm:$0xff]
  %v77 = vld [vmem:[%s1 + $0xb8] sm:$0xff]
  %v78 = vld [vmem:[%s1 + $0xc0] sm:$0xff]
  %v79 = vld [vmem:[%s1 + $0xc8] sm:$0xff]
  %v80 = vld [vmem:[%s1 + $0xd0] sm:$0xff]
  %v81 = vld [vmem:[%s1 + $0xd8] sm:$0xff]
  %v82 = vld [vmem:[%s1 + $0xe0] sm:$0xff]
  %v83 = vld [vmem:[%s1 + $0xe8] sm:$0xff]
  %v84 = vld [vmem:[%s1 + $0xf0] sm:$0xff]
  %v85 = vld [vmem:[%s1 + $0xf8] sm:$0xff]
  %v86 = vld [vmem:[%s1 + $0x100] sm:$0xff]
  %v87 = vld [vmem:[%s1 + $0x108] sm:$0xff]
  %v88 = vld [vmem:[%s1 + $0x110] sm:$0xff]
  %v89 = vld [vmem:[%s1 + $0x118] sm:$0xff]
  %v90 = vld [vmem:[%s1 + $0x120] sm:$0xff]
  %v91 = vld [vmem:[%s1 + $0x128] sm:$0xff]
  %v92 = vld [vmem:[%s1 + $0x130] sm:$0xff]
  %v93 = vld [vmem:[%s1 + $0x138] sm:$0xff]
  %v94 = vld [vmem:[%s1 + $0x140] sm:$0xff]
  %v95 = vld [vmem:[%s1 + $0x148] sm:$0xff]
  %v96 = vld [vmem:[%s1 + $0x150] sm:$0xff]
  %v97 = vld [vmem:[%s1 + $0x158] sm:$0xff]
  %v98 = vld [vmem:[%s1 + $0x160] sm:$0xff]
  %v99 = vld [vmem:[%s1 + $0x168] sm:$0xff]
  %v100 = vld [vmem:[%s1 + $0x170] sm:$0xff]
  %v101 = vld [vmem:[%s1 + $0x178] sm:$0xff]
  %v102 = vld [vmem:[%s1 + $0x180] sm:$0xff]
  %v103 = vld [vmem:[%s1 + $0x188] sm:$0xff]
  %v104 = vld [vmem:[%s1 + $0x190] sm:$0xff]
  %v105 = vld [vmem:[%s1 + $0x198] sm:$0xff]
  %v106 = vld [vmem:[%s1 + $0x1a0] sm:$0xff]
  %v107 = vld [vmem:[%s1 + $0x1a8] sm:$0xff]
  %v108 = vld [vmem:[%s1 + $0x1b0] sm:$0xff]
  %v109 = vld [vmem:[%s1 + $0x1b8] sm:$0xff]
  %v110 = vld [vmem:[%s1 + $0x1c0] sm:$0xff]
  %v111 = vld [vmem:[%s1 + $0x1c8] sm:$0xff]
  %v112 = vld [vmem:[%s1 + $0x1d0] sm:$0xff]
  %v113 = vld [vmem:[%s1 + $0x1d8] sm:$0xff]
  %v114 = vld [vmem:[%s1 + $0x1e0] sm:$0xff]
  %v115 = vld [vmem:[%s1 + $0x1e8] sm:$0xff]
  %v116 = vld [vmem:[%s1 + $0x1f0] sm:$0xff]
  %v117 = vld [vmem:[%s1 + $0x1f8] sm:$0xff]
  %v118 = vld [vmem:[%s1 + $0x200] sm:$0xff]
  %v119 = vld [vmem:[%s1 + $0x208] sm:$0xff]
  %v120 = vld [vmem:[%s1 + $0x210] sm:$0xff]
  %v121 = vld [vmem:[%s1 + $0x218] sm:$0xff]
  %v122 = vld [vmem:[%s1 + $0x220] sm:$0xff]
  %v123 = vld [vmem:[%s1 + $0x228] sm:$0xff]
  %v124 = vld [vmem:[%s1 + $0x230] sm:$0xff]
  %v125 = vld [vmem:[%s1 + $0x238] sm:$0xff]
  %v126 = vld [vmem:[%s2] sm:$0xff]
  %v127 = vld [vmem:[%s2 + $0x8] sm:$0xff]
  %v128 = vld [vmem:[%s2 + $0x10] sm:$0xff]
  %v129 = vld [vmem:[%s2 + $0x18] sm:$0xff]
  %v130 = vld [vmem:[%s2 + $0x20] sm:$0xff]
  %v131 = vld [vmem:[%s2 + $0x28] sm:$0xff]
  %v132 = vld [vmem:[%s2 + $0x30] sm:$0xff]
  %v133 = vld [vmem:[%s2 + $0x38] sm:$0xff]
  %135 = vset.pattern.permute.xlu0 0
  %136 = vperm.xlu0 %135, %v126
  %v137 = vpop.permute.xlu0 %136
  %140 = vset.pattern.permute.xlu0 0
  %141 = vperm.xlu0 %140, %v127
  %v142 = vpop.permute.xlu0 %141
  %145 = vset.pattern.permute.xlu0 0
  %146 = vperm.xlu0 %145, %v128
  %v147 = vpop.permute.xlu0 %146
  %150 = vset.pattern.permute.xlu0 0
  %151 = vperm.xlu0 %150, %v129
  %v152 = vpop.permute.xlu0 %151
  %155 = vset.pattern.permute.xlu0 0
  %156 = vperm.xlu0 %155, %v130
  %v157 = vpop.permute.xlu0 %156
  %160 = vset.pattern.permute.xlu0 0
  %161 = vperm.xlu0 %160, %v131
  %v162 = vpop.permute.xlu0 %161
  %165 = vset.pattern.permute.xlu0 0
  %166 = vperm.xlu0 %165, %v132
  %v167 = vpop.permute.xlu0 %166
  %170 = vset.pattern.permute.xlu0 0
  %171 = vperm.xlu0 %170, %v133
  %v172 = vpop.permute.xlu0 %171
  %vm174 = vcmask 523264
  %v176 = vsel %vm174, %v18, 0
  %v179 = vsel %vm174, %v23, 0
  %v182 = vsel %vm174, %v28, 0
  %v185 = vsel %vm174, %v33, 0
  %v188 = vsel %vm174, %v38, 0
  %v191 = vsel %vm174, %v43, 0
  %v194 = vsel %vm174, %v48, 0
  %v197 = vsel %vm174, %v53, 0
  %199 = vmatprep.subr.mxu0 0.0
  %200 = vmatpush1.msra.mxu0 %v54
  %201 = vmatprep.subr.mxu0 0.0
  %202 = vmatpush1.msra.mxu0 %v55
  %203 = vmatprep.subr.mxu0 0.0
  %204 = vmatpush1.msra.mxu0 %v56
  %205 = vmatprep.subr.mxu0 0.0
  %206 = vmatpush1.msra.mxu0 %v57
  %207 = vmatprep.subr.mxu0 0.0
  %208 = vmatpush1.msra.mxu0 %v58
  %209 = vmatprep.subr.mxu0 0.0
  %210 = vmatpush1.msra.mxu0 %v59
  %211 = vmatprep.subr.mxu0 0.0
  %212 = vmatpush1.msra.mxu0 %v60
  %213 = vmatprep.subr.mxu0 0.0
  %214 = vmatpush1.msra.mxu0 %v61
  %215 = vmatprep.subr.mxu0 0.0
  %216 = vmatpush1.msra.mxu0 %v62
  %217 = vmatprep.subr.mxu0 0.0
  %218 = vmatpush1.msra.mxu0 %v63
  %219 = vmatprep.subr.mxu0 0.0
  %220 = vmatpush1.msra.mxu0 %v64
  %221 = vmatprep.subr.mxu0 0.0
  %222 = vmatpush1.msra.mxu0 %v65
  %223 = vmatprep.subr.mxu0 0.0
  %224 = vmatpush1.msra.mxu0 %v66
  %225 = vmatprep.subr.mxu0 0.0
  %226 = vmatpush1.msra.mxu0 %v67
  %227 = vmatprep.subr.mxu0 0.0
  %228 = vmatpush1.msra.mxu0 %v68
  %229 = vmatprep.subr.mxu0 0.0
  %230 = vmatpush1.msra.mxu0 %v69
  %231 = vmatprep.subr.mxu0 0.0
  %232 = vmatpush1.msra.mxu0 %v70
  %233 = vmatprep.subr.mxu0 0.0
  %234 = vmatpush1.msra.mxu0 %v71
  %235 = vmatprep.subr.mxu0 0.0
  %236 = vmatpush1.msra.mxu0 %v72
  %237 = vmatprep.subr.mxu0 0.0
  %238 = vmatpush1.msra.mxu0 %v73
  %239 = vmatprep.subr.mxu0 0.0
  %240 = vmatpush1.msra.mxu0 %v74
  %241 = vmatprep.subr.mxu0 0.0
  %242 = vmatpush1.msra.mxu0 %v75
  %243 = vmatprep.subr.mxu0 0.0
  %244 = vmatpush1.msra.mxu0 %v76
  %245 = vmatprep.subr.mxu0 0.0
  %246 = vmatpush1.msra.mxu0 %v77
  %247 = vmatprep.subr.mxu0 0.0
  %248 = vmatpush1.msra.mxu0 %v78
  %249 = vmatprep.subr.mxu0 0.0
  %250 = vmatpush1.msra.mxu0 %v79
  %251 = vmatprep.subr.mxu0 0.0
  %252 = vmatpush1.msra.mxu0 %v80
  %253 = vmatprep.subr.mxu0 0.0
  %254 = vmatpush1.msra.mxu0 %v81
  %255 = vmatprep.subr.mxu0 0.0
  %256 = vmatpush1.msra.mxu0 %v82
  %257 = vmatprep.subr.mxu0 0.0
  %258 = vmatpush1.msra.mxu0 %v83
  %259 = vmatprep.subr.mxu0 0.0
  %260 = vmatpush1.msra.mxu0 %v84
  %261 = vmatprep.subr.mxu0 0.0
  %262 = vmatpush1.msra.mxu0 %v85
  %263 = vmatprep.mubr.f32.mxu0 %v15
  %264 = vmatmul.mubr.f32.gmra.mrb[0].mxu0 %v14
  %v265 = vpop.f32.mrb[0].mxu0
  %v266 = vadd.f32 %v137, %v265
  %v267 = vpop.f32.mrb[0].mxu0
  %268 = vmatprep.mubr.f32.mxu0 %v20
  %269 = vmatmul.mubr.f32.gmra.mrb[0].mxu0 %v19
  %v270 = vpop.f32.mrb[0].mxu0
  %v271 = vadd.f32 %v142, %v270
  %v272 = vpop.f32.mrb[0].mxu0
  %273 = vmatprep.mubr.f32.mxu0 %v25
  %274 = vmatmul.mubr.f32.gmra.mrb[0].mxu0 %v24
  %v275 = vpop.f32.mrb[0].mxu0
  %v276 = vadd.f32 %v147, %v275
  %v277 = vpop.f32.mrb[0].mxu0
  %278 = vmatprep.mubr.f32.mxu0 %v30
  %279 = vmatmul.mubr.f32.gmra.mrb[0].mxu0 %v29
  %v280 = vpop.f32.mrb[0].mxu0
  %v281 = vadd.f32 %v152, %v280
  %v282 = vpop.f32.mrb[0].mxu0
  %283 = vmatprep.mubr.f32.mxu0 %v35
  %284 = vmatmul.mubr.f32.gmra.mrb[0].mxu0 %v34
  %v285 = vpop.f32.mrb[0].mxu0
  %v286 = vadd.f32 %v157, %v285
  %v287 = vpop.f32.mrb[0].mxu0
  %288 = vmatprep.mubr.f32.mxu0 %v40
  %289 = vmatmul.mubr.f32.gmra.mrb[0].mxu0 %v39
  %v290 = vpop.f32.mrb[0].mxu0
  %v291 = vadd.f32 %v162, %v290
  %v292 = vpop.f32.mrb[0].mxu0
  %293 = vmatprep.mubr.f32.mxu0 %v45
  %294 = vmatmul.mubr.f32.gmra.mrb[0].mxu0 %v44
  %v295 = vpop.f32.mrb[0].mxu0
  %v296 = vadd.f32 %v167, %v295
  %v297 = vpop.f32.mrb[0].mxu0
  %298 = vmatprep.mubr.f32.mxu0 %v50
  %299 = vmatmul.mubr.f32.gmra.mrb[0].mxu0 %v49
  %v300 = vpop.f32.mrb[0].mxu0
  %v301 = vadd.f32 %v172, %v300
  %v302 = vpop.f32.mrb[0].mxu0
  %303 = vdwg.mxu0
  %304 = vmatprep.subr.mxu0 0.0
  %305 = vmatpush1.msra.mxu0 %v86
  %306 = vmatprep.subr.mxu0 0.0
  %307 = vmatpush1.msra.mxu0 %v87
  %308 = vmatprep.subr.mxu0 0.0
  %309 = vmatpush1.msra.mxu0 %v88
  %310 = vmatprep.subr.mxu0 0.0
  %311 = vmatpush1.msra.mxu0 %v89
  %312 = vmatprep.subr.mxu0 0.0
  %313 = vmatpush1.msra.mxu0 %v90
  %314 = vmatprep.subr.mxu0 0.0
  %315 = vmatpush1.msra.mxu0 %v91
  %316 = vmatprep.subr.mxu0 0.0
  %317 = vmatpush1.msra.mxu0 %v92
  %318 = vmatprep.subr.mxu0 0.0
  %319 = vmatpush1.msra.mxu0 %v93
  %320 = vmatprep.subr.mxu0 0.0
  %321 = vmatpush1.msra.mxu0 %v94
  %322 = vmatprep.subr.mxu0 0.0
  %323 = vmatpush1.msra.mxu0 %v95
  %324 = vmatprep.subr.mxu0 0.0
  %325 = vmatpush1.msra.mxu0 %v96
  %326 = vmatprep.subr.mxu0 0.0
  %327 = vmatpush1.msra.mxu0 %v97
  %328 = vmatprep.subr.mxu0 0.0
  %329 = vmatpush1.msra.mxu0 %v98
  %330 = vmatprep.subr.mxu0 0.0
  %331 = vmatpush1.msra.mxu0 %v99
  %332 = vmatprep.subr.mxu0 0.0
  %333 = vmatpush1.msra.mxu0 %v100
  %334 = vmatprep.subr.mxu0 0.0
  %335 = vmatpush1.msra.mxu0 %v101
  %336 = vmatprep.subr.mxu0 0.0
  %337 = vmatpush1.msra.mxu0 %v102
  %338 = vmatprep.subr.mxu0 0.0
  %339 = vmatpush1.msra.mxu0 %v103
  %340 = vmatprep.subr.mxu0 0.0
  %341 = vmatpush1.msra.mxu0 %v104
  %342 = vmatprep.subr.mxu0 0.0
  %343 = vmatpush1.msra.mxu0 %v105
  %344 = vmatprep.subr.mxu0 0.0
  %345 = vmatpush1.msra.mxu0 %v106
  %346 = vmatprep.subr.mxu0 0.0
  %347 = vmatpush1.msra.mxu0 %v107
  %348 = vmatprep.subr.mxu0 0.0
  %349 = vmatpush1.msra.mxu0 %v108
  %350 = vmatprep.subr.mxu0 0.0
  %351 = vmatpush1.msra.mxu0 %v109
  %352 = vmatprep.subr.mxu0 0.0
  %353 = vmatpush1.msra.mxu0 %v110
  %354 = vmatprep.subr.mxu0 0.0
  %355 = vmatpush1.msra.mxu0 %v111
  %356 = vmatprep.subr.mxu0 0.0
  %357 = vmatpush1.msra.mxu0 %v112
  %358 = vmatprep.subr.mxu0 0.0
  %359 = vmatpush1.msra.mxu0 %v113
  %360 = vmatprep.subr.mxu0 0.0
  %361 = vmatpush1.msra.mxu0 %v114
  %362 = vmatprep.subr.mxu0 0.0
  %363 = vmatpush1.msra.mxu0 %v115
  %364 = vmatprep.subr.mxu0 0.0
  %365 = vmatpush1.msra.mxu0 %v116
  %366 = vmatprep.subr.mxu0 0.0
  %367 = vmatpush1.msra.mxu0 %v117
  %368 = vmatprep.mubr.f32.mxu0 %v17
  %369 = vmatmul.mubr.f32.gmra.mrb[0].mxu0 %v16
  %v370 = vpop.f32.mrb[0].mxu0
  %v371 = vadd.f32 %v266, %v370
  %v372 = vpop.f32.mrb[0].mxu0
  %373 = vmatprep.mubr.f32.mxu0 %v22
  %374 = vmatmul.mubr.f32.gmra.mrb[0].mxu0 %v21
  %v375 = vpop.f32.mrb[0].mxu0
  %v376 = vadd.f32 %v271, %v375
  %v377 = vpop.f32.mrb[0].mxu0
  %378 = vmatprep.mubr.f32.mxu0 %v27
  %379 = vmatmul.mubr.f32.gmra.mrb[0].mxu0 %v26
  %v380 = vpop.f32.mrb[0].mxu0
  %v381 = vadd.f32 %v276, %v380
  %v382 = vpop.f32.mrb[0].mxu0
  %383 = vmatprep.mubr.f32.mxu0 %v32
  %384 = vmatmul.mubr.f32.gmra.mrb[0].mxu0 %v31
  %v385 = vpop.f32.mrb[0].mxu0
  %v386 = vadd.f32 %v281, %v385
  %v387 = vpop.f32.mrb[0].mxu0
  %388 = vmatprep.mubr.f32.mxu0 %v37
  %389 = vmatmul.mubr.f32.gmra.mrb[0].mxu0 %v36
  %v390 = vpop.f32.mrb[0].mxu0
  %v391 = vadd.f32 %v286, %v390
  %v392 = vpop.f32.mrb[0].mxu0
  %393 = vmatprep.mubr.f32.mxu0 %v42
  %394 = vmatmul.mubr.f32.gmra.mrb[0].mxu0 %v41
  %v395 = vpop.f32.mrb[0].mxu0
  %v396 = vadd.f32 %v291, %v395
  %v397 = vpop.f32.mrb[0].mxu0
  %398 = vmatprep.mubr.f32.mxu0 %v47
  %399 = vmatmul.mubr.f32.gmra.mrb[0].mxu0 %v46
  %v400 = vpop.f32.mrb[0].mxu0
  %v401 = vadd.f32 %v296, %v400
  %v402 = vpop.f32.mrb[0].mxu0
  %403 = vmatprep.mubr.f32.mxu0 %v52
  %404 = vmatmul.mubr.f32.gmra.mrb[0].mxu0 %v51
  %v405 = vpop.f32.mrb[0].mxu0
  %v406 = vadd.f32 %v301, %v405
  %v407 = vpop.f32.mrb[0].mxu0
  %408 = vdwg.mxu0
  %409 = vmatprep.subr.mxu0 0.0
  %410 = vmatpush1.msra.mxu0 %v118
  %411 = vmatprep.subr.mxu0 0.0
  %412 = vmatpush1.msra.mxu0 %v119
  %413 = vmatprep.subr.mxu0 0.0
  %414 = vmatpush1.msra.mxu0 %v120
  %415 = vmatprep.subr.mxu0 0.0
  %416 = vmatpush1.msra.mxu0 %v121
  %417 = vmatprep.subr.mxu0 0.0
  %418 = vmatpush1.msra.mxu0 %v122
  %419 = vmatprep.subr.mxu0 0.0
  %420 = vmatpush1.msra.mxu0 %v123
  %421 = vmatprep.subr.mxu0 0.0
  %422 = vmatpush1.msra.mxu0 %v124
  %423 = vmatprep.subr.mxu0 0.0
  %424 = vmatpush1.msra.mxu0 %v125
  %425 = vmatprep.subr.mxu0 0.0
  %426 = vmatpush1.msra.mxu0 0.0
  %427 = vmatprep.subr.mxu0 0.0
  %428 = vmatpush1.msra.mxu0 0.0
  %429 = vmatprep.subr.mxu0 0.0
  %430 = vmatpush1.msra.mxu0 0.0
  %431 = vmatprep.subr.mxu0 0.0
  %432 = vmatpush1.msra.mxu0 0.0
  %433 = vmatprep.subr.mxu0 0.0
  %434 = vmatpush1.msra.mxu0 0.0
  %435 = vmatprep.subr.mxu0 0.0
  %436 = vmatpush1.msra.mxu0 0.0
  %437 = vmatprep.subr.mxu0 0.0
  %438 = vmatpush1.msra.mxu0 0.0
  %439 = vmatprep.subr.mxu0 0.0
  %440 = vmatpush1.msra.mxu0 0.0
  %441 = vmatprep.subr.mxu0 0.0
  %442 = vmatpush1.msra.mxu0 0.0
  %443 = vmatprep.subr.mxu0 0.0
  %444 = vmatpush1.msra.mxu0 0.0
  %445 = vmatprep.subr.mxu0 0.0
  %446 = vmatpush1.msra.mxu0 0.0
  %447 = vmatprep.subr.mxu0 0.0
  %448 = vmatpush1.msra.mxu0 0.0
  %449 = vmatprep.subr.mxu0 0.0
  %450 = vmatpush1.msra.mxu0 0.0
  %451 = vmatprep.subr.mxu0 0.0
  %452 = vmatpush1.msra.mxu0 0.0
  %453 = vmatprep.subr.mxu0 0.0
  %454 = vmatpush1.msra.mxu0 0.0
  %455 = vmatprep.subr.mxu0 0.0
  %456 = vmatpush1.msra.mxu0 0.0
  %457 = vmatprep.subr.mxu0 0.0
  %458 = vmatpush1.msra.mxu0 0.0
  %459 = vmatprep.subr.mxu0 0.0
  %460 = vmatpush1.msra.mxu0 0.0
  %461 = vmatprep.subr.mxu0 0.0
  %462 = vmatpush1.msra.mxu0 0.0
  %463 = vmatprep.subr.mxu0 0.0
  %464 = vmatpush1.msra.mxu0 0.0
  %465 = vmatprep.subr.mxu0 0.0
  %466 = vmatpush1.msra.mxu0 0.0
  %467 = vmatprep.subr.mxu0 0.0
  %468 = vmatpush1.msra.mxu0 0.0
  %469 = vmatprep.subr.mxu0 0.0
  %470 = vmatpush1.msra.mxu0 0.0
  %471 = vmatprep.subr.mxu0 0.0
  %472 = vmatpush1.msra.mxu0 0.0
  %473 = vmatprep.mubr.f32.mxu0 0.0
  %474 = vmatmul.mubr.f32.gmra.mrb[0].mxu0 %v176
  %v475 = vpop.f32.mrb[0].mxu0
  %v476 = vadd.f32 %v371, %v475
  %v477 = vpop.f32.mrb[0].mxu0
  %478 = vmatprep.mubr.f32.mxu0 0.0
  %479 = vmatmul.mubr.f32.gmra.mrb[0].mxu0 %v179
  %v480 = vpop.f32.mrb[0].mxu0
  %v481 = vadd.f32 %v376, %v480
  %v482 = vpop.f32.mrb[0].mxu0
  %483 = vmatprep.mubr.f32.mxu0 0.0
  %484 = vmatmul.mubr.f32.gmra.mrb[0].mxu0 %v182
  %v485 = vpop.f32.mrb[0].mxu0
  %v486 = vadd.f32 %v381, %v485
  %v487 = vpop.f32.mrb[0].mxu0
  %488 = vmatprep.mubr.f32.mxu0 0.0
  %489 = vmatmul.mubr.f32.gmra.mrb[0].mxu0 %v185
  %v490 = vpop.f32.mrb[0].mxu0
  %v491 = vadd.f32 %v386, %v490
  %v492 = vpop.f32.mrb[0].mxu0
  %493 = vmatprep.mubr.f32.mxu0 0.0
  %494 = vmatmul.mubr.f32.gmra.mrb[0].mxu0 %v188
  %v495 = vpop.f32.mrb[0].mxu0
  %v496 = vadd.f32 %v391, %v495
  %v497 = vpop.f32.mrb[0].mxu0
  %498 = vmatprep.mubr.f32.mxu0 0.0
  %499 = vmatmul.mubr.f32.gmra.mrb[0].mxu0 %v191
  %v500 = vpop.f32.mrb[0].mxu0
  %v501 = vadd.f32 %v396, %v500
  %v502 = vpop.f32.mrb[0].mxu0
  %503 = vmatprep.mubr.f32.mxu0 0.0
  %504 = vmatmul.mubr.f32.gmra.mrb[0].mxu0 %v194
  %v505 = vpop.f32.mrb[0].mxu0
  %v506 = vadd.f32 %v401, %v505
  %v507 = vpop.f32.mrb[0].mxu0
  %508 = vmatprep.mubr.f32.mxu0 0.0
  %509 = vmatmul.mubr.f32.gmra.mrb[0].mxu0 %v197
  %v510 = vpop.f32.mrb[0].mxu0
  %v511 = vadd.f32 %v406, %v510
  %v512 = vpop.f32.mrb[0].mxu0
  %513 = vdwg.mxu0
  %v514 = vmax.f32 %v476, 0.0
  %v515 = vmax.f32 %v481, 0.0
  %v516 = vmax.f32 %v486, 0.0
  %v517 = vmax.f32 %v491, 0.0
  %v518 = vmax.f32 %v496, 0.0
  %v519 = vmax.f32 %v501, 0.0
  %v520 = vmax.f32 %v506, 0.0
  %v521 = vmax.f32 %v511, 0.0
  %vm522 = vcmask 64512
  %523 = vst.msk [vmem:[%s3] sm:$0xff] %vm522, %v514
  %524 = vst.msk [vmem:[%s3 + $0x8] sm:$0xff] %vm522, %v515
  %525 = vst.msk [vmem:[%s3 + $0x10] sm:$0xff] %vm522, %v516
  %526 = vst.msk [vmem:[%s3 + $0x18] sm:$0xff] %vm522, %v517
  %527 = vst.msk [vmem:[%s3 + $0x20] sm:$0xff] %vm522, %v518
  %528 = vst.msk [vmem:[%s3 + $0x28] sm:$0xff] %vm522, %v519
  %529 = vst.msk [vmem:[%s3 + $0x30] sm:$0xff] %vm522, %v520
  %530 = vst.msk [vmem:[%s3 + $0x38] sm:$0xff] %vm522, %v521
  // Predicated region
  $region14: #{feature_ex_forward.27} parent=0 // pred_check
    _
  $region15: #{feature_ex_forward.27} parent=0 // pred_check_branch
    %532 = sbr.rel (0) target = $region17
  $region16: #{feature_ex_forward.27} parent=0 // pred_region
    _
  $region17: #{feature_ex_forward.27} parent=0 // pred_fallthru
    _
  // Predicated region
  $region18: #{feature_ex_forward.27} parent=0 // pred_check
    _
  $region19: #{feature_ex_forward.27} parent=0 // pred_check_branch
    %534 = sbr.rel (0) target = $region21
  $region20: #{feature_ex_forward.27} parent=0 // pred_region
    _
  $region21: #{feature_ex_forward.27} parent=0 // pred_fallthru
    _

// kernel: feature_ex_forward.30
$region0: #{feature_ex_forward.30}
  #allocation0 [shape = 'u32[]', space=smem, size = 0x4, offset = 0x4, fixed_abs, tag = 'smem constant byte address 0x4 - core index']
  #allocation1 [shape = 'u32[144,128]{1,0:T(1,128)}', space=vmem, size = 0x12000, scoped, tag = 'internal scratch']
  %s0 = inlined_call_operand.vmem [shape: f32[64,32], index: 0, kind: input, shape index: {}]
  %s1 = inlined_call_operand.vmem [shape: f32[32,32], index: 1, kind: input, shape index: {}]
  %s2 = inlined_call_operand.vmem [shape: f32[64,1], index: 2, kind: input, shape index: {}]
  %s3 = inlined_call_operand.vmem [shape: f32[64,32], index: 3, kind: input, shape index: {}]
  %s4 = inlined_call_operand.vmem [shape: f32[64,32], index: 4, kind: output, shape index: {}]
  %s5 = sld [smem:[#allocation0]]
  $region26: #{feature_ex_forward.30} parent=0
    _
  %s7 = ssub.s32 1, %s5
  %s8 = scalar_select 0, %s7, %s5
  // Predicated region
  $region2: #{feature_ex_forward.30} parent=0 // pred_check
    _
  $region3: #{feature_ex_forward.30} parent=0 // pred_check_branch
    %10 = sbr.rel (0) target = $region5
  $region4: #{feature_ex_forward.30} parent=0 // pred_region
    _
  $region5: #{feature_ex_forward.30} parent=0 // pred_fallthru
    _
  // Predicated region
  $region6: #{feature_ex_forward.30} parent=0 // pred_check
    _
  $region7: #{feature_ex_forward.30} parent=0 // pred_check_branch
    %12 = sbr.rel (0) target = $region9
  $region8: #{feature_ex_forward.30} parent=0 // pred_region
    _
  $region9: #{feature_ex_forward.30} parent=0 // pred_fallthru
    _
  // Predicated region
  $region10: #{feature_ex_forward.30} parent=0 // pred_check
    _
  $region11: #{feature_ex_forward.30} parent=0 // pred_check_branch
    %14 = sbr.rel (0) target = $region13
  $region12: #{feature_ex_forward.30} parent=0 // pred_region
    _
  $region13: #{feature_ex_forward.30} parent=0 // pred_fallthru
    _
  // Predicated region
  $region14: #{feature_ex_forward.30} parent=0 // pred_check
    _
  $region15: #{feature_ex_forward.30} parent=0 // pred_check_branch
    %16 = sbr.rel (0) target = $region17
  $region16: #{feature_ex_forward.30} parent=0 // pred_region
    _
  $region17: #{feature_ex_forward.30} parent=0 // pred_fallthru
    _
  %v17 = vld [vmem:[%s0] sm:$0xff]
  %v18 = vld [vmem:[%s0 + $0x8] sm:$0xff]
  %v19 = vld [vmem:[%s0 + $0x10] sm:$0xff]
  %v20 = vld [vmem:[%s0 + $0x18] sm:$0xff]
  %v21 = vld [vmem:[%s0 + $0x20] sm:$0xff]
  %v22 = vld [vmem:[%s0 + $0x28] sm:$0xff]
  %v23 = vld [vmem:[%s0 + $0x30] sm:$0xff]
  %v24 = vld [vmem:[%s0 + $0x38] sm:$0xff]
  %v25 = vld [vmem:[%s1] sm:$0xff]
  %v26 = vld [vmem:[%s1 + $0x8] sm:$0xff]
  %v27 = vld [vmem:[%s1 + $0x10] sm:$0xff]
  %v28 = vld [vmem:[%s1 + $0x18] sm:$0xff]
  %v29 = vld [vmem:[%s2] sm:$0xff]
  %v30 = vld [vmem:[%s2 + $0x8] sm:$0xff]
  %v31 = vld [vmem:[%s2 + $0x10] sm:$0xff]
  %v32 = vld [vmem:[%s2 + $0x18] sm:$0xff]
  %v33 = vld [vmem:[%s2 + $0x20] sm:$0xff]
  %v34 = vld [vmem:[%s2 + $0x28] sm:$0xff]
  %v35 = vld [vmem:[%s2 + $0x30] sm:$0xff]
  %v36 = vld [vmem:[%s2 + $0x38] sm:$0xff]
  %38 = vset.pattern.permute.xlu0 0
  %39 = vperm.xlu0 %38, %v29
  %v40 = vpop.permute.xlu0 %39
  %43 = vset.pattern.permute.xlu0 0
  %44 = vperm.xlu0 %43, %v30
  %v45 = vpop.permute.xlu0 %44
  %48 = vset.pattern.permute.xlu0 0
  %49 = vperm.xlu0 %48, %v31
  %v50 = vpop.permute.xlu0 %49
  %53 = vset.pattern.permute.xlu0 0
  %54 = vperm.xlu0 %53, %v32
  %v55 = vpop.permute.xlu0 %54
  %58 = vset.pattern.permute.xlu0 0
  %59 = vperm.xlu0 %58, %v33
  %v60 = vpop.permute.xlu0 %59
  %63 = vset.pattern.permute.xlu0 0
  %64 = vperm.xlu0 %63, %v34
  %v65 = vpop.permute.xlu0 %64
  %68 = vset.pattern.permute.xlu0 0
  %69 = vperm.xlu0 %68, %v35
  %v70 = vpop.permute.xlu0 %69
  %73 = vset.pattern.permute.xlu0 0
  %74 = vperm.xlu0 %73, %v36
  %v75 = vpop.permute.xlu0 %74
  %vm77 = vcmask 261120
  %v79 = vsel %vm77, %v17, 0
  %v82 = vsel %vm77, %v18, 0
  %v85 = vsel %vm77, %v19, 0
  %v88 = vsel %vm77, %v20, 0
  %v91 = vsel %vm77, %v21, 0
  %v94 = vsel %vm77, %v22, 0
  %v97 = vsel %vm77, %v23, 0
  %v100 = vsel %vm77, %v24, 0
  %102 = vmatprep.subr.mxu0 0.0
  %103 = vmatpush1.msra.mxu0 %v25
  %104 = vmatprep.subr.mxu0 0.0
  %105 = vmatpush1.msra.mxu0 %v26
  %106 = vmatprep.subr.mxu0 0.0
  %107 = vmatpush1.msra.mxu0 %v27
  %108 = vmatprep.subr.mxu0 0.0
  %109 = vmatpush1.msra.mxu0 %v28
  %110 = vmatprep.subr.mxu0 0.0
  %111 = vmatpush1.msra.mxu0 0.0
  %112 = vmatprep.subr.mxu0 0.0
  %113 = vmatpush1.msra.mxu0 0.0
  %114 = vmatprep.subr.mxu0 0.0
  %115 = vmatpush1.msra.mxu0 0.0
  %116 = vmatprep.subr.mxu0 0.0
  %117 = vmatpush1.msra.mxu0 0.0
  %118 = vmatprep.subr.mxu0 0.0
  %119 = vmatpush1.msra.mxu0 0.0
  %120 = vmatprep.subr.mxu0 0.0
  %121 = vmatpush1.msra.mxu0 0.0
  %122 = vmatprep.subr.mxu0 0.0
  %123 = vmatpush1.msra.mxu0 0.0
  %124 = vmatprep.subr.mxu0 0.0
  %125 = vmatpush1.msra.mxu0 0.0
  %126 = vmatprep.subr.mxu0 0.0
  %127 = vmatpush1.msra.mxu0 0.0
  %128 = vmatprep.subr.mxu0 0.0
  %129 = vmatpush1.msra.mxu0 0.0
  %130 = vmatprep.subr.mxu0 0.0
  %131 = vmatpush1.msra.mxu0 0.0
  %132 = vmatprep.subr.mxu0 0.0
  %133 = vmatpush1.msra.mxu0 0.0
  %134 = vmatprep.subr.mxu0 0.0
  %135 = vmatpush1.msra.mxu0 0.0
  %136 = vmatprep.subr.mxu0 0.0
  %137 = vmatpush1.msra.mxu0 0.0
  %138 = vmatprep.subr.mxu0 0.0
  %139 = vmatpush1.msra.mxu0 0.0
  %140 = vmatprep.subr.mxu0 0.0
  %141 = vmatpush1.msra.mxu0 0.0
  %142 = vmatprep.subr.mxu0 0.0
  %143 = vmatpush1.msra.mxu0 0.0
  %144 = vmatprep.subr.mxu0 0.0
  %145 = vmatpush1.msra.mxu0 0.0
  %146 = vmatprep.subr.mxu0 0.0
  %147 = vmatpush1.msra.mxu0 0.0
  %148 = vmatprep.subr.mxu0 0.0
  %149 = vmatpush1.msra.mxu0 0.0
  %150 = vmatprep.subr.mxu0 0.0
  %151 = vmatpush1.msra.mxu0 0.0
  %152 = vmatprep.subr.mxu0 0.0
  %153 = vmatpush1.msra.mxu0 0.0
  %154 = vmatprep.subr.mxu0 0.0
  %155 = vmatpush1.msra.mxu0 0.0
  %156 = vmatprep.subr.mxu0 0.0
  %157 = vmatpush1.msra.mxu0 0.0
  %158 = vmatprep.subr.mxu0 0.0
  %159 = vmatpush1.msra.mxu0 0.0
  %160 = vmatprep.subr.mxu0 0.0
  %161 = vmatpush1.msra.mxu0 0.0
  %162 = vmatprep.subr.mxu0 0.0
  %163 = vmatpush1.msra.mxu0 0.0
  %164 = vmatprep.subr.mxu0 0.0
  %165 = vmatpush1.msra.mxu0 0.0
  %166 = vmatprep.mubr.f32.mxu0 0.0
  %167 = vmatmul.mubr.f32.gmra.mrb[0].mxu0 %v79
  %v168 = vpop.f32.mrb[0].mxu0
  %v169 = vadd.f32 %v40, %v168
  %v170 = vpop.f32.mrb[0].mxu0
  %171 = vmatprep.mubr.f32.mxu0 0.0
  %172 = vmatmul.mubr.f32.gmra.mrb[0].mxu0 %v82
  %v173 = vpop.f32.mrb[0].mxu0
  %v174 = vadd.f32 %v45, %v173
  %v175 = vpop.f32.mrb[0].mxu0
  %176 = vmatprep.mubr.f32.mxu0 0.0
  %177 = vmatmul.mubr.f32.gmra.mrb[0].mxu0 %v85
  %v178 = vpop.f32.mrb[0].mxu0
  %v179 = vadd.f32 %v50, %v178
  %v180 = vpop.f32.mrb[0].mxu0
  %181 = vmatprep.mubr.f32.mxu0 0.0
  %182 = vmatmul.mubr.f32.gmra.mrb[0].mxu0 %v88
  %v183 = vpop.f32.mrb[0].mxu0
  %v184 = vadd.f32 %v55, %v183
  %v185 = vpop.f32.mrb[0].mxu0
  %186 = vmatprep.mubr.f32.mxu0 0.0
  %187 = vmatmul.mubr.f32.gmra.mrb[0].mxu0 %v91
  %v188 = vpop.f32.mrb[0].mxu0
  %v189 = vadd.f32 %v60, %v188
  %v190 = vpop.f32.mrb[0].mxu0
  %191 = vmatprep.mubr.f32.mxu0 0.0
  %192 = vmatmul.mubr.f32.gmra.mrb[0].mxu0 %v94
  %v193 = vpop.f32.mrb[0].mxu0
  %v194 = vadd.f32 %v65, %v193
  %v195 = vpop.f32.mrb[0].mxu0
  %196 = vmatprep.mubr.f32.mxu0 0.0
  %197 = vmatmul.mubr.f32.gmra.mrb[0].mxu0 %v97
  %v198 = vpop.f32.mrb[0].mxu0
  %v199 = vadd.f32 %v70, %v198
  %v200 = vpop.f32.mrb[0].mxu0
  %201 = vmatprep.mubr.f32.mxu0 0.0
  %202 = vmatmul.mubr.f32.gmra.mrb[0].mxu0 %v100
  %v203 = vpop.f32.mrb[0].mxu0
  %v204 = vadd.f32 %v75, %v203
  %v205 = vpop.f32.mrb[0].mxu0
  %206 = vdwg.mxu0
  %v207 = vld [vmem:[%s3] sm:$0xff]
  %v208 = vld [vmem:[%s3 + $0x8] sm:$0xff]
  %v209 = vld [vmem:[%s3 + $0x10] sm:$0xff]
  %v210 = vld [vmem:[%s3 + $0x18] sm:$0xff]
  %v211 = vld [vmem:[%s3 + $0x20] sm:$0xff]
  %v212 = vld [vmem:[%s3 + $0x28] sm:$0xff]
  %v213 = vld [vmem:[%s3 + $0x30] sm:$0xff]
  %v214 = vld [vmem:[%s3 + $0x38] sm:$0xff]
  %v215 = vadd.f32 %v169, %v207
  %v216 = vadd.f32 %v174, %v208
  %v217 = vadd.f32 %v179, %v209
  %v218 = vadd.f32 %v184, %v210
  %v219 = vadd.f32 %v189, %v211
  %v220 = vadd.f32 %v194, %v212
  %v221 = vadd.f32 %v199, %v213
  %v222 = vadd.f32 %v204, %v214
  %223 = vst.msk [vmem:[%s4] sm:$0xff] %vm77, %v215
  %224 = vst.msk [vmem:[%s4 + $0x8] sm:$0xff] %vm77, %v216
  %225 = vst.msk [vmem:[%s4 + $0x10] sm:$0xff] %vm77, %v217
  %226 = vst.msk [vmem:[%s4 + $0x18] sm:$0xff] %vm77, %v218
  %227 = vst.msk [vmem:[%s4 + $0x20] sm:$0xff] %vm77, %v219
  %228 = vst.msk [vmem:[%s4 + $0x28] sm:$0xff] %vm77, %v220
  %229 = vst.msk [vmem:[%s4 + $0x30] sm:$0xff] %vm77, %v221
  %230 = vst.msk [vmem:[%s4 + $0x38] sm:$0xff] %vm77, %v222
  // Predicated region
  $region18: #{feature_ex_forward.30} parent=0 // pred_check
    _
  $region19: #{feature_ex_forward.30} parent=0 // pred_check_branch
    %232 = sbr.rel (0) target = $region21
  $region20: #{feature_ex_forward.30} parent=0 // pred_region
    _
  $region21: #{feature_ex_forward.30} parent=0 // pred_fallthru
    _
  // Predicated region
  $region22: #{feature_ex_forward.30} parent=0 // pred_check
    _
  $region23: #{feature_ex_forward.30} parent=0 // pred_check_branch
    %234 = sbr.rel (0) target = $region25
  $region24: #{feature_ex_forward.30} parent=0 // pred_region
    _
  $region25: #{feature_ex_forward.30} parent=0 // pred_fallthru
    _

// kernel: feature_ex_forward.32
$region0: #{feature_ex_forward.32}
  #allocation0 [shape = 'u32[]', space=smem, size = 0x4, offset = 0x4, fixed_abs, tag = 'smem constant byte address 0x4 - core index']
  #allocation1 [shape = 'u32[144,128]{1,0:T(1,128)}', space=vmem, size = 0x12000, scoped, tag = 'internal scratch']
  %s0 = inlined_call_operand.vmem [shape: f32[64,16], index: 0, kind: input, shape index: {}]
  %s1 = inlined_call_operand.vmem [shape: f32[16,128], index: 1, kind: input, shape index: {}]
  %s2 = inlined_call_operand.vmem [shape: f32[64,1], index: 2, kind: input, shape index: {}]
  %s3 = inlined_call_operand.vmem [shape: f32[64,128], index: 3, kind: input, shape index: {}]
  %s4 = inlined_call_operand.vmem [shape: f32[64,128], index: 4, kind: output, shape index: {}]
  %s5 = sld [smem:[#allocation0]]
  $region26: #{feature_ex_forward.32} parent=0
    _
  %s7 = ssub.s32 1, %s5
  %s8 = scalar_select 0, %s7, %s5
  // Predicated region
  $region2: #{feature_ex_forward.32} parent=0 // pred_check
    _
  $region3: #{feature_ex_forward.32} parent=0 // pred_check_branch
    %10 = sbr.rel (0) target = $region5
  $region4: #{feature_ex_forward.32} parent=0 // pred_region
    _
  $region5: #{feature_ex_forward.32} parent=0 // pred_fallthru
    _
  // Predicated region
  $region6: #{feature_ex_forward.32} parent=0 // pred_check
    _
  $region7: #{feature_ex_forward.32} parent=0 // pred_check_branch
    %12 = sbr.rel (0) target = $region9
  $region8: #{feature_ex_forward.32} parent=0 // pred_region
    _
  $region9: #{feature_ex_forward.32} parent=0 // pred_fallthru
    _
  // Predicated region
  $region10: #{feature_ex_forward.32} parent=0 // pred_check
    _
  $region11: #{feature_ex_forward.32} parent=0 // pred_check_branch
    %14 = sbr.rel (0) target = $region13
  $region12: #{feature_ex_forward.32} parent=0 // pred_region
    _
  $region13: #{feature_ex_forward.32} parent=0 // pred_fallthru
    _
  // Predicated region
  $region14: #{feature_ex_forward.32} parent=0 // pred_check
    _
  $region15: #{feature_ex_forward.32} parent=0 // pred_check_branch
    %16 = sbr.rel (0) target = $region17
  $region16: #{feature_ex_forward.32} parent=0 // pred_region
    _
  $region17: #{feature_ex_forward.32} parent=0 // pred_fallthru
    _
  %v17 = vld [vmem:[%s0] sm:$0xff]
  %v18 = vld [vmem:[%s0 + $0x8] sm:$0xff]
  %v19 = vld [vmem:[%s0 + $0x10] sm:$0xff]
  %v20 = vld [vmem:[%s0 + $0x18] sm:$0xff]
  %v21 = vld [vmem:[%s0 + $0x20] sm:$0xff]
  %v22 = vld [vmem:[%s0 + $0x28] sm:$0xff]
  %v23 = vld [vmem:[%s0 + $0x30] sm:$0xff]
  %v24 = vld [vmem:[%s0 + $0x38] sm:$0xff]
  %v25 = vld [vmem:[%s1] sm:$0xff]
  %v26 = vld [vmem:[%s1 + $0x8] sm:$0xff]
  %v27 = vld [vmem:[%s2] sm:$0xff]
  %v28 = vld [vmem:[%s2 + $0x8] sm:$0xff]
  %v29 = vld [vmem:[%s2 + $0x10] sm:$0xff]
  %v30 = vld [vmem:[%s2 + $0x18] sm:$0xff]
  %v31 = vld [vmem:[%s2 + $0x20] sm:$0xff]
  %v32 = vld [vmem:[%s2 + $0x28] sm:$0xff]
  %v33 = vld [vmem:[%s2 + $0x30] sm:$0xff]
  %v34 = vld [vmem:[%s2 + $0x38] sm:$0xff]
  %36 = vset.pattern.permute.xlu0 0
  %37 = vperm.xlu0 %36, %v27
  %v38 = vpop.permute.xlu0 %37
  %41 = vset.pattern.permute.xlu0 0
  %42 = vperm.xlu0 %41, %v28
  %v43 = vpop.permute.xlu0 %42
  %46 = vset.pattern.permute.xlu0 0
  %47 = vperm.xlu0 %46, %v29
  %v48 = vpop.permute.xlu0 %47
  %51 = vset.pattern.permute.xlu0 0
  %52 = vperm.xlu0 %51, %v30
  %v53 = vpop.permute.xlu0 %52
  %56 = vset.pattern.permute.xlu0 0
  %57 = vperm.xlu0 %56, %v31
  %v58 = vpop.permute.xlu0 %57
  %61 = vset.pattern.permute.xlu0 0
  %62 = vperm.xlu0 %61, %v32
  %v63 = vpop.permute.xlu0 %62
  %66 = vset.pattern.permute.xlu0 0
  %67 = vperm.xlu0 %66, %v33
  %v68 = vpop.permute.xlu0 %67
  %71 = vset.pattern.permute.xlu0 0
  %72 = vperm.xlu0 %71, %v34
  %v73 = vpop.permute.xlu0 %72
  %vm75 = vcmask 130048
  %v77 = vsel %vm75, %v17, 0
  %v80 = vsel %vm75, %v18, 0
  %v83 = vsel %vm75, %v19, 0
  %v86 = vsel %vm75, %v20, 0
  %v89 = vsel %vm75, %v21, 0
  %v92 = vsel %vm75, %v22, 0
  %v95 = vsel %vm75, %v23, 0
  %v98 = vsel %vm75, %v24, 0
  %100 = vmatprep.subr.mxu0 0.0
  %101 = vmatpush1.msra.mxu0 %v25
  %102 = vmatprep.subr.mxu0 0.0
  %103 = vmatpush1.msra.mxu0 %v26
  %104 = vmatprep.subr.mxu0 0.0
  %105 = vmatpush1.msra.mxu0 0.0
  %106 = vmatprep.subr.mxu0 0.0
  %107 = vmatpush1.msra.mxu0 0.0
  %108 = vmatprep.subr.mxu0 0.0
  %109 = vmatpush1.msra.mxu0 0.0
  %110 = vmatprep.subr.mxu0 0.0
  %111 = vmatpush1.msra.mxu0 0.0
  %112 = vmatprep.subr.mxu0 0.0
  %113 = vmatpush1.msra.mxu0 0.0
  %114 = vmatprep.subr.mxu0 0.0
  %115 = vmatpush1.msra.mxu0 0.0
  %116 = vmatprep.subr.mxu0 0.0
  %117 = vmatpush1.msra.mxu0 0.0
  %118 = vmatprep.subr.mxu0 0.0
  %119 = vmatpush1.msra.mxu0 0.0
  %120 = vmatprep.subr.mxu0 0.0
  %121 = vmatpush1.msra.mxu0 0.0
  %122 = vmatprep.subr.mxu0 0.0
  %123 = vmatpush1.msra.mxu0 0.0
  %124 = vmatprep.subr.mxu0 0.0
  %125 = vmatpush1.msra.mxu0 0.0
  %126 = vmatprep.subr.mxu0 0.0
  %127 = vmatpush1.msra.mxu0 0.0
  %128 = vmatprep.subr.mxu0 0.0
  %129 = vmatpush1.msra.mxu0 0.0
  %130 = vmatprep.subr.mxu0 0.0
  %131 = vmatpush1.msra.mxu0 0.0
  %132 = vmatprep.subr.mxu0 0.0
  %133 = vmatpush1.msra.mxu0 0.0
  %134 = vmatprep.subr.mxu0 0.0
  %135 = vmatpush1.msra.mxu0 0.0
  %136 = vmatprep.subr.mxu0 0.0
  %137 = vmatpush1.msra.mxu0 0.0
  %138 = vmatprep.subr.mxu0 0.0
  %139 = vmatpush1.msra.mxu0 0.0
  %140 = vmatprep.subr.mxu0 0.0
  %141 = vmatpush1.msra.mxu0 0.0
  %142 = vmatprep.subr.mxu0 0.0
  %143 = vmatpush1.msra.mxu0 0.0
  %144 = vmatprep.subr.mxu0 0.0
  %145 = vmatpush1.msra.mxu0 0.0
  %146 = vmatprep.subr.mxu0 0.0
  %147 = vmatpush1.msra.mxu0 0.0
  %148 = vmatprep.subr.mxu0 0.0
  %149 = vmatpush1.msra.mxu0 0.0
  %150 = vmatprep.subr.mxu0 0.0
  %151 = vmatpush1.msra.mxu0 0.0
  %152 = vmatprep.subr.mxu0 0.0
  %153 = vmatpush1.msra.mxu0 0.0
  %154 = vmatprep.subr.mxu0 0.0
  %155 = vmatpush1.msra.mxu0 0.0
  %156 = vmatprep.subr.mxu0 0.0
  %157 = vmatpush1.msra.mxu0 0.0
  %158 = vmatprep.subr.mxu0 0.0
  %159 = vmatpush1.msra.mxu0 0.0
  %160 = vmatprep.subr.mxu0 0.0
  %161 = vmatpush1.msra.mxu0 0.0
  %162 = vmatprep.subr.mxu0 0.0
  %163 = vmatpush1.msra.mxu0 0.0
  %164 = vmatprep.mubr.f32.mxu0 0.0
  %165 = vmatmul.mubr.f32.gmra.mrb[0].mxu0 %v77
  %v166 = vpop.f32.mrb[0].mxu0
  %v167 = vadd.f32 %v38, %v166
  %v168 = vpop.f32.mrb[0].mxu0
  %169 = vmatprep.mubr.f32.mxu0 0.0
  %170 = vmatmul.mubr.f32.gmra.mrb[0].mxu0 %v80
  %v171 = vpop.f32.mrb[0].mxu0
  %v172 = vadd.f32 %v43, %v171
  %v173 = vpop.f32.mrb[0].mxu0
  %174 = vmatprep.mubr.f32.mxu0 0.0
  %175 = vmatmul.mubr.f32.gmra.mrb[0].mxu0 %v83
  %v176 = vpop.f32.mrb[0].mxu0
  %v177 = vadd.f32 %v48, %v176
  %v178 = vpop.f32.mrb[0].mxu0
  %179 = vmatprep.mubr.f32.mxu0 0.0
  %180 = vmatmul.mubr.f32.gmra.mrb[0].mxu0 %v86
  %v181 = vpop.f32.mrb[0].mxu0
  %v182 = vadd.f32 %v53, %v181
  %v183 = vpop.f32.mrb[0].mxu0
  %184 = vmatprep.mubr.f32.mxu0 0.0
  %185 = vmatmul.mubr.f32.gmra.mrb[0].mxu0 %v89
  %v186 = vpop.f32.mrb[0].mxu0
  %v187 = vadd.f32 %v58, %v186
  %v188 = vpop.f32.mrb[0].mxu0
  %189 = vmatprep.mubr.f32.mxu0 0.0
  %190 = vmatmul.mubr.f32.gmra.mrb[0].mxu0 %v92
  %v191 = vpop.f32.mrb[0].mxu0
  %v192 = vadd.f32 %v63, %v191
  %v193 = vpop.f32.mrb[0].mxu0
  %194 = vmatprep.mubr.f32.mxu0 0.0
  %195 = vmatmul.mubr.f32.gmra.mrb[0].mxu0 %v95
  %v196 = vpop.f32.mrb[0].mxu0
  %v197 = vadd.f32 %v68, %v196
  %v198 = vpop.f32.mrb[0].mxu0
  %199 = vmatprep.mubr.f32.mxu0 0.0
  %200 = vmatmul.mubr.f32.gmra.mrb[0].mxu0 %v98
  %v201 = vpop.f32.mrb[0].mxu0
  %v202 = vadd.f32 %v73, %v201
  %v203 = vpop.f32.mrb[0].mxu0
  %204 = vdwg.mxu0
  %v205 = vld [vmem:[%s3] sm:$0xff]
  %v206 = vld [vmem:[%s3 + $0x8] sm:$0xff]
  %v207 = vld [vmem:[%s3 + $0x10] sm:$0xff]
  %v208 = vld [vmem:[%s3 + $0x18] sm:$0xff]
  %v209 = vld [vmem:[%s3 + $0x20] sm:$0xff]
  %v210 = vld [vmem:[%s3 + $0x28] sm:$0xff]
  %v211 = vld [vmem:[%s3 + $0x30] sm:$0xff]
  %v212 = vld [vmem:[%s3 + $0x38] sm:$0xff]
  %v213 = vadd.f32 %v167, %v205
  %v214 = vadd.f32 %v172, %v206
  %v215 = vadd.f32 %v177, %v207
  %v216 = vadd.f32 %v182, %v208
  %v217 = vadd.f32 %v187, %v209
  %v218 = vadd.f32 %v192, %v210
  %v219 = vadd.f32 %v197, %v211
  %v220 = vadd.f32 %v202, %v212
  %221 = vst [vmem:[%s4] sm:$0xff] %v213
  %222 = vst [vmem:[%s4 + $0x8] sm:$0xff] %v214
  %223 = vst [vmem:[%s4 + $0x10] sm:$0xff] %v215
  %224 = vst [vmem:[%s4 + $0x18] sm:$0xff] %v216
  %225 = vst [vmem:[%s4 + $0x20] sm:$0xff] %v217
  %226 = vst [vmem:[%s4 + $0x28] sm:$0xff] %v218
  %227 = vst [vmem:[%s4 + $0x30] sm:$0xff] %v219
  %228 = vst [vmem:[%s4 + $0x38] sm:$0xff] %v220
  // Predicated region
  $region18: #{feature_ex_forward.32} parent=0 // pred_check
    _
  $region19: #{feature_ex_forward.32} parent=0 // pred_check_branch
    %230 = sbr.rel (0) target = $region21
  $region20: #{feature_ex_forward.32} parent=0 // pred_region
    _
  $region21: #{feature_ex_forward.32} parent=0 // pred_fallthru
    _
  // Predicated region
  $region22: #{feature_ex_forward.32} parent=0 // pred_check
    _
  $region23: #{feature_ex_forward.32} parent=0 // pred_check_branch
    %232 = sbr.rel (0) target = $region25
  $region24: #{feature_ex_forward.32} parent=0 // pred_region
    _
  $region25: #{feature_ex_forward.32} parent=0 // pred_fallthru
    _

// kernel: feature_ex_forward.34
$region0: #{feature_ex_forward.34}
  #allocation0 [shape = 'u32[]', space=smem, size = 0x4, offset = 0x4, fixed_abs, tag = 'smem constant byte address 0x4 - core index']
  #allocation1 [shape = 'u32[144,128]{1,0:T(1,128)}', space=vmem, size = 0x12000, scoped, tag = 'internal scratch']
  %s0 = inlined_call_operand.vmem [shape: f32[64,8], index: 0, kind: input, shape index: {}]
  %s1 = inlined_call_operand.vmem [shape: f32[8,512], index: 1, kind: input, shape index: {}]
  %s2 = inlined_call_operand.vmem [shape: f32[64,1], index: 2, kind: input, shape index: {}]
  %s3 = inlined_call_operand.vmem [shape: f32[64,512], index: 3, kind: input, shape index: {}]
  %s4 = inlined_call_operand.vmem [shape: f32[64,512], index: 4, kind: output, shape index: {}]
  %s5 = sld [smem:[#allocation0]]
  $region91: #{feature_ex_forward.34} parent=0
    _
  %s7 = ssub.s32 1, %s5
  %s8 = scalar_select 0, %s7, %s5
  $region1: #{feature_ex_forward.34} parent=0
    #allocation2 [shape = 'u8[131072]{0}', space=vmem, size = 0x20000, scoped, tag = 'input window, operand 3']
    #allocation3 [shape = 'u8[131072]{0}', space=vmem, size = 0x20000, scoped, tag = 'output window, operand 0']
    loop: start=0, step=1, limit=4
    $region2: #{feature_ex_forward.34} parent=1 // loop_pre_header
      _
    $region3: #{feature_ex_forward.34} parent=1 // loop_header
      %s10 = sphi 0, %s14
      %p11 = scmp.ge.s32.totalorder %s10, 4
      %s18 = sphi 0, %s18
      %s20 = sphi 0, %s18
      %s21 = sphi 0, %s20
      %s35 = sphi 0, %s21
      %s41 = sphi 0, %s43
      %s44 = sphi 0, %s41
      %s45 = sphi 0, %s44
      %s61 = sphi 0, %s45
      %s65 = sphi 0, %s65
      %s67 = sphi 0, %s65
      %s68 = sphi 0, %s67
      %s82 = sphi 0, %s68
      %s88 = sphi 0, %s90
      %s91 = sphi 0, %s88
      %s92 = sphi 0, %s91
      %s108 = sphi 0, %s92
      %s114 = sphi 0, %s116
      %s117 = sphi 0, %s114
      %s118 = sphi 0, %s117
      %s134 = sphi 0, %s118
    $region4: #{feature_ex_forward.34} parent=1 // loop_header_branch
      %13 = sbr.rel (%p11) target = $region8
    $region5: #{feature_ex_forward.34} parent=1 // loop_body
      %s15 = ssub.s32 %s10, 1
      %s16 = ssub.s32 %s10, 2
      %s17 = sadd.s32 %s10, 1
      %s19 = sadd.s32 %s18, 1
      %p22 = scmp.eq.s32.totalorder %s10, 1
      %p23 = scmp.ne.s32.totalorder %s18, %s20
      %p24 = scmp.eq.s32.totalorder %s10, 0
      %p25 = por %p23, %p24
      %p26 = scmp.ne.s32.totalorder %s18, %s20
      %p27 = scmp.eq.s32.totalorder %s15, 1
      %p28 = por %p26, %p27
      %p29 = scmp.ne.s32.totalorder %s20, %s21
      %p30 = scmp.eq.s32.totalorder %s15, 0
      %p31 = por %p29, %p30
      %p32 = scmp.ne.s32.totalorder %s20, %s21
      %p33 = scmp.eq.s32.totalorder %s16, 1
      %p34 = por %p32, %p33
      %p36 = scmp.ne.s32.totalorder %s21, %s35
      %p37 = scmp.eq.s32.totalorder %s16, 0
      %p38 = por %p36, %p37
      %s39 = ssub.s32 %s10, %s17
      %p40 = scmp.eq.s32.totalorder %s39, 0
      %s42 = sadd.s32 %s41, 1
      %s43 = scalar_select %p40, %s41, %s42
      %p46 = pneg %p40
      %p47 = scmp.eq.s32.totalorder %s10, 1
      %p48 = por %p46, %p47
      %p49 = scmp.ne.s32.totalorder %s41, %s44
      %p50 = scmp.eq.s32.totalorder %s10, 0
      %p51 = por %p49, %p50
      %p52 = scmp.ne.s32.totalorder %s41, %s44
      %p53 = scmp.eq.s32.totalorder %s15, 1
      %p54 = por %p52, %p53
      %p55 = scmp.ne.s32.totalorder %s44, %s45
      %p56 = scmp.eq.s32.totalorder %s15, 0
      %p57 = por %p55, %p56
      %p58 = scmp.ne.s32.totalorder %s44, %s45
      %p59 = scmp.eq.s32.totalorder %s16, 1
      %p60 = por %p58, %p59
      %p62 = scmp.ne.s32.totalorder %s45, %s61
      %p63 = scmp.eq.s32.totalorder %s16, 0
      %p64 = por %p62, %p63
      %s66 = sadd.s32 %s65, 1
      %p69 = scmp.eq.s32.totalorder %s10, 1
      %p70 = scmp.ne.s32.totalorder %s65, %s67
      %p71 = scmp.eq.s32.totalorder %s10, 0
      %p72 = por %p70, %p71
      %p73 = scmp.ne.s32.totalorder %s65, %s67
      %p74 = scmp.eq.s32.totalorder %s15, 1
      %p75 = por %p73, %p74
      %p76 = scmp.ne.s32.totalorder %s67, %s68
      %p77 = scmp.eq.s32.totalorder %s15, 0
      %p78 = por %p76, %p77
      %p79 = scmp.ne.s32.totalorder %s67, %s68
      %p80 = scmp.eq.s32.totalorder %s16, 1
      %p81 = por %p79, %p80
      %p83 = scmp.ne.s32.totalorder %s68, %s82
      %p84 = scmp.eq.s32.totalorder %s16, 0
      %p85 = por %p83, %p84
      %s86 = ssub.s32 %s10, %s17
      %p87 = scmp.eq.s32.totalorder %s86, 0
      %s89 = sadd.s32 %s88, 1
      %s90 = scalar_select %p87, %s88, %s89
      %p93 = pneg %p87
      %p94 = scmp.eq.s32.totalorder %s10, 1
      %p95 = por %p93, %p94
      %p96 = scmp.ne.s32.totalorder %s88, %s91
      %p97 = scmp.eq.s32.totalorder %s10, 0
      %p98 = por %p96, %p97
      %p99 = scmp.ne.s32.totalorder %s88, %s91
      %p100 = scmp.eq.s32.totalorder %s15, 1
      %p101 = por %p99, %p100
      %p102 = scmp.ne.s32.totalorder %s91, %s92
      %p103 = scmp.eq.s32.totalorder %s15, 0
      %p104 = por %p102, %p103
      %p105 = scmp.ne.s32.totalorder %s91, %s92
      %p106 = scmp.eq.s32.totalorder %s16, 1
      %p107 = por %p105, %p106
      %p109 = scmp.ne.s32.totalorder %s92, %s108
      %p110 = scmp.eq.s32.totalorder %s16, 0
      %p111 = por %p109, %p110
      %s112 = ssub.s32 %s10, %s17
      %p113 = scmp.eq.s32.totalorder %s112, 0
      %s115 = sadd.s32 %s114, 1
      %s116 = scalar_select %p113, %s114, %s115
      %p119 = pneg %p113
      %p120 = scmp.eq.s32.totalorder %s10, 1
      %p121 = por %p119, %p120
      %p122 = scmp.ne.s32.totalorder %s114, %s117
      %p123 = scmp.eq.s32.totalorder %s10, 0
      %p124 = por %p122, %p123
      %p125 = scmp.ne.s32.totalorder %s114, %s117
      %p126 = scmp.eq.s32.totalorder %s15, 1
      %p127 = por %p125, %p126
      %p128 = scmp.ne.s32.totalorder %s117, %s118
      %p129 = scmp.eq.s32.totalorder %s15, 0
      %p130 = por %p128, %p129
      %p131 = scmp.ne.s32.totalorder %s117, %s118
      %p132 = scmp.eq.s32.totalorder %s16, 1
      %p133 = por %p131, %p132
      %p135 = scmp.ne.s32.totalorder %s118, %s134
      %p136 = scmp.eq.s32.totalorder %s16, 0
      %p137 = por %p135, %p136
      %p138 = scmp.le.s32.totalorder 1, %s10
      %p139 = scmp.lt.s32.totalorder %s10, 3
      %p140 = pnand %p138, %p139
      %p141 = pneg %p140
      // Predicated region
      $region9: #{feature_ex_forward.34} parent=5 // pred_check
        _
      $region10: #{feature_ex_forward.34} parent=5 // pred_check_branch
        %143 = sbr.rel (%p140) target = $region12
      $region11: #{feature_ex_forward.34} parent=5 // pred_region
        %s144 = ssub.s32 %s10, 1
        // Predicated region
        $region13: #{feature_ex_forward.34} parent=11 // pred_check
          %p145 = pneg %p31
        $region14: #{feature_ex_forward.34} parent=11 // pred_check_branch
          %147 = sbr.rel (%p145) target = $region16
        $region15: #{feature_ex_forward.34} parent=11 // pred_region
          _
        $region16: #{feature_ex_forward.34} parent=11 // pred_fallthru
          _
        // Predicated region
        $region17: #{feature_ex_forward.34} parent=11 // pred_check
          %p148 = pneg %p78
        $region18: #{feature_ex_forward.34} parent=11 // pred_check_branch
          %150 = sbr.rel (%p148) target = $region20
        $region19: #{feature_ex_forward.34} parent=11 // pred_region
          _
        $region20: #{feature_ex_forward.34} parent=11 // pred_fallthru
          _
      $region12: #{feature_ex_forward.34} parent=5 // pred_fallthru
        _
      %p151 = scmp.lt.s32.totalorder %s10, 2
      // Predicated region
      $region21: #{feature_ex_forward.34} parent=5 // pred_check
        %p152 = pneg %p151
      $region22: #{feature_ex_forward.34} parent=5 // pred_check_branch
        %154 = sbr.rel (%p152) target = $region24
      $region23: #{feature_ex_forward.34} parent=5 // pred_region
        // Predicated region
        $region25: #{feature_ex_forward.34} parent=23 // pred_check
          %p155 = pneg %p51
        $region26: #{feature_ex_forward.34} parent=23 // pred_check_branch
          %157 = sbr.rel (%p155) target = $region28
        $region27: #{feature_ex_forward.34} parent=23 // pred_region
          %s158 = smul.u32 2, %s10
          %p159 = scmp.lt.s32.totalorder %s158, 3
          %s160 = scalar_select %p159, %s158, 3
          %s161 = smul.addr %s160, 8
          %s162 = scalar_lea.vmem %s1, %s161
          %s163 = smul.u32 2, %s10
        $region28: #{feature_ex_forward.34} parent=23 // pred_fallthru
          _
        // Predicated region
        $region29: #{feature_ex_forward.34} parent=23 // pred_check
          %p164 = pneg %p98
        $region30: #{feature_ex_forward.34} parent=23 // pred_check_branch
          %166 = sbr.rel (%p164) target = $region32
        $region31: #{feature_ex_forward.34} parent=23 // pred_region
          %s167 = sand.u32 %s88, 1
          %s168 = sand.u32 %s88, 1
          %s169 = smul.addr %s168, 128
          %s170 = scalar_lea.vmem [#allocation2], %s169
          %s171 = smul.u32 2, %s10
          %s172 = smul.addr %s171, 8
          %s173 = scalar_lea.vmem %s3, %s172
          // Predicated region
          $region33: #{feature_ex_forward.34} parent=31 // pred_check
            _
          $region34: #{feature_ex_forward.34} parent=31 // pred_check_branch
            %175 = sbr.rel (0) target = $region36
          $region35: #{feature_ex_forward.34} parent=31 // pred_region
            // Predicated region
            $region37: #{feature_ex_forward.34} parent=35 // pred_check
              _
            $region38: #{feature_ex_forward.34} parent=35 // pred_check_branch
              %177 = sbr.rel (0) target = $region40
            $region39: #{feature_ex_forward.34} parent=35 // pred_region
              loop: start=0, step=1, limit=1
              $region41: #{feature_ex_forward.34} parent=39 // loop_pre_header
                _
              $region42: #{feature_ex_forward.34} parent=39 // loop_header
                %s179 = sphi 0, %s183
                %p180 = scmp.ge.s32.totalorder %s179, 1
                %s184 = sphi %s173, %s173
                %s185 = sphi %s170, %s170
              $region43: #{feature_ex_forward.34} parent=39 // loop_header_branch
                %182 = sbr.rel (%p180) target = $region47
              $region44: #{feature_ex_forward.34} parent=39 // loop_body
                %v186 = vld [vmem:[%s184] sm:$0xff]
                %187 = vst [vmem:[%s185] sm:$0xff] %v186
                %v188 = vld [vmem:[%s184 + $0x8] sm:$0xff]
                %189 = vst [vmem:[%s185 + $0x8] sm:$0xff] %v188
                %v190 = vld [vmem:[%s184 + $0x20] sm:$0xff]
                %191 = vst [vmem:[%s185 + $0x10] sm:$0xff] %v190
                %v192 = vld [vmem:[%s184 + $0x28] sm:$0xff]
                %193 = vst [vmem:[%s185 + $0x18] sm:$0xff] %v192
                %v194 = vld [vmem:[%s184 + $0x40] sm:$0xff]
                %195 = vst [vmem:[%s185 + $0x20] sm:$0xff] %v194
                %v196 = vld [vmem:[%s184 + $0x48] sm:$0xff]
                %197 = vst [vmem:[%s185 + $0x28] sm:$0xff] %v196
                %v198 = vld [vmem:[%s184 + $0x60] sm:$0xff]
                %199 = vst [vmem:[%s185 + $0x30] sm:$0xff] %v198
                %v200 = vld [vmem:[%s184 + $0x68] sm:$0xff]
                %201 = vst [vmem:[%s185 + $0x38] sm:$0xff] %v200
                %v202 = vld [vmem:[%s184 + $0x80] sm:$0xff]
                %203 = vst [vmem:[%s185 + $0x40] sm:$0xff] %v202
                %v204 = vld [vmem:[%s184 + $0x88] sm:$0xff]
                %205 = vst [vmem:[%s185 + $0x48] sm:$0xff] %v204
                %v206 = vld [vmem:[%s184 + $0xa0] sm:$0xff]
                %207 = vst [vmem:[%s185 + $0x50] sm:$0xff] %v206
                %v208 = vld [vmem:[%s184 + $0xa8] sm:$0xff]
                %209 = vst [vmem:[%s185 + $0x58] sm:$0xff] %v208
                %v210 = vld [vmem:[%s184 + $0xc0] sm:$0xff]
                %211 = vst [vmem:[%s185 + $0x60] sm:$0xff] %v210
                %v212 = vld [vmem:[%s184 + $0xc8] sm:$0xff]
                %213 = vst [vmem:[%s185 + $0x68] sm:$0xff] %v212
                %v214 = vld [vmem:[%s184 + $0xe0] sm:$0xff]
                %215 = vst [vmem:[%s185 + $0x70] sm:$0xff] %v214
                %v216 = vld [vmem:[%s184 + $0xe8] sm:$0xff]
                %217 = vst [vmem:[%s185 + $0x78] sm:$0xff] %v216
              $region45: #{feature_ex_forward.34} parent=39 // loop_footer
                %s183 = sadd.s32 1, %s179
              $region46: #{feature_ex_forward.34} parent=39 // loop_footer_branch
                %178 = sbr.rel target = $region42
              $region47: #{feature_ex_forward.34} parent=39 // loop_exit
                _
            $region40: #{feature_ex_forward.34} parent=35 // pred_fallthru
              _
            // Predicated region
            $region48: #{feature_ex_forward.34} parent=35 // pred_check
              _
            $region49: #{feature_ex_forward.34} parent=35 // pred_check_branch
              %219 = sbr.rel target = $region51
            $region50: #{feature_ex_forward.34} parent=35 // pred_region
              _
            $region51: #{feature_ex_forward.34} parent=35 // pred_fallthru
              _
          $region36: #{feature_ex_forward.34} parent=31 // pred_fallthru
            _
          %220 = vnop
        $region32: #{feature_ex_forward.34} parent=23 // pred_fallthru
          _
      $region24: #{feature_ex_forward.34} parent=5 // pred_fallthru
        _
      %p221 = scmp.le.s32.totalorder 1, %s10
      %p222 = scmp.lt.s32.totalorder %s10, 3
      %p223 = pnand %p221, %p222
      %p224 = pneg %p223
      // Predicated region
      $region52: #{feature_ex_forward.34} parent=5 // pred_check
        _
      $region53: #{feature_ex_forward.34} parent=5 // pred_check_branch
        %226 = sbr.rel (%p223) target = $region55
      $region54: #{feature_ex_forward.34} parent=5 // pred_region
        %s227 = ssub.s32 %s10, 1
        %s228 = sand.u32 %s91, 1
        %s229 = sand.u32 %s91, 1
        %s230 = smul.addr %s229, 128
        %s231 = scalar_lea.vmem [#allocation2], %s230
        // Predicated region
        $region56: #{feature_ex_forward.34} parent=54 // pred_check
          %p232 = pneg %p104
        $region57: #{feature_ex_forward.34} parent=54 // pred_check_branch
          %234 = sbr.rel (%p232) target = $region59
        $region58: #{feature_ex_forward.34} parent=54 // pred_region
          _
        $region59: #{feature_ex_forward.34} parent=54 // pred_fallthru
          _
        %p235 = pneg %p31
        %p236 = pneg %p28
        %s237 = smul.u32 2, %s15
        %p238 = scmp.lt.s32.totalorder %s237, 3
        %s239 = scalar_select %p238, %s237, 3
        %s240 = smul.addr %s239, 8
        %s241 = scalar_lea.vmem %s1, %s240
        %p242 = pneg %p57
        %p243 = pneg %p54
        %p244 = pneg %p78
        %p245 = pneg %p75
        %s246 = sand.u32 %s91, 1
        %s247 = sand.u32 %s91, 1
        %s248 = smul.addr %s247, 128
        %s249 = scalar_lea.vmem [#allocation2], %s248
        %p250 = pneg %p104
        %p251 = pneg %p101
        %p252 = pneg %p130
        %p253 = pneg %p127
        %s254 = sand.u32 %s117, 1
        %s255 = sand.u32 %s117, 1
        %s256 = smul.addr %s255, 128
        %s257 = scalar_lea.vmem [#allocation3], %s256
        %s258 = smul.u32 2, %s15
        %p259 = scmp.lt.s32.totalorder %s258, 3
        %s260 = scalar_select %p259, %s258, 3
        %s261 = smul.addr %s260, 8
        %s262 = scalar_lea.vmem %s1, %s261
        %s263 = smul.u32 2, %s15
        %s264 = smul.u32 2, %s15
        %s265 = smul.u32 2, %s15
        %v266 = vld [vmem:[%s0] sm:$0xff]
        %v267 = vld [vmem:[%s0 + $0x8] sm:$0xff]
        %v268 = vld [vmem:[%s0 + $0x10] sm:$0xff]
        %v269 = vld [vmem:[%s0 + $0x18] sm:$0xff]
        %v270 = vld [vmem:[%s0 + $0x20] sm:$0xff]
        %v271 = vld [vmem:[%s0 + $0x28] sm:$0xff]
        %v272 = vld [vmem:[%s0 + $0x30] sm:$0xff]
        %v273 = vld [vmem:[%s0 + $0x38] sm:$0xff]
        %v274 = vld [vmem:[%s262] sm:$0xff]
        %v275 = vld [vmem:[%s262 + $0x8] sm:$0xff]
        %v276 = vld [vmem:[%s2] sm:$0xff]
        %v277 = vld [vmem:[%s2 + $0x8] sm:$0xff]
        %v278 = vld [vmem:[%s2 + $0x10] sm:$0xff]
        %v279 = vld [vmem:[%s2 + $0x18] sm:$0xff]
        %v280 = vld [vmem:[%s2 + $0x20] sm:$0xff]
        %v281 = vld [vmem:[%s2 + $0x28] sm:$0xff]
        %v282 = vld [vmem:[%s2 + $0x30] sm:$0xff]
        %v283 = vld [vmem:[%s2 + $0x38] sm:$0xff]
        %285 = vset.pattern.permute.xlu0 0
        %286 = vperm.xlu0 %285, %v276
        %v287 = vpop.permute.xlu0 %286
        %290 = vset.pattern.permute.xlu0 0
        %291 = vperm.xlu0 %290, %v277
        %v292 = vpop.permute.xlu0 %291
        %295 = vset.pattern.permute.xlu0 0
        %296 = vperm.xlu0 %295, %v278
        %v297 = vpop.permute.xlu0 %296
        %300 = vset.pattern.permute.xlu0 0
        %301 = vperm.xlu0 %300, %v279
        %v302 = vpop.permute.xlu0 %301
        %305 = vset.pattern.permute.xlu0 0
        %306 = vperm.xlu0 %305, %v280
        %v307 = vpop.permute.xlu0 %306
        %310 = vset.pattern.permute.xlu0 0
        %311 = vperm.xlu0 %310, %v281
        %v312 = vpop.permute.xlu0 %311
        %315 = vset.pattern.permute.xlu0 0
        %316 = vperm.xlu0 %315, %v282
        %v317 = vpop.permute.xlu0 %316
        %320 = vset.pattern.permute.xlu0 0
        %321 = vperm.xlu0 %320, %v283
        %v322 = vpop.permute.xlu0 %321
        %vm324 = vcmask 64512
        %v326 = vsel %vm324, %v266, 0
        %v329 = vsel %vm324, %v267, 0
        %v332 = vsel %vm324, %v268, 0
        %v335 = vsel %vm324, %v269, 0
        %v338 = vsel %vm324, %v270, 0
        %v341 = vsel %vm324, %v271, 0
        %v344 = vsel %vm324, %v272, 0
        %v347 = vsel %vm324, %v273, 0
        %349 = vmatprep.subr.mxu0 %v275
        %350 = vmatpush1.msra.mxu0 %v274
        %351 = vmatprep.subr.mxu0 0.0
        %352 = vmatpush1.msra.mxu0 0.0
        %353 = vmatprep.subr.mxu0 0.0
        %354 = vmatpush1.msra.mxu0 0.0
        %355 = vmatprep.subr.mxu0 0.0
        %356 = vmatpush1.msra.mxu0 0.0
        %357 = vmatprep.subr.mxu0 0.0
        %358 = vmatpush1.msra.mxu0 0.0
        %359 = vmatprep.subr.mxu0 0.0
        %360 = vmatpush1.msra.mxu0 0.0
        %361 = vmatprep.subr.mxu0 0.0
        %362 = vmatpush1.msra.mxu0 0.0
        %363 = vmatprep.subr.mxu0 0.0
        %364 = vmatpush1.msra.mxu0 0.0
        %365 = vmatprep.subr.mxu0 0.0
        %366 = vmatpush1.msra.mxu0 0.0
        %367 = vmatprep.subr.mxu0 0.0
        %368 = vmatpush1.msra.mxu0 0.0
        %369 = vmatprep.subr.mxu0 0.0
        %370 = vmatpush1.msra.mxu0 0.0
        %371 = vmatprep.subr.mxu0 0.0
        %372 = vmatpush1.msra.mxu0 0.0
        %373 = vmatprep.subr.mxu0 0.0
        %374 = vmatpush1.msra.mxu0 0.0
        %375 = vmatprep.subr.mxu0 0.0
        %376 = vmatpush1.msra.mxu0 0.0
        %377 = vmatprep.subr.mxu0 0.0
        %378 = vmatpush1.msra.mxu0 0.0
        %379 = vmatprep.subr.mxu0 0.0
        %380 = vmatpush1.msra.mxu0 0.0
        %381 = vmatprep.subr.mxu0 0.0
        %382 = vmatpush1.msra.mxu0 0.0
        %383 = vmatprep.subr.mxu0 0.0
        %384 = vmatpush1.msra.mxu0 0.0
        %385 = vmatprep.subr.mxu0 0.0
        %386 = vmatpush1.msra.mxu0 0.0
        %387 = vmatprep.subr.mxu0 0.0
        %388 = vmatpush1.msra.mxu0 0.0
        %389 = vmatprep.subr.mxu0 0.0
        %390 = vmatpush1.msra.mxu0 0.0
        %391 = vmatprep.subr.mxu0 0.0
        %392 = vmatpush1.msra.mxu0 0.0
        %393 = vmatprep.subr.mxu0 0.0
        %394 = vmatpush1.msra.mxu0 0.0
        %395 = vmatprep.subr.mxu0 0.0
        %396 = vmatpush1.msra.mxu0 0.0
        %397 = vmatprep.subr.mxu0 0.0
        %398 = vmatpush1.msra.mxu0 0.0
        %399 = vmatprep.subr.mxu0 0.0
        %400 = vmatpush1.msra.mxu0 0.0
        %401 = vmatprep.subr.mxu0 0.0
        %402 = vmatpush1.msra.mxu0 0.0
        %403 = vmatprep.subr.mxu0 0.0
        %404 = vmatpush1.msra.mxu0 0.0
        %405 = vmatprep.subr.mxu0 0.0
        %406 = vmatpush1.msra.mxu0 0.0
        %407 = vmatprep.subr.mxu0 0.0
        %408 = vmatpush1.msra.mxu0 0.0
        %409 = vmatprep.subr.mxu0 0.0
        %410 = vmatpush1.msra.mxu0 0.0
        %411 = vmatprep.subr.mxu0 0.0
        %412 = vmatpush1.msra.mxu0 0.0
        %413 = vmatprep.mubr.f32.mxu0 0.0
        %414 = vmatmul.mubr.f32.gmra.mrb[0].mxu0 %v326
        %v415 = vpop.f32.mrb[0].mxu0
        %v416 = vadd.f32 %v287, %v415
        %v417 = vpop.f32.mrb[0].mxu0
        %v418 = vadd.f32 %v287, %v417
        %419 = vmatprep.mubr.f32.mxu0 0.0
        %420 = vmatmul.mubr.f32.gmra.mrb[0].mxu0 %v329
        %v421 = vpop.f32.mrb[0].mxu0
        %v422 = vadd.f32 %v292, %v421
        %v423 = vpop.f32.mrb[0].mxu0
        %v424 = vadd.f32 %v292, %v423
        %425 = vmatprep.mubr.f32.mxu0 0.0
        %426 = vmatmul.mubr.f32.gmra.mrb[0].mxu0 %v332
        %v427 = vpop.f32.mrb[0].mxu0
        %v428 = vadd.f32 %v297, %v427
        %v429 = vpop.f32.mrb[0].mxu0
        %v430 = vadd.f32 %v297, %v429
        %431 = vmatprep.mubr.f32.mxu0 0.0
        %432 = vmatmul.mubr.f32.gmra.mrb[0].mxu0 %v335
        %v433 = vpop.f32.mrb[0].mxu0
        %v434 = vadd.f32 %v302, %v433
        %v435 = vpop.f32.mrb[0].mxu0
        %v436 = vadd.f32 %v302, %v435
        %437 = vmatprep.mubr.f32.mxu0 0.0
        %438 = vmatmul.mubr.f32.gmra.mrb[0].mxu0 %v338
        %v439 = vpop.f32.mrb[0].mxu0
        %v440 = vadd.f32 %v307, %v439
        %v441 = vpop.f32.mrb[0].mxu0
        %v442 = vadd.f32 %v307, %v441
        %443 = vmatprep.mubr.f32.mxu0 0.0
        %444 = vmatmul.mubr.f32.gmra.mrb[0].mxu0 %v341
        %v445 = vpop.f32.mrb[0].mxu0
        %v446 = vadd.f32 %v312, %v445
        %v447 = vpop.f32.mrb[0].mxu0
        %v448 = vadd.f32 %v312, %v447
        %449 = vmatprep.mubr.f32.mxu0 0.0
        %450 = vmatmul.mubr.f32.gmra.mrb[0].mxu0 %v344
        %v451 = vpop.f32.mrb[0].mxu0
        %v452 = vadd.f32 %v317, %v451
        %v453 = vpop.f32.mrb[0].mxu0
        %v454 = vadd.f32 %v317, %v453
        %455 = vmatprep.mubr.f32.mxu0 0.0
        %456 = vmatmul.mubr.f32.gmra.mrb[0].mxu0 %v347
        %v457 = vpop.f32.mrb[0].mxu0
        %v458 = vadd.f32 %v322, %v457
        %v459 = vpop.f32.mrb[0].mxu0
        %v460 = vadd.f32 %v322, %v459
        %461 = vdwg.mxu0
        %v462 = vld [vmem:[%s231] sm:$0xff]
        %v463 = vld [vmem:[%s231 + $0x8] sm:$0xff]
        %v464 = vld [vmem:[%s231 + $0x10] sm:$0xff]
        %v465 = vld [vmem:[%s231 + $0x18] sm:$0xff]
        %v466 = vld [vmem:[%s231 + $0x20] sm:$0xff]
        %v467 = vld [vmem:[%s231 + $0x28] sm:$0xff]
        %v468 = vld [vmem:[%s231 + $0x30] sm:$0xff]
        %v469 = vld [vmem:[%s231 + $0x38] sm:$0xff]
        %v470 = vld [vmem:[%s231 + $0x40] sm:$0xff]
        %v471 = vld [vmem:[%s231 + $0x48] sm:$0xff]
        %v472 = vld [vmem:[%s231 + $0x50] sm:$0xff]
        %v473 = vld [vmem:[%s231 + $0x58] sm:$0xff]
        %v474 = vld [vmem:[%s231 + $0x60] sm:$0xff]
        %v475 = vld [vmem:[%s231 + $0x68] sm:$0xff]
        %v476 = vld [vmem:[%s231 + $0x70] sm:$0xff]
        %v477 = vld [vmem:[%s231 + $0x78] sm:$0xff]
        %v478 = vadd.f32 %v416, %v462
        %v479 = vadd.f32 %v418, %v463
        %v480 = vadd.f32 %v422, %v464
        %v481 = vadd.f32 %v424, %v465
        %v482 = vadd.f32 %v428, %v466
        %v483 = vadd.f32 %v430, %v467
        %v484 = vadd.f32 %v434, %v468
        %v485 = vadd.f32 %v436, %v469
        %v486 = vadd.f32 %v440, %v470
        %v487 = vadd.f32 %v442, %v471
        %v488 = vadd.f32 %v446, %v472
        %v489 = vadd.f32 %v448, %v473
        %v490 = vadd.f32 %v452, %v474
        %v491 = vadd.f32 %v454, %v475
        %v492 = vadd.f32 %v458, %v476
        %v493 = vadd.f32 %v460, %v477
        %494 = vst [vmem:[%s257] sm:$0xff] %v478
        %495 = vst [vmem:[%s257 + $0x8] sm:$0xff] %v479
        %496 = vst [vmem:[%s257 + $0x10] sm:$0xff] %v480
        %497 = vst [vmem:[%s257 + $0x18] sm:$0xff] %v481
        %498 = vst [vmem:[%s257 + $0x20] sm:$0xff] %v482
        %499 = vst [vmem:[%s257 + $0x28] sm:$0xff] %v483
        %500 = vst [vmem:[%s257 + $0x30] sm:$0xff] %v484
        %501 = vst [vmem:[%s257 + $0x38] sm:$0xff] %v485
        %502 = vst [vmem:[%s257 + $0x40] sm:$0xff] %v486
        %503 = vst [vmem:[%s257 + $0x48] sm:$0xff] %v487
        %504 = vst [vmem:[%s257 + $0x50] sm:$0xff] %v488
        %505 = vst [vmem:[%s257 + $0x58] sm:$0xff] %v489
        %506 = vst [vmem:[%s257 + $0x60] sm:$0xff] %v490
        %507 = vst [vmem:[%s257 + $0x68] sm:$0xff] %v491
        %508 = vst [vmem:[%s257 + $0x70] sm:$0xff] %v492
        %509 = vst [vmem:[%s257 + $0x78] sm:$0xff] %v493
        %s510 = sand.u32 %s117, 1
        %s511 = sand.u32 %s117, 1
        %s512 = smul.addr %s511, 128
        %s513 = scalar_lea.vmem [#allocation3], %s512
        // Predicated region
        $region60: #{feature_ex_forward.34} parent=54 // pred_check
          %p514 = pneg %p127
        $region61: #{feature_ex_forward.34} parent=54 // pred_check_branch
          %516 = sbr.rel (%p514) target = $region63
        $region62: #{feature_ex_forward.34} parent=54 // pred_region
          %s517 = smul.u32 2, %s15
          %s518 = smul.addr %s517, 8
          %s519 = scalar_lea.vmem %s4, %s518
          // Predicated region
          $region64: #{feature_ex_forward.34} parent=62 // pred_check
            _
          $region65: #{feature_ex_forward.34} parent=62 // pred_check_branch
            %521 = sbr.rel (0) target = $region67
          $region66: #{feature_ex_forward.34} parent=62 // pred_region
            // Predicated region
            $region68: #{feature_ex_forward.34} parent=66 // pred_check
              _
            $region69: #{feature_ex_forward.34} parent=66 // pred_check_branch
              %523 = sbr.rel (0) target = $region71
            $region70: #{feature_ex_forward.34} parent=66 // pred_region
              loop: start=0, step=1, limit=1
              $region72: #{feature_ex_forward.34} parent=70 // loop_pre_header
                _
              $region73: #{feature_ex_forward.34} parent=70 // loop_header
                %s525 = sphi 0, %s529
                %p526 = scmp.ge.s32.totalorder %s525, 1
                %s530 = sphi %s513, %s513
                %s531 = sphi %s519, %s519
              $region74: #{feature_ex_forward.34} parent=70 // loop_header_branch
                %528 = sbr.rel (%p526) target = $region78
              $region75: #{feature_ex_forward.34} parent=70 // loop_body
                %v532 = vld [vmem:[%s530] sm:$0xff]
                %533 = vst [vmem:[%s531] sm:$0xff] %v532
                %v534 = vld [vmem:[%s530 + $0x8] sm:$0xff]
                %535 = vst [vmem:[%s531 + $0x8] sm:$0xff] %v534
                %v536 = vld [vmem:[%s530 + $0x10] sm:$0xff]
                %537 = vst [vmem:[%s531 + $0x20] sm:$0xff] %v536
                %v538 = vld [vmem:[%s530 + $0x18] sm:$0xff]
                %539 = vst [vmem:[%s531 + $0x28] sm:$0xff] %v538
                %v540 = vld [vmem:[%s530 + $0x20] sm:$0xff]
                %541 = vst [vmem:[%s531 + $0x40] sm:$0xff] %v540
                %v542 = vld [vmem:[%s530 + $0x28] sm:$0xff]
                %543 = vst [vmem:[%s531 + $0x48] sm:$0xff] %v542
                %v544 = vld [vmem:[%s530 + $0x30] sm:$0xff]
                %545 = vst [vmem:[%s531 + $0x60] sm:$0xff] %v544
                %v546 = vld [vmem:[%s530 + $0x38] sm:$0xff]
                %547 = vst [vmem:[%s531 + $0x68] sm:$0xff] %v546
                %v548 = vld [vmem:[%s530 + $0x40] sm:$0xff]
                %549 = vst [vmem:[%s531 + $0x80] sm:$0xff] %v548
                %v550 = vld [vmem:[%s530 + $0x48] sm:$0xff]
                %551 = vst [vmem:[%s531 + $0x88] sm:$0xff] %v550
                %v552 = vld [vmem:[%s530 + $0x50] sm:$0xff]
                %553 = vst [vmem:[%s531 + $0xa0] sm:$0xff] %v552
                %v554 = vld [vmem:[%s530 + $0x58] sm:$0xff]
                %555 = vst [vmem:[%s531 + $0xa8] sm:$0xff] %v554
                %v556 = vld [vmem:[%s530 + $0x60] sm:$0xff]
                %557 = vst [vmem:[%s531 + $0xc0] sm:$0xff] %v556
                %v558 = vld [vmem:[%s530 + $0x68] sm:$0xff]
                %559 = vst [vmem:[%s531 + $0xc8] sm:$0xff] %v558
                %v560 = vld [vmem:[%s530 + $0x70] sm:$0xff]
                %561 = vst [vmem:[%s531 + $0xe0] sm:$0xff] %v560
                %v562 = vld [vmem:[%s530 + $0x78] sm:$0xff]
                %563 = vst [vmem:[%s531 + $0xe8] sm:$0xff] %v562
              $region76: #{feature_ex_forward.34} parent=70 // loop_footer
                %s529 = sadd.s32 1, %s525
              $region77: #{feature_ex_forward.34} parent=70 // loop_footer_branch
                %524 = sbr.rel target = $region73
              $region78: #{feature_ex_forward.34} parent=70 // loop_exit
                _
            $region71: #{feature_ex_forward.34} parent=66 // pred_fallthru
              _
            // Predicated region
            $region79: #{feature_ex_forward.34} parent=66 // pred_check
              _
            $region80: #{feature_ex_forward.34} parent=66 // pred_check_branch
              %565 = sbr.rel target = $region82
            $region81: #{feature_ex_forward.34} parent=66 // pred_region
              _
            $region82: #{feature_ex_forward.34} parent=66 // pred_fallthru
              _
          $region67: #{feature_ex_forward.34} parent=62 // pred_fallthru
            _
          %566 = vnop
        $region63: #{feature_ex_forward.34} parent=54 // pred_fallthru
          _
      $region55: #{feature_ex_forward.34} parent=5 // pred_fallthru
        _
      %p567 = scmp.le.s32.totalorder 2, %s10
      // Predicated region
      $region83: #{feature_ex_forward.34} parent=5 // pred_check
        %p568 = pneg %p567
      $region84: #{feature_ex_forward.34} parent=5 // pred_check_branch
        %570 = sbr.rel (%p568) target = $region86
      $region85: #{feature_ex_forward.34} parent=5 // pred_region
        %s571 = ssub.s32 %s10, 2
        // Predicated region
        $region87: #{feature_ex_forward.34} parent=85 // pred_check
          %p572 = pneg %p133
        $region88: #{feature_ex_forward.34} parent=85 // pred_check_branch
          %574 = sbr.rel (%p572) target = $region90
        $region89: #{feature_ex_forward.34} parent=85 // pred_region
          %s575 = sand.u32 %s118, 1
          %s576 = sand.u32 %s118, 1
          %s577 = smul.addr %s576, 128
          %s578 = scalar_lea.vmem [#allocation3], %s577
        $region90: #{feature_ex_forward.34} parent=85 // pred_fallthru
          _
      $region86: #{feature_ex_forward.34} parent=5 // pred_fallthru
        _
    $region6: #{feature_ex_forward.34} parent=1 // loop_footer
      %s14 = sadd.s32 1, %s10
    $region7: #{feature_ex_forward.34} parent=1 // loop_footer_branch
      %9 = sbr.rel target = $region3
    $region8: #{feature_ex_forward.34} parent=1 // loop_exit
      _

// kernel: feature_ex_forward.31
$region0: #{feature_ex_forward.31}
  #allocation0 [shape = 'u32[]', space=smem, size = 0x4, offset = 0x4, fixed_abs, tag = 'smem constant byte address 0x4 - core index']
  #allocation1 [shape = 'u32[144,128]{1,0:T(1,128)}', space=vmem, size = 0x12000, scoped, tag = 'internal scratch']
  %s0 = inlined_call_operand.vmem [shape: f32[32,576], index: 0, kind: input, shape index: {}]
  %s1 = inlined_call_operand.vmem [shape: f32[576,32], index: 1, kind: input, shape index: {}]
  %s2 = inlined_call_operand.vmem [shape: f32[32,1], index: 2, kind: input, shape index: {}]
  %s3 = inlined_call_operand.vmem [shape: f32[32,32], index: 3, kind: output, shape index: {}]
  %s4 = sld [smem:[#allocation0]]
  $region22: #{feature_ex_forward.31} parent=0
    _
  %s6 = ssub.s32 1, %s4
  %s7 = scalar_select 0, %s6, %s4
  // Predicated region
  $region2: #{feature_ex_forward.31} parent=0 // pred_check
    _
  $region3: #{feature_ex_forward.31} parent=0 // pred_check_branch
    %9 = sbr.rel (0) target = $region5
  $region4: #{feature_ex_forward.31} parent=0 // pred_region
    _
  $region5: #{feature_ex_forward.31} parent=0 // pred_fallthru
    _
  // Predicated region
  $region6: #{feature_ex_forward.31} parent=0 // pred_check
    _
  $region7: #{feature_ex_forward.31} parent=0 // pred_check_branch
    %11 = sbr.rel (0) target = $region9
  $region8: #{feature_ex_forward.31} parent=0 // pred_region
    _
  $region9: #{feature_ex_forward.31} parent=0 // pred_fallthru
    _
  // Predicated region
  $region10: #{feature_ex_forward.31} parent=0 // pred_check
    _
  $region11: #{feature_ex_forward.31} parent=0 // pred_check_branch
    %13 = sbr.rel (0) target = $region13
  $region12: #{feature_ex_forward.31} parent=0 // pred_region
    _
  $region13: #{feature_ex_forward.31} parent=0 // pred_fallthru
    _
  %v14 = vld [vmem:[%s0] sm:$0xff]
  %v15 = vld [vmem:[%s0 + $0x8] sm:$0xff]
  %v16 = vld [vmem:[%s0 + $0x10] sm:$0xff]
  %v17 = vld [vmem:[%s0 + $0x18] sm:$0xff]
  %v18 = vld [vmem:[%s0 + $0x20] sm:$0xff]
  %v19 = vld [vmem:[%s0 + $0x28] sm:$0xff]
  %v20 = vld [vmem:[%s0 + $0x30] sm:$0xff]
  %v21 = vld [vmem:[%s0 + $0x38] sm:$0xff]
  %v22 = vld [vmem:[%s0 + $0x40] sm:$0xff]
  %v23 = vld [vmem:[%s0 + $0x48] sm:$0xff]
  %v24 = vld [vmem:[%s0 + $0x50] sm:$0xff]
  %v25 = vld [vmem:[%s0 + $0x58] sm:$0xff]
  %v26 = vld [vmem:[%s0 + $0x60] sm:$0xff]
  %v27 = vld [vmem:[%s0 + $0x68] sm:$0xff]
  %v28 = vld [vmem:[%s0 + $0x70] sm:$0xff]
  %v29 = vld [vmem:[%s0 + $0x78] sm:$0xff]
  %v30 = vld [vmem:[%s0 + $0x80] sm:$0xff]
  %v31 = vld [vmem:[%s0 + $0x88] sm:$0xff]
  %v32 = vld [vmem:[%s0 + $0x90] sm:$0xff]
  %v33 = vld [vmem:[%s0 + $0x98] sm:$0xff]
  %v34 = vld [vmem:[%s1] sm:$0xff]
  %v35 = vld [vmem:[%s1 + $0x8] sm:$0xff]
  %v36 = vld [vmem:[%s1 + $0x10] sm:$0xff]
  %v37 = vld [vmem:[%s1 + $0x18] sm:$0xff]
  %v38 = vld [vmem:[%s1 + $0x20] sm:$0xff]
  %v39 = vld [vmem:[%s1 + $0x28] sm:$0xff]
  %v40 = vld [vmem:[%s1 + $0x30] sm:$0xff]
  %v41 = vld [vmem:[%s1 + $0x38] sm:$0xff]
  %v42 = vld [vmem:[%s1 + $0x40] sm:$0xff]
  %v43 = vld [vmem:[%s1 + $0x48] sm:$0xff]
  %v44 = vld [vmem:[%s1 + $0x50] sm:$0xff]
  %v45 = vld [vmem:[%s1 + $0x58] sm:$0xff]
  %v46 = vld [vmem:[%s1 + $0x60] sm:$0xff]
  %v47 = vld [vmem:[%s1 + $0x68] sm:$0xff]
  %v48 = vld [vmem:[%s1 + $0x70] sm:$0xff]
  %v49 = vld [vmem:[%s1 + $0x78] sm:$0xff]
  %v50 = vld [vmem:[%s1 + $0x80] sm:$0xff]
  %v51 = vld [vmem:[%s1 + $0x88] sm:$0xff]
  %v52 = vld [vmem:[%s1 + $0x90] sm:$0xff]
  %v53 = vld [vmem:[%s1 + $0x98] sm:$0xff]
  %v54 = vld [vmem:[%s1 + $0xa0] sm:$0xff]
  %v55 = vld [vmem:[%s1 + $0xa8] sm:$0xff]
  %v56 = vld [vmem:[%s1 + $0xb0] sm:$0xff]
  %v57 = vld [vmem:[%s1 + $0xb8] sm:$0xff]
  %v58 = vld [vmem:[%s1 + $0xc0] sm:$0xff]
  %v59 = vld [vmem:[%s1 + $0xc8] sm:$0xff]
  %v60 = vld [vmem:[%s1 + $0xd0] sm:$0xff]
  %v61 = vld [vmem:[%s1 + $0xd8] sm:$0xff]
  %v62 = vld [vmem:[%s1 + $0xe0] sm:$0xff]
  %v63 = vld [vmem:[%s1 + $0xe8] sm:$0xff]
  %v64 = vld [vmem:[%s1 + $0xf0] sm:$0xff]
  %v65 = vld [vmem:[%s1 + $0xf8] sm:$0xff]
  %v66 = vld [vmem:[%s1 + $0x100] sm:$0xff]
  %v67 = vld [vmem:[%s1 + $0x108] sm:$0xff]
  %v68 = vld [vmem:[%s1 + $0x110] sm:$0xff]
  %v69 = vld [vmem:[%s1 + $0x118] sm:$0xff]
  %v70 = vld [vmem:[%s1 + $0x120] sm:$0xff]
  %v71 = vld [vmem:[%s1 + $0x128] sm:$0xff]
  %v72 = vld [vmem:[%s1 + $0x130] sm:$0xff]
  %v73 = vld [vmem:[%s1 + $0x138] sm:$0xff]
  %v74 = vld [vmem:[%s1 + $0x140] sm:$0xff]
  %v75 = vld [vmem:[%s1 + $0x148] sm:$0xff]
  %v76 = vld [vmem:[%s1 + $0x150] sm:$0xff]
  %v77 = vld [vmem:[%s1 + $0x158] sm:$0xff]
  %v78 = vld [vmem:[%s1 + $0x160] sm:$0xff]
  %v79 = vld [vmem:[%s1 + $0x168] sm:$0xff]
  %v80 = vld [vmem:[%s1 + $0x170] sm:$0xff]
  %v81 = vld [vmem:[%s1 + $0x178] sm:$0xff]
  %v82 = vld [vmem:[%s1 + $0x180] sm:$0xff]
  %v83 = vld [vmem:[%s1 + $0x188] sm:$0xff]
  %v84 = vld [vmem:[%s1 + $0x190] sm:$0xff]
  %v85 = vld [vmem:[%s1 + $0x198] sm:$0xff]
  %v86 = vld [vmem:[%s1 + $0x1a0] sm:$0xff]
  %v87 = vld [vmem:[%s1 + $0x1a8] sm:$0xff]
  %v88 = vld [vmem:[%s1 + $0x1b0] sm:$0xff]
  %v89 = vld [vmem:[%s1 + $0x1b8] sm:$0xff]
  %v90 = vld [vmem:[%s1 + $0x1c0] sm:$0xff]
  %v91 = vld [vmem:[%s1 + $0x1c8] sm:$0xff]
  %v92 = vld [vmem:[%s1 + $0x1d0] sm:$0xff]
  %v93 = vld [vmem:[%s1 + $0x1d8] sm:$0xff]
  %v94 = vld [vmem:[%s1 + $0x1e0] sm:$0xff]
  %v95 = vld [vmem:[%s1 + $0x1e8] sm:$0xff]
  %v96 = vld [vmem:[%s1 + $0x1f0] sm:$0xff]
  %v97 = vld [vmem:[%s1 + $0x1f8] sm:$0xff]
  %v98 = vld [vmem:[%s1 + $0x200] sm:$0xff]
  %v99 = vld [vmem:[%s1 + $0x208] sm:$0xff]
  %v100 = vld [vmem:[%s1 + $0x210] sm:$0xff]
  %v101 = vld [vmem:[%s1 + $0x218] sm:$0xff]
  %v102 = vld [vmem:[%s1 + $0x220] sm:$0xff]
  %v103 = vld [vmem:[%s1 + $0x228] sm:$0xff]
  %v104 = vld [vmem:[%s1 + $0x230] sm:$0xff]
  %v105 = vld [vmem:[%s1 + $0x238] sm:$0xff]
  %v106 = vld [vmem:[%s2] sm:$0xff]
  %v107 = vld [vmem:[%s2 + $0x8] sm:$0xff]
  %v108 = vld [vmem:[%s2 + $0x10] sm:$0xff]
  %v109 = vld [vmem:[%s2 + $0x18] sm:$0xff]
  %111 = vset.pattern.permute.xlu0 0
  %112 = vperm.xlu0 %111, %v106
  %v113 = vpop.permute.xlu0 %112
  %116 = vset.pattern.permute.xlu0 0
  %117 = vperm.xlu0 %116, %v107
  %v118 = vpop.permute.xlu0 %117
  %121 = vset.pattern.permute.xlu0 0
  %122 = vperm.xlu0 %121, %v108
  %v123 = vpop.permute.xlu0 %122
  %126 = vset.pattern.permute.xlu0 0
  %127 = vperm.xlu0 %126, %v109
  %v128 = vpop.permute.xlu0 %127
  %vm130 = vcmask 523264
  %v132 = vsel %vm130, %v18, 0
  %v135 = vsel %vm130, %v23, 0
  %v138 = vsel %vm130, %v28, 0
  %v141 = vsel %vm130, %v33, 0
  %143 = vmatprep.subr.mxu0 0.0
  %144 = vmatpush1.msra.mxu0 %v34
  %145 = vmatprep.subr.mxu0 0.0
  %146 = vmatpush1.msra.mxu0 %v35
  %147 = vmatprep.subr.mxu0 0.0
  %148 = vmatpush1.msra.mxu0 %v36
  %149 = vmatprep.subr.mxu0 0.0
  %150 = vmatpush1.msra.mxu0 %v37
  %151 = vmatprep.subr.mxu0 0.0
  %152 = vmatpush1.msra.mxu0 %v38
  %153 = vmatprep.subr.mxu0 0.0
  %154 = vmatpush1.msra.mxu0 %v39
  %155 = vmatprep.subr.mxu0 0.0
  %156 = vmatpush1.msra.mxu0 %v40
  %157 = vmatprep.subr.mxu0 0.0
  %158 = vmatpush1.msra.mxu0 %v41
  %159 = vmatprep.subr.mxu0 0.0
  %160 = vmatpush1.msra.mxu0 %v42
  %161 = vmatprep.subr.mxu0 0.0
  %162 = vmatpush1.msra.mxu0 %v43
  %163 = vmatprep.subr.mxu0 0.0
  %164 = vmatpush1.msra.mxu0 %v44
  %165 = vmatprep.subr.mxu0 0.0
  %166 = vmatpush1.msra.mxu0 %v45
  %167 = vmatprep.subr.mxu0 0.0
  %168 = vmatpush1.msra.mxu0 %v46
  %169 = vmatprep.subr.mxu0 0.0
  %170 = vmatpush1.msra.mxu0 %v47
  %171 = vmatprep.subr.mxu0 0.0
  %172 = vmatpush1.msra.mxu0 %v48
  %173 = vmatprep.subr.mxu0 0.0
  %174 = vmatpush1.msra.mxu0 %v49
  %175 = vmatprep.subr.mxu0 0.0
  %176 = vmatpush1.msra.mxu0 %v50
  %177 = vmatprep.subr.mxu0 0.0
  %178 = vmatpush1.msra.mxu0 %v51
  %179 = vmatprep.subr.mxu0 0.0
  %180 = vmatpush1.msra.mxu0 %v52
  %181 = vmatprep.subr.mxu0 0.0
  %182 = vmatpush1.msra.mxu0 %v53
  %183 = vmatprep.subr.mxu0 0.0
  %184 = vmatpush1.msra.mxu0 %v54
  %185 = vmatprep.subr.mxu0 0.0
  %186 = vmatpush1.msra.mxu0 %v55
  %187 = vmatprep.subr.mxu0 0.0
  %188 = vmatpush1.msra.mxu0 %v56
  %189 = vmatprep.subr.mxu0 0.0
  %190 = vmatpush1.msra.mxu0 %v57
  %191 = vmatprep.subr.mxu0 0.0
  %192 = vmatpush1.msra.mxu0 %v58
  %193 = vmatprep.subr.mxu0 0.0
  %194 = vmatpush1.msra.mxu0 %v59
  %195 = vmatprep.subr.mxu0 0.0
  %196 = vmatpush1.msra.mxu0 %v60
  %197 = vmatprep.subr.mxu0 0.0
  %198 = vmatpush1.msra.mxu0 %v61
  %199 = vmatprep.subr.mxu0 0.0
  %200 = vmatpush1.msra.mxu0 %v62
  %201 = vmatprep.subr.mxu0 0.0
  %202 = vmatpush1.msra.mxu0 %v63
  %203 = vmatprep.subr.mxu0 0.0
  %204 = vmatpush1.msra.mxu0 %v64
  %205 = vmatprep.subr.mxu0 0.0
  %206 = vmatpush1.msra.mxu0 %v65
  %207 = vmatprep.mubr.f32.mxu0 %v15
  %208 = vmatmul.mubr.f32.gmra.mrb[0].mxu0 %v14
  %v209 = vpop.f32.mrb[0].mxu0
  %v210 = vadd.f32 %v113, %v209
  %v211 = vpop.f32.mrb[0].mxu0
  %212 = vmatprep.mubr.f32.mxu0 %v20
  %213 = vmatmul.mubr.f32.gmra.mrb[0].mxu0 %v19
  %v214 = vpop.f32.mrb[0].mxu0
  %v215 = vadd.f32 %v118, %v214
  %v216 = vpop.f32.mrb[0].mxu0
  %217 = vmatprep.mubr.f32.mxu0 %v25
  %218 = vmatmul.mubr.f32.gmra.mrb[0].mxu0 %v24
  %v219 = vpop.f32.mrb[0].mxu0
  %v220 = vadd.f32 %v123, %v219
  %v221 = vpop.f32.mrb[0].mxu0
  %222 = vmatprep.mubr.f32.mxu0 %v30
  %223 = vmatmul.mubr.f32.gmra.mrb[0].mxu0 %v29
  %v224 = vpop.f32.mrb[0].mxu0
  %v225 = vadd.f32 %v128, %v224
  %v226 = vpop.f32.mrb[0].mxu0
  %227 = vdwg.mxu0
  %228 = vmatprep.subr.mxu0 0.0
  %229 = vmatpush1.msra.mxu0 %v66
  %230 = vmatprep.subr.mxu0 0.0
  %231 = vmatpush1.msra.mxu0 %v67
  %232 = vmatprep.subr.mxu0 0.0
  %233 = vmatpush1.msra.mxu0 %v68
  %234 = vmatprep.subr.mxu0 0.0
  %235 = vmatpush1.msra.mxu0 %v69
  %236 = vmatprep.subr.mxu0 0.0
  %237 = vmatpush1.msra.mxu0 %v70
  %238 = vmatprep.subr.mxu0 0.0
  %239 = vmatpush1.msra.mxu0 %v71
  %240 = vmatprep.subr.mxu0 0.0
  %241 = vmatpush1.msra.mxu0 %v72
  %242 = vmatprep.subr.mxu0 0.0
  %243 = vmatpush1.msra.mxu0 %v73
  %244 = vmatprep.subr.mxu0 0.0
  %245 = vmatpush1.msra.mxu0 %v74
  %246 = vmatprep.subr.mxu0 0.0
  %247 = vmatpush1.msra.mxu0 %v75
  %248 = vmatprep.subr.mxu0 0.0
  %249 = vmatpush1.msra.mxu0 %v76
  %250 = vmatprep.subr.mxu0 0.0
  %251 = vmatpush1.msra.mxu0 %v77
  %252 = vmatprep.subr.mxu0 0.0
  %253 = vmatpush1.msra.mxu0 %v78
  %254 = vmatprep.subr.mxu0 0.0
  %255 = vmatpush1.msra.mxu0 %v79
  %256 = vmatprep.subr.mxu0 0.0
  %257 = vmatpush1.msra.mxu0 %v80
  %258 = vmatprep.subr.mxu0 0.0
  %259 = vmatpush1.msra.mxu0 %v81
  %260 = vmatprep.subr.mxu0 0.0
  %261 = vmatpush1.msra.mxu0 %v82
  %262 = vmatprep.subr.mxu0 0.0
  %263 = vmatpush1.msra.mxu0 %v83
  %264 = vmatprep.subr.mxu0 0.0
  %265 = vmatpush1.msra.mxu0 %v84
  %266 = vmatprep.subr.mxu0 0.0
  %267 = vmatpush1.msra.mxu0 %v85
  %268 = vmatprep.subr.mxu0 0.0
  %269 = vmatpush1.msra.mxu0 %v86
  %270 = vmatprep.subr.mxu0 0.0
  %271 = vmatpush1.msra.mxu0 %v87
  %272 = vmatprep.subr.mxu0 0.0
  %273 = vmatpush1.msra.mxu0 %v88
  %274 = vmatprep.subr.mxu0 0.0
  %275 = vmatpush1.msra.mxu0 %v89
  %276 = vmatprep.subr.mxu0 0.0
  %277 = vmatpush1.msra.mxu0 %v90
  %278 = vmatprep.subr.mxu0 0.0
  %279 = vmatpush1.msra.mxu0 %v91
  %280 = vmatprep.subr.mxu0 0.0
  %281 = vmatpush1.msra.mxu0 %v92
  %282 = vmatprep.subr.mxu0 0.0
  %283 = vmatpush1.msra.mxu0 %v93
  %284 = vmatprep.subr.mxu0 0.0
  %285 = vmatpush1.msra.mxu0 %v94
  %286 = vmatprep.subr.mxu0 0.0
  %287 = vmatpush1.msra.mxu0 %v95
  %288 = vmatprep.subr.mxu0 0.0
  %289 = vmatpush1.msra.mxu0 %v96
  %290 = vmatprep.subr.mxu0 0.0
  %291 = vmatpush1.msra.mxu0 %v97
  %292 = vmatprep.mubr.f32.mxu0 %v17
  %293 = vmatmul.mubr.f32.gmra.mrb[0].mxu0 %v16
  %v294 = vpop.f32.mrb[0].mxu0
  %v295 = vadd.f32 %v210, %v294
  %v296 = vpop.f32.mrb[0].mxu0
  %297 = vmatprep.mubr.f32.mxu0 %v22
  %298 = vmatmul.mubr.f32.gmra.mrb[0].mxu0 %v21
  %v299 = vpop.f32.mrb[0].mxu0
  %v300 = vadd.f32 %v215, %v299
  %v301 = vpop.f32.mrb[0].mxu0
  %302 = vmatprep.mubr.f32.mxu0 %v27
  %303 = vmatmul.mubr.f32.gmra.mrb[0].mxu0 %v26
  %v304 = vpop.f32.mrb[0].mxu0
  %v305 = vadd.f32 %v220, %v304
  %v306 = vpop.f32.mrb[0].mxu0
  %307 = vmatprep.mubr.f32.mxu0 %v32
  %308 = vmatmul.mubr.f32.gmra.mrb[0].mxu0 %v31
  %v309 = vpop.f32.mrb[0].mxu0
  %v310 = vadd.f32 %v225, %v309
  %v311 = vpop.f32.mrb[0].mxu0
  %312 = vdwg.mxu0
  %313 = vmatprep.subr.mxu0 0.0
  %314 = vmatpush1.msra.mxu0 %v98
  %315 = vmatprep.subr.mxu0 0.0
  %316 = vmatpush1.msra.mxu0 %v99
  %317 = vmatprep.subr.mxu0 0.0
  %318 = vmatpush1.msra.mxu0 %v100
  %319 = vmatprep.subr.mxu0 0.0
  %320 = vmatpush1.msra.mxu0 %v101
  %321 = vmatprep.subr.mxu0 0.0
  %322 = vmatpush1.msra.mxu0 %v102
  %323 = vmatprep.subr.mxu0 0.0
  %324 = vmatpush1.msra.mxu0 %v103
  %325 = vmatprep.subr.mxu0 0.0
  %326 = vmatpush1.msra.mxu0 %v104
  %327 = vmatprep.subr.mxu0 0.0
  %328 = vmatpush1.msra.mxu0 %v105
  %329 = vmatprep.subr.mxu0 0.0
  %330 = vmatpush1.msra.mxu0 0.0
  %331 = vmatprep.subr.mxu0 0.0
  %332 = vmatpush1.msra.mxu0 0.0
  %333 = vmatprep.subr.mxu0 0.0
  %334 = vmatpush1.msra.mxu0 0.0
  %335 = vmatprep.subr.mxu0 0.0
  %336 = vmatpush1.msra.mxu0 0.0
  %337 = vmatprep.subr.mxu0 0.0
  %338 = vmatpush1.msra.mxu0 0.0
  %339 = vmatprep.subr.mxu0 0.0
  %340 = vmatpush1.msra.mxu0 0.0
  %341 = vmatprep.subr.mxu0 0.0
  %342 = vmatpush1.msra.mxu0 0.0
  %343 = vmatprep.subr.mxu0 0.0
  %344 = vmatpush1.msra.mxu0 0.0
  %345 = vmatprep.subr.mxu0 0.0
  %346 = vmatpush1.msra.mxu0 0.0
  %347 = vmatprep.subr.mxu0 0.0
  %348 = vmatpush1.msra.mxu0 0.0
  %349 = vmatprep.subr.mxu0 0.0
  %350 = vmatpush1.msra.mxu0 0.0
  %351 = vmatprep.subr.mxu0 0.0
  %352 = vmatpush1.msra.mxu0 0.0
  %353 = vmatprep.subr.mxu0 0.0
  %354 = vmatpush1.msra.mxu0 0.0
  %355 = vmatprep.subr.mxu0 0.0
  %356 = vmatpush1.msra.mxu0 0.0
  %357 = vmatprep.subr.mxu0 0.0
  %358 = vmatpush1.msra.mxu0 0.0
  %359 = vmatprep.subr.mxu0 0.0
  %360 = vmatpush1.msra.mxu0 0.0
  %361 = vmatprep.subr.mxu0 0.0
  %362 = vmatpush1.msra.mxu0 0.0
  %363 = vmatprep.subr.mxu0 0.0
  %364 = vmatpush1.msra.mxu0 0.0
  %365 = vmatprep.subr.mxu0 0.0
  %366 = vmatpush1.msra.mxu0 0.0
  %367 = vmatprep.subr.mxu0 0.0
  %368 = vmatpush1.msra.mxu0 0.0
  %369 = vmatprep.subr.mxu0 0.0
  %370 = vmatpush1.msra.mxu0 0.0
  %371 = vmatprep.subr.mxu0 0.0
  %372 = vmatpush1.msra.mxu0 0.0
  %373 = vmatprep.subr.mxu0 0.0
  %374 = vmatpush1.msra.mxu0 0.0
  %375 = vmatprep.subr.mxu0 0.0
  %376 = vmatpush1.msra.mxu0 0.0
  %377 = vmatprep.mubr.f32.mxu0 0.0
  %378 = vmatmul.mubr.f32.gmra.mrb[0].mxu0 %v132
  %v379 = vpop.f32.mrb[0].mxu0
  %v380 = vadd.f32 %v295, %v379
  %v381 = vpop.f32.mrb[0].mxu0
  %382 = vmatprep.mubr.f32.mxu0 0.0
  %383 = vmatmul.mubr.f32.gmra.mrb[0].mxu0 %v135
  %v384 = vpop.f32.mrb[0].mxu0
  %v385 = vadd.f32 %v300, %v384
  %v386 = vpop.f32.mrb[0].mxu0
  %387 = vmatprep.mubr.f32.mxu0 0.0
  %388 = vmatmul.mubr.f32.gmra.mrb[0].mxu0 %v138
  %v389 = vpop.f32.mrb[0].mxu0
  %v390 = vadd.f32 %v305, %v389
  %v391 = vpop.f32.mrb[0].mxu0
  %392 = vmatprep.mubr.f32.mxu0 0.0
  %393 = vmatmul.mubr.f32.gmra.mrb[0].mxu0 %v141
  %v394 = vpop.f32.mrb[0].mxu0
  %v395 = vadd.f32 %v310, %v394
  %v396 = vpop.f32.mrb[0].mxu0
  %397 = vdwg.mxu0
  %vm398 = vcmask 261120
  %399 = vst.msk [vmem:[%s3] sm:$0xff] %vm398, %v380
  %400 = vst.msk [vmem:[%s3 + $0x8] sm:$0xff] %vm398, %v385
  %401 = vst.msk [vmem:[%s3 + $0x10] sm:$0xff] %vm398, %v390
  %402 = vst.msk [vmem:[%s3 + $0x18] sm:$0xff] %vm398, %v395
  // Predicated region
  $region14: #{feature_ex_forward.31} parent=0 // pred_check
    _
  $region15: #{feature_ex_forward.31} parent=0 // pred_check_branch
    %404 = sbr.rel (0) target = $region17
  $region16: #{feature_ex_forward.31} parent=0 // pred_region
    _
  $region17: #{feature_ex_forward.31} parent=0 // pred_fallthru
    _
  // Predicated region
  $region18: #{feature_ex_forward.31} parent=0 // pred_check
    _
  $region19: #{feature_ex_forward.31} parent=0 // pred_check_branch
    %406 = sbr.rel (0) target = $region21
  $region20: #{feature_ex_forward.31} parent=0 // pred_region
    _
  $region21: #{feature_ex_forward.31} parent=0 // pred_fallthru
    _

// kernel: feature_ex_forward.33
$region0: #{feature_ex_forward.33}
  #allocation0 [shape = 'u32[]', space=smem, size = 0x4, offset = 0x4, fixed_abs, tag = 'smem constant byte address 0x4 - core index']
  #allocation1 [shape = 'u32[144,128]{1,0:T(1,128)}', space=vmem, size = 0x12000, scoped, tag = 'internal scratch']
  %s0 = inlined_call_operand.vmem [shape: f32[16,576], index: 0, kind: input, shape index: {}]
  %s1 = inlined_call_operand.vmem [shape: f32[576,128], index: 1, kind: input, shape index: {}]
  %s2 = inlined_call_operand.vmem [shape: f32[16,1], index: 2, kind: input, shape index: {}]
  %s3 = inlined_call_operand.vmem [shape: f32[16,128], index: 3, kind: output, shape index: {}]
  %s4 = sld [smem:[#allocation0]]
  $region22: #{feature_ex_forward.33} parent=0
    _
  %s6 = ssub.s32 1, %s4
  %s7 = scalar_select 0, %s6, %s4
  // Predicated region
  $region2: #{feature_ex_forward.33} parent=0 // pred_check
    _
  $region3: #{feature_ex_forward.33} parent=0 // pred_check_branch
    %9 = sbr.rel (0) target = $region5
  $region4: #{feature_ex_forward.33} parent=0 // pred_region
    _
  $region5: #{feature_ex_forward.33} parent=0 // pred_fallthru
    _
  // Predicated region
  $region6: #{feature_ex_forward.33} parent=0 // pred_check
    _
  $region7: #{feature_ex_forward.33} parent=0 // pred_check_branch
    %11 = sbr.rel (0) target = $region9
  $region8: #{feature_ex_forward.33} parent=0 // pred_region
    _
  $region9: #{feature_ex_forward.33} parent=0 // pred_fallthru
    _
  // Predicated region
  $region10: #{feature_ex_forward.33} parent=0 // pred_check
    _
  $region11: #{feature_ex_forward.33} parent=0 // pred_check_branch
    %13 = sbr.rel (0) target = $region13
  $region12: #{feature_ex_forward.33} parent=0 // pred_region
    _
  $region13: #{feature_ex_forward.33} parent=0 // pred_fallthru
    _
  %v14 = vld [vmem:[%s0] sm:$0xff]
  %v15 = vld [vmem:[%s0 + $0x8] sm:$0xff]
  %v16 = vld [vmem:[%s0 + $0x10] sm:$0xff]
  %v17 = vld [vmem:[%s0 + $0x18] sm:$0xff]
  %v18 = vld [vmem:[%s0 + $0x20] sm:$0xff]
  %v19 = vld [vmem:[%s0 + $0x28] sm:$0xff]
  %v20 = vld [vmem:[%s0 + $0x30] sm:$0xff]
  %v21 = vld [vmem:[%s0 + $0x38] sm:$0xff]
  %v22 = vld [vmem:[%s0 + $0x40] sm:$0xff]
  %v23 = vld [vmem:[%s0 + $0x48] sm:$0xff]
  %v24 = vld [vmem:[%s1] sm:$0xff]
  %v25 = vld [vmem:[%s1 + $0x8] sm:$0xff]
  %v26 = vld [vmem:[%s1 + $0x10] sm:$0xff]
  %v27 = vld [vmem:[%s1 + $0x18] sm:$0xff]
  %v28 = vld [vmem:[%s1 + $0x20] sm:$0xff]
  %v29 = vld [vmem:[%s1 + $0x28] sm:$0xff]
  %v30 = vld [vmem:[%s1 + $0x30] sm:$0xff]
  %v31 = vld [vmem:[%s1 + $0x38] sm:$0xff]
  %v32 = vld [vmem:[%s1 + $0x40] sm:$0xff]
  %v33 = vld [vmem:[%s1 + $0x48] sm:$0xff]
  %v34 = vld [vmem:[%s1 + $0x50] sm:$0xff]
  %v35 = vld [vmem:[%s1 + $0x58] sm:$0xff]
  %v36 = vld [vmem:[%s1 + $0x60] sm:$0xff]
  %v37 = vld [vmem:[%s1 + $0x68] sm:$0xff]
  %v38 = vld [vmem:[%s1 + $0x70] sm:$0xff]
  %v39 = vld [vmem:[%s1 + $0x78] sm:$0xff]
  %v40 = vld [vmem:[%s1 + $0x80] sm:$0xff]
  %v41 = vld [vmem:[%s1 + $0x88] sm:$0xff]
  %v42 = vld [vmem:[%s1 + $0x90] sm:$0xff]
  %v43 = vld [vmem:[%s1 + $0x98] sm:$0xff]
  %v44 = vld [vmem:[%s1 + $0xa0] sm:$0xff]
  %v45 = vld [vmem:[%s1 + $0xa8] sm:$0xff]
  %v46 = vld [vmem:[%s1 + $0xb0] sm:$0xff]
  %v47 = vld [vmem:[%s1 + $0xb8] sm:$0xff]
  %v48 = vld [vmem:[%s1 + $0xc0] sm:$0xff]
  %v49 = vld [vmem:[%s1 + $0xc8] sm:$0xff]
  %v50 = vld [vmem:[%s1 + $0xd0] sm:$0xff]
  %v51 = vld [vmem:[%s1 + $0xd8] sm:$0xff]
  %v52 = vld [vmem:[%s1 + $0xe0] sm:$0xff]
  %v53 = vld [vmem:[%s1 + $0xe8] sm:$0xff]
  %v54 = vld [vmem:[%s1 + $0xf0] sm:$0xff]
  %v55 = vld [vmem:[%s1 + $0xf8] sm:$0xff]
  %v56 = vld [vmem:[%s1 + $0x100] sm:$0xff]
  %v57 = vld [vmem:[%s1 + $0x108] sm:$0xff]
  %v58 = vld [vmem:[%s1 + $0x110] sm:$0xff]
  %v59 = vld [vmem:[%s1 + $0x118] sm:$0xff]
  %v60 = vld [vmem:[%s1 + $0x120] sm:$0xff]
  %v61 = vld [vmem:[%s1 + $0x128] sm:$0xff]
  %v62 = vld [vmem:[%s1 + $0x130] sm:$0xff]
  %v63 = vld [vmem:[%s1 + $0x138] sm:$0xff]
  %v64 = vld [vmem:[%s1 + $0x140] sm:$0xff]
  %v65 = vld [vmem:[%s1 + $0x148] sm:$0xff]
  %v66 = vld [vmem:[%s1 + $0x150] sm:$0xff]
  %v67 = vld [vmem:[%s1 + $0x158] sm:$0xff]
  %v68 = vld [vmem:[%s1 + $0x160] sm:$0xff]
  %v69 = vld [vmem:[%s1 + $0x168] sm:$0xff]
  %v70 = vld [vmem:[%s1 + $0x170] sm:$0xff]
  %v71 = vld [vmem:[%s1 + $0x178] sm:$0xff]
  %v72 = vld [vmem:[%s1 + $0x180] sm:$0xff]
  %v73 = vld [vmem:[%s1 + $0x188] sm:$0xff]
  %v74 = vld [vmem:[%s1 + $0x190] sm:$0xff]
  %v75 = vld [vmem:[%s1 + $0x198] sm:$0xff]
  %v76 = vld [vmem:[%s1 + $0x1a0] sm:$0xff]
  %v77 = vld [vmem:[%s1 + $0x1a8] sm:$0xff]
  %v78 = vld [vmem:[%s1 + $0x1b0] sm:$0xff]
  %v79 = vld [vmem:[%s1 + $0x1b8] sm:$0xff]
  %v80 = vld [vmem:[%s1 + $0x1c0] sm:$0xff]
  %v81 = vld [vmem:[%s1 + $0x1c8] sm:$0xff]
  %v82 = vld [vmem:[%s1 + $0x1d0] sm:$0xff]
  %v83 = vld [vmem:[%s1 + $0x1d8] sm:$0xff]
  %v84 = vld [vmem:[%s1 + $0x1e0] sm:$0xff]
  %v85 = vld [vmem:[%s1 + $0x1e8] sm:$0xff]
  %v86 = vld [vmem:[%s1 + $0x1f0] sm:$0xff]
  %v87 = vld [vmem:[%s1 + $0x1f8] sm:$0xff]
  %v88 = vld [vmem:[%s1 + $0x200] sm:$0xff]
  %v89 = vld [vmem:[%s1 + $0x208] sm:$0xff]
  %v90 = vld [vmem:[%s1 + $0x210] sm:$0xff]
  %v91 = vld [vmem:[%s1 + $0x218] sm:$0xff]
  %v92 = vld [vmem:[%s1 + $0x220] sm:$0xff]
  %v93 = vld [vmem:[%s1 + $0x228] sm:$0xff]
  %v94 = vld [vmem:[%s1 + $0x230] sm:$0xff]
  %v95 = vld [vmem:[%s1 + $0x238] sm:$0xff]
  %v96 = vld [vmem:[%s2] sm:$0xff]
  %v97 = vld [vmem:[%s2 + $0x8] sm:$0xff]
  %99 = vset.pattern.permute.xlu0 0
  %100 = vperm.xlu0 %99, %v96
  %v101 = vpop.permute.xlu0 %100
  %104 = vset.pattern.permute.xlu0 0
  %105 = vperm.xlu0 %104, %v97
  %v106 = vpop.permute.xlu0 %105
  %vm108 = vcmask 523264
  %v110 = vsel %vm108, %v18, 0
  %v113 = vsel %vm108, %v23, 0
  %115 = vmatprep.subr.mxu0 0.0
  %116 = vmatpush1.msra.mxu0 %v24
  %117 = vmatprep.subr.mxu0 0.0
  %118 = vmatpush1.msra.mxu0 %v25
  %119 = vmatprep.subr.mxu0 0.0
  %120 = vmatpush1.msra.mxu0 %v26
  %121 = vmatprep.subr.mxu0 0.0
  %122 = vmatpush1.msra.mxu0 %v27
  %123 = vmatprep.subr.mxu0 0.0
  %124 = vmatpush1.msra.mxu0 %v28
  %125 = vmatprep.subr.mxu0 0.0
  %126 = vmatpush1.msra.mxu0 %v29
  %127 = vmatprep.subr.mxu0 0.0
  %128 = vmatpush1.msra.mxu0 %v30
  %129 = vmatprep.subr.mxu0 0.0
  %130 = vmatpush1.msra.mxu0 %v31
  %131 = vmatprep.subr.mxu0 0.0
  %132 = vmatpush1.msra.mxu0 %v32
  %133 = vmatprep.subr.mxu0 0.0
  %134 = vmatpush1.msra.mxu0 %v33
  %135 = vmatprep.subr.mxu0 0.0
  %136 = vmatpush1.msra.mxu0 %v34
  %137 = vmatprep.subr.mxu0 0.0
  %138 = vmatpush1.msra.mxu0 %v35
  %139 = vmatprep.subr.mxu0 0.0
  %140 = vmatpush1.msra.mxu0 %v36
  %141 = vmatprep.subr.mxu0 0.0
  %142 = vmatpush1.msra.mxu0 %v37
  %143 = vmatprep.subr.mxu0 0.0
  %144 = vmatpush1.msra.mxu0 %v38
  %145 = vmatprep.subr.mxu0 0.0
  %146 = vmatpush1.msra.mxu0 %v39
  %147 = vmatprep.subr.mxu0 0.0
  %148 = vmatpush1.msra.mxu0 %v40
  %149 = vmatprep.subr.mxu0 0.0
  %150 = vmatpush1.msra.mxu0 %v41
  %151 = vmatprep.subr.mxu0 0.0
  %152 = vmatpush1.msra.mxu0 %v42
  %153 = vmatprep.subr.mxu0 0.0
  %154 = vmatpush1.msra.mxu0 %v43
  %155 = vmatprep.subr.mxu0 0.0
  %156 = vmatpush1.msra.mxu0 %v44
  %157 = vmatprep.subr.mxu0 0.0
  %158 = vmatpush1.msra.mxu0 %v45
  %159 = vmatprep.subr.mxu0 0.0
  %160 = vmatpush1.msra.mxu0 %v46
  %161 = vmatprep.subr.mxu0 0.0
  %162 = vmatpush1.msra.mxu0 %v47
  %163 = vmatprep.subr.mxu0 0.0
  %164 = vmatpush1.msra.mxu0 %v48
  %165 = vmatprep.subr.mxu0 0.0
  %166 = vmatpush1.msra.mxu0 %v49
  %167 = vmatprep.subr.mxu0 0.0
  %168 = vmatpush1.msra.mxu0 %v50
  %169 = vmatprep.subr.mxu0 0.0
  %170 = vmatpush1.msra.mxu0 %v51
  %171 = vmatprep.subr.mxu0 0.0
  %172 = vmatpush1.msra.mxu0 %v52
  %173 = vmatprep.subr.mxu0 0.0
  %174 = vmatpush1.msra.mxu0 %v53
  %175 = vmatprep.subr.mxu0 0.0
  %176 = vmatpush1.msra.mxu0 %v54
  %177 = vmatprep.subr.mxu0 0.0
  %178 = vmatpush1.msra.mxu0 %v55
  %179 = vmatprep.mubr.f32.mxu0 %v15
  %180 = vmatmul.mubr.f32.gmra.mrb[0].mxu0 %v14
  %v181 = vpop.f32.mrb[0].mxu0
  %v182 = vadd.f32 %v101, %v181
  %v183 = vpop.f32.mrb[0].mxu0
  %184 = vmatprep.mubr.f32.mxu0 %v20
  %185 = vmatmul.mubr.f32.gmra.mrb[0].mxu0 %v19
  %v186 = vpop.f32.mrb[0].mxu0
  %v187 = vadd.f32 %v106, %v186
  %v188 = vpop.f32.mrb[0].mxu0
  %189 = vdwg.mxu0
  %190 = vmatprep.subr.mxu0 0.0
  %191 = vmatpush1.msra.mxu0 %v56
  %192 = vmatprep.subr.mxu0 0.0
  %193 = vmatpush1.msra.mxu0 %v57
  %194 = vmatprep.subr.mxu0 0.0
  %195 = vmatpush1.msra.mxu0 %v58
  %196 = vmatprep.subr.mxu0 0.0
  %197 = vmatpush1.msra.mxu0 %v59
  %198 = vmatprep.subr.mxu0 0.0
  %199 = vmatpush1.msra.mxu0 %v60
  %200 = vmatprep.subr.mxu0 0.0
  %201 = vmatpush1.msra.mxu0 %v61
  %202 = vmatprep.subr.mxu0 0.0
  %203 = vmatpush1.msra.mxu0 %v62
  %204 = vmatprep.subr.mxu0 0.0
  %205 = vmatpush1.msra.mxu0 %v63
  %206 = vmatprep.subr.mxu0 0.0
  %207 = vmatpush1.msra.mxu0 %v64
  %208 = vmatprep.subr.mxu0 0.0
  %209 = vmatpush1.msra.mxu0 %v65
  %210 = vmatprep.subr.mxu0 0.0
  %211 = vmatpush1.msra.mxu0 %v66
  %212 = vmatprep.subr.mxu0 0.0
  %213 = vmatpush1.msra.mxu0 %v67
  %214 = vmatprep.subr.mxu0 0.0
  %215 = vmatpush1.msra.mxu0 %v68
  %216 = vmatprep.subr.mxu0 0.0
  %217 = vmatpush1.msra.mxu0 %v69
  %218 = vmatprep.subr.mxu0 0.0
  %219 = vmatpush1.msra.mxu0 %v70
  %220 = vmatprep.subr.mxu0 0.0
  %221 = vmatpush1.msra.mxu0 %v71
  %222 = vmatprep.subr.mxu0 0.0
  %223 = vmatpush1.msra.mxu0 %v72
  %224 = vmatprep.subr.mxu0 0.0
  %225 = vmatpush1.msra.mxu0 %v73
  %226 = vmatprep.subr.mxu0 0.0
  %227 = vmatpush1.msra.mxu0 %v74
  %228 = vmatprep.subr.mxu0 0.0
  %229 = vmatpush1.msra.mxu0 %v75
  %230 = vmatprep.subr.mxu0 0.0
  %231 = vmatpush1.msra.mxu0 %v76
  %232 = vmatprep.subr.mxu0 0.0
  %233 = vmatpush1.msra.mxu0 %v77
  %234 = vmatprep.subr.mxu0 0.0
  %235 = vmatpush1.msra.mxu0 %v78
  %236 = vmatprep.subr.mxu0 0.0
  %237 = vmatpush1.msra.mxu0 %v79
  %238 = vmatprep.subr.mxu0 0.0
  %239 = vmatpush1.msra.mxu0 %v80
  %240 = vmatprep.subr.mxu0 0.0
  %241 = vmatpush1.msra.mxu0 %v81
  %242 = vmatprep.subr.mxu0 0.0
  %243 = vmatpush1.msra.mxu0 %v82
  %244 = vmatprep.subr.mxu0 0.0
  %245 = vmatpush1.msra.mxu0 %v83
  %246 = vmatprep.subr.mxu0 0.0
  %247 = vmatpush1.msra.mxu0 %v84
  %248 = vmatprep.subr.mxu0 0.0
  %249 = vmatpush1.msra.mxu0 %v85
  %250 = vmatprep.subr.mxu0 0.0
  %251 = vmatpush1.msra.mxu0 %v86
  %252 = vmatprep.subr.mxu0 0.0
  %253 = vmatpush1.msra.mxu0 %v87
  %254 = vmatprep.mubr.f32.mxu0 %v17
  %255 = vmatmul.mubr.f32.gmra.mrb[0].mxu0 %v16
  %v256 = vpop.f32.mrb[0].mxu0
  %v257 = vadd.f32 %v182, %v256
  %v258 = vpop.f32.mrb[0].mxu0
  %259 = vmatprep.mubr.f32.mxu0 %v22
  %260 = vmatmul.mubr.f32.gmra.mrb[0].mxu0 %v21
  %v261 = vpop.f32.mrb[0].mxu0
  %v262 = vadd.f32 %v187, %v261
  %v263 = vpop.f32.mrb[0].mxu0
  %264 = vdwg.mxu0
  %265 = vmatprep.subr.mxu0 0.0
  %266 = vmatpush1.msra.mxu0 %v88
  %267 = vmatprep.subr.mxu0 0.0
  %268 = vmatpush1.msra.mxu0 %v89
  %269 = vmatprep.subr.mxu0 0.0
  %270 = vmatpush1.msra.mxu0 %v90
  %271 = vmatprep.subr.mxu0 0.0
  %272 = vmatpush1.msra.mxu0 %v91
  %273 = vmatprep.subr.mxu0 0.0
  %274 = vmatpush1.msra.mxu0 %v92
  %275 = vmatprep.subr.mxu0 0.0
  %276 = vmatpush1.msra.mxu0 %v93
  %277 = vmatprep.subr.mxu0 0.0
  %278 = vmatpush1.msra.mxu0 %v94
  %279 = vmatprep.subr.mxu0 0.0
  %280 = vmatpush1.msra.mxu0 %v95
  %281 = vmatprep.subr.mxu0 0.0
  %282 = vmatpush1.msra.mxu0 0.0
  %283 = vmatprep.subr.mxu0 0.0
  %284 = vmatpush1.msra.mxu0 0.0
  %285 = vmatprep.subr.mxu0 0.0
  %286 = vmatpush1.msra.mxu0 0.0
  %287 = vmatprep.subr.mxu0 0.0
  %288 = vmatpush1.msra.mxu0 0.0
  %289 = vmatprep.subr.mxu0 0.0
  %290 = vmatpush1.msra.mxu0 0.0
  %291 = vmatprep.subr.mxu0 0.0
  %292 = vmatpush1.msra.mxu0 0.0
  %293 = vmatprep.subr.mxu0 0.0
  %294 = vmatpush1.msra.mxu0 0.0
  %295 = vmatprep.subr.mxu0 0.0
  %296 = vmatpush1.msra.mxu0 0.0
  %297 = vmatprep.subr.mxu0 0.0
  %298 = vmatpush1.msra.mxu0 0.0
  %299 = vmatprep.subr.mxu0 0.0
  %300 = vmatpush1.msra.mxu0 0.0
  %301 = vmatprep.subr.mxu0 0.0
  %302 = vmatpush1.msra.mxu0 0.0
  %303 = vmatprep.subr.mxu0 0.0
  %304 = vmatpush1.msra.mxu0 0.0
  %305 = vmatprep.subr.mxu0 0.0
  %306 = vmatpush1.msra.mxu0 0.0
  %307 = vmatprep.subr.mxu0 0.0
  %308 = vmatpush1.msra.mxu0 0.0
  %309 = vmatprep.subr.mxu0 0.0
  %310 = vmatpush1.msra.mxu0 0.0
  %311 = vmatprep.subr.mxu0 0.0
  %312 = vmatpush1.msra.mxu0 0.0
  %313 = vmatprep.subr.mxu0 0.0
  %314 = vmatpush1.msra.mxu0 0.0
  %315 = vmatprep.subr.mxu0 0.0
  %316 = vmatpush1.msra.mxu0 0.0
  %317 = vmatprep.subr.mxu0 0.0
  %318 = vmatpush1.msra.mxu0 0.0
  %319 = vmatprep.subr.mxu0 0.0
  %320 = vmatpush1.msra.mxu0 0.0
  %321 = vmatprep.subr.mxu0 0.0
  %322 = vmatpush1.msra.mxu0 0.0
  %323 = vmatprep.subr.mxu0 0.0
  %324 = vmatpush1.msra.mxu0 0.0
  %325 = vmatprep.subr.mxu0 0.0
  %326 = vmatpush1.msra.mxu0 0.0
  %327 = vmatprep.subr.mxu0 0.0
  %328 = vmatpush1.msra.mxu0 0.0
  %329 = vmatprep.mubr.f32.mxu0 0.0
  %330 = vmatmul.mubr.f32.gmra.mrb[0].mxu0 %v110
  %v331 = vpop.f32.mrb[0].mxu0
  %v332 = vadd.f32 %v257, %v331
  %v333 = vpop.f32.mrb[0].mxu0
  %334 = vmatprep.mubr.f32.mxu0 0.0
  %335 = vmatmul.mubr.f32.gmra.mrb[0].mxu0 %v113
  %v336 = vpop.f32.mrb[0].mxu0
  %v337 = vadd.f32 %v262, %v336
  %v338 = vpop.f32.mrb[0].mxu0
  %339 = vdwg.mxu0
  %340 = vst [vmem:[%s3] sm:$0xff] %v332
  %341 = vst [vmem:[%s3 + $0x8] sm:$0xff] %v337
  // Predicated region
  $region14: #{feature_ex_forward.33} parent=0 // pred_check
    _
  $region15: #{feature_ex_forward.33} parent=0 // pred_check_branch
    %343 = sbr.rel (0) target = $region17
  $region16: #{feature_ex_forward.33} parent=0 // pred_region
    _
  $region17: #{feature_ex_forward.33} parent=0 // pred_fallthru
    _
  // Predicated region
  $region18: #{feature_ex_forward.33} parent=0 // pred_check
    _
  $region19: #{feature_ex_forward.33} parent=0 // pred_check_branch
    %345 = sbr.rel (0) target = $region21
  $region20: #{feature_ex_forward.33} parent=0 // pred_region
    _
  $region21: #{feature_ex_forward.33} parent=0 // pred_fallthru
    _

// kernel: feature_ex_forward.35
$region0: #{feature_ex_forward.35}
  #allocation0 [shape = 'u32[]', space=smem, size = 0x4, offset = 0x4, fixed_abs, tag = 'smem constant byte address 0x4 - core index']
  #allocation1 [shape = 'u32[144,128]{1,0:T(1,128)}', space=vmem, size = 0x12000, scoped, tag = 'internal scratch']
  %s0 = inlined_call_operand.vmem [shape: f32[8,576], index: 0, kind: input, shape index: {}]
  %s1 = inlined_call_operand.vmem [shape: f32[576,512], index: 1, kind: input, shape index: {}]
  %s2 = inlined_call_operand.vmem [shape: f32[8,1], index: 2, kind: input, shape index: {}]
  %s3 = inlined_call_operand.vmem [shape: f32[8,512], index: 3, kind: output, shape index: {}]
  %s4 = sld [smem:[#allocation0]]
  $region68: #{feature_ex_forward.35} parent=0
    _
  %s6 = ssub.s32 1, %s4
  %s7 = scalar_select 0, %s6, %s4
  $region1: #{feature_ex_forward.35} parent=0
    #allocation2 [shape = 'u8[1179648]{0}', space=vmem, size = 0x120000, scoped, tag = 'input window, operand 1']
    loop: start=0, step=1, limit=4
    $region2: #{feature_ex_forward.35} parent=1 // loop_pre_header
      _
    $region3: #{feature_ex_forward.35} parent=1 // loop_header
      %s9 = sphi 0, %s13
      %p10 = scmp.ge.s32.totalorder %s9, 4
      %s17 = sphi 0, %s17
      %s19 = sphi 0, %s17
      %s20 = sphi 0, %s19
      %s34 = sphi 0, %s20
      %s40 = sphi 0, %s42
      %s43 = sphi 0, %s40
      %s44 = sphi 0, %s43
      %s60 = sphi 0, %s44
      %s64 = sphi 0, %s64
      %s66 = sphi 0, %s64
      %s67 = sphi 0, %s66
      %s81 = sphi 0, %s67
      %s87 = sphi 0, %s89
      %s90 = sphi 0, %s87
      %s91 = sphi 0, %s90
      %s107 = sphi 0, %s91
    $region4: #{feature_ex_forward.35} parent=1 // loop_header_branch
      %12 = sbr.rel (%p10) target = $region8
    $region5: #{feature_ex_forward.35} parent=1 // loop_body
      %s14 = ssub.s32 %s9, 1
      %s15 = ssub.s32 %s9, 2
      %s16 = sadd.s32 %s9, 1
      %s18 = sadd.s32 %s17, 1
      %p21 = scmp.eq.s32.totalorder %s9, 1
      %p22 = scmp.ne.s32.totalorder %s17, %s19
      %p23 = scmp.eq.s32.totalorder %s9, 0
      %p24 = por %p22, %p23
      %p25 = scmp.ne.s32.totalorder %s17, %s19
      %p26 = scmp.eq.s32.totalorder %s14, 1
      %p27 = por %p25, %p26
      %p28 = scmp.ne.s32.totalorder %s19, %s20
      %p29 = scmp.eq.s32.totalorder %s14, 0
      %p30 = por %p28, %p29
      %p31 = scmp.ne.s32.totalorder %s19, %s20
      %p32 = scmp.eq.s32.totalorder %s15, 1
      %p33 = por %p31, %p32
      %p35 = scmp.ne.s32.totalorder %s20, %s34
      %p36 = scmp.eq.s32.totalorder %s15, 0
      %p37 = por %p35, %p36
      %s38 = ssub.s32 %s9, %s16
      %p39 = scmp.eq.s32.totalorder %s38, 0
      %s41 = sadd.s32 %s40, 1
      %s42 = scalar_select %p39, %s40, %s41
      %p45 = pneg %p39
      %p46 = scmp.eq.s32.totalorder %s9, 1
      %p47 = por %p45, %p46
      %p48 = scmp.ne.s32.totalorder %s40, %s43
      %p49 = scmp.eq.s32.totalorder %s9, 0
      %p50 = por %p48, %p49
      %p51 = scmp.ne.s32.totalorder %s40, %s43
      %p52 = scmp.eq.s32.totalorder %s14, 1
      %p53 = por %p51, %p52
      %p54 = scmp.ne.s32.totalorder %s43, %s44
      %p55 = scmp.eq.s32.totalorder %s14, 0
      %p56 = por %p54, %p55
      %p57 = scmp.ne.s32.totalorder %s43, %s44
      %p58 = scmp.eq.s32.totalorder %s15, 1
      %p59 = por %p57, %p58
      %p61 = scmp.ne.s32.totalorder %s44, %s60
      %p62 = scmp.eq.s32.totalorder %s15, 0
      %p63 = por %p61, %p62
      %s65 = sadd.s32 %s64, 1
      %p68 = scmp.eq.s32.totalorder %s9, 1
      %p69 = scmp.ne.s32.totalorder %s64, %s66
      %p70 = scmp.eq.s32.totalorder %s9, 0
      %p71 = por %p69, %p70
      %p72 = scmp.ne.s32.totalorder %s64, %s66
      %p73 = scmp.eq.s32.totalorder %s14, 1
      %p74 = por %p72, %p73
      %p75 = scmp.ne.s32.totalorder %s66, %s67
      %p76 = scmp.eq.s32.totalorder %s14, 0
      %p77 = por %p75, %p76
      %p78 = scmp.ne.s32.totalorder %s66, %s67
      %p79 = scmp.eq.s32.totalorder %s15, 1
      %p80 = por %p78, %p79
      %p82 = scmp.ne.s32.totalorder %s67, %s81
      %p83 = scmp.eq.s32.totalorder %s15, 0
      %p84 = por %p82, %p83
      %s85 = ssub.s32 %s9, %s16
      %p86 = scmp.eq.s32.totalorder %s85, 0
      %s88 = sadd.s32 %s87, 1
      %s89 = scalar_select %p86, %s87, %s88
      %p92 = pneg %p86
      %p93 = scmp.eq.s32.totalorder %s9, 1
      %p94 = por %p92, %p93
      %p95 = scmp.ne.s32.totalorder %s87, %s90
      %p96 = scmp.eq.s32.totalorder %s9, 0
      %p97 = por %p95, %p96
      %p98 = scmp.ne.s32.totalorder %s87, %s90
      %p99 = scmp.eq.s32.totalorder %s14, 1
      %p100 = por %p98, %p99
      %p101 = scmp.ne.s32.totalorder %s90, %s91
      %p102 = scmp.eq.s32.totalorder %s14, 0
      %p103 = por %p101, %p102
      %p104 = scmp.ne.s32.totalorder %s90, %s91
      %p105 = scmp.eq.s32.totalorder %s15, 1
      %p106 = por %p104, %p105
      %p108 = scmp.ne.s32.totalorder %s91, %s107
      %p109 = scmp.eq.s32.totalorder %s15, 0
      %p110 = por %p108, %p109
      %p111 = scmp.le.s32.totalorder 1, %s9
      %p112 = scmp.lt.s32.totalorder %s9, 3
      %p113 = pnand %p111, %p112
      %p114 = pneg %p113
      // Predicated region
      $region9: #{feature_ex_forward.35} parent=5 // pred_check
        _
      $region10: #{feature_ex_forward.35} parent=5 // pred_check_branch
        %116 = sbr.rel (%p113) target = $region12
      $region11: #{feature_ex_forward.35} parent=5 // pred_region
        %s117 = ssub.s32 %s9, 1
        // Predicated region
        $region13: #{feature_ex_forward.35} parent=11 // pred_check
          %p118 = pneg %p30
        $region14: #{feature_ex_forward.35} parent=11 // pred_check_branch
          %120 = sbr.rel (%p118) target = $region16
        $region15: #{feature_ex_forward.35} parent=11 // pred_region
          _
        $region16: #{feature_ex_forward.35} parent=11 // pred_fallthru
          _
        // Predicated region
        $region17: #{feature_ex_forward.35} parent=11 // pred_check
          %p121 = pneg %p77
        $region18: #{feature_ex_forward.35} parent=11 // pred_check_branch
          %123 = sbr.rel (%p121) target = $region20
        $region19: #{feature_ex_forward.35} parent=11 // pred_region
          _
        $region20: #{feature_ex_forward.35} parent=11 // pred_fallthru
          _
      $region12: #{feature_ex_forward.35} parent=5 // pred_fallthru
        _
      %p124 = scmp.lt.s32.totalorder %s9, 2
      // Predicated region
      $region21: #{feature_ex_forward.35} parent=5 // pred_check
        %p125 = pneg %p124
      $region22: #{feature_ex_forward.35} parent=5 // pred_check_branch
        %127 = sbr.rel (%p125) target = $region24
      $region23: #{feature_ex_forward.35} parent=5 // pred_region
        // Predicated region
        $region25: #{feature_ex_forward.35} parent=23 // pred_check
          %p128 = pneg %p50
        $region26: #{feature_ex_forward.35} parent=23 // pred_check_branch
          %130 = sbr.rel (%p128) target = $region28
        $region27: #{feature_ex_forward.35} parent=23 // pred_region
          %s131 = sand.u32 %s40, 1
          %s132 = sand.u32 %s40, 1
          %s133 = smul.addr %s132, 1152
          %s134 = scalar_lea.vmem [#allocation2], %s133
          %s135 = smul.u32 2, %s9
          %s136 = smul.addr %s135, 8
          %s137 = scalar_lea.vmem %s1, %s136
          // Predicated region
          $region29: #{feature_ex_forward.35} parent=27 // pred_check
            _
          $region30: #{feature_ex_forward.35} parent=27 // pred_check_branch
            %139 = sbr.rel (0) target = $region32
          $region31: #{feature_ex_forward.35} parent=27 // pred_region
            // Predicated region
            $region33: #{feature_ex_forward.35} parent=31 // pred_check
              _
            $region34: #{feature_ex_forward.35} parent=31 // pred_check_branch
              %141 = sbr.rel (0) target = $region36
            $region35: #{feature_ex_forward.35} parent=31 // pred_region
              loop: start=0, step=1, limit=1
              $region37: #{feature_ex_forward.35} parent=35 // loop_pre_header
                _
              $region38: #{feature_ex_forward.35} parent=35 // loop_header
                %s143 = sphi 0, %s147
                %p144 = scmp.ge.s32.totalorder %s143, 1
                %s148 = sphi %s137, %s137
                %s149 = sphi %s134, %s134
              $region39: #{feature_ex_forward.35} parent=35 // loop_header_branch
                %146 = sbr.rel (%p144) target = $region43
              $region40: #{feature_ex_forward.35} parent=35 // loop_body
                %v150 = vld [vmem:[%s148] sm:$0xff]
                %151 = vst [vmem:[%s149] sm:$0xff] %v150
                %v152 = vld [vmem:[%s148 + $0x8] sm:$0xff]
                %153 = vst [vmem:[%s149 + $0x8] sm:$0xff] %v152
                %v154 = vld [vmem:[%s148 + $0x20] sm:$0xff]
                %155 = vst [vmem:[%s149 + $0x10] sm:$0xff] %v154
                %v156 = vld [vmem:[%s148 + $0x28] sm:$0xff]
                %157 = vst [vmem:[%s149 + $0x18] sm:$0xff] %v156
                %v158 = vld [vmem:[%s148 + $0x40] sm:$0xff]
                %159 = vst [vmem:[%s149 + $0x20] sm:$0xff] %v158
                %v160 = vld [vmem:[%s148 + $0x48] sm:$0xff]
                %161 = vst [vmem:[%s149 + $0x28] sm:$0xff] %v160
                %v162 = vld [vmem:[%s148 + $0x60] sm:$0xff]
                %163 = vst [vmem:[%s149 + $0x30] sm:$0xff] %v162
                %v164 = vld [vmem:[%s148 + $0x68] sm:$0xff]
                %165 = vst [vmem:[%s149 + $0x38] sm:$0xff] %v164
                %v166 = vld [vmem:[%s148 + $0x80] sm:$0xff]
                %167 = vst [vmem:[%s149 + $0x40] sm:$0xff] %v166
                %v168 = vld [vmem:[%s148 + $0x88] sm:$0xff]
                %169 = vst [vmem:[%s149 + $0x48] sm:$0xff] %v168
                %v170 = vld [vmem:[%s148 + $0xa0] sm:$0xff]
                %171 = vst [vmem:[%s149 + $0x50] sm:$0xff] %v170
                %v172 = vld [vmem:[%s148 + $0xa8] sm:$0xff]
                %173 = vst [vmem:[%s149 + $0x58] sm:$0xff] %v172
                %v174 = vld [vmem:[%s148 + $0xc0] sm:$0xff]
                %175 = vst [vmem:[%s149 + $0x60] sm:$0xff] %v174
                %v176 = vld [vmem:[%s148 + $0xc8] sm:$0xff]
                %177 = vst [vmem:[%s149 + $0x68] sm:$0xff] %v176
                %v178 = vld [vmem:[%s148 + $0xe0] sm:$0xff]
                %179 = vst [vmem:[%s149 + $0x70] sm:$0xff] %v178
                %v180 = vld [vmem:[%s148 + $0xe8] sm:$0xff]
                %181 = vst [vmem:[%s149 + $0x78] sm:$0xff] %v180
                %v182 = vld [vmem:[%s148 + $0x100] sm:$0xff]
                %183 = vst [vmem:[%s149 + $0x80] sm:$0xff] %v182
                %v184 = vld [vmem:[%s148 + $0x108] sm:$0xff]
                %185 = vst [vmem:[%s149 + $0x88] sm:$0xff] %v184
                %v186 = vld [vmem:[%s148 + $0x120] sm:$0xff]
                %187 = vst [vmem:[%s149 + $0x90] sm:$0xff] %v186
                %v188 = vld [vmem:[%s148 + $0x128] sm:$0xff]
                %189 = vst [vmem:[%s149 + $0x98] sm:$0xff] %v188
                %v190 = vld [vmem:[%s148 + $0x140] sm:$0xff]
                %191 = vst [vmem:[%s149 + $0xa0] sm:$0xff] %v190
                %v192 = vld [vmem:[%s148 + $0x148] sm:$0xff]
                %193 = vst [vmem:[%s149 + $0xa8] sm:$0xff] %v192
                %v194 = vld [vmem:[%s148 + $0x160] sm:$0xff]
                %195 = vst [vmem:[%s149 + $0xb0] sm:$0xff] %v194
                %v196 = vld [vmem:[%s148 + $0x168] sm:$0xff]
                %197 = vst [vmem:[%s149 + $0xb8] sm:$0xff] %v196
                %v198 = vld [vmem:[%s148 + $0x180] sm:$0xff]
                %199 = vst [vmem:[%s149 + $0xc0] sm:$0xff] %v198
                %v200 = vld [vmem:[%s148 + $0x188] sm:$0xff]
                %201 = vst [vmem:[%s149 + $0xc8] sm:$0xff] %v200
                %v202 = vld [vmem:[%s148 + $0x1a0] sm:$0xff]
                %203 = vst [vmem:[%s149 + $0xd0] sm:$0xff] %v202
                %v204 = vld [vmem:[%s148 + $0x1a8] sm:$0xff]
                %205 = vst [vmem:[%s149 + $0xd8] sm:$0xff] %v204
                %v206 = vld [vmem:[%s148 + $0x1c0] sm:$0xff]
                %207 = vst [vmem:[%s149 + $0xe0] sm:$0xff] %v206
                %v208 = vld [vmem:[%s148 + $0x1c8] sm:$0xff]
                %209 = vst [vmem:[%s149 + $0xe8] sm:$0xff] %v208
                %v210 = vld [vmem:[%s148 + $0x1e0] sm:$0xff]
                %211 = vst [vmem:[%s149 + $0xf0] sm:$0xff] %v210
                %v212 = vld [vmem:[%s148 + $0x1e8] sm:$0xff]
                %213 = vst [vmem:[%s149 + $0xf8] sm:$0xff] %v212
                %v214 = vld [vmem:[%s148 + $0x200] sm:$0xff]
                %215 = vst [vmem:[%s149 + $0x100] sm:$0xff] %v214
                %v216 = vld [vmem:[%s148 + $0x208] sm:$0xff]
                %217 = vst [vmem:[%s149 + $0x108] sm:$0xff] %v216
                %v218 = vld [vmem:[%s148 + $0x220] sm:$0xff]
                %219 = vst [vmem:[%s149 + $0x110] sm:$0xff] %v218
                %v220 = vld [vmem:[%s148 + $0x228] sm:$0xff]
                %221 = vst [vmem:[%s149 + $0x118] sm:$0xff] %v220
                %v222 = vld [vmem:[%s148 + $0x240] sm:$0xff]
                %223 = vst [vmem:[%s149 + $0x120] sm:$0xff] %v222
                %v224 = vld [vmem:[%s148 + $0x248] sm:$0xff]
                %225 = vst [vmem:[%s149 + $0x128] sm:$0xff] %v224
                %v226 = vld [vmem:[%s148 + $0x260] sm:$0xff]
                %227 = vst [vmem:[%s149 + $0x130] sm:$0xff] %v226
                %v228 = vld [vmem:[%s148 + $0x268] sm:$0xff]
                %229 = vst [vmem:[%s149 + $0x138] sm:$0xff] %v228
                %v230 = vld [vmem:[%s148 + $0x280] sm:$0xff]
                %231 = vst [vmem:[%s149 + $0x140] sm:$0xff] %v230
                %v232 = vld [vmem:[%s148 + $0x288] sm:$0xff]
                %233 = vst [vmem:[%s149 + $0x148] sm:$0xff] %v232
                %v234 = vld [vmem:[%s148 + $0x2a0] sm:$0xff]
                %235 = vst [vmem:[%s149 + $0x150] sm:$0xff] %v234
                %v236 = vld [vmem:[%s148 + $0x2a8] sm:$0xff]
                %237 = vst [vmem:[%s149 + $0x158] sm:$0xff] %v236
                %v238 = vld [vmem:[%s148 + $0x2c0] sm:$0xff]
                %239 = vst [vmem:[%s149 + $0x160] sm:$0xff] %v238
                %v240 = vld [vmem:[%s148 + $0x2c8] sm:$0xff]
                %241 = vst [vmem:[%s149 + $0x168] sm:$0xff] %v240
                %v242 = vld [vmem:[%s148 + $0x2e0] sm:$0xff]
                %243 = vst [vmem:[%s149 + $0x170] sm:$0xff] %v242
                %v244 = vld [vmem:[%s148 + $0x2e8] sm:$0xff]
                %245 = vst [vmem:[%s149 + $0x178] sm:$0xff] %v244
                %v246 = vld [vmem:[%s148 + $0x300] sm:$0xff]
                %247 = vst [vmem:[%s149 + $0x180] sm:$0xff] %v246
                %v248 = vld [vmem:[%s148 + $0x308] sm:$0xff]
                %249 = vst [vmem:[%s149 + $0x188] sm:$0xff] %v248
                %v250 = vld [vmem:[%s148 + $0x320] sm:$0xff]
                %251 = vst [vmem:[%s149 + $0x190] sm:$0xff] %v250
                %v252 = vld [vmem:[%s148 + $0x328] sm:$0xff]
                %253 = vst [vmem:[%s149 + $0x198] sm:$0xff] %v252
                %v254 = vld [vmem:[%s148 + $0x340] sm:$0xff]
                %255 = vst [vmem:[%s149 + $0x1a0] sm:$0xff] %v254
                %v256 = vld [vmem:[%s148 + $0x348] sm:$0xff]
                %257 = vst [vmem:[%s149 + $0x1a8] sm:$0xff] %v256
                %v258 = vld [vmem:[%s148 + $0x360] sm:$0xff]
                %259 = vst [vmem:[%s149 + $0x1b0] sm:$0xff] %v258
                %v260 = vld [vmem:[%s148 + $0x368] sm:$0xff]
                %261 = vst [vmem:[%s149 + $0x1b8] sm:$0xff] %v260
                %v262 = vld [vmem:[%s148 + $0x380] sm:$0xff]
                %263 = vst [vmem:[%s149 + $0x1c0] sm:$0xff] %v262
                %v264 = vld [vmem:[%s148 + $0x388] sm:$0xff]
                %265 = vst [vmem:[%s149 + $0x1c8] sm:$0xff] %v264
                %v266 = vld [vmem:[%s148 + $0x3a0] sm:$0xff]
                %267 = vst [vmem:[%s149 + $0x1d0] sm:$0xff] %v266
                %v268 = vld [vmem:[%s148 + $0x3a8] sm:$0xff]
                %269 = vst [vmem:[%s149 + $0x1d8] sm:$0xff] %v268
                %v270 = vld [vmem:[%s148 + $0x3c0] sm:$0xff]
                %271 = vst [vmem:[%s149 + $0x1e0] sm:$0xff] %v270
                %v272 = vld [vmem:[%s148 + $0x3c8] sm:$0xff]
                %273 = vst [vmem:[%s149 + $0x1e8] sm:$0xff] %v272
                %v274 = vld [vmem:[%s148 + $0x3e0] sm:$0xff]
                %275 = vst [vmem:[%s149 + $0x1f0] sm:$0xff] %v274
                %v276 = vld [vmem:[%s148 + $0x3e8] sm:$0xff]
                %277 = vst [vmem:[%s149 + $0x1f8] sm:$0xff] %v276
                %v278 = vld [vmem:[%s148 + $0x400] sm:$0xff]
                %279 = vst [vmem:[%s149 + $0x200] sm:$0xff] %v278
                %v280 = vld [vmem:[%s148 + $0x408] sm:$0xff]
                %281 = vst [vmem:[%s149 + $0x208] sm:$0xff] %v280
                %v282 = vld [vmem:[%s148 + $0x420] sm:$0xff]
                %283 = vst [vmem:[%s149 + $0x210] sm:$0xff] %v282
                %v284 = vld [vmem:[%s148 + $0x428] sm:$0xff]
                %285 = vst [vmem:[%s149 + $0x218] sm:$0xff] %v284
                %v286 = vld [vmem:[%s148 + $0x440] sm:$0xff]
                %287 = vst [vmem:[%s149 + $0x220] sm:$0xff] %v286
                %v288 = vld [vmem:[%s148 + $0x448] sm:$0xff]
                %289 = vst [vmem:[%s149 + $0x228] sm:$0xff] %v288
                %v290 = vld [vmem:[%s148 + $0x460] sm:$0xff]
                %291 = vst [vmem:[%s149 + $0x230] sm:$0xff] %v290
                %v292 = vld [vmem:[%s148 + $0x468] sm:$0xff]
                %293 = vst [vmem:[%s149 + $0x238] sm:$0xff] %v292
                %v294 = vld [vmem:[%s148 + $0x480] sm:$0xff]
                %295 = vst [vmem:[%s149 + $0x240] sm:$0xff] %v294
                %v296 = vld [vmem:[%s148 + $0x488] sm:$0xff]
                %297 = vst [vmem:[%s149 + $0x248] sm:$0xff] %v296
                %v298 = vld [vmem:[%s148 + $0x4a0] sm:$0xff]
                %299 = vst [vmem:[%s149 + $0x250] sm:$0xff] %v298
                %v300 = vld [vmem:[%s148 + $0x4a8] sm:$0xff]
                %301 = vst [vmem:[%s149 + $0x258] sm:$0xff] %v300
                %v302 = vld [vmem:[%s148 + $0x4c0] sm:$0xff]
                %303 = vst [vmem:[%s149 + $0x260] sm:$0xff] %v302
                %v304 = vld [vmem:[%s148 + $0x4c8] sm:$0xff]
                %305 = vst [vmem:[%s149 + $0x268] sm:$0xff] %v304
                %v306 = vld [vmem:[%s148 + $0x4e0] sm:$0xff]
                %307 = vst [vmem:[%s149 + $0x270] sm:$0xff] %v306
                %v308 = vld [vmem:[%s148 + $0x4e8] sm:$0xff]
                %309 = vst [vmem:[%s149 + $0x278] sm:$0xff] %v308
                %v310 = vld [vmem:[%s148 + $0x500] sm:$0xff]
                %311 = vst [vmem:[%s149 + $0x280] sm:$0xff] %v310
                %v312 = vld [vmem:[%s148 + $0x508] sm:$0xff]
                %313 = vst [vmem:[%s149 + $0x288] sm:$0xff] %v312
                %v314 = vld [vmem:[%s148 + $0x520] sm:$0xff]
                %315 = vst [vmem:[%s149 + $0x290] sm:$0xff] %v314
                %v316 = vld [vmem:[%s148 + $0x528] sm:$0xff]
                %317 = vst [vmem:[%s149 + $0x298] sm:$0xff] %v316
                %v318 = vld [vmem:[%s148 + $0x540] sm:$0xff]
                %319 = vst [vmem:[%s149 + $0x2a0] sm:$0xff] %v318
                %v320 = vld [vmem:[%s148 + $0x548] sm:$0xff]
                %321 = vst [vmem:[%s149 + $0x2a8] sm:$0xff] %v320
                %v322 = vld [vmem:[%s148 + $0x560] sm:$0xff]
                %323 = vst [vmem:[%s149 + $0x2b0] sm:$0xff] %v322
                %v324 = vld [vmem:[%s148 + $0x568] sm:$0xff]
                %325 = vst [vmem:[%s149 + $0x2b8] sm:$0xff] %v324
                %v326 = vld [vmem:[%s148 + $0x580] sm:$0xff]
                %327 = vst [vmem:[%s149 + $0x2c0] sm:$0xff] %v326
                %v328 = vld [vmem:[%s148 + $0x588] sm:$0xff]
                %329 = vst [vmem:[%s149 + $0x2c8] sm:$0xff] %v328
                %v330 = vld [vmem:[%s148 + $0x5a0] sm:$0xff]
                %331 = vst [vmem:[%s149 + $0x2d0] sm:$0xff] %v330
                %v332 = vld [vmem:[%s148 + $0x5a8] sm:$0xff]
                %333 = vst [vmem:[%s149 + $0x2d8] sm:$0xff] %v332
                %v334 = vld [vmem:[%s148 + $0x5c0] sm:$0xff]
                %335 = vst [vmem:[%s149 + $0x2e0] sm:$0xff] %v334
                %v336 = vld [vmem:[%s148 + $0x5c8] sm:$0xff]
                %337 = vst [vmem:[%s149 + $0x2e8] sm:$0xff] %v336
                %v338 = vld [vmem:[%s148 + $0x5e0] sm:$0xff]
                %339 = vst [vmem:[%s149 + $0x2f0] sm:$0xff] %v338
                %v340 = vld [vmem:[%s148 + $0x5e8] sm:$0xff]
                %341 = vst [vmem:[%s149 + $0x2f8] sm:$0xff] %v340
                %v342 = vld [vmem:[%s148 + $0x600] sm:$0xff]
                %343 = vst [vmem:[%s149 + $0x300] sm:$0xff] %v342
                %v344 = vld [vmem:[%s148 + $0x608] sm:$0xff]
                %345 = vst [vmem:[%s149 + $0x308] sm:$0xff] %v344
                %v346 = vld [vmem:[%s148 + $0x620] sm:$0xff]
                %347 = vst [vmem:[%s149 + $0x310] sm:$0xff] %v346
                %v348 = vld [vmem:[%s148 + $0x628] sm:$0xff]
                %349 = vst [vmem:[%s149 + $0x318] sm:$0xff] %v348
                %v350 = vld [vmem:[%s148 + $0x640] sm:$0xff]
                %351 = vst [vmem:[%s149 + $0x320] sm:$0xff] %v350
                %v352 = vld [vmem:[%s148 + $0x648] sm:$0xff]
                %353 = vst [vmem:[%s149 + $0x328] sm:$0xff] %v352
                %v354 = vld [vmem:[%s148 + $0x660] sm:$0xff]
                %355 = vst [vmem:[%s149 + $0x330] sm:$0xff] %v354
                %v356 = vld [vmem:[%s148 + $0x668] sm:$0xff]
                %357 = vst [vmem:[%s149 + $0x338] sm:$0xff] %v356
                %v358 = vld [vmem:[%s148 + $0x680] sm:$0xff]
                %359 = vst [vmem:[%s149 + $0x340] sm:$0xff] %v358
                %v360 = vld [vmem:[%s148 + $0x688] sm:$0xff]
                %361 = vst [vmem:[%s149 + $0x348] sm:$0xff] %v360
                %v362 = vld [vmem:[%s148 + $0x6a0] sm:$0xff]
                %363 = vst [vmem:[%s149 + $0x350] sm:$0xff] %v362
                %v364 = vld [vmem:[%s148 + $0x6a8] sm:$0xff]
                %365 = vst [vmem:[%s149 + $0x358] sm:$0xff] %v364
                %v366 = vld [vmem:[%s148 + $0x6c0] sm:$0xff]
                %367 = vst [vmem:[%s149 + $0x360] sm:$0xff] %v366
                %v368 = vld [vmem:[%s148 + $0x6c8] sm:$0xff]
                %369 = vst [vmem:[%s149 + $0x368] sm:$0xff] %v368
                %v370 = vld [vmem:[%s148 + $0x6e0] sm:$0xff]
                %371 = vst [vmem:[%s149 + $0x370] sm:$0xff] %v370
                %v372 = vld [vmem:[%s148 + $0x6e8] sm:$0xff]
                %373 = vst [vmem:[%s149 + $0x378] sm:$0xff] %v372
                %v374 = vld [vmem:[%s148 + $0x700] sm:$0xff]
                %375 = vst [vmem:[%s149 + $0x380] sm:$0xff] %v374
                %v376 = vld [vmem:[%s148 + $0x708] sm:$0xff]
                %377 = vst [vmem:[%s149 + $0x388] sm:$0xff] %v376
                %v378 = vld [vmem:[%s148 + $0x720] sm:$0xff]
                %379 = vst [vmem:[%s149 + $0x390] sm:$0xff] %v378
                %v380 = vld [vmem:[%s148 + $0x728] sm:$0xff]
                %381 = vst [vmem:[%s149 + $0x398] sm:$0xff] %v380
                %v382 = vld [vmem:[%s148 + $0x740] sm:$0xff]
                %383 = vst [vmem:[%s149 + $0x3a0] sm:$0xff] %v382
                %v384 = vld [vmem:[%s148 + $0x748] sm:$0xff]
                %385 = vst [vmem:[%s149 + $0x3a8] sm:$0xff] %v384
                %v386 = vld [vmem:[%s148 + $0x760] sm:$0xff]
                %387 = vst [vmem:[%s149 + $0x3b0] sm:$0xff] %v386
                %v388 = vld [vmem:[%s148 + $0x768] sm:$0xff]
                %389 = vst [vmem:[%s149 + $0x3b8] sm:$0xff] %v388
                %v390 = vld [vmem:[%s148 + $0x780] sm:$0xff]
                %391 = vst [vmem:[%s149 + $0x3c0] sm:$0xff] %v390
                %v392 = vld [vmem:[%s148 + $0x788] sm:$0xff]
                %393 = vst [vmem:[%s149 + $0x3c8] sm:$0xff] %v392
                %v394 = vld [vmem:[%s148 + $0x7a0] sm:$0xff]
                %395 = vst [vmem:[%s149 + $0x3d0] sm:$0xff] %v394
                %v396 = vld [vmem:[%s148 + $0x7a8] sm:$0xff]
                %397 = vst [vmem:[%s149 + $0x3d8] sm:$0xff] %v396
                %v398 = vld [vmem:[%s148 + $0x7c0] sm:$0xff]
                %399 = vst [vmem:[%s149 + $0x3e0] sm:$0xff] %v398
                %v400 = vld [vmem:[%s148 + $0x7c8] sm:$0xff]
                %401 = vst [vmem:[%s149 + $0x3e8] sm:$0xff] %v400
                %v402 = vld [vmem:[%s148 + $0x7e0] sm:$0xff]
                %403 = vst [vmem:[%s149 + $0x3f0] sm:$0xff] %v402
                %v404 = vld [vmem:[%s148 + $0x7e8] sm:$0xff]
                %405 = vst [vmem:[%s149 + $0x3f8] sm:$0xff] %v404
                %v406 = vld [vmem:[%s148 + $0x800] sm:$0xff]
                %407 = vst [vmem:[%s149 + $0x400] sm:$0xff] %v406
                %v408 = vld [vmem:[%s148 + $0x808] sm:$0xff]
                %409 = vst [vmem:[%s149 + $0x408] sm:$0xff] %v408
                %v410 = vld [vmem:[%s148 + $0x820] sm:$0xff]
                %411 = vst [vmem:[%s149 + $0x410] sm:$0xff] %v410
                %v412 = vld [vmem:[%s148 + $0x828] sm:$0xff]
                %413 = vst [vmem:[%s149 + $0x418] sm:$0xff] %v412
                %v414 = vld [vmem:[%s148 + $0x840] sm:$0xff]
                %415 = vst [vmem:[%s149 + $0x420] sm:$0xff] %v414
                %v416 = vld [vmem:[%s148 + $0x848] sm:$0xff]
                %417 = vst [vmem:[%s149 + $0x428] sm:$0xff] %v416
                %v418 = vld [vmem:[%s148 + $0x860] sm:$0xff]
                %419 = vst [vmem:[%s149 + $0x430] sm:$0xff] %v418
                %v420 = vld [vmem:[%s148 + $0x868] sm:$0xff]
                %421 = vst [vmem:[%s149 + $0x438] sm:$0xff] %v420
                %v422 = vld [vmem:[%s148 + $0x880] sm:$0xff]
                %423 = vst [vmem:[%s149 + $0x440] sm:$0xff] %v422
                %v424 = vld [vmem:[%s148 + $0x888] sm:$0xff]
                %425 = vst [vmem:[%s149 + $0x448] sm:$0xff] %v424
                %v426 = vld [vmem:[%s148 + $0x8a0] sm:$0xff]
                %427 = vst [vmem:[%s149 + $0x450] sm:$0xff] %v426
                %v428 = vld [vmem:[%s148 + $0x8a8] sm:$0xff]
                %429 = vst [vmem:[%s149 + $0x458] sm:$0xff] %v428
                %v430 = vld [vmem:[%s148 + $0x8c0] sm:$0xff]
                %431 = vst [vmem:[%s149 + $0x460] sm:$0xff] %v430
                %v432 = vld [vmem:[%s148 + $0x8c8] sm:$0xff]
                %433 = vst [vmem:[%s149 + $0x468] sm:$0xff] %v432
                %v434 = vld [vmem:[%s148 + $0x8e0] sm:$0xff]
                %435 = vst [vmem:[%s149 + $0x470] sm:$0xff] %v434
                %v436 = vld [vmem:[%s148 + $0x8e8] sm:$0xff]
                %437 = vst [vmem:[%s149 + $0x478] sm:$0xff] %v436
              $region41: #{feature_ex_forward.35} parent=35 // loop_footer
                %s147 = sadd.s32 1, %s143
              $region42: #{feature_ex_forward.35} parent=35 // loop_footer_branch
                %142 = sbr.rel target = $region38
              $region43: #{feature_ex_forward.35} parent=35 // loop_exit
                _
            $region36: #{feature_ex_forward.35} parent=31 // pred_fallthru
              _
            // Predicated region
            $region44: #{feature_ex_forward.35} parent=31 // pred_check
              _
            $region45: #{feature_ex_forward.35} parent=31 // pred_check_branch
              %439 = sbr.rel target = $region47
            $region46: #{feature_ex_forward.35} parent=31 // pred_region
              _
            $region47: #{feature_ex_forward.35} parent=31 // pred_fallthru
              _
          $region32: #{feature_ex_forward.35} parent=27 // pred_fallthru
            _
          %440 = vnop
        $region28: #{feature_ex_forward.35} parent=23 // pred_fallthru
          _
      $region24: #{feature_ex_forward.35} parent=5 // pred_fallthru
        _
      %p441 = scmp.le.s32.totalorder 1, %s9
      %p442 = scmp.lt.s32.totalorder %s9, 3
      %p443 = pnand %p441, %p442
      %p444 = pneg %p443
      // Predicated region
      $region48: #{feature_ex_forward.35} parent=5 // pred_check
        _
      $region49: #{feature_ex_forward.35} parent=5 // pred_check_branch
        %446 = sbr.rel (%p443) target = $region51
      $region50: #{feature_ex_forward.35} parent=5 // pred_region
        %s447 = ssub.s32 %s9, 1
        %s448 = sand.u32 %s43, 1
        %s449 = sand.u32 %s43, 1
        %s450 = smul.addr %s449, 1152
        %s451 = scalar_lea.vmem [#allocation2], %s450
        // Predicated region
        $region52: #{feature_ex_forward.35} parent=50 // pred_check
          %p452 = pneg %p56
        $region53: #{feature_ex_forward.35} parent=50 // pred_check_branch
          %454 = sbr.rel (%p452) target = $region55
        $region54: #{feature_ex_forward.35} parent=50 // pred_region
          _
        $region55: #{feature_ex_forward.35} parent=50 // pred_fallthru
          _
        %p455 = pneg %p30
        %p456 = pneg %p27
        %s457 = sand.u32 %s43, 1
        %s458 = sand.u32 %s43, 1
        %s459 = smul.addr %s458, 1152
        %s460 = scalar_lea.vmem [#allocation2], %s459
        %p461 = pneg %p56
        %p462 = pneg %p53
        %p463 = pneg %p77
        %p464 = pneg %p74
        %p465 = pneg %p103
        %p466 = pneg %p100
        %s467 = smul.u32 2, %s14
        %p468 = scmp.lt.s32.totalorder %s467, 3
        %s469 = scalar_select %p468, %s467, 3
        %s470 = smul.addr %s469, 8
        %s471 = scalar_lea.vmem %s3, %s470
        %s472 = smul.u32 2, %s14
        %s473 = smul.u32 2, %s14
        %p474 = scmp.lt.s32.totalorder %s473, 3
        %s475 = scalar_select %p474, %s473, 3
        %s476 = smul.addr %s475, 8
        %s477 = scalar_lea.vmem %s3, %s476
        %s478 = smul.u32 2, %s14
        %v479 = vld [vmem:[%s0] sm:$0xff]
        %v480 = vld [vmem:[%s0 + $0x8] sm:$0xff]
        %v481 = vld [vmem:[%s0 + $0x10] sm:$0xff]
        %v482 = vld [vmem:[%s0 + $0x18] sm:$0xff]
        %v483 = vld [vmem:[%s0 + $0x20] sm:$0xff]
        %v484 = vld [vmem:[%s451] sm:$0xff]
        %v485 = vld [vmem:[%s451 + $0x8] sm:$0xff]
        %v486 = vld [vmem:[%s451 + $0x10] sm:$0xff]
        %v487 = vld [vmem:[%s451 + $0x18] sm:$0xff]
        %v488 = vld [vmem:[%s451 + $0x20] sm:$0xff]
        %v489 = vld [vmem:[%s451 + $0x28] sm:$0xff]
        %v490 = vld [vmem:[%s451 + $0x30] sm:$0xff]
        %v491 = vld [vmem:[%s451 + $0x38] sm:$0xff]
        %v492 = vld [vmem:[%s451 + $0x40] sm:$0xff]
        %v493 = vld [vmem:[%s451 + $0x48] sm:$0xff]
        %v494 = vld [vmem:[%s451 + $0x50] sm:$0xff]
        %v495 = vld [vmem:[%s451 + $0x58] sm:$0xff]
        %v496 = vld [vmem:[%s451 + $0x60] sm:$0xff]
        %v497 = vld [vmem:[%s451 + $0x68] sm:$0xff]
        %v498 = vld [vmem:[%s451 + $0x70] sm:$0xff]
        %v499 = vld [vmem:[%s451 + $0x78] sm:$0xff]
        %v500 = vld [vmem:[%s451 + $0x80] sm:$0xff]
        %v501 = vld [vmem:[%s451 + $0x88] sm:$0xff]
        %v502 = vld [vmem:[%s451 + $0x90] sm:$0xff]
        %v503 = vld [vmem:[%s451 + $0x98] sm:$0xff]
        %v504 = vld [vmem:[%s451 + $0xa0] sm:$0xff]
        %v505 = vld [vmem:[%s451 + $0xa8] sm:$0xff]
        %v506 = vld [vmem:[%s451 + $0xb0] sm:$0xff]
        %v507 = vld [vmem:[%s451 + $0xb8] sm:$0xff]
        %v508 = vld [vmem:[%s451 + $0xc0] sm:$0xff]
        %v509 = vld [vmem:[%s451 + $0xc8] sm:$0xff]
        %v510 = vld [vmem:[%s451 + $0xd0] sm:$0xff]
        %v511 = vld [vmem:[%s451 + $0xd8] sm:$0xff]
        %v512 = vld [vmem:[%s451 + $0xe0] sm:$0xff]
        %v513 = vld [vmem:[%s451 + $0xe8] sm:$0xff]
        %v514 = vld [vmem:[%s451 + $0xf0] sm:$0xff]
        %v515 = vld [vmem:[%s451 + $0xf8] sm:$0xff]
        %v516 = vld [vmem:[%s451 + $0x100] sm:$0xff]
        %v517 = vld [vmem:[%s451 + $0x108] sm:$0xff]
        %v518 = vld [vmem:[%s451 + $0x110] sm:$0xff]
        %v519 = vld [vmem:[%s451 + $0x118] sm:$0xff]
        %v520 = vld [vmem:[%s451 + $0x120] sm:$0xff]
        %v521 = vld [vmem:[%s451 + $0x128] sm:$0xff]
        %v522 = vld [vmem:[%s451 + $0x130] sm:$0xff]
        %v523 = vld [vmem:[%s451 + $0x138] sm:$0xff]
        %v524 = vld [vmem:[%s451 + $0x140] sm:$0xff]
        %v525 = vld [vmem:[%s451 + $0x148] sm:$0xff]
        %v526 = vld [vmem:[%s451 + $0x150] sm:$0xff]
        %v527 = vld [vmem:[%s451 + $0x158] sm:$0xff]
        %v528 = vld [vmem:[%s451 + $0x160] sm:$0xff]
        %v529 = vld [vmem:[%s451 + $0x168] sm:$0xff]
        %v530 = vld [vmem:[%s451 + $0x170] sm:$0xff]
        %v531 = vld [vmem:[%s451 + $0x178] sm:$0xff]
        %v532 = vld [vmem:[%s451 + $0x180] sm:$0xff]
        %v533 = vld [vmem:[%s451 + $0x188] sm:$0xff]
        %v534 = vld [vmem:[%s451 + $0x190] sm:$0xff]
        %v535 = vld [vmem:[%s451 + $0x198] sm:$0xff]
        %v536 = vld [vmem:[%s451 + $0x1a0] sm:$0xff]
        %v537 = vld [vmem:[%s451 + $0x1a8] sm:$0xff]
        %v538 = vld [vmem:[%s451 + $0x1b0] sm:$0xff]
        %v539 = vld [vmem:[%s451 + $0x1b8] sm:$0xff]
        %v540 = vld [vmem:[%s451 + $0x1c0] sm:$0xff]
        %v541 = vld [vmem:[%s451 + $0x1c8] sm:$0xff]
        %v542 = vld [vmem:[%s451 + $0x1d0] sm:$0xff]
        %v543 = vld [vmem:[%s451 + $0x1d8] sm:$0xff]
        %v544 = vld [vmem:[%s451 + $0x1e0] sm:$0xff]
        %v545 = vld [vmem:[%s451 + $0x1e8] sm:$0xff]
        %v546 = vld [vmem:[%s451 + $0x1f0] sm:$0xff]
        %v547 = vld [vmem:[%s451 + $0x1f8] sm:$0xff]
        %v548 = vld [vmem:[%s451 + $0x200] sm:$0xff]
        %v549 = vld [vmem:[%s451 + $0x208] sm:$0xff]
        %v550 = vld [vmem:[%s451 + $0x210] sm:$0xff]
        %v551 = vld [vmem:[%s451 + $0x218] sm:$0xff]
        %v552 = vld [vmem:[%s451 + $0x220] sm:$0xff]
        %v553 = vld [vmem:[%s451 + $0x228] sm:$0xff]
        %v554 = vld [vmem:[%s451 + $0x230] sm:$0xff]
        %v555 = vld [vmem:[%s451 + $0x238] sm:$0xff]
        %v556 = vld [vmem:[%s451 + $0x240] sm:$0xff]
        %v557 = vld [vmem:[%s451 + $0x248] sm:$0xff]
        %v558 = vld [vmem:[%s451 + $0x250] sm:$0xff]
        %v559 = vld [vmem:[%s451 + $0x258] sm:$0xff]
        %v560 = vld [vmem:[%s451 + $0x260] sm:$0xff]
        %v561 = vld [vmem:[%s451 + $0x268] sm:$0xff]
        %v562 = vld [vmem:[%s451 + $0x270] sm:$0xff]
        %v563 = vld [vmem:[%s451 + $0x278] sm:$0xff]
        %v564 = vld [vmem:[%s451 + $0x280] sm:$0xff]
        %v565 = vld [vmem:[%s451 + $0x288] sm:$0xff]
        %v566 = vld [vmem:[%s451 + $0x290] sm:$0xff]
        %v567 = vld [vmem:[%s451 + $0x298] sm:$0xff]
        %v568 = vld [vmem:[%s451 + $0x2a0] sm:$0xff]
        %v569 = vld [vmem:[%s451 + $0x2a8] sm:$0xff]
        %v570 = vld [vmem:[%s451 + $0x2b0] sm:$0xff]
        %v571 = vld [vmem:[%s451 + $0x2b8] sm:$0xff]
        %v572 = vld [vmem:[%s451 + $0x2c0] sm:$0xff]
        %v573 = vld [vmem:[%s451 + $0x2c8] sm:$0xff]
        %v574 = vld [vmem:[%s451 + $0x2d0] sm:$0xff]
        %v575 = vld [vmem:[%s451 + $0x2d8] sm:$0xff]
        %v576 = vld [vmem:[%s451 + $0x2e0] sm:$0xff]
        %v577 = vld [vmem:[%s451 + $0x2e8] sm:$0xff]
        %v578 = vld [vmem:[%s451 + $0x2f0] sm:$0xff]
        %v579 = vld [vmem:[%s451 + $0x2f8] sm:$0xff]
        %v580 = vld [vmem:[%s451 + $0x300] sm:$0xff]
        %v581 = vld [vmem:[%s451 + $0x308] sm:$0xff]
        %v582 = vld [vmem:[%s451 + $0x310] sm:$0xff]
        %v583 = vld [vmem:[%s451 + $0x318] sm:$0xff]
        %v584 = vld [vmem:[%s451 + $0x320] sm:$0xff]
        %v585 = vld [vmem:[%s451 + $0x328] sm:$0xff]
        %v586 = vld [vmem:[%s451 + $0x330] sm:$0xff]
        %v587 = vld [vmem:[%s451 + $0x338] sm:$0xff]
        %v588 = vld [vmem:[%s451 + $0x340] sm:$0xff]
        %v589 = vld [vmem:[%s451 + $0x348] sm:$0xff]
        %v590 = vld [vmem:[%s451 + $0x350] sm:$0xff]
        %v591 = vld [vmem:[%s451 + $0x358] sm:$0xff]
        %v592 = vld [vmem:[%s451 + $0x360] sm:$0xff]
        %v593 = vld [vmem:[%s451 + $0x368] sm:$0xff]
        %v594 = vld [vmem:[%s451 + $0x370] sm:$0xff]
        %v595 = vld [vmem:[%s451 + $0x378] sm:$0xff]
        %v596 = vld [vmem:[%s451 + $0x380] sm:$0xff]
        %v597 = vld [vmem:[%s451 + $0x388] sm:$0xff]
        %v598 = vld [vmem:[%s451 + $0x390] sm:$0xff]
        %v599 = vld [vmem:[%s451 + $0x398] sm:$0xff]
        %v600 = vld [vmem:[%s451 + $0x3a0] sm:$0xff]
        %v601 = vld [vmem:[%s451 + $0x3a8] sm:$0xff]
        %v602 = vld [vmem:[%s451 + $0x3b0] sm:$0xff]
        %v603 = vld [vmem:[%s451 + $0x3b8] sm:$0xff]
        %v604 = vld [vmem:[%s451 + $0x3c0] sm:$0xff]
        %v605 = vld [vmem:[%s451 + $0x3c8] sm:$0xff]
        %v606 = vld [vmem:[%s451 + $0x3d0] sm:$0xff]
        %v607 = vld [vmem:[%s451 + $0x3d8] sm:$0xff]
        %v608 = vld [vmem:[%s451 + $0x3e0] sm:$0xff]
        %v609 = vld [vmem:[%s451 + $0x3e8] sm:$0xff]
        %v610 = vld [vmem:[%s451 + $0x3f0] sm:$0xff]
        %v611 = vld [vmem:[%s451 + $0x3f8] sm:$0xff]
        %v612 = vld [vmem:[%s451 + $0x400] sm:$0xff]
        %v613 = vld [vmem:[%s451 + $0x408] sm:$0xff]
        %v614 = vld [vmem:[%s451 + $0x410] sm:$0xff]
        %v615 = vld [vmem:[%s451 + $0x418] sm:$0xff]
        %v616 = vld [vmem:[%s451 + $0x420] sm:$0xff]
        %v617 = vld [vmem:[%s451 + $0x428] sm:$0xff]
        %v618 = vld [vmem:[%s451 + $0x430] sm:$0xff]
        %v619 = vld [vmem:[%s451 + $0x438] sm:$0xff]
        %v620 = vld [vmem:[%s451 + $0x440] sm:$0xff]
        %v621 = vld [vmem:[%s451 + $0x448] sm:$0xff]
        %v622 = vld [vmem:[%s451 + $0x450] sm:$0xff]
        %v623 = vld [vmem:[%s451 + $0x458] sm:$0xff]
        %v624 = vld [vmem:[%s451 + $0x460] sm:$0xff]
        %v625 = vld [vmem:[%s451 + $0x468] sm:$0xff]
        %v626 = vld [vmem:[%s451 + $0x470] sm:$0xff]
        %v627 = vld [vmem:[%s451 + $0x478] sm:$0xff]
        %v628 = vld [vmem:[%s2] sm:$0xff]
        %630 = vset.pattern.permute.xlu0 0
        %631 = vperm.xlu0 %630, %v628
        %v632 = vpop.permute.xlu0 %631
        %vm634 = vcmask 523264
        %v636 = vsel %vm634, %v483, 0
        %638 = vmatprep.subr.mxu0 %v485
        %639 = vmatpush1.msra.mxu0 %v484
        %640 = vmatprep.subr.mxu0 %v487
        %641 = vmatpush1.msra.mxu0 %v486
        %642 = vmatprep.subr.mxu0 %v489
        %643 = vmatpush1.msra.mxu0 %v488
        %644 = vmatprep.subr.mxu0 %v491
        %645 = vmatpush1.msra.mxu0 %v490
        %646 = vmatprep.subr.mxu0 %v493
        %647 = vmatpush1.msra.mxu0 %v492
        %648 = vmatprep.subr.mxu0 %v495
        %649 = vmatpush1.msra.mxu0 %v494
        %650 = vmatprep.subr.mxu0 %v497
        %651 = vmatpush1.msra.mxu0 %v496
        %652 = vmatprep.subr.mxu0 %v499
        %653 = vmatpush1.msra.mxu0 %v498
        %654 = vmatprep.subr.mxu0 %v501
        %655 = vmatpush1.msra.mxu0 %v500
        %656 = vmatprep.subr.mxu0 %v503
        %657 = vmatpush1.msra.mxu0 %v502
        %658 = vmatprep.subr.mxu0 %v505
        %659 = vmatpush1.msra.mxu0 %v504
        %660 = vmatprep.subr.mxu0 %v507
        %661 = vmatpush1.msra.mxu0 %v506
        %662 = vmatprep.subr.mxu0 %v509
        %663 = vmatpush1.msra.mxu0 %v508
        %664 = vmatprep.subr.mxu0 %v511
        %665 = vmatpush1.msra.mxu0 %v510
        %666 = vmatprep.subr.mxu0 %v513
        %667 = vmatpush1.msra.mxu0 %v512
        %668 = vmatprep.subr.mxu0 %v515
        %669 = vmatpush1.msra.mxu0 %v514
        %670 = vmatprep.subr.mxu0 %v517
        %671 = vmatpush1.msra.mxu0 %v516
        %672 = vmatprep.subr.mxu0 %v519
        %673 = vmatpush1.msra.mxu0 %v518
        %674 = vmatprep.subr.mxu0 %v521
        %675 = vmatpush1.msra.mxu0 %v520
        %676 = vmatprep.subr.mxu0 %v523
        %677 = vmatpush1.msra.mxu0 %v522
        %678 = vmatprep.subr.mxu0 %v525
        %679 = vmatpush1.msra.mxu0 %v524
        %680 = vmatprep.subr.mxu0 %v527
        %681 = vmatpush1.msra.mxu0 %v526
        %682 = vmatprep.subr.mxu0 %v529
        %683 = vmatpush1.msra.mxu0 %v528
        %684 = vmatprep.subr.mxu0 %v531
        %685 = vmatpush1.msra.mxu0 %v530
        %686 = vmatprep.subr.mxu0 %v533
        %687 = vmatpush1.msra.mxu0 %v532
        %688 = vmatprep.subr.mxu0 %v535
        %689 = vmatpush1.msra.mxu0 %v534
        %690 = vmatprep.subr.mxu0 %v537
        %691 = vmatpush1.msra.mxu0 %v536
        %692 = vmatprep.subr.mxu0 %v539
        %693 = vmatpush1.msra.mxu0 %v538
        %694 = vmatprep.subr.mxu0 %v541
        %695 = vmatpush1.msra.mxu0 %v540
        %696 = vmatprep.subr.mxu0 %v543
        %697 = vmatpush1.msra.mxu0 %v542
        %698 = vmatprep.subr.mxu0 %v545
        %699 = vmatpush1.msra.mxu0 %v544
        %700 = vmatprep.subr.mxu0 %v547
        %701 = vmatpush1.msra.mxu0 %v546
        %702 = vmatprep.mubr.f32.mxu0 %v480
        %703 = vmatmul.mubr.f32.gmra.mrb[0].mxu0 %v479
        %v704 = vpop.f32.mrb[0].mxu0
        %v705 = vadd.f32 %v632, %v704
        %v706 = vpop.f32.mrb[0].mxu0
        %v707 = vadd.f32 %v632, %v706
        %708 = vdwg.mxu0
        %709 = vmatprep.subr.mxu0 %v549
        %710 = vmatpush1.msra.mxu0 %v548
        %711 = vmatprep.subr.mxu0 %v551
        %712 = vmatpush1.msra.mxu0 %v550
        %713 = vmatprep.subr.mxu0 %v553
        %714 = vmatpush1.msra.mxu0 %v552
        %715 = vmatprep.subr.mxu0 %v555
        %716 = vmatpush1.msra.mxu0 %v554
        %717 = vmatprep.subr.mxu0 %v557
        %718 = vmatpush1.msra.mxu0 %v556
        %719 = vmatprep.subr.mxu0 %v559
        %720 = vmatpush1.msra.mxu0 %v558
        %721 = vmatprep.subr.mxu0 %v561
        %722 = vmatpush1.msra.mxu0 %v560
        %723 = vmatprep.subr.mxu0 %v563
        %724 = vmatpush1.msra.mxu0 %v562
        %725 = vmatprep.subr.mxu0 %v565
        %726 = vmatpush1.msra.mxu0 %v564
        %727 = vmatprep.subr.mxu0 %v567
        %728 = vmatpush1.msra.mxu0 %v566
        %729 = vmatprep.subr.mxu0 %v569
        %730 = vmatpush1.msra.mxu0 %v568
        %731 = vmatprep.subr.mxu0 %v571
        %732 = vmatpush1.msra.mxu0 %v570
        %733 = vmatprep.subr.mxu0 %v573
        %734 = vmatpush1.msra.mxu0 %v572
        %735 = vmatprep.subr.mxu0 %v575
        %736 = vmatpush1.msra.mxu0 %v574
        %737 = vmatprep.subr.mxu0 %v577
        %738 = vmatpush1.msra.mxu0 %v576
        %739 = vmatprep.subr.mxu0 %v579
        %740 = vmatpush1.msra.mxu0 %v578
        %741 = vmatprep.subr.mxu0 %v581
        %742 = vmatpush1.msra.mxu0 %v580
        %743 = vmatprep.subr.mxu0 %v583
        %744 = vmatpush1.msra.mxu0 %v582
        %745 = vmatprep.subr.mxu0 %v585
        %746 = vmatpush1.msra.mxu0 %v584
        %747 = vmatprep.subr.mxu0 %v587
        %748 = vmatpush1.msra.mxu0 %v586
        %749 = vmatprep.subr.mxu0 %v589
        %750 = vmatpush1.msra.mxu0 %v588
        %751 = vmatprep.subr.mxu0 %v591
        %752 = vmatpush1.msra.mxu0 %v590
        %753 = vmatprep.subr.mxu0 %v593
        %754 = vmatpush1.msra.mxu0 %v592
        %755 = vmatprep.subr.mxu0 %v595
        %756 = vmatpush1.msra.mxu0 %v594
        %757 = vmatprep.subr.mxu0 %v597
        %758 = vmatpush1.msra.mxu0 %v596
        %759 = vmatprep.subr.mxu0 %v599
        %760 = vmatpush1.msra.mxu0 %v598
        %761 = vmatprep.subr.mxu0 %v601
        %762 = vmatpush1.msra.mxu0 %v600
        %763 = vmatprep.subr.mxu0 %v603
        %764 = vmatpush1.msra.mxu0 %v602
        %765 = vmatprep.subr.mxu0 %v605
        %766 = vmatpush1.msra.mxu0 %v604
        %767 = vmatprep.subr.mxu0 %v607
        %768 = vmatpush1.msra.mxu0 %v606
        %769 = vmatprep.subr.mxu0 %v609
        %770 = vmatpush1.msra.mxu0 %v608
        %771 = vmatprep.subr.mxu0 %v611
        %772 = vmatpush1.msra.mxu0 %v610
        %773 = vmatprep.mubr.f32.mxu0 %v482
        %774 = vmatmul.mubr.f32.gmra.mrb[0].mxu0 %v481
        %v775 = vpop.f32.mrb[0].mxu0
        %v776 = vadd.f32 %v705, %v775
        %v777 = vpop.f32.mrb[0].mxu0
        %v778 = vadd.f32 %v707, %v777
        %779 = vdwg.mxu0
        %780 = vmatprep.subr.mxu0 %v613
        %781 = vmatpush1.msra.mxu0 %v612
        %782 = vmatprep.subr.mxu0 %v615
        %783 = vmatpush1.msra.mxu0 %v614
        %784 = vmatprep.subr.mxu0 %v617
        %785 = vmatpush1.msra.mxu0 %v616
        %786 = vmatprep.subr.mxu0 %v619
        %787 = vmatpush1.msra.mxu0 %v618
        %788 = vmatprep.subr.mxu0 %v621
        %789 = vmatpush1.msra.mxu0 %v620
        %790 = vmatprep.subr.mxu0 %v623
        %791 = vmatpush1.msra.mxu0 %v622
        %792 = vmatprep.subr.mxu0 %v625
        %793 = vmatpush1.msra.mxu0 %v624
        %794 = vmatprep.subr.mxu0 %v627
        %795 = vmatpush1.msra.mxu0 %v626
        %796 = vmatprep.subr.mxu0 0.0
        %797 = vmatpush1.msra.mxu0 0.0
        %798 = vmatprep.subr.mxu0 0.0
        %799 = vmatpush1.msra.mxu0 0.0
        %800 = vmatprep.subr.mxu0 0.0
        %801 = vmatpush1.msra.mxu0 0.0
        %802 = vmatprep.subr.mxu0 0.0
        %803 = vmatpush1.msra.mxu0 0.0
        %804 = vmatprep.subr.mxu0 0.0
        %805 = vmatpush1.msra.mxu0 0.0
        %806 = vmatprep.subr.mxu0 0.0
        %807 = vmatpush1.msra.mxu0 0.0
        %808 = vmatprep.subr.mxu0 0.0
        %809 = vmatpush1.msra.mxu0 0.0
        %810 = vmatprep.subr.mxu0 0.0
        %811 = vmatpush1.msra.mxu0 0.0
        %812 = vmatprep.subr.mxu0 0.0
        %813 = vmatpush1.msra.mxu0 0.0
        %814 = vmatprep.subr.mxu0 0.0
        %815 = vmatpush1.msra.mxu0 0.0
        %816 = vmatprep.subr.mxu0 0.0
        %817 = vmatpush1.msra.mxu0 0.0
        %818 = vmatprep.subr.mxu0 0.0
        %819 = vmatpush1.msra.mxu0 0.0
        %820 = vmatprep.subr.mxu0 0.0
        %821 = vmatpush1.msra.mxu0 0.0
        %822 = vmatprep.subr.mxu0 0.0
        %823 = vmatpush1.msra.mxu0 0.0
        %824 = vmatprep.subr.mxu0 0.0
        %825 = vmatpush1.msra.mxu0 0.0
        %826 = vmatprep.subr.mxu0 0.0
        %827 = vmatpush1.msra.mxu0 0.0
        %828 = vmatprep.subr.mxu0 0.0
        %829 = vmatpush1.msra.mxu0 0.0
        %830 = vmatprep.subr.mxu0 0.0
        %831 = vmatpush1.msra.mxu0 0.0
        %832 = vmatprep.subr.mxu0 0.0
        %833 = vmatpush1.msra.mxu0 0.0
        %834 = vmatprep.subr.mxu0 0.0
        %835 = vmatpush1.msra.mxu0 0.0
        %836 = vmatprep.subr.mxu0 0.0
        %837 = vmatpush1.msra.mxu0 0.0
        %838 = vmatprep.subr.mxu0 0.0
        %839 = vmatpush1.msra.mxu0 0.0
        %840 = vmatprep.subr.mxu0 0.0
        %841 = vmatpush1.msra.mxu0 0.0
        %842 = vmatprep.subr.mxu0 0.0
        %843 = vmatpush1.msra.mxu0 0.0
        %844 = vmatprep.mubr.f32.mxu0 0.0
        %845 = vmatmul.mubr.f32.gmra.mrb[0].mxu0 %v636
        %v846 = vpop.f32.mrb[0].mxu0
        %v847 = vadd.f32 %v776, %v846
        %v848 = vpop.f32.mrb[0].mxu0
        %v849 = vadd.f32 %v778, %v848
        %850 = vdwg.mxu0
        %851 = vst [vmem:[%s477] sm:$0xff] %v847
        %852 = vst [vmem:[%s477 + $0x8] sm:$0xff] %v849
        %s853 = smul.u32 2, %s14
        %p854 = scmp.lt.s32.totalorder %s853, 3
        %s855 = scalar_select %p854, %s853, 3
        %s856 = smul.addr %s855, 8
        %s857 = scalar_lea.vmem %s3, %s856
        // Predicated region
        $region56: #{feature_ex_forward.35} parent=50 // pred_check
          %p858 = pneg %p100
        $region57: #{feature_ex_forward.35} parent=50 // pred_check_branch
          %860 = sbr.rel (%p858) target = $region59
        $region58: #{feature_ex_forward.35} parent=50 // pred_region
          %s861 = smul.u32 2, %s14
        $region59: #{feature_ex_forward.35} parent=50 // pred_fallthru
          _
      $region51: #{feature_ex_forward.35} parent=5 // pred_fallthru
        _
      %p862 = scmp.le.s32.totalorder 2, %s9
      // Predicated region
      $region60: #{feature_ex_forward.35} parent=5 // pred_check
        %p863 = pneg %p862
      $region61: #{feature_ex_forward.35} parent=5 // pred_check_branch
        %865 = sbr.rel (%p863) target = $region63
      $region62: #{feature_ex_forward.35} parent=5 // pred_region
        %s866 = ssub.s32 %s9, 2
        // Predicated region
        $region64: #{feature_ex_forward.35} parent=62 // pred_check
          %p867 = pneg %p106
        $region65: #{feature_ex_forward.35} parent=62 // pred_check_branch
          %869 = sbr.rel (%p867) target = $region67
        $region66: #{feature_ex_forward.35} parent=62 // pred_region
          %s870 = smul.u32 2, %s15
          %p871 = scmp.lt.s32.totalorder %s870, 3
          %s872 = scalar_select %p871, %s870, 3
          %s873 = smul.addr %s872, 8
          %s874 = scalar_lea.vmem %s3, %s873
        $region67: #{feature_ex_forward.35} parent=62 // pred_fallthru
          _
      $region63: #{feature_ex_forward.35} parent=5 // pred_fallthru
        _
    $region6: #{feature_ex_forward.35} parent=1 // loop_footer
      %s13 = sadd.s32 1, %s9
    $region7: #{feature_ex_forward.35} parent=1 // loop_footer_branch
      %8 = sbr.rel target = $region3
    $region8: #{feature_ex_forward.35} parent=1 // loop_exit
      _

</llo_original>
